<compile_context>
chip_gen: v7x
topology: tpu7x:2x2x1
jax: 0.10.0
libtpu: 0.0.40
codegen_flags: <defaults>
</compile_context>

<pallas_src>
import functools

import jax
import jax.numpy as jnp
from jax.experimental import pallas as pl
from jax.experimental.pallas import tpu as pltpu


_VMEM_LIMIT_BYTES = 32 * 1024 * 1024     # explicit scoped-VMEM request (v7x-safe)
_FUSED_VMEM_BUDGET = 24 * 1024 * 1024    # budget for the fused-path y cache


def _round_up(v, m):
    return (v + m - 1) // m * m


# ----------------------------------------------------------------------------
# Kernel A (primary, single pallas_call): conv-matmul + BN(batch stats) + LeakyReLU
# grid = (pass, M-tile); pre-BN y cached in VMEM -> no matmul recompute.
# ----------------------------------------------------------------------------
def _fused_conv_bn_lrelu_kernel(x_ref, w_ref, g_ref, beta_ref, o_ref,
                                y_cache_ref, s0_ref, s1_ref, *,
                                m_true, tm, n_m, eps, neg_slope):
    # x_ref:       (tm, Kp)       patch tile (only moved during pass 0)
    # w_ref:       (Kp, Cp)       resident weights
    # g_ref/beta_ref: (1, Cp) f32 resident BN affine params
    # o_ref:       (tm, Cp)       output tile (only written during pass 1)
    # y_cache_ref: (n_m, tm, Cp)  f32 VMEM cache of pre-BN activations
    # s0_ref/s1_ref: (1, Cp) f32  pass 0: sum / sumsq;  pass 1: scale / shift
    p = pl.program_id(0)      # 0 = conv + stats sweep, 1 = normalize sweep
    i = pl.program_id(1)      # M-tile index
    m_padded = (n_m * tm) != m_true   # static

    @pl.when(p == 0)
    def _conv_and_stats():
        # Conv as matmul on the MXU (bf16 operands in fast path, f32 accumulate).
        # No bias: it cancels exactly under the following batch-stat BatchNorm.
        y = jnp.dot(x_ref[...], w_ref[...], preferred_element_type=jnp.float32)
        y_cache_ref[i] = y                       # cache pre-BN activations

        @pl.when(i == 0)
        def _init():
            s0_ref[...] = jnp.zeros_like(s0_ref)
            s1_ref[...] = jnp.zeros_like(s1_ref)

        def _acc(yv):
            s0_ref[...] += jnp.sum(yv, axis=0, keepdims=True)
            s1_ref[...] += jnp.sum(yv * yv, axis=0, keepdims=True)

        if m_padded:
            # Only the last tile can contain M-padding rows; mask only there.
            @pl.when(i < n_m - 1)
            def _():
                _acc(y)

            @pl.when(i == n_m - 1)
            def _():
                row = (n_m - 1) * tm + jax.lax.broadcasted_iota(
                    jnp.int32, (tm, 1), 0)
                _acc(y * (row < m_true).astype(jnp.float32))
        else:
            _acc(y)

    @pl.when(p == 1)
    def _normalize():
        @pl.when(i == 0)
        def _finalize_stats():
            inv_m = 1.0 / m_true
            mean = s0_ref[...] * inv_m
            var = jnp.maximum(s1_ref[...] * inv_m - mean * mean, 0.0)
            a = g_ref[...] * jax.lax.rsqrt(var + eps)
            s0_ref[...] = a                            # BN scale
            s1_ref[...] = beta_ref[...] - a * mean     # BN shift

        y = y_cache_ref[i]
        yn = s0_ref[...] * y + s1_ref[...]
        o_ref[...] = jnp.where(yn >= 0, yn, neg_slope * yn).astype(o_ref.dtype)


def _fused_call(x2d, w2d, gamma, beta, *, m_true, tm, out_dtype, eps, neg_slope):
    Mp, Kp = x2d.shape
    Cp = w2d.shape[1]
    n_m = Mp // tm

    def x_index_map(p, i):
        # Pass 0: stream tile i.  Pass 1: stay on the last block -> zero X DMA.
        return (i * (1 - p) + p * (n_m - 1), 0)

    def out_index_map(p, i):
        # Pass 0: constant block 0 (never written -> no garbage writeback).
        # Pass 1: tile i -> block i.
        return (i * p, 0)

    kernel = functools.partial(_fused_conv_bn_lrelu_kernel, m_true=m_true,
                               tm=tm, n_m=n_m, eps=eps, neg_slope=neg_slope)
    return pl.pallas_call(
        kernel,
        out_shape=jax.ShapeDtypeStruct((Mp, Cp), out_dtype),
        grid_spec=pltpu.PrefetchScalarGridSpec(
            num_scalar_prefetch=0,
            grid=(2, n_m),                                   # (pass, M-tile)
            in_specs=[
                pl.BlockSpec((tm, Kp), x_index_map),         # X: pass-0 only
                pl.BlockSpec((Kp, Cp), lambda p, i: (0, 0)),  # W resident
                pl.BlockSpec((1, Cp), lambda p, i: (0, 0)),   # gamma
                pl.BlockSpec((1, Cp), lambda p, i: (0, 0)),   # beta
            ],
            out_specs=pl.BlockSpec((tm, Cp), out_index_map),
            scratch_shapes=[
                pltpu.VMEM((n_m, tm, Cp), jnp.float32),   # pre-BN y cache
                pltpu.VMEM((1, Cp), jnp.float32),         # sum  -> BN scale
                pltpu.VMEM((1, Cp), jnp.float32),         # sumsq -> BN shift
            ],
        ),
        compiler_params=pltpu.CompilerParams(
            # Both axes are sequential: pass 1 depends on all of pass 0 and the
            # M axis accumulates into shared VMEM scratch.  (v7x megacore is
            # exploited by the spill path's "parallel" normalize kernel.)
            dimension_semantics=("arbitrary", "arbitrary"),
            vmem_limit_bytes=_VMEM_LIMIT_BYTES),
    )(x2d, w2d, gamma.reshape(1, Cp), beta.reshape(1, Cp))


# ----------------------------------------------------------------------------
# Kernel B (fallback for large Mp*Cp): conv+stats spilling y to HBM, then a
# separate normalize kernel whose M axis is "parallel" (v7x uses both TCs).
# ----------------------------------------------------------------------------
def _conv_stats_kernel(x_ref, w_ref, g_ref, beta_ref, y_ref, a_ref, c_ref,
                       s0_ref, s1_ref, *, m_true, tm, n_m, eps):
    i = pl.program_id(0)
    m_padded = (n_m * tm) != m_true

    y = jnp.dot(x_ref[...], w_ref[...], preferred_element_type=jnp.float32)
    y_ref[...] = y.astype(y_ref.dtype)            # spill pre-BN activations

    @pl.when(i == 0)
    def _init():
        s0_ref[...] = jnp.zeros_like(s0_ref)
        s1_ref[...] = jnp.zeros_like(s1_ref)

    def _acc(yv):
        s0_ref[...] += jnp.sum(yv, axis=0, keepdims=True)
        s1_ref[...] += jnp.sum(yv * yv, axis=0, keepdims=True)

    if m_padded:
        @pl.when(i < n_m - 1)
        def _():
            _acc(y)

        @pl.when(i == n_m - 1)
        def _():
            row = (n_m - 1) * tm + jax.lax.broadcasted_iota(jnp.int32, (tm, 1), 0)
            _acc(y * (row < m_true).astype(jnp.float32))
    else:
        _acc(y)

    @pl.when(i == n_m - 1)
    def _finalize():
        inv_m = 1.0 / m_true
        mean = s0_ref[...] * inv_m
        var = jnp.maximum(s1_ref[...] * inv_m - mean * mean, 0.0)
        a = g_ref[...] * jax.lax.rsqrt(var + eps)
        a_ref[...] = a
        c_ref[...] = beta_ref[...] - a * mean


def _bn_lrelu_kernel(y_ref, a_ref, c_ref, o_ref, *, neg_slope):
    y = y_ref[...].astype(jnp.float32)
    yn = a_ref[...] * y + c_ref[...]
    o_ref[...] = jnp.where(yn >= 0, yn, neg_slope * yn).astype(o_ref.dtype)


def _spill_call(x2d, w2d, gamma, beta, *, m_true, tm, out_dtype, y_spill_dtype,
                eps, neg_slope):
    Mp, Kp = x2d.shape
    Cp = w2d.shape[1]
    n_m = Mp // tm

    stats_kernel = functools.partial(_conv_stats_kernel, m_true=m_true, tm=tm,
                                     n_m=n_m, eps=eps)
    y2d, a, c = pl.pallas_call(
        stats_kernel,
        out_shape=(jax.ShapeDtypeStruct((Mp, Cp), y_spill_dtype),
                   jax.ShapeDtypeStruct((1, Cp), jnp.float32),
                   jax.ShapeDtypeStruct((1, Cp), jnp.float32)),
        grid_spec=pltpu.PrefetchScalarGridSpec(
            num_scalar_prefetch=0,
            grid=(n_m,),
            in_specs=[
                pl.BlockSpec((tm, Kp), lambda i: (i, 0)),
                pl.BlockSpec((Kp, Cp), lambda i: (0, 0)),
                pl.BlockSpec((1, Cp), lambda i: (0, 0)),
                pl.BlockSpec((1, Cp), lambda i: (0, 0)),
            ],
            out_specs=[pl.BlockSpec((tm, Cp), lambda i: (i, 0)),
                       pl.BlockSpec((1, Cp), lambda i: (0, 0)),
                       pl.BlockSpec((1, Cp), lambda i: (0, 0))],
            scratch_shapes=[pltpu.VMEM((1, Cp), jnp.float32),
                            pltpu.VMEM((1, Cp), jnp.float32)],
        ),
        compiler_params=pltpu.CompilerParams(
            dimension_semantics=("arbitrary",),
            vmem_limit_bytes=_VMEM_LIMIT_BYTES),
    )(x2d, w2d, gamma.reshape(1, Cp), beta.reshape(1, Cp))

    norm_kernel = functools.partial(_bn_lrelu_kernel, neg_slope=neg_slope)
    return pl.pallas_call(
        norm_kernel,
        out_shape=jax.ShapeDtypeStruct((Mp, Cp), out_dtype),
        grid_spec=pltpu.PrefetchScalarGridSpec(
            num_scalar_prefetch=0,
            grid=(n_m,),
            in_specs=[
                pl.BlockSpec((tm, Cp), lambda i: (i, 0)),
                pl.BlockSpec((1, Cp), lambda i: (0, 0)),
                pl.BlockSpec((1, Cp), lambda i: (0, 0)),
            ],
            out_specs=pl.BlockSpec((tm, Cp), lambda i: (i, 0)),
        ),
        compiler_params=pltpu.CompilerParams(
            dimension_semantics=("parallel",),      # megacore-friendly on v7x
            vmem_limit_bytes=_VMEM_LIMIT_BYTES),
    )(y2d, a, c)


# ----------------------------------------------------------------------------
# Plain-JAX glue: im2col on NHWC (layout only, no FLOPs, no transposes)
# ----------------------------------------------------------------------------
def im2col_nhwc(x, k=3, stride=2, pad=1):
    # x: (N, H, W, C) -> (N*Ho*Wo, C*k*k), K ordered (c, kh*k+kw) to match
    # w_oihw.reshape(Cout, Cin*k*k).
    N, H, W, C = x.shape
    xp = jnp.pad(x, ((0, 0), (pad, pad), (pad, pad), (0, 0)))
    Ho = (H + 2 * pad - k) // stride + 1
    Wo = (W + 2 * pad - k) // stride + 1
    patches = []
    for i in range(k):
        for j in range(k):
            patches.append(xp[:, i:i + stride * Ho:stride,
                              j:j + stride * Wo:stride, :])
    p = jnp.stack(patches, axis=-1)                 # (N, Ho, Wo, C, k*k)
    return p.reshape(N * Ho * Wo, C * k * k), Ho, Wo


def discriminator_layer(x_nhwc, w_oihw, b, gamma, beta, *, m_tile=512,
                        compute_dtype=jnp.bfloat16, out_dtype=None,
                        force_spill=False, eps=1e-5, neg_slope=0.2):
    # The conv bias `b` is accepted for API parity but deliberately unused:
    # with batch-stat BatchNorm directly after the conv it cancels exactly.
    del b
    assert m_tile % 8 == 0
    if out_dtype is None:
        out_dtype = compute_dtype
    N, H, W, Cin = x_nhwc.shape
    Cout = w_oihw.shape[0]

    # Cast to the compute dtype before the patch HBM round-trip (halves bytes
    # in the bf16 path).
    patches, Ho, Wo = im2col_nhwc(x_nhwc.astype(compute_dtype))   # [M, Cin*9]
    M, K = patches.shape

    # Lane-dense geometry: pad K and Cout to multiples of 128 (exact; padded
    # output channels are sliced off).
    Kp = _round_up(K, 128)
    Cp = _round_up(Cout, 128)

    if M <= m_tile:
        tm, Mp = M, M              # single resident M-tile
    else:
        tm = m_tile
        Mp = _round_up(M, tm)      # padded rows masked out of BN stats

    x2d = jnp.pad(patches, ((0, Mp - M), (0, Kp - K)))
    w2d = jnp.pad(w_oihw.reshape(Cout, K).T.astype(compute_dtype),
                  ((0, Kp - K), (0, Cp - Cout)))
    gp = jnp.pad(gamma, (0, Cp - Cout))
    betap = jnp.pad(beta, (0, Cp - Cout))

    # VMEM budget for the fused (y-cached-in-VMEM) path; spill otherwise.
    ib = jnp.dtype(compute_dtype).itemsize
    ob = jnp.dtype(out_dtype).itemsize
    fused_bytes = (2 * tm * Kp * ib + 2 * Kp * Cp * ib + 2 * tm * Cp * ob
                   + Mp * Cp * 4 + (1 << 20))
    use_fused = (not force_spill) and fused_bytes <= _FUSED_VMEM_BUDGET

    if use_fused:
        y2d = _fused_call(x2d, w2d, gp, betap, m_true=M, tm=tm,
                          out_dtype=out_dtype, eps=eps, neg_slope=neg_slope)
    else:
        y2d = _spill_call(x2d, w2d, gp, betap, m_true=M, tm=tm,
                          out_dtype=out_dtype, y_spill_dtype=compute_dtype,
                          eps=eps, neg_slope=neg_slope)

    y2d = y2d[:M, :Cout]
    return y2d.reshape(N, Ho, Wo, Cout)       # stays NHWC (no transpose)


def discriminator_forward(x_nchw, params, *, m_tile=512,
                          compute_dtype=jnp.bfloat16, force_spill=False):
    # One NCHW->NHWC transpose up front; all layers stay NHWC; transpose back
    # only at the very end (PyTorch returns NCHW).
    feat = jnp.transpose(x_nchw, (0, 2, 3, 1))
    for (w, b, g, beta) in params:
        feat = discriminator_layer(feat, w, b, g, beta, m_tile=m_tile,
                                   compute_dtype=compute_dtype,
                                   force_spill=force_spill)
    return jnp.transpose(feat, (0, 3, 1, 2))


# ----------------------------------------------------------------------------
# Pure-JAX reference (for correctness checks) -- NCHW, includes the conv bias.
# ----------------------------------------------------------------------------
def ref_layer(x, w, b, g, beta, compute_dtype=jnp.float32):
    y = jax.lax.conv_general_dilated(
        x.astype(compute_dtype), w.astype(compute_dtype),
        window_strides=(2, 2), padding=((1, 1), (1, 1)),
        dimension_numbers=("NCHW", "OIHW", "NCHW"),
        preferred_element_type=jnp.float32)
    y = y + b[None, :, None, None]
    mean = y.mean(axis=(0, 2, 3), keepdims=True)
    var = ((y - mean) ** 2).mean(axis=(0, 2, 3), keepdims=True)   # biased var
    y = g[None, :, None, None] * (y - mean) * jax.lax.rsqrt(var + 1e-5) \
        + beta[None, :, None, None]
    return jnp.where(y >= 0, y, 0.2 * y)


def ref_forward(x, params):
    feat = x
    for (w, b, g, beta) in params:
        feat = ref_layer(feat, w, b, g, beta)
    return feat


# ----------------------------------------------------------------------------
def make_params(in_channels, key):
    # Conv weights ~ N(0, 0.02); small nonzero bias (to demonstrate that the
    # kernel's bias-free conv is exact under batch-stat BN); gamma=1, beta=0.
    channels = [in_channels, 64, 128, 256, 512]
    params = []
    for li in range(4):
        key, wk, bk = jax.random.split(key, 3)
        cin, cout = channels[li], channels[li + 1]
        w = 0.02 * jax.random.normal(wk, (cout, cin, 3, 3), dtype=jnp.float32)
        b = 0.02 * jax.random.normal(bk, (cout,), dtype=jnp.float32)
        gamma = jnp.ones((cout,), jnp.float32)
        beta = jnp.zeros((cout,), jnp.float32)
        params.append((w, b, gamma, beta))
    return params


if __name__ == "__main__":
    key = jax.random.PRNGKey(0)
    key, xk = jax.random.split(key)

    N, in_channels, H, W = 2, 4, 16, 16
    x = jax.random.normal(xk, (N, in_channels, H, W), dtype=jnp.float32)
    params = make_params(in_channels, key)

    ref = jax.block_until_ready(ref_forward(x, params))

    # 1) f32 fused path (default tiling): end-to-end check against f32 ref.
    fwd_f32 = jax.jit(functools.partial(discriminator_forward,
                                        compute_dtype=jnp.float32))
    out_f32 = jax.block_until_ready(fwd_f32(x, params))
    assert out_f32.shape == (N, 512, 1, 1), out_f32.shape
    assert jnp.allclose(out_f32, ref, rtol=1e-2, atol=1e-2), \
        float(jnp.max(jnp.abs(out_f32 - ref)))

    # 2) f32 fused path, small M tile: multi-tile grid + padded-row masking.
    fwd_tiled = jax.jit(functools.partial(discriminator_forward, m_tile=48,
                                          compute_dtype=jnp.float32))
    out_tiled = jax.block_until_ready(fwd_tiled(x, params))
    assert jnp.allclose(out_tiled, ref, rtol=1e-2, atol=1e-2), \
        float(jnp.max(jnp.abs(out_tiled - ref)))

    # 3) f32 spill path (y spilled to HBM + separate "parallel" normalize).
    fwd_spill = jax.jit(functools.partial(discriminator_forward, m_tile=48,
                                          compute_dtype=jnp.float32,
                                          force_spill=True))
    out_spill = jax.block_until_ready(fwd_spill(x, params))
    assert jnp.allclose(out_spill, ref, rtol=1e-2, atol=1e-2), \
        float(jnp.max(jnp.abs(out_spill - ref)))

    # 4) bf16 production path (bf16 operands, bf16 output): shape / finiteness.
    fwd_bf16 = jax.jit(discriminator_forward)
    out_bf16 = jax.block_until_ready(fwd_bf16(x, params))
    assert out_bf16.shape == (N, 512, 1, 1), out_bf16.shape
    assert out_bf16.dtype == jnp.bfloat16
    assert bool(jnp.all(jnp.isfinite(out_bf16.astype(jnp.float32))))

    # 5) bf16 path per-layer check against a quantization-matched reference
    #    (same bf16-cast conv operands), avoiding cross-layer error
    #    compounding through tiny-batch BatchNorm amplification.
    feat = x                                  # NCHW f32 reference activations
    for (w, b, g, beta) in params:
        lr = ref_layer(feat, w, b, g, beta, compute_dtype=jnp.bfloat16)
        lp = discriminator_layer(jnp.transpose(feat, (0, 2, 3, 1)),
                                 w, b, g, beta, compute_dtype=jnp.bfloat16)
        lp = jnp.transpose(lp, (0, 3, 1, 2)).astype(jnp.float32)
        lp, lr = jax.block_until_ready((lp, lr))
        assert jnp.allclose(lp, lr, rtol=2e-2, atol=2e-2), \
            float(jnp.max(jnp.abs(lp - lr)))
        feat = lr

    print("KERNEL_OK")
</pallas_src>

<mosaic_0001>
module attributes {stable_mosaic.version = 11 : i64} {
  func.func @_fused_conv_bn_lrelu_kernel(%arg0: i32, %arg1: i32, %arg2: memref<128x128xf32, #tpu.memory_space<vmem>>, %arg3: memref<128x128xf32, #tpu.memory_space<vmem>>, %arg4: memref<1x128xf32, #tpu.memory_space<vmem>>, %arg5: memref<1x128xf32, #tpu.memory_space<vmem>>, %arg6: memref<128x128xf32, #tpu.memory_space<vmem>>, %arg7: memref<1x128x128xf32, #tpu.memory_space<vmem>>, %arg8: memref<1x128xf32, #tpu.memory_space<vmem>>, %arg9: memref<1x128xf32, #tpu.memory_space<vmem>>) attributes {dimension_semantics = [#tpu.dimension_semantics<arbitrary>, #tpu.dimension_semantics<arbitrary>], iteration_bounds = array<i64: 2, 1>, scalar_prefetch = 0 : i64, scratch_operands = 3 : i64, tpu.core_type = #tpu.core_type<tc>, window_params = [{transform_indices = @transform_0, window_bounds = array<i64: 128, 128>}, {pipeline_mode = #tpu.pipeline_mode<synchronous>, transform_indices = @transform_1, window_bounds = array<i64: 128, 128>}, {pipeline_mode = #tpu.pipeline_mode<synchronous>, transform_indices = @transform_2, window_bounds = array<i64: 1, 128>}, {pipeline_mode = #tpu.pipeline_mode<synchronous>, transform_indices = @transform_3, window_bounds = array<i64: 1, 128>}, {transform_indices = @transform_4, window_bounds = array<i64: 128, 128>}]} {
    %c0_i32 = arith.constant 0 : i32
    %0 = arith.cmpi eq, %arg0, %c0_i32 : i32
    %1 = arith.extui %0 : i1 to i32
    %c0_i32_0 = arith.constant 0 : i32
    %2 = arith.cmpi ne, %1, %c0_i32_0 : i32
    scf.if %2 {
      %c0 = arith.constant 0 : index
      %c0_2 = arith.constant 0 : index
      %6 = vector.load %arg2[%c0, %c0_2] : memref<128x128xf32, #tpu.memory_space<vmem>>, vector<128x128xf32>
      %c0_3 = arith.constant 0 : index
      %c0_4 = arith.constant 0 : index
      %7 = vector.load %arg3[%c0_3, %c0_4] : memref<128x128xf32, #tpu.memory_space<vmem>>, vector<128x128xf32>
      %cst = arith.constant dense<0.000000e+00> : vector<128x128xf32>
      %8 = tpu.matmul %6, %7, %cst {dimension_numbers = #tpu.dot_dimension_numbers<[1], [0], [0], [1], [0, 0, 1, 1], [], []>} : vector<128x128xf32>, vector<128x128xf32>, vector<128x128xf32> -> vector<128x128xf32>
      %9 = arith.index_cast %arg1 : i32 to index
      %c0_5 = arith.constant 0 : index
      %c0_6 = arith.constant 0 : index
      %10 = vector.load %arg7[%9, %c0_5, %c0_6] : memref<1x128x128xf32, #tpu.memory_space<vmem>>, vector<1x128x128xf32>
      %11 = vector.shape_cast %10 : vector<1x128x128xf32> to vector<128x128xf32>
      %12 = vector.shape_cast %8 : vector<128x128xf32> to vector<1x128x128xf32>
      tpu.vector_store %arg7[%9, %c0_5, %c0_6], %12 {strides = array<i32>} : memref<1x128x128xf32, #tpu.memory_space<vmem>>, vector<1x128x128xf32>,
      %c0_i32_7 = arith.constant 0 : i32
      %13 = arith.cmpi eq, %arg1, %c0_i32_7 : i32
      %14 = arith.extui %13 : i1 to i32
      %c0_i32_8 = arith.constant 0 : i32
      %15 = arith.cmpi ne, %14, %c0_i32_8 : i32
      scf.if %15 {
        %cst_19 = arith.constant 0.000000e+00 : f32
        %27 = vector.broadcast %cst_19 : f32 to vector<1x128xf32>
        %c0_20 = arith.constant 0 : index
        %c0_21 = arith.constant 0 : index
        %28 = vector.load %arg8[%c0_20, %c0_21] : memref<1x128xf32, #tpu.memory_space<vmem>>, vector<1x128xf32>
        tpu.vector_store %arg8[%c0_20, %c0_21], %27 {strides = array<i32>} : memref<1x128xf32, #tpu.memory_space<vmem>>, vector<1x128xf32>,
        %cst_22 = arith.constant 0.000000e+00 : f32
        %29 = vector.broadcast %cst_22 : f32 to vector<1x128xf32>
        %c0_23 = arith.constant 0 : index
        %c0_24 = arith.constant 0 : index
        %30 = vector.load %arg9[%c0_23, %c0_24] : memref<1x128xf32, #tpu.memory_space<vmem>>, vector<1x128xf32>
        tpu.vector_store %arg9[%c0_23, %c0_24], %29 {strides = array<i32>} : memref<1x128xf32, #tpu.memory_space<vmem>>, vector<1x128xf32>,
      } else {
      }
      %c0_9 = arith.constant 0 : index
      %c0_10 = arith.constant 0 : index
      %16 = vector.load %arg8[%c0_9, %c0_10] : memref<1x128xf32, #tpu.memory_space<vmem>>, vector<1x128xf32>
      %cst_11 = arith.constant dense<0.000000e+00> : vector<128xf32>
      %17 = vector.multi_reduction <add>, %8, %cst_11 [0] : vector<128x128xf32> to vector<128xf32>
      %18 = vector.shape_cast %17 : vector<128xf32> to vector<1x128xf32>
      %19 = arith.addf %16, %18 : vector<1x128xf32>
      %c0_12 = arith.constant 0 : index
      %c0_13 = arith.constant 0 : index
      %20 = vector.load %arg8[%c0_12, %c0_13] : memref<1x128xf32, #tpu.memory_space<vmem>>, vector<1x128xf32>
      tpu.vector_store %arg8[%c0_12, %c0_13], %19 {strides = array<i32>} : memref<1x128xf32, #tpu.memory_space<vmem>>, vector<1x128xf32>,
      %c0_14 = arith.constant 0 : index
      %c0_15 = arith.constant 0 : index
      %21 = vector.load %arg9[%c0_14, %c0_15] : memref<1x128xf32, #tpu.memory_space<vmem>>, vector<1x128xf32>
      %22 = arith.mulf %8, %8 : vector<128x128xf32>
      %cst_16 = arith.constant dense<0.000000e+00> : vector<128xf32>
      %23 = vector.multi_reduction <add>, %22, %cst_16 [0] : vector<128x128xf32> to vector<128xf32>
      %24 = vector.shape_cast %23 : vector<128xf32> to vector<1x128xf32>
      %25 = arith.addf %21, %24 : vector<1x128xf32>
      %c0_17 = arith.constant 0 : index
      %c0_18 = arith.constant 0 : index
      %26 = vector.load %arg9[%c0_17, %c0_18] : memref<1x128xf32, #tpu.memory_space<vmem>>, vector<1x128xf32>
      tpu.vector_store %arg9[%c0_17, %c0_18], %25 {strides = array<i32>} : memref<1x128xf32, #tpu.memory_space<vmem>>, vector<1x128xf32>,
    } else {
    }
    %c1_i32 = arith.constant 1 : i32
    %3 = arith.cmpi eq, %arg0, %c1_i32 : i32
    %4 = arith.extui %3 : i1 to i32
    %c0_i32_1 = arith.constant 0 : i32
    %5 = arith.cmpi ne, %4, %c0_i32_1 : i32
    scf.if %5 {
      %c0_i32_2 = arith.constant 0 : i32
      %6 = arith.cmpi eq, %arg1, %c0_i32_2 : i32
      %7 = arith.extui %6 : i1 to i32
      %c0_i32_3 = arith.constant 0 : i32
      %8 = arith.cmpi ne, %7, %c0_i32_3 : i32
      scf.if %8 {
        %c0_12 = arith.constant 0 : index
        %c0_13 = arith.constant 0 : index
        %24 = vector.load %arg8[%c0_12, %c0_13] : memref<1x128xf32, #tpu.memory_space<vmem>>, vector<1x128xf32>
        %cst_14 = arith.constant 7.812500e-03 : f32
        %25 = vector.broadcast %cst_14 : f32 to vector<1x128xf32>
        %26 = arith.mulf %24, %25 : vector<1x128xf32>
        %c0_15 = arith.constant 0 : index
        %c0_16 = arith.constant 0 : index
        %27 = vector.load %arg9[%c0_15, %c0_16] : memref<1x128xf32, #tpu.memory_space<vmem>>, vector<1x128xf32>
        %cst_17 = arith.constant 7.812500e-03 : f32
        %28 = vector.broadcast %cst_17 : f32 to vector<1x128xf32>
        %29 = arith.mulf %27, %28 : vector<1x128xf32>
        %30 = arith.mulf %26, %26 : vector<1x128xf32>
        %31 = arith.subf %29, %30 : vector<1x128xf32>
        %cst_18 = arith.constant 0.000000e+00 : f32
        %32 = vector.broadcast %cst_18 : f32 to vector<1x128xf32>
        %33 = arith.maximumf %31, %32 : vector<1x128xf32>
        %c0_19 = arith.constant 0 : index
        %c0_20 = arith.constant 0 : index
        %34 = vector.load %arg4[%c0_19, %c0_20] : memref<1x128xf32, #tpu.memory_space<vmem>>, vector<1x128xf32>
        %cst_21 = arith.constant 9.99999974E-6 : f32
        %35 = vector.broadcast %cst_21 : f32 to vector<1x128xf32>
        %36 = arith.addf %33, %35 : vector<1x128xf32>
        %37 = math.rsqrt %36 : vector<1x128xf32>
        %38 = arith.mulf %34, %37 : vector<1x128xf32>
        %c0_22 = arith.constant 0 : index
        %c0_23 = arith.constant 0 : index
        %39 = vector.load %arg8[%c0_22, %c0_23] : memref<1x128xf32, #tpu.memory_space<vmem>>, vector<1x128xf32>
        tpu.vector_store %arg8[%c0_22, %c0_23], %38 {strides = array<i32>} : memref<1x128xf32, #tpu.memory_space<vmem>>, vector<1x128xf32>,
        %c0_24 = arith.constant 0 : index
        %c0_25 = arith.constant 0 : index
        %40 = vector.load %arg5[%c0_24, %c0_25] : memref<1x128xf32, #tpu.memory_space<vmem>>, vector<1x128xf32>
        %41 = arith.mulf %38, %26 : vector<1x128xf32>
        %42 = arith.subf %40, %41 : vector<1x128xf32>
        %c0_26 = arith.constant 0 : index
        %c0_27 = arith.constant 0 : index
        %43 = vector.load %arg9[%c0_26, %c0_27] : memref<1x128xf32, #tpu.memory_space<vmem>>, vector<1x128xf32>
        tpu.vector_store %arg9[%c0_26, %c0_27], %42 {strides = array<i32>} : memref<1x128xf32, #tpu.memory_space<vmem>>, vector<1x128xf32>,
      } else {
      }
      %9 = arith.index_cast %arg1 : i32 to index
      %c0 = arith.constant 0 : index
      %c0_4 = arith.constant 0 : index
      %10 = vector.load %arg7[%9, %c0, %c0_4] : memref<1x128x128xf32, #tpu.memory_space<vmem>>, vector<1x128x128xf32>
      %11 = vector.shape_cast %10 : vector<1x128x128xf32> to vector<128x128xf32>
      %c0_5 = arith.constant 0 : index
      %c0_6 = arith.constant 0 : index
      %12 = vector.load %arg8[%c0_5, %c0_6] : memref<1x128xf32, #tpu.memory_space<vmem>>, vector<1x128xf32>
      %13 = vector.broadcast %12 : vector<1x128xf32> to vector<128x128xf32>
      %14 = arith.mulf %13, %11 : vector<128x128xf32>
      %c0_7 = arith.constant 0 : index
      %c0_8 = arith.constant 0 : index
      %15 = vector.load %arg9[%c0_7, %c0_8] : memref<1x128xf32, #tpu.memory_space<vmem>>, vector<1x128xf32>
      %16 = vector.broadcast %15 : vector<1x128xf32> to vector<128x128xf32>
      %17 = arith.addf %14, %16 : vector<128x128xf32>
      %cst = arith.constant 0.000000e+00 : f32
      %18 = vector.broadcast %cst : f32 to vector<128x128xf32>
      %19 = arith.cmpf oge, %17, %18 : vector<128x128xf32>
      %cst_9 = arith.constant 2.000000e-01 : f32
      %20 = vector.broadcast %cst_9 : f32 to vector<128x128xf32>
      %21 = arith.mulf %20, %17 : vector<128x128xf32>
      %22 = arith.select %19, %17, %21 : vector<128x128xi1>, vector<128x128xf32>
      %c0_10 = arith.constant 0 : index
      %c0_11 = arith.constant 0 : index
      %23 = vector.load %arg6[%c0_10, %c0_11] : memref<128x128xf32, #tpu.memory_space<vmem>>, vector<128x128xf32>
      tpu.vector_store %arg6[%c0_10, %c0_11], %22 {strides = array<i32>} : memref<128x128xf32, #tpu.memory_space<vmem>>, vector<128x128xf32>,
    } else {
    }
    return
  }
  func.func @transform_0(%arg0: i32, %arg1: i32) -> (i32, i32) {
    %c1_i32 = arith.constant 1 : i32
    %0 = arith.subi %c1_i32, %arg0 : i32
    %1 = arith.muli %arg1, %0 : i32
    %c0_i32 = arith.constant 0 : i32
    %2 = arith.muli %arg0, %c0_i32 : i32
    %3 = arith.addi %1, %2 : i32
    %c0_i32_0 = arith.constant 0 : i32
    %c0_i32_1 = arith.constant 0 : i32
    return %3, %c0_i32_0 : i32, i32
  }
  func.func @transform_1(%arg0: i32, %arg1: i32) -> (i32, i32) {
    %c0_i32 = arith.constant 0 : i32
    %c0_i32_0 = arith.constant 0 : i32
    %c0_i32_1 = arith.constant 0 : i32
    return %c0_i32, %c0_i32_0 : i32, i32
  }
  func.func @transform_2(%arg0: i32, %arg1: i32) -> (i32, i32) {
    %c0_i32 = arith.constant 0 : i32
    %c0_i32_0 = arith.constant 0 : i32
    %c0_i32_1 = arith.constant 0 : i32
    return %c0_i32, %c0_i32_0 : i32, i32
  }
  func.func @transform_3(%arg0: i32, %arg1: i32) -> (i32, i32) {
    %c0_i32 = arith.constant 0 : i32
    %c0_i32_0 = arith.constant 0 : i32
    %c0_i32_1 = arith.constant 0 : i32
    return %c0_i32, %c0_i32_0 : i32, i32
  }
  func.func @transform_4(%arg0: i32, %arg1: i32) -> (i32, i32) {
    %0 = arith.muli %arg1, %arg0 : i32
    %c0_i32 = arith.constant 0 : i32
    %c0_i32_0 = arith.constant 0 : i32
    return %0, %c0_i32 : i32, i32
  }
}

module attributes {stable_mosaic.version = 11 : i64} {
  func.func @_fused_conv_bn_lrelu_kernel(%arg0: i32, %arg1: i32, %arg2: memref<32x640xf32, #tpu.memory_space<vmem>>, %arg3: memref<640x128xf32, #tpu.memory_space<vmem>>, %arg4: memref<1x128xf32, #tpu.memory_space<vmem>>, %arg5: memref<1x128xf32, #tpu.memory_space<vmem>>, %arg6: memref<32x128xf32, #tpu.memory_space<vmem>>, %arg7: memref<1x32x128xf32, #tpu.memory_space<vmem>>, %arg8: memref<1x128xf32, #tpu.memory_space<vmem>>, %arg9: memref<1x128xf32, #tpu.memory_space<vmem>>) attributes {dimension_semantics = [#tpu.dimension_semantics<arbitrary>, #tpu.dimension_semantics<arbitrary>], iteration_bounds = array<i64: 2, 1>, scalar_prefetch = 0 : i64, scratch_operands = 3 : i64, tpu.core_type = #tpu.core_type<tc>, window_params = [{transform_indices = @transform_0, window_bounds = array<i64: 32, 640>}, {pipeline_mode = #tpu.pipeline_mode<synchronous>, transform_indices = @transform_1, window_bounds = array<i64: 640, 128>}, {pipeline_mode = #tpu.pipeline_mode<synchronous>, transform_indices = @transform_2, window_bounds = array<i64: 1, 128>}, {pipeline_mode = #tpu.pipeline_mode<synchronous>, transform_indices = @transform_3, window_bounds = array<i64: 1, 128>}, {transform_indices = @transform_4, window_bounds = array<i64: 32, 128>}]} {
    %c0_i32 = arith.constant 0 : i32
    %0 = arith.cmpi eq, %arg0, %c0_i32 : i32
    %1 = arith.extui %0 : i1 to i32
    %c0_i32_0 = arith.constant 0 : i32
    %2 = arith.cmpi ne, %1, %c0_i32_0 : i32
    scf.if %2 {
      %c0 = arith.constant 0 : index
      %c0_2 = arith.constant 0 : index
      %6 = vector.load %arg2[%c0, %c0_2] : memref<32x640xf32, #tpu.memory_space<vmem>>, vector<32x640xf32>
      %c0_3 = arith.constant 0 : index
      %c0_4 = arith.constant 0 : index
      %7 = vector.load %arg3[%c0_3, %c0_4] : memref<640x128xf32, #tpu.memory_space<vmem>>, vector<640x128xf32>
      %cst = arith.constant dense<0.000000e+00> : vector<32x128xf32>
      %8 = tpu.matmul %6, %7, %cst {dimension_numbers = #tpu.dot_dimension_numbers<[1], [0], [0], [1], [0, 0, 1, 1], [], []>} : vector<32x640xf32>, vector<640x128xf32>, vector<32x128xf32> -> vector<32x128xf32>
      %9 = arith.index_cast %arg1 : i32 to index
      %c0_5 = arith.constant 0 : index
      %c0_6 = arith.constant 0 : index
      %10 = vector.load %arg7[%9, %c0_5, %c0_6] : memref<1x32x128xf32, #tpu.memory_space<vmem>>, vector<1x32x128xf32>
      %11 = vector.shape_cast %10 : vector<1x32x128xf32> to vector<32x128xf32>
      %12 = vector.shape_cast %8 : vector<32x128xf32> to vector<1x32x128xf32>
      tpu.vector_store %arg7[%9, %c0_5, %c0_6], %12 {strides = array<i32>} : memref<1x32x128xf32, #tpu.memory_space<vmem>>, vector<1x32x128xf32>,
      %c0_i32_7 = arith.constant 0 : i32
      %13 = arith.cmpi eq, %arg1, %c0_i32_7 : i32
      %14 = arith.extui %13 : i1 to i32
      %c0_i32_8 = arith.constant 0 : i32
      %15 = arith.cmpi ne, %14, %c0_i32_8 : i32
      scf.if %15 {
        %cst_19 = arith.constant 0.000000e+00 : f32
        %27 = vector.broadcast %cst_19 : f32 to vector<1x128xf32>
        %c0_20 = arith.constant 0 : index
        %c0_21 = arith.constant 0 : index
        %28 = vector.load %arg8[%c0_20, %c0_21] : memref<1x128xf32, #tpu.memory_space<vmem>>, vector<1x128xf32>
        tpu.vector_store %arg8[%c0_20, %c0_21], %27 {strides = array<i32>} : memref<1x128xf32, #tpu.memory_space<vmem>>, vector<1x128xf32>,
        %cst_22 = arith.constant 0.000000e+00 : f32
        %29 = vector.broadcast %cst_22 : f32 to vector<1x128xf32>
        %c0_23 = arith.constant 0 : index
        %c0_24 = arith.constant 0 : index
        %30 = vector.load %arg9[%c0_23, %c0_24] : memref<1x128xf32, #tpu.memory_space<vmem>>, vector<1x128xf32>
        tpu.vector_store %arg9[%c0_23, %c0_24], %29 {strides = array<i32>} : memref<1x128xf32, #tpu.memory_space<vmem>>, vector<1x128xf32>,
      } else {
      }
      %c0_9 = arith.constant 0 : index
      %c0_10 = arith.constant 0 : index
      %16 = vector.load %arg8[%c0_9, %c0_10] : memref<1x128xf32, #tpu.memory_space<vmem>>, vector<1x128xf32>
      %cst_11 = arith.constant dense<0.000000e+00> : vector<128xf32>
      %17 = vector.multi_reduction <add>, %8, %cst_11 [0] : vector<32x128xf32> to vector<128xf32>
      %18 = vector.shape_cast %17 : vector<128xf32> to vector<1x128xf32>
      %19 = arith.addf %16, %18 : vector<1x128xf32>
      %c0_12 = arith.constant 0 : index
      %c0_13 = arith.constant 0 : index
      %20 = vector.load %arg8[%c0_12, %c0_13] : memref<1x128xf32, #tpu.memory_space<vmem>>, vector<1x128xf32>
      tpu.vector_store %arg8[%c0_12, %c0_13], %19 {strides = array<i32>} : memref<1x128xf32, #tpu.memory_space<vmem>>, vector<1x128xf32>,
      %c0_14 = arith.constant 0 : index
      %c0_15 = arith.constant 0 : index
      %21 = vector.load %arg9[%c0_14, %c0_15] : memref<1x128xf32, #tpu.memory_space<vmem>>, vector<1x128xf32>
      %22 = arith.mulf %8, %8 : vector<32x128xf32>
      %cst_16 = arith.constant dense<0.000000e+00> : vector<128xf32>
      %23 = vector.multi_reduction <add>, %22, %cst_16 [0] : vector<32x128xf32> to vector<128xf32>
      %24 = vector.shape_cast %23 : vector<128xf32> to vector<1x128xf32>
      %25 = arith.addf %21, %24 : vector<1x128xf32>
      %c0_17 = arith.constant 0 : index
      %c0_18 = arith.constant 0 : index
      %26 = vector.load %arg9[%c0_17, %c0_18] : memref<1x128xf32, #tpu.memory_space<vmem>>, vector<1x128xf32>
      tpu.vector_store %arg9[%c0_17, %c0_18], %25 {strides = array<i32>} : memref<1x128xf32, #tpu.memory_space<vmem>>, vector<1x128xf32>,
    } else {
    }
    %c1_i32 = arith.constant 1 : i32
    %3 = arith.cmpi eq, %arg0, %c1_i32 : i32
    %4 = arith.extui %3 : i1 to i32
    %c0_i32_1 = arith.constant 0 : i32
    %5 = arith.cmpi ne, %4, %c0_i32_1 : i32
    scf.if %5 {
      %c0_i32_2 = arith.constant 0 : i32
      %6 = arith.cmpi eq, %arg1, %c0_i32_2 : i32
      %7 = arith.extui %6 : i1 to i32
      %c0_i32_3 = arith.constant 0 : i32
      %8 = arith.cmpi ne, %7, %c0_i32_3 : i32
      scf.if %8 {
        %c0_12 = arith.constant 0 : index
        %c0_13 = arith.constant 0 : index
        %24 = vector.load %arg8[%c0_12, %c0_13] : memref<1x128xf32, #tpu.memory_space<vmem>>, vector<1x128xf32>
        %cst_14 = arith.constant 3.125000e-02 : f32
        %25 = vector.broadcast %cst_14 : f32 to vector<1x128xf32>
        %26 = arith.mulf %24, %25 : vector<1x128xf32>
        %c0_15 = arith.constant 0 : index
        %c0_16 = arith.constant 0 : index
        %27 = vector.load %arg9[%c0_15, %c0_16] : memref<1x128xf32, #tpu.memory_space<vmem>>, vector<1x128xf32>
        %cst_17 = arith.constant 3.125000e-02 : f32
        %28 = vector.broadcast %cst_17 : f32 to vector<1x128xf32>
        %29 = arith.mulf %27, %28 : vector<1x128xf32>
        %30 = arith.mulf %26, %26 : vector<1x128xf32>
        %31 = arith.subf %29, %30 : vector<1x128xf32>
        %cst_18 = arith.constant 0.000000e+00 : f32
        %32 = vector.broadcast %cst_18 : f32 to vector<1x128xf32>
        %33 = arith.maximumf %31, %32 : vector<1x128xf32>
        %c0_19 = arith.constant 0 : index
        %c0_20 = arith.constant 0 : index
        %34 = vector.load %arg4[%c0_19, %c0_20] : memref<1x128xf32, #tpu.memory_space<vmem>>, vector<1x128xf32>
        %cst_21 = arith.constant 9.99999974E-6 : f32
        %35 = vector.broadcast %cst_21 : f32 to vector<1x128xf32>
        %36 = arith.addf %33, %35 : vector<1x128xf32>
        %37 = math.rsqrt %36 : vector<1x128xf32>
        %38 = arith.mulf %34, %37 : vector<1x128xf32>
        %c0_22 = arith.constant 0 : index
        %c0_23 = arith.constant 0 : index
        %39 = vector.load %arg8[%c0_22, %c0_23] : memref<1x128xf32, #tpu.memory_space<vmem>>, vector<1x128xf32>
        tpu.vector_store %arg8[%c0_22, %c0_23], %38 {strides = array<i32>} : memref<1x128xf32, #tpu.memory_space<vmem>>, vector<1x128xf32>,
        %c0_24 = arith.constant 0 : index
        %c0_25 = arith.constant 0 : index
        %40 = vector.load %arg5[%c0_24, %c0_25] : memref<1x128xf32, #tpu.memory_space<vmem>>, vector<1x128xf32>
        %41 = arith.mulf %38, %26 : vector<1x128xf32>
        %42 = arith.subf %40, %41 : vector<1x128xf32>
        %c0_26 = arith.constant 0 : index
        %c0_27 = arith.constant 0 : index
        %43 = vector.load %arg9[%c0_26, %c0_27] : memref<1x128xf32, #tpu.memory_space<vmem>>, vector<1x128xf32>
        tpu.vector_store %arg9[%c0_26, %c0_27], %42 {strides = array<i32>} : memref<1x128xf32, #tpu.memory_space<vmem>>, vector<1x128xf32>,
      } else {
      }
      %9 = arith.index_cast %arg1 : i32 to index
      %c0 = arith.constant 0 : index
      %c0_4 = arith.constant 0 : index
      %10 = vector.load %arg7[%9, %c0, %c0_4] : memref<1x32x128xf32, #tpu.memory_space<vmem>>, vector<1x32x128xf32>
      %11 = vector.shape_cast %10 : vector<1x32x128xf32> to vector<32x128xf32>
      %c0_5 = arith.constant 0 : index
      %c0_6 = arith.constant 0 : index
      %12 = vector.load %arg8[%c0_5, %c0_6] : memref<1x128xf32, #tpu.memory_space<vmem>>, vector<1x128xf32>
      %13 = vector.broadcast %12 : vector<1x128xf32> to vector<32x128xf32>
      %14 = arith.mulf %13, %11 : vector<32x128xf32>
      %c0_7 = arith.constant 0 : index
      %c0_8 = arith.constant 0 : index
      %15 = vector.load %arg9[%c0_7, %c0_8] : memref<1x128xf32, #tpu.memory_space<vmem>>, vector<1x128xf32>
      %16 = vector.broadcast %15 : vector<1x128xf32> to vector<32x128xf32>
      %17 = arith.addf %14, %16 : vector<32x128xf32>
      %cst = arith.constant 0.000000e+00 : f32
      %18 = vector.broadcast %cst : f32 to vector<32x128xf32>
      %19 = arith.cmpf oge, %17, %18 : vector<32x128xf32>
      %cst_9 = arith.constant 2.000000e-01 : f32
      %20 = vector.broadcast %cst_9 : f32 to vector<32x128xf32>
      %21 = arith.mulf %20, %17 : vector<32x128xf32>
      %22 = arith.select %19, %17, %21 : vector<32x128xi1>, vector<32x128xf32>
      %c0_10 = arith.constant 0 : index
      %c0_11 = arith.constant 0 : index
      %23 = vector.load %arg6[%c0_10, %c0_11] : memref<32x128xf32, #tpu.memory_space<vmem>>, vector<32x128xf32>
      tpu.vector_store %arg6[%c0_10, %c0_11], %22 {strides = array<i32>} : memref<32x128xf32, #tpu.memory_space<vmem>>, vector<32x128xf32>,
    } else {
    }
    return
  }
  func.func @transform_0(%arg0: i32, %arg1: i32) -> (i32, i32) {
    %c1_i32 = arith.constant 1 : i32
    %0 = arith.subi %c1_i32, %arg0 : i32
    %1 = arith.muli %arg1, %0 : i32
    %c0_i32 = arith.constant 0 : i32
    %2 = arith.muli %arg0, %c0_i32 : i32
    %3 = arith.addi %1, %2 : i32
    %c0_i32_0 = arith.constant 0 : i32
    %c0_i32_1 = arith.constant 0 : i32
    return %3, %c0_i32_0 : i32, i32
  }
  func.func @transform_1(%arg0: i32, %arg1: i32) -> (i32, i32) {
    %c0_i32 = arith.constant 0 : i32
    %c0_i32_0 = arith.constant 0 : i32
    %c0_i32_1 = arith.constant 0 : i32
    return %c0_i32, %c0_i32_0 : i32, i32
  }
  func.func @transform_2(%arg0: i32, %arg1: i32) -> (i32, i32) {
    %c0_i32 = arith.constant 0 : i32
    %c0_i32_0 = arith.constant 0 : i32
    %c0_i32_1 = arith.constant 0 : i32
    return %c0_i32, %c0_i32_0 : i32, i32
  }
  func.func @transform_3(%arg0: i32, %arg1: i32) -> (i32, i32) {
    %c0_i32 = arith.constant 0 : i32
    %c0_i32_0 = arith.constant 0 : i32
    %c0_i32_1 = arith.constant 0 : i32
    return %c0_i32, %c0_i32_0 : i32, i32
  }
  func.func @transform_4(%arg0: i32, %arg1: i32) -> (i32, i32) {
    %0 = arith.muli %arg1, %arg0 : i32
    %c0_i32 = arith.constant 0 : i32
    %c0_i32_0 = arith.constant 0 : i32
    return %0, %c0_i32 : i32, i32
  }
}

module attributes {stable_mosaic.version = 11 : i64} {
  func.func @_fused_conv_bn_lrelu_kernel(%arg0: i32, %arg1: i32, %arg2: memref<8x1152xf32, #tpu.memory_space<vmem>>, %arg3: memref<1152x256xf32, #tpu.memory_space<vmem>>, %arg4: memref<1x256xf32, #tpu.memory_space<vmem>>, %arg5: memref<1x256xf32, #tpu.memory_space<vmem>>, %arg6: memref<8x256xf32, #tpu.memory_space<vmem>>, %arg7: memref<1x8x256xf32, #tpu.memory_space<vmem>>, %arg8: memref<1x256xf32, #tpu.memory_space<vmem>>, %arg9: memref<1x256xf32, #tpu.memory_space<vmem>>) attributes {dimension_semantics = [#tpu.dimension_semantics<arbitrary>, #tpu.dimension_semantics<arbitrary>], iteration_bounds = array<i64: 2, 1>, scalar_prefetch = 0 : i64, scratch_operands = 3 : i64, tpu.core_type = #tpu.core_type<tc>, window_params = [{transform_indices = @transform_0, window_bounds = array<i64: 8, 1152>}, {pipeline_mode = #tpu.pipeline_mode<synchronous>, transform_indices = @transform_1, window_bounds = array<i64: 1152, 256>}, {pipeline_mode = #tpu.pipeline_mode<synchronous>, transform_indices = @transform_2, window_bounds = array<i64: 1, 256>}, {pipeline_mode = #tpu.pipeline_mode<synchronous>, transform_indices = @transform_3, window_bounds = array<i64: 1, 256>}, {transform_indices = @transform_4, window_bounds = array<i64: 8, 256>}]} {
    %c0_i32 = arith.constant 0 : i32
    %0 = arith.cmpi eq, %arg0, %c0_i32 : i32
    %1 = arith.extui %0 : i1 to i32
    %c0_i32_0 = arith.constant 0 : i32
    %2 = arith.cmpi ne, %1, %c0_i32_0 : i32
    scf.if %2 {
      %c0 = arith.constant 0 : index
      %c0_2 = arith.constant 0 : index
      %6 = vector.load %arg2[%c0, %c0_2] : memref<8x1152xf32, #tpu.memory_space<vmem>>, vector<8x1152xf32>
      %c0_3 = arith.constant 0 : index
      %c0_4 = arith.constant 0 : index
      %7 = vector.load %arg3[%c0_3, %c0_4] : memref<1152x256xf32, #tpu.memory_space<vmem>>, vector<1152x256xf32>
      %cst = arith.constant dense<0.000000e+00> : vector<8x256xf32>
      %8 = tpu.matmul %6, %7, %cst {dimension_numbers = #tpu.dot_dimension_numbers<[1], [0], [0], [1], [0, 0, 1, 1], [], []>} : vector<8x1152xf32>, vector<1152x256xf32>, vector<8x256xf32> -> vector<8x256xf32>
      %9 = arith.index_cast %arg1 : i32 to index
      %c0_5 = arith.constant 0 : index
      %c0_6 = arith.constant 0 : index
      %10 = vector.load %arg7[%9, %c0_5, %c0_6] : memref<1x8x256xf32, #tpu.memory_space<vmem>>, vector<1x8x256xf32>
      %11 = vector.shape_cast %10 : vector<1x8x256xf32> to vector<8x256xf32>
      %12 = vector.shape_cast %8 : vector<8x256xf32> to vector<1x8x256xf32>
      tpu.vector_store %arg7[%9, %c0_5, %c0_6], %12 {strides = array<i32>} : memref<1x8x256xf32, #tpu.memory_space<vmem>>, vector<1x8x256xf32>,
      %c0_i32_7 = arith.constant 0 : i32
      %13 = arith.cmpi eq, %arg1, %c0_i32_7 : i32
      %14 = arith.extui %13 : i1 to i32
      %c0_i32_8 = arith.constant 0 : i32
      %15 = arith.cmpi ne, %14, %c0_i32_8 : i32
      scf.if %15 {
        %cst_19 = arith.constant 0.000000e+00 : f32
        %27 = vector.broadcast %cst_19 : f32 to vector<1x256xf32>
        %c0_20 = arith.constant 0 : index
        %c0_21 = arith.constant 0 : index
        %28 = vector.load %arg8[%c0_20, %c0_21] : memref<1x256xf32, #tpu.memory_space<vmem>>, vector<1x256xf32>
        tpu.vector_store %arg8[%c0_20, %c0_21], %27 {strides = array<i32>} : memref<1x256xf32, #tpu.memory_space<vmem>>, vector<1x256xf32>,
        %cst_22 = arith.constant 0.000000e+00 : f32
        %29 = vector.broadcast %cst_22 : f32 to vector<1x256xf32>
        %c0_23 = arith.constant 0 : index
        %c0_24 = arith.constant 0 : index
        %30 = vector.load %arg9[%c0_23, %c0_24] : memref<1x256xf32, #tpu.memory_space<vmem>>, vector<1x256xf32>
        tpu.vector_store %arg9[%c0_23, %c0_24], %29 {strides = array<i32>} : memref<1x256xf32, #tpu.memory_space<vmem>>, vector<1x256xf32>,
      } else {
      }
      %c0_9 = arith.constant 0 : index
      %c0_10 = arith.constant 0 : index
      %16 = vector.load %arg8[%c0_9, %c0_10] : memref<1x256xf32, #tpu.memory_space<vmem>>, vector<1x256xf32>
      %cst_11 = arith.constant dense<0.000000e+00> : vector<256xf32>
      %17 = vector.multi_reduction <add>, %8, %cst_11 [0] : vector<8x256xf32> to vector<256xf32>
      %18 = vector.shape_cast %17 : vector<256xf32> to vector<1x256xf32>
      %19 = arith.addf %16, %18 : vector<1x256xf32>
      %c0_12 = arith.constant 0 : index
      %c0_13 = arith.constant 0 : index
      %20 = vector.load %arg8[%c0_12, %c0_13] : memref<1x256xf32, #tpu.memory_space<vmem>>, vector<1x256xf32>
      tpu.vector_store %arg8[%c0_12, %c0_13], %19 {strides = array<i32>} : memref<1x256xf32, #tpu.memory_space<vmem>>, vector<1x256xf32>,
      %c0_14 = arith.constant 0 : index
      %c0_15 = arith.constant 0 : index
      %21 = vector.load %arg9[%c0_14, %c0_15] : memref<1x256xf32, #tpu.memory_space<vmem>>, vector<1x256xf32>
      %22 = arith.mulf %8, %8 : vector<8x256xf32>
      %cst_16 = arith.constant dense<0.000000e+00> : vector<256xf32>
      %23 = vector.multi_reduction <add>, %22, %cst_16 [0] : vector<8x256xf32> to vector<256xf32>
      %24 = vector.shape_cast %23 : vector<256xf32> to vector<1x256xf32>
      %25 = arith.addf %21, %24 : vector<1x256xf32>
      %c0_17 = arith.constant 0 : index
      %c0_18 = arith.constant 0 : index
      %26 = vector.load %arg9[%c0_17, %c0_18] : memref<1x256xf32, #tpu.memory_space<vmem>>, vector<1x256xf32>
      tpu.vector_store %arg9[%c0_17, %c0_18], %25 {strides = array<i32>} : memref<1x256xf32, #tpu.memory_space<vmem>>, vector<1x256xf32>,
    } else {
    }
    %c1_i32 = arith.constant 1 : i32
    %3 = arith.cmpi eq, %arg0, %c1_i32 : i32
    %4 = arith.extui %3 : i1 to i32
    %c0_i32_1 = arith.constant 0 : i32
    %5 = arith.cmpi ne, %4, %c0_i32_1 : i32
    scf.if %5 {
      %c0_i32_2 = arith.constant 0 : i32
      %6 = arith.cmpi eq, %arg1, %c0_i32_2 : i32
      %7 = arith.extui %6 : i1 to i32
      %c0_i32_3 = arith.constant 0 : i32
      %8 = arith.cmpi ne, %7, %c0_i32_3 : i32
      scf.if %8 {
        %c0_12 = arith.constant 0 : index
        %c0_13 = arith.constant 0 : index
        %24 = vector.load %arg8[%c0_12, %c0_13] : memref<1x256xf32, #tpu.memory_space<vmem>>, vector<1x256xf32>
        %cst_14 = arith.constant 1.250000e-01 : f32
        %25 = vector.broadcast %cst_14 : f32 to vector<1x256xf32>
        %26 = arith.mulf %24, %25 : vector<1x256xf32>
        %c0_15 = arith.constant 0 : index
        %c0_16 = arith.constant 0 : index
        %27 = vector.load %arg9[%c0_15, %c0_16] : memref<1x256xf32, #tpu.memory_space<vmem>>, vector<1x256xf32>
        %cst_17 = arith.constant 1.250000e-01 : f32
        %28 = vector.broadcast %cst_17 : f32 to vector<1x256xf32>
        %29 = arith.mulf %27, %28 : vector<1x256xf32>
        %30 = arith.mulf %26, %26 : vector<1x256xf32>
        %31 = arith.subf %29, %30 : vector<1x256xf32>
        %cst_18 = arith.constant 0.000000e+00 : f32
        %32 = vector.broadcast %cst_18 : f32 to vector<1x256xf32>
        %33 = arith.maximumf %31, %32 : vector<1x256xf32>
        %c0_19 = arith.constant 0 : index
        %c0_20 = arith.constant 0 : index
        %34 = vector.load %arg4[%c0_19, %c0_20] : memref<1x256xf32, #tpu.memory_space<vmem>>, vector<1x256xf32>
        %cst_21 = arith.constant 9.99999974E-6 : f32
        %35 = vector.broadcast %cst_21 : f32 to vector<1x256xf32>
        %36 = arith.addf %33, %35 : vector<1x256xf32>
        %37 = math.rsqrt %36 : vector<1x256xf32>
        %38 = arith.mulf %34, %37 : vector<1x256xf32>
        %c0_22 = arith.constant 0 : index
        %c0_23 = arith.constant 0 : index
        %39 = vector.load %arg8[%c0_22, %c0_23] : memref<1x256xf32, #tpu.memory_space<vmem>>, vector<1x256xf32>
        tpu.vector_store %arg8[%c0_22, %c0_23], %38 {strides = array<i32>} : memref<1x256xf32, #tpu.memory_space<vmem>>, vector<1x256xf32>,
        %c0_24 = arith.constant 0 : index
        %c0_25 = arith.constant 0 : index
        %40 = vector.load %arg5[%c0_24, %c0_25] : memref<1x256xf32, #tpu.memory_space<vmem>>, vector<1x256xf32>
        %41 = arith.mulf %38, %26 : vector<1x256xf32>
        %42 = arith.subf %40, %41 : vector<1x256xf32>
        %c0_26 = arith.constant 0 : index
        %c0_27 = arith.constant 0 : index
        %43 = vector.load %arg9[%c0_26, %c0_27] : memref<1x256xf32, #tpu.memory_space<vmem>>, vector<1x256xf32>
        tpu.vector_store %arg9[%c0_26, %c0_27], %42 {strides = array<i32>} : memref<1x256xf32, #tpu.memory_space<vmem>>, vector<1x256xf32>,
      } else {
      }
      %9 = arith.index_cast %arg1 : i32 to index
      %c0 = arith.constant 0 : index
      %c0_4 = arith.constant 0 : index
      %10 = vector.load %arg7[%9, %c0, %c0_4] : memref<1x8x256xf32, #tpu.memory_space<vmem>>, vector<1x8x256xf32>
      %11 = vector.shape_cast %10 : vector<1x8x256xf32> to vector<8x256xf32>
      %c0_5 = arith.constant 0 : index
      %c0_6 = arith.constant 0 : index
      %12 = vector.load %arg8[%c0_5, %c0_6] : memref<1x256xf32, #tpu.memory_space<vmem>>, vector<1x256xf32>
      %13 = vector.broadcast %12 : vector<1x256xf32> to vector<8x256xf32>
      %14 = arith.mulf %13, %11 : vector<8x256xf32>
      %c0_7 = arith.constant 0 : index
      %c0_8 = arith.constant 0 : index
      %15 = vector.load %arg9[%c0_7, %c0_8] : memref<1x256xf32, #tpu.memory_space<vmem>>, vector<1x256xf32>
      %16 = vector.broadcast %15 : vector<1x256xf32> to vector<8x256xf32>
      %17 = arith.addf %14, %16 : vector<8x256xf32>
      %cst = arith.constant 0.000000e+00 : f32
      %18 = vector.broadcast %cst : f32 to vector<8x256xf32>
      %19 = arith.cmpf oge, %17, %18 : vector<8x256xf32>
      %cst_9 = arith.constant 2.000000e-01 : f32
      %20 = vector.broadcast %cst_9 : f32 to vector<8x256xf32>
      %21 = arith.mulf %20, %17 : vector<8x256xf32>
      %22 = arith.select %19, %17, %21 : vector<8x256xi1>, vector<8x256xf32>
      %c0_10 = arith.constant 0 : index
      %c0_11 = arith.constant 0 : index
      %23 = vector.load %arg6[%c0_10, %c0_11] : memref<8x256xf32, #tpu.memory_space<vmem>>, vector<8x256xf32>
      tpu.vector_store %arg6[%c0_10, %c0_11], %22 {strides = array<i32>} : memref<8x256xf32, #tpu.memory_space<vmem>>, vector<8x256xf32>,
    } else {
    }
    return
  }
  func.func @transform_0(%arg0: i32, %arg1: i32) -> (i32, i32) {
    %c1_i32 = arith.constant 1 : i32
    %0 = arith.subi %c1_i32, %arg0 : i32
    %1 = arith.muli %arg1, %0 : i32
    %c0_i32 = arith.constant 0 : i32
    %2 = arith.muli %arg0, %c0_i32 : i32
    %3 = arith.addi %1, %2 : i32
    %c0_i32_0 = arith.constant 0 : i32
    %c0_i32_1 = arith.constant 0 : i32
    return %3, %c0_i32_0 : i32, i32
  }
  func.func @transform_1(%arg0: i32, %arg1: i32) -> (i32, i32) {
    %c0_i32 = arith.constant 0 : i32
    %c0_i32_0 = arith.constant 0 : i32
    %c0_i32_1 = arith.constant 0 : i32
    return %c0_i32, %c0_i32_0 : i32, i32
  }
  func.func @transform_2(%arg0: i32, %arg1: i32) -> (i32, i32) {
    %c0_i32 = arith.constant 0 : i32
    %c0_i32_0 = arith.constant 0 : i32
    %c0_i32_1 = arith.constant 0 : i32
    return %c0_i32, %c0_i32_0 : i32, i32
  }
  func.func @transform_3(%arg0: i32, %arg1: i32) -> (i32, i32) {
    %c0_i32 = arith.constant 0 : i32
    %c0_i32_0 = arith.constant 0 : i32
    %c0_i32_1 = arith.constant 0 : i32
    return %c0_i32, %c0_i32_0 : i32, i32
  }
  func.func @transform_4(%arg0: i32, %arg1: i32) -> (i32, i32) {
    %0 = arith.muli %arg1, %arg0 : i32
    %c0_i32 = arith.constant 0 : i32
    %c0_i32_0 = arith.constant 0 : i32
    return %0, %c0_i32 : i32, i32
  }
}

module attributes {stable_mosaic.version = 11 : i64} {
  func.func @_fused_conv_bn_lrelu_kernel(%arg0: i32, %arg1: i32, %arg2: memref<2x2304xf32, #tpu.memory_space<vmem>>, %arg3: memref<2304x512xf32, #tpu.memory_space<vmem>>, %arg4: memref<1x512xf32, #tpu.memory_space<vmem>>, %arg5: memref<1x512xf32, #tpu.memory_space<vmem>>, %arg6: memref<2x512xf32, #tpu.memory_space<vmem>>, %arg7: memref<1x2x512xf32, #tpu.memory_space<vmem>>, %arg8: memref<1x512xf32, #tpu.memory_space<vmem>>, %arg9: memref<1x512xf32, #tpu.memory_space<vmem>>) attributes {dimension_semantics = [#tpu.dimension_semantics<arbitrary>, #tpu.dimension_semantics<arbitrary>], iteration_bounds = array<i64: 2, 1>, scalar_prefetch = 0 : i64, scratch_operands = 3 : i64, tpu.core_type = #tpu.core_type<tc>, window_params = [{transform_indices = @transform_0, window_bounds = array<i64: 2, 2304>}, {pipeline_mode = #tpu.pipeline_mode<synchronous>, transform_indices = @transform_1, window_bounds = array<i64: 2304, 512>}, {pipeline_mode = #tpu.pipeline_mode<synchronous>, transform_indices = @transform_2, window_bounds = array<i64: 1, 512>}, {pipeline_mode = #tpu.pipeline_mode<synchronous>, transform_indices = @transform_3, window_bounds = array<i64: 1, 512>}, {transform_indices = @transform_4, window_bounds = array<i64: 2, 512>}]} {
    %c0_i32 = arith.constant 0 : i32
    %0 = arith.cmpi eq, %arg0, %c0_i32 : i32
    %1 = arith.extui %0 : i1 to i32
    %c0_i32_0 = arith.constant 0 : i32
    %2 = arith.cmpi ne, %1, %c0_i32_0 : i32
    scf.if %2 {
      %c0 = arith.constant 0 : index
      %c0_2 = arith.constant 0 : index
      %6 = vector.load %arg2[%c0, %c0_2] : memref<2x2304xf32, #tpu.memory_space<vmem>>, vector<2x2304xf32>
      %c0_3 = arith.constant 0 : index
      %c0_4 = arith.constant 0 : index
      %7 = vector.load %arg3[%c0_3, %c0_4] : memref<2304x512xf32, #tpu.memory_space<vmem>>, vector<2304x512xf32>
      %cst = arith.constant dense<0.000000e+00> : vector<2x512xf32>
      %8 = tpu.matmul %6, %7, %cst {dimension_numbers = #tpu.dot_dimension_numbers<[1], [0], [0], [1], [0, 0, 1, 1], [], []>} : vector<2x2304xf32>, vector<2304x512xf32>, vector<2x512xf32> -> vector<2x512xf32>
      %9 = arith.index_cast %arg1 : i32 to index
      %c0_5 = arith.constant 0 : index
      %c0_6 = arith.constant 0 : index
      %10 = vector.load %arg7[%9, %c0_5, %c0_6] : memref<1x2x512xf32, #tpu.memory_space<vmem>>, vector<1x2x512xf32>
      %11 = vector.shape_cast %10 : vector<1x2x512xf32> to vector<2x512xf32>
      %12 = vector.shape_cast %8 : vector<2x512xf32> to vector<1x2x512xf32>
      tpu.vector_store %arg7[%9, %c0_5, %c0_6], %12 {strides = array<i32>} : memref<1x2x512xf32, #tpu.memory_space<vmem>>, vector<1x2x512xf32>,
      %c0_i32_7 = arith.constant 0 : i32
      %13 = arith.cmpi eq, %arg1, %c0_i32_7 : i32
      %14 = arith.extui %13 : i1 to i32
      %c0_i32_8 = arith.constant 0 : i32
      %15 = arith.cmpi ne, %14, %c0_i32_8 : i32
      scf.if %15 {
        %cst_19 = arith.constant 0.000000e+00 : f32
        %27 = vector.broadcast %cst_19 : f32 to vector<1x512xf32>
        %c0_20 = arith.constant 0 : index
        %c0_21 = arith.constant 0 : index
        %28 = vector.load %arg8[%c0_20, %c0_21] : memref<1x512xf32, #tpu.memory_space<vmem>>, vector<1x512xf32>
        tpu.vector_store %arg8[%c0_20, %c0_21], %27 {strides = array<i32>} : memref<1x512xf32, #tpu.memory_space<vmem>>, vector<1x512xf32>,
        %cst_22 = arith.constant 0.000000e+00 : f32
        %29 = vector.broadcast %cst_22 : f32 to vector<1x512xf32>
        %c0_23 = arith.constant 0 : index
        %c0_24 = arith.constant 0 : index
        %30 = vector.load %arg9[%c0_23, %c0_24] : memref<1x512xf32, #tpu.memory_space<vmem>>, vector<1x512xf32>
        tpu.vector_store %arg9[%c0_23, %c0_24], %29 {strides = array<i32>} : memref<1x512xf32, #tpu.memory_space<vmem>>, vector<1x512xf32>,
      } else {
      }
      %c0_9 = arith.constant 0 : index
      %c0_10 = arith.constant 0 : index
      %16 = vector.load %arg8[%c0_9, %c0_10] : memref<1x512xf32, #tpu.memory_space<vmem>>, vector<1x512xf32>
      %cst_11 = arith.constant dense<0.000000e+00> : vector<512xf32>
      %17 = vector.multi_reduction <add>, %8, %cst_11 [0] : vector<2x512xf32> to vector<512xf32>
      %18 = vector.shape_cast %17 : vector<512xf32> to vector<1x512xf32>
      %19 = arith.addf %16, %18 : vector<1x512xf32>
      %c0_12 = arith.constant 0 : index
      %c0_13 = arith.constant 0 : index
      %20 = vector.load %arg8[%c0_12, %c0_13] : memref<1x512xf32, #tpu.memory_space<vmem>>, vector<1x512xf32>
      tpu.vector_store %arg8[%c0_12, %c0_13], %19 {strides = array<i32>} : memref<1x512xf32, #tpu.memory_space<vmem>>, vector<1x512xf32>,
      %c0_14 = arith.constant 0 : index
      %c0_15 = arith.constant 0 : index
      %21 = vector.load %arg9[%c0_14, %c0_15] : memref<1x512xf32, #tpu.memory_space<vmem>>, vector<1x512xf32>
      %22 = arith.mulf %8, %8 : vector<2x512xf32>
      %cst_16 = arith.constant dense<0.000000e+00> : vector<512xf32>
      %23 = vector.multi_reduction <add>, %22, %cst_16 [0] : vector<2x512xf32> to vector<512xf32>
      %24 = vector.shape_cast %23 : vector<512xf32> to vector<1x512xf32>
      %25 = arith.addf %21, %24 : vector<1x512xf32>
      %c0_17 = arith.constant 0 : index
      %c0_18 = arith.constant 0 : index
      %26 = vector.load %arg9[%c0_17, %c0_18] : memref<1x512xf32, #tpu.memory_space<vmem>>, vector<1x512xf32>
      tpu.vector_store %arg9[%c0_17, %c0_18], %25 {strides = array<i32>} : memref<1x512xf32, #tpu.memory_space<vmem>>, vector<1x512xf32>,
    } else {
    }
    %c1_i32 = arith.constant 1 : i32
    %3 = arith.cmpi eq, %arg0, %c1_i32 : i32
    %4 = arith.extui %3 : i1 to i32
    %c0_i32_1 = arith.constant 0 : i32
    %5 = arith.cmpi ne, %4, %c0_i32_1 : i32
    scf.if %5 {
      %c0_i32_2 = arith.constant 0 : i32
      %6 = arith.cmpi eq, %arg1, %c0_i32_2 : i32
      %7 = arith.extui %6 : i1 to i32
      %c0_i32_3 = arith.constant 0 : i32
      %8 = arith.cmpi ne, %7, %c0_i32_3 : i32
      scf.if %8 {
        %c0_12 = arith.constant 0 : index
        %c0_13 = arith.constant 0 : index
        %24 = vector.load %arg8[%c0_12, %c0_13] : memref<1x512xf32, #tpu.memory_space<vmem>>, vector<1x512xf32>
        %cst_14 = arith.constant 5.000000e-01 : f32
        %25 = vector.broadcast %cst_14 : f32 to vector<1x512xf32>
        %26 = arith.mulf %24, %25 : vector<1x512xf32>
        %c0_15 = arith.constant 0 : index
        %c0_16 = arith.constant 0 : index
        %27 = vector.load %arg9[%c0_15, %c0_16] : memref<1x512xf32, #tpu.memory_space<vmem>>, vector<1x512xf32>
        %cst_17 = arith.constant 5.000000e-01 : f32
        %28 = vector.broadcast %cst_17 : f32 to vector<1x512xf32>
        %29 = arith.mulf %27, %28 : vector<1x512xf32>
        %30 = arith.mulf %26, %26 : vector<1x512xf32>
        %31 = arith.subf %29, %30 : vector<1x512xf32>
        %cst_18 = arith.constant 0.000000e+00 : f32
        %32 = vector.broadcast %cst_18 : f32 to vector<1x512xf32>
        %33 = arith.maximumf %31, %32 : vector<1x512xf32>
        %c0_19 = arith.constant 0 : index
        %c0_20 = arith.constant 0 : index
        %34 = vector.load %arg4[%c0_19, %c0_20] : memref<1x512xf32, #tpu.memory_space<vmem>>, vector<1x512xf32>
        %cst_21 = arith.constant 9.99999974E-6 : f32
        %35 = vector.broadcast %cst_21 : f32 to vector<1x512xf32>
        %36 = arith.addf %33, %35 : vector<1x512xf32>
        %37 = math.rsqrt %36 : vector<1x512xf32>
        %38 = arith.mulf %34, %37 : vector<1x512xf32>
        %c0_22 = arith.constant 0 : index
        %c0_23 = arith.constant 0 : index
        %39 = vector.load %arg8[%c0_22, %c0_23] : memref<1x512xf32, #tpu.memory_space<vmem>>, vector<1x512xf32>
        tpu.vector_store %arg8[%c0_22, %c0_23], %38 {strides = array<i32>} : memref<1x512xf32, #tpu.memory_space<vmem>>, vector<1x512xf32>,
        %c0_24 = arith.constant 0 : index
        %c0_25 = arith.constant 0 : index
        %40 = vector.load %arg5[%c0_24, %c0_25] : memref<1x512xf32, #tpu.memory_space<vmem>>, vector<1x512xf32>
        %41 = arith.mulf %38, %26 : vector<1x512xf32>
        %42 = arith.subf %40, %41 : vector<1x512xf32>
        %c0_26 = arith.constant 0 : index
        %c0_27 = arith.constant 0 : index
        %43 = vector.load %arg9[%c0_26, %c0_27] : memref<1x512xf32, #tpu.memory_space<vmem>>, vector<1x512xf32>
        tpu.vector_store %arg9[%c0_26, %c0_27], %42 {strides = array<i32>} : memref<1x512xf32, #tpu.memory_space<vmem>>, vector<1x512xf32>,
      } else {
      }
      %9 = arith.index_cast %arg1 : i32 to index
      %c0 = arith.constant 0 : index
      %c0_4 = arith.constant 0 : index
      %10 = vector.load %arg7[%9, %c0, %c0_4] : memref<1x2x512xf32, #tpu.memory_space<vmem>>, vector<1x2x512xf32>
      %11 = vector.shape_cast %10 : vector<1x2x512xf32> to vector<2x512xf32>
      %c0_5 = arith.constant 0 : index
      %c0_6 = arith.constant 0 : index
      %12 = vector.load %arg8[%c0_5, %c0_6] : memref<1x512xf32, #tpu.memory_space<vmem>>, vector<1x512xf32>
      %13 = vector.broadcast %12 : vector<1x512xf32> to vector<2x512xf32>
      %14 = arith.mulf %13, %11 : vector<2x512xf32>
      %c0_7 = arith.constant 0 : index
      %c0_8 = arith.constant 0 : index
      %15 = vector.load %arg9[%c0_7, %c0_8] : memref<1x512xf32, #tpu.memory_space<vmem>>, vector<1x512xf32>
      %16 = vector.broadcast %15 : vector<1x512xf32> to vector<2x512xf32>
      %17 = arith.addf %14, %16 : vector<2x512xf32>
      %cst = arith.constant 0.000000e+00 : f32
      %18 = vector.broadcast %cst : f32 to vector<2x512xf32>
      %19 = arith.cmpf oge, %17, %18 : vector<2x512xf32>
      %cst_9 = arith.constant 2.000000e-01 : f32
      %20 = vector.broadcast %cst_9 : f32 to vector<2x512xf32>
      %21 = arith.mulf %20, %17 : vector<2x512xf32>
      %22 = arith.select %19, %17, %21 : vector<2x512xi1>, vector<2x512xf32>
      %c0_10 = arith.constant 0 : index
      %c0_11 = arith.constant 0 : index
      %23 = vector.load %arg6[%c0_10, %c0_11] : memref<2x512xf32, #tpu.memory_space<vmem>>, vector<2x512xf32>
      tpu.vector_store %arg6[%c0_10, %c0_11], %22 {strides = array<i32>} : memref<2x512xf32, #tpu.memory_space<vmem>>, vector<2x512xf32>,
    } else {
    }
    return
  }
  func.func @transform_0(%arg0: i32, %arg1: i32) -> (i32, i32) {
    %c1_i32 = arith.constant 1 : i32
    %0 = arith.subi %c1_i32, %arg0 : i32
    %1 = arith.muli %arg1, %0 : i32
    %c0_i32 = arith.constant 0 : i32
    %2 = arith.muli %arg0, %c0_i32 : i32
    %3 = arith.addi %1, %2 : i32
    %c0_i32_0 = arith.constant 0 : i32
    %c0_i32_1 = arith.constant 0 : i32
    return %3, %c0_i32_0 : i32, i32
  }
  func.func @transform_1(%arg0: i32, %arg1: i32) -> (i32, i32) {
    %c0_i32 = arith.constant 0 : i32
    %c0_i32_0 = arith.constant 0 : i32
    %c0_i32_1 = arith.constant 0 : i32
    return %c0_i32, %c0_i32_0 : i32, i32
  }
  func.func @transform_2(%arg0: i32, %arg1: i32) -> (i32, i32) {
    %c0_i32 = arith.constant 0 : i32
    %c0_i32_0 = arith.constant 0 : i32
    %c0_i32_1 = arith.constant 0 : i32
    return %c0_i32, %c0_i32_0 : i32, i32
  }
  func.func @transform_3(%arg0: i32, %arg1: i32) -> (i32, i32) {
    %c0_i32 = arith.constant 0 : i32
    %c0_i32_0 = arith.constant 0 : i32
    %c0_i32_1 = arith.constant 0 : i32
    return %c0_i32, %c0_i32_0 : i32, i32
  }
  func.func @transform_4(%arg0: i32, %arg1: i32) -> (i32, i32) {
    %0 = arith.muli %arg1, %arg0 : i32
    %c0_i32 = arith.constant 0 : i32
    %c0_i32_0 = arith.constant 0 : i32
    return %0, %c0_i32 : i32, i32
  }
}

</mosaic_0001>

<llo_original>
// kernel: discriminator_forward.4
$region0: #{discriminator_forward.4}
  #allocation0 [shape = 'u32[]', space=smem, size = 0x4, offset = 0x4, fixed_abs, tag = 'smem constant byte address 0x4 - core index']
  #allocation1 [shape = 'u32[144,128]{1,0:T(1,128)}', space=vmem, size = 0x12000, scoped, tag = 'internal scratch']
  #allocation2 [shape = 'f32[1,128,128]{2,1,0:T(8,128)}', space=vmem, size = 0x10000, scoped, tag = 'scratch operand']
  #allocation3 [shape = 'f32[1,128]{1,0:T(1,128)}', space=vmem, size = 0x200, scoped, tag = 'scratch operand']
  #allocation4 [shape = 'f32[1,128]{1,0:T(1,128)}', space=vmem, size = 0x200, scoped, tag = 'scratch operand']
  %s0 = inlined_call_operand.vmem [shape: f32[128,128], index: 0, kind: input, shape index: {}]
  %s1 = inlined_call_operand.vmem [shape: f32[128,128], index: 1, kind: input, shape index: {}]
  %s2 = inlined_call_operand.vmem [shape: f32[1,128], index: 2, kind: input, shape index: {}]
  %s3 = inlined_call_operand.vmem [shape: f32[1,128], index: 3, kind: input, shape index: {}]
  %s4 = inlined_call_operand.vmem [shape: f32[128,128], index: 4, kind: output, shape index: {}]
  %s5 = sld [smem:[#allocation0]]
  $region65: #{discriminator_forward.4} parent=0
    _
  %s7 = ssub.s32 1, %s5
  %s8 = scalar_select 0, %s7, %s5
  loop: start=0, step=1, limit=4
  $region2: #{discriminator_forward.4} parent=0 // loop_pre_header
    _
  $region3: #{discriminator_forward.4} parent=0 // loop_header
    %s10 = sphi 0, %s14
    %p11 = scmp.ge.s32.totalorder %s10, 4
    %s17 = sphi 0, %s29
    %s18 = sphi 0, %s25
    %s19 = sphi 0, %s17
    %s20 = sphi 0, %s18
    %s21 = sphi 0, %s19
    %s22 = sphi 0, %s20
    %s36 = sphi 0, %s38
    %s39 = sphi 0, %s36
    %s40 = sphi 0, %s39
    %s56 = sphi 0, %s40
    %s60 = sphi 0, %s60
    %s62 = sphi 0, %s60
    %s63 = sphi 0, %s62
    %s77 = sphi 0, %s63
    %s81 = sphi 0, %s81
    %s83 = sphi 0, %s81
    %s84 = sphi 0, %s83
    %s98 = sphi 0, %s84
    %s102 = sphi 0, %s102
    %s104 = sphi 0, %s102
    %s105 = sphi 0, %s104
    %s119 = sphi 0, %s105
    %s127 = sphi 0, %s129
    %s130 = sphi 0, %s127
    %s131 = sphi 0, %s130
    %s147 = sphi 0, %s131
  $region4: #{discriminator_forward.4} parent=0 // loop_header_branch
    %13 = sbr.rel (%p11) target = $region8
  $region5: #{discriminator_forward.4} parent=0 // loop_body
    %s15 = ssub.s32 %s10, 1
    %s16 = ssub.s32 %s10, 2
    %s23 = sadd.s32 1, %s18
    %p24 = scmp.ge.s32.totalorder %s23, 1
    %s25 = scalar_select %p24, 0, %s23
    %s26 = sadd.s32 1, %s17
    %s27 = scalar_select %p24, %s26, %s17
    %p28 = scmp.ge.s32.totalorder %s27, 2
    %s29 = scalar_select %p28, 0, %s27
    %s30 = ssub.s32 1, %s17
    %s31 = smul.u32 %s18, %s30
    %s32 = ssub.s32 1, %s29
    %s33 = smul.u32 %s25, %s32
    %s34 = ssub.s32 %s31, %s33
    %p35 = scmp.eq.s32.totalorder %s34, 0
    %s37 = sadd.s32 %s36, 1
    %s38 = scalar_select %p35, %s36, %s37
    %p41 = pneg %p35
    %p42 = scmp.eq.s32.totalorder %s10, 1
    %p43 = por %p41, %p42
    %p44 = scmp.ne.s32.totalorder %s36, %s39
    %p45 = scmp.eq.s32.totalorder %s10, 0
    %p46 = por %p44, %p45
    %p47 = scmp.ne.s32.totalorder %s36, %s39
    %p48 = scmp.eq.s32.totalorder %s15, 1
    %p49 = por %p47, %p48
    %p50 = scmp.ne.s32.totalorder %s39, %s40
    %p51 = scmp.eq.s32.totalorder %s15, 0
    %p52 = por %p50, %p51
    %p53 = scmp.ne.s32.totalorder %s39, %s40
    %p54 = scmp.eq.s32.totalorder %s16, 1
    %p55 = por %p53, %p54
    %p57 = scmp.ne.s32.totalorder %s40, %s56
    %p58 = scmp.eq.s32.totalorder %s16, 0
    %p59 = por %p57, %p58
    %s61 = sadd.s32 %s60, 1
    %p64 = scmp.eq.s32.totalorder %s10, 1
    %p65 = scmp.ne.s32.totalorder %s60, %s62
    %p66 = scmp.eq.s32.totalorder %s10, 0
    %p67 = por %p65, %p66
    %p68 = scmp.ne.s32.totalorder %s60, %s62
    %p69 = scmp.eq.s32.totalorder %s15, 1
    %p70 = por %p68, %p69
    %p71 = scmp.ne.s32.totalorder %s62, %s63
    %p72 = scmp.eq.s32.totalorder %s15, 0
    %p73 = por %p71, %p72
    %p74 = scmp.ne.s32.totalorder %s62, %s63
    %p75 = scmp.eq.s32.totalorder %s16, 1
    %p76 = por %p74, %p75
    %p78 = scmp.ne.s32.totalorder %s63, %s77
    %p79 = scmp.eq.s32.totalorder %s16, 0
    %p80 = por %p78, %p79
    %s82 = sadd.s32 %s81, 1
    %p85 = scmp.eq.s32.totalorder %s10, 1
    %p86 = scmp.ne.s32.totalorder %s81, %s83
    %p87 = scmp.eq.s32.totalorder %s10, 0
    %p88 = por %p86, %p87
    %p89 = scmp.ne.s32.totalorder %s81, %s83
    %p90 = scmp.eq.s32.totalorder %s15, 1
    %p91 = por %p89, %p90
    %p92 = scmp.ne.s32.totalorder %s83, %s84
    %p93 = scmp.eq.s32.totalorder %s15, 0
    %p94 = por %p92, %p93
    %p95 = scmp.ne.s32.totalorder %s83, %s84
    %p96 = scmp.eq.s32.totalorder %s16, 1
    %p97 = por %p95, %p96
    %p99 = scmp.ne.s32.totalorder %s84, %s98
    %p100 = scmp.eq.s32.totalorder %s16, 0
    %p101 = por %p99, %p100
    %s103 = sadd.s32 %s102, 1
    %p106 = scmp.eq.s32.totalorder %s10, 1
    %p107 = scmp.ne.s32.totalorder %s102, %s104
    %p108 = scmp.eq.s32.totalorder %s10, 0
    %p109 = por %p107, %p108
    %p110 = scmp.ne.s32.totalorder %s102, %s104
    %p111 = scmp.eq.s32.totalorder %s15, 1
    %p112 = por %p110, %p111
    %p113 = scmp.ne.s32.totalorder %s104, %s105
    %p114 = scmp.eq.s32.totalorder %s15, 0
    %p115 = por %p113, %p114
    %p116 = scmp.ne.s32.totalorder %s104, %s105
    %p117 = scmp.eq.s32.totalorder %s16, 1
    %p118 = por %p116, %p117
    %p120 = scmp.ne.s32.totalorder %s105, %s119
    %p121 = scmp.eq.s32.totalorder %s16, 0
    %p122 = por %p120, %p121
    %s123 = smul.u32 %s18, %s17
    %s124 = smul.u32 %s25, %s29
    %s125 = ssub.s32 %s123, %s124
    %p126 = scmp.eq.s32.totalorder %s125, 0
    %s128 = sadd.s32 %s127, 1
    %s129 = scalar_select %p126, %s127, %s128
    %p132 = pneg %p126
    %p133 = scmp.eq.s32.totalorder %s10, 1
    %p134 = por %p132, %p133
    %p135 = scmp.ne.s32.totalorder %s127, %s130
    %p136 = scmp.eq.s32.totalorder %s10, 0
    %p137 = por %p135, %p136
    %p138 = scmp.ne.s32.totalorder %s127, %s130
    %p139 = scmp.eq.s32.totalorder %s15, 1
    %p140 = por %p138, %p139
    %p141 = scmp.ne.s32.totalorder %s130, %s131
    %p142 = scmp.eq.s32.totalorder %s15, 0
    %p143 = por %p141, %p142
    %p144 = scmp.ne.s32.totalorder %s130, %s131
    %p145 = scmp.eq.s32.totalorder %s16, 1
    %p146 = por %p144, %p145
    %p148 = scmp.ne.s32.totalorder %s131, %s147
    %p149 = scmp.eq.s32.totalorder %s16, 0
    %p150 = por %p148, %p149
    %p151 = scmp.le.s32.totalorder 1, %s10
    %p152 = scmp.lt.s32.totalorder %s10, 3
    %p153 = pnand %p151, %p152
    %p154 = pneg %p153
    // Predicated region
    $region9: #{discriminator_forward.4} parent=5 // pred_check
      _
    $region10: #{discriminator_forward.4} parent=5 // pred_check_branch
      %156 = sbr.rel (%p153) target = $region12
    $region11: #{discriminator_forward.4} parent=5 // pred_region
      %s157 = ssub.s32 %s10, 1
      // Predicated region
      $region13: #{discriminator_forward.4} parent=11 // pred_check
        %p158 = pneg %p73
      $region14: #{discriminator_forward.4} parent=11 // pred_check_branch
        %160 = sbr.rel (%p158) target = $region16
      $region15: #{discriminator_forward.4} parent=11 // pred_region
        _
      $region16: #{discriminator_forward.4} parent=11 // pred_fallthru
        _
      // Predicated region
      $region17: #{discriminator_forward.4} parent=11 // pred_check
        %p161 = pneg %p94
      $region18: #{discriminator_forward.4} parent=11 // pred_check_branch
        %163 = sbr.rel (%p161) target = $region20
      $region19: #{discriminator_forward.4} parent=11 // pred_region
        _
      $region20: #{discriminator_forward.4} parent=11 // pred_fallthru
        _
      // Predicated region
      $region21: #{discriminator_forward.4} parent=11 // pred_check
        %p164 = pneg %p115
      $region22: #{discriminator_forward.4} parent=11 // pred_check_branch
        %166 = sbr.rel (%p164) target = $region24
      $region23: #{discriminator_forward.4} parent=11 // pred_region
        _
      $region24: #{discriminator_forward.4} parent=11 // pred_fallthru
        _
    $region12: #{discriminator_forward.4} parent=5 // pred_fallthru
      _
    %p167 = scmp.lt.s32.totalorder %s10, 2
    // Predicated region
    $region25: #{discriminator_forward.4} parent=5 // pred_check
      %p168 = pneg %p167
    $region26: #{discriminator_forward.4} parent=5 // pred_check_branch
      %170 = sbr.rel (%p168) target = $region28
    $region27: #{discriminator_forward.4} parent=5 // pred_region
      // Predicated region
      $region29: #{discriminator_forward.4} parent=27 // pred_check
        %p171 = pneg %p46
      $region30: #{discriminator_forward.4} parent=27 // pred_check_branch
        %173 = sbr.rel (%p171) target = $region32
      $region31: #{discriminator_forward.4} parent=27 // pred_region
        %s174 = ssub.s32 1, %s17
        %s175 = smul.u32 %s18, %s174
        %s176 = smul.u32 16, %s175
        %p177 = scmp.lt.s32.totalorder %s176, 15
        %s178 = scalar_select %p177, %s176, 15
        %s179 = smul.addr %s178, 8
        %s180 = scalar_lea.vmem %s0, %s179
        %s181 = ssub.s32 1, %s17
        %s182 = smul.u32 %s18, %s181
        %s183 = smul.u32 16, %s182
      $region32: #{discriminator_forward.4} parent=27 // pred_fallthru
        _
    $region28: #{discriminator_forward.4} parent=5 // pred_fallthru
      _
    %p184 = scmp.le.s32.totalorder 1, %s10
    %p185 = scmp.lt.s32.totalorder %s10, 3
    %p186 = pnand %p184, %p185
    %p187 = pneg %p186
    // Predicated region
    $region33: #{discriminator_forward.4} parent=5 // pred_check
      _
    $region34: #{discriminator_forward.4} parent=5 // pred_check_branch
      %189 = sbr.rel (%p186) target = $region36
    $region35: #{discriminator_forward.4} parent=5 // pred_region
      %s190 = ssub.s32 %s10, 1
      %s191 = ssub.s32 1, %s19
      %s192 = smul.u32 %s20, %s191
      %s193 = smul.u32 16, %s192
      %p194 = scmp.lt.s32.totalorder %s193, 15
      %s195 = scalar_select %p194, %s193, 15
      %s196 = smul.addr %s195, 8
      %s197 = scalar_lea.vmem %s0, %s196
      %p198 = pneg %p52
      %p199 = pneg %p49
      %p200 = pneg %p73
      %p201 = pneg %p70
      %p202 = pneg %p94
      %p203 = pneg %p91
      %p204 = pneg %p115
      %p205 = pneg %p112
      %p206 = pneg %p143
      %p207 = pneg %p140
      %s208 = smul.u32 %s20, %s19
      %s209 = smul.u32 16, %s208
      %p210 = scmp.lt.s32.totalorder %s209, 15
      %s211 = scalar_select %p210, %s209, 15
      %s212 = smul.addr %s211, 8
      %s213 = scalar_lea.vmem %s4, %s212
      %s214 = ssub.s32 1, %s19
      %s215 = smul.u32 %s20, %s214
      %s216 = smul.u32 16, %s215
      %p217 = scmp.lt.s32.totalorder %s216, 15
      %s218 = scalar_select %p217, %s216, 15
      %s219 = smul.addr %s218, 8
      %s220 = scalar_lea.vmem %s0, %s219
      %s221 = ssub.s32 1, %s19
      %s222 = smul.u32 %s20, %s221
      %s223 = smul.u32 16, %s222
      %s224 = smul.u32 %s20, %s19
      %s225 = smul.u32 16, %s224
      %p226 = scmp.lt.s32.totalorder %s225, 15
      %s227 = scalar_select %p226, %s225, 15
      %s228 = smul.addr %s227, 8
      %s229 = scalar_lea.vmem %s4, %s228
      %s230 = smul.u32 %s20, %s19
      %s231 = smul.u32 16, %s230
      %p232 = scmp.eq.s32.totalorder %s19, 0
      // Predicated region
      $region37: #{discriminator_forward.4} parent=35 // pred_check
        %p233 = pneg %p232
      $region38: #{discriminator_forward.4} parent=35 // pred_check_branch
        %235 = sbr.rel (%p233) target = $region40
      $region39: #{discriminator_forward.4} parent=35 // pred_region
        %v236 = vld [vmem:[%s220] sm:$0xff]
        %v237 = vld [vmem:[%s220 + $0x8] sm:$0xff]
        %v238 = vld [vmem:[%s220 + $0x10] sm:$0xff]
        %v239 = vld [vmem:[%s220 + $0x18] sm:$0xff]
        %v240 = vld [vmem:[%s220 + $0x20] sm:$0xff]
        %v241 = vld [vmem:[%s220 + $0x28] sm:$0xff]
        %v242 = vld [vmem:[%s220 + $0x30] sm:$0xff]
        %v243 = vld [vmem:[%s220 + $0x38] sm:$0xff]
        %v244 = vld [vmem:[%s220 + $0x40] sm:$0xff]
        %v245 = vld [vmem:[%s220 + $0x48] sm:$0xff]
        %v246 = vld [vmem:[%s220 + $0x50] sm:$0xff]
        %v247 = vld [vmem:[%s220 + $0x58] sm:$0xff]
        %v248 = vld [vmem:[%s220 + $0x60] sm:$0xff]
        %v249 = vld [vmem:[%s220 + $0x68] sm:$0xff]
        %v250 = vld [vmem:[%s220 + $0x70] sm:$0xff]
        %v251 = vld [vmem:[%s220 + $0x78] sm:$0xff]
        %v252 = vld [vmem:[%s1] sm:$0xff]
        %v253 = vld [vmem:[%s1 + $0x8] sm:$0xff]
        %v254 = vld [vmem:[%s1 + $0x10] sm:$0xff]
        %v255 = vld [vmem:[%s1 + $0x18] sm:$0xff]
        %v256 = vld [vmem:[%s1 + $0x20] sm:$0xff]
        %v257 = vld [vmem:[%s1 + $0x28] sm:$0xff]
        %v258 = vld [vmem:[%s1 + $0x30] sm:$0xff]
        %v259 = vld [vmem:[%s1 + $0x38] sm:$0xff]
        %v260 = vld [vmem:[%s1 + $0x40] sm:$0xff]
        %v261 = vld [vmem:[%s1 + $0x48] sm:$0xff]
        %v262 = vld [vmem:[%s1 + $0x50] sm:$0xff]
        %v263 = vld [vmem:[%s1 + $0x58] sm:$0xff]
        %v264 = vld [vmem:[%s1 + $0x60] sm:$0xff]
        %v265 = vld [vmem:[%s1 + $0x68] sm:$0xff]
        %v266 = vld [vmem:[%s1 + $0x70] sm:$0xff]
        %v267 = vld [vmem:[%s1 + $0x78] sm:$0xff]
        %268 = vmatprep.subr.mxu0 0.0
        %269 = vmatpush1.msra.mxu0 %v252
        %270 = vmatprep.subr.mxu0 0.0
        %271 = vmatpush1.msra.mxu0 %v253
        %272 = vmatprep.subr.mxu0 0.0
        %273 = vmatpush1.msra.mxu0 %v254
        %274 = vmatprep.subr.mxu0 0.0
        %275 = vmatpush1.msra.mxu0 %v255
        %276 = vmatprep.subr.mxu0 0.0
        %277 = vmatpush1.msra.mxu0 %v256
        %278 = vmatprep.subr.mxu0 0.0
        %279 = vmatpush1.msra.mxu0 %v257
        %280 = vmatprep.subr.mxu0 0.0
        %281 = vmatpush1.msra.mxu0 %v258
        %282 = vmatprep.subr.mxu0 0.0
        %283 = vmatpush1.msra.mxu0 %v259
        %284 = vmatprep.subr.mxu0 0.0
        %285 = vmatpush1.msra.mxu0 %v260
        %286 = vmatprep.subr.mxu0 0.0
        %287 = vmatpush1.msra.mxu0 %v261
        %288 = vmatprep.subr.mxu0 0.0
        %289 = vmatpush1.msra.mxu0 %v262
        %290 = vmatprep.subr.mxu0 0.0
        %291 = vmatpush1.msra.mxu0 %v263
        %292 = vmatprep.subr.mxu0 0.0
        %293 = vmatpush1.msra.mxu0 %v264
        %294 = vmatprep.subr.mxu0 0.0
        %295 = vmatpush1.msra.mxu0 %v265
        %296 = vmatprep.subr.mxu0 0.0
        %297 = vmatpush1.msra.mxu0 %v266
        %298 = vmatprep.subr.mxu0 0.0
        %299 = vmatpush1.msra.mxu0 %v267
        %300 = vmatprep.subr.mxu0 0.0
        %301 = vmatpush1.msra.mxu0 0.0
        %302 = vmatprep.subr.mxu0 0.0
        %303 = vmatpush1.msra.mxu0 0.0
        %304 = vmatprep.subr.mxu0 0.0
        %305 = vmatpush1.msra.mxu0 0.0
        %306 = vmatprep.subr.mxu0 0.0
        %307 = vmatpush1.msra.mxu0 0.0
        %308 = vmatprep.subr.mxu0 0.0
        %309 = vmatpush1.msra.mxu0 0.0
        %310 = vmatprep.subr.mxu0 0.0
        %311 = vmatpush1.msra.mxu0 0.0
        %312 = vmatprep.subr.mxu0 0.0
        %313 = vmatpush1.msra.mxu0 0.0
        %314 = vmatprep.subr.mxu0 0.0
        %315 = vmatpush1.msra.mxu0 0.0
        %316 = vmatprep.subr.mxu0 0.0
        %317 = vmatpush1.msra.mxu0 0.0
        %318 = vmatprep.subr.mxu0 0.0
        %319 = vmatpush1.msra.mxu0 0.0
        %320 = vmatprep.subr.mxu0 0.0
        %321 = vmatpush1.msra.mxu0 0.0
        %322 = vmatprep.subr.mxu0 0.0
        %323 = vmatpush1.msra.mxu0 0.0
        %324 = vmatprep.subr.mxu0 0.0
        %325 = vmatpush1.msra.mxu0 0.0
        %326 = vmatprep.subr.mxu0 0.0
        %327 = vmatpush1.msra.mxu0 0.0
        %328 = vmatprep.subr.mxu0 0.0
        %329 = vmatpush1.msra.mxu0 0.0
        %330 = vmatprep.subr.mxu0 0.0
        %331 = vmatpush1.msra.mxu0 0.0
        %332 = vmatprep.mubr.f32.mxu0 0.0
        %333 = vmatmul.mubr.f32.gmra.mrb[0].mxu0 %v236
        %v334 = vpop.f32.mrb[0].mxu0
        %v335 = vadd.f32 0.0, %v334
        %v336 = vpop.f32.mrb[0].mxu0
        %337 = vmatprep.mubr.f32.mxu0 0.0
        %338 = vmatmul.mubr.f32.gmra.mrb[0].mxu0 %v237
        %v339 = vpop.f32.mrb[0].mxu0
        %v340 = vadd.f32 0.0, %v339
        %v341 = vpop.f32.mrb[0].mxu0
        %342 = vmatprep.mubr.f32.mxu0 0.0
        %343 = vmatmul.mubr.f32.gmra.mrb[0].mxu0 %v238
        %v344 = vpop.f32.mrb[0].mxu0
        %v345 = vadd.f32 0.0, %v344
        %v346 = vpop.f32.mrb[0].mxu0
        %347 = vmatprep.mubr.f32.mxu0 0.0
        %348 = vmatmul.mubr.f32.gmra.mrb[0].mxu0 %v239
        %v349 = vpop.f32.mrb[0].mxu0
        %v350 = vadd.f32 0.0, %v349
        %v351 = vpop.f32.mrb[0].mxu0
        %352 = vmatprep.mubr.f32.mxu0 0.0
        %353 = vmatmul.mubr.f32.gmra.mrb[0].mxu0 %v240
        %v354 = vpop.f32.mrb[0].mxu0
        %v355 = vadd.f32 0.0, %v354
        %v356 = vpop.f32.mrb[0].mxu0
        %357 = vmatprep.mubr.f32.mxu0 0.0
        %358 = vmatmul.mubr.f32.gmra.mrb[0].mxu0 %v241
        %v359 = vpop.f32.mrb[0].mxu0
        %v360 = vadd.f32 0.0, %v359
        %v361 = vpop.f32.mrb[0].mxu0
        %362 = vmatprep.mubr.f32.mxu0 0.0
        %363 = vmatmul.mubr.f32.gmra.mrb[0].mxu0 %v242
        %v364 = vpop.f32.mrb[0].mxu0
        %v365 = vadd.f32 0.0, %v364
        %v366 = vpop.f32.mrb[0].mxu0
        %367 = vmatprep.mubr.f32.mxu0 0.0
        %368 = vmatmul.mubr.f32.gmra.mrb[0].mxu0 %v243
        %v369 = vpop.f32.mrb[0].mxu0
        %v370 = vadd.f32 0.0, %v369
        %v371 = vpop.f32.mrb[0].mxu0
        %372 = vmatprep.mubr.f32.mxu0 0.0
        %373 = vmatmul.mubr.f32.gmra.mrb[0].mxu0 %v244
        %v374 = vpop.f32.mrb[0].mxu0
        %v375 = vadd.f32 0.0, %v374
        %v376 = vpop.f32.mrb[0].mxu0
        %377 = vmatprep.mubr.f32.mxu0 0.0
        %378 = vmatmul.mubr.f32.gmra.mrb[0].mxu0 %v245
        %v379 = vpop.f32.mrb[0].mxu0
        %v380 = vadd.f32 0.0, %v379
        %v381 = vpop.f32.mrb[0].mxu0
        %382 = vmatprep.mubr.f32.mxu0 0.0
        %383 = vmatmul.mubr.f32.gmra.mrb[0].mxu0 %v246
        %v384 = vpop.f32.mrb[0].mxu0
        %v385 = vadd.f32 0.0, %v384
        %v386 = vpop.f32.mrb[0].mxu0
        %387 = vmatprep.mubr.f32.mxu0 0.0
        %388 = vmatmul.mubr.f32.gmra.mrb[0].mxu0 %v247
        %v389 = vpop.f32.mrb[0].mxu0
        %v390 = vadd.f32 0.0, %v389
        %v391 = vpop.f32.mrb[0].mxu0
        %392 = vmatprep.mubr.f32.mxu0 0.0
        %393 = vmatmul.mubr.f32.gmra.mrb[0].mxu0 %v248
        %v394 = vpop.f32.mrb[0].mxu0
        %v395 = vadd.f32 0.0, %v394
        %v396 = vpop.f32.mrb[0].mxu0
        %397 = vmatprep.mubr.f32.mxu0 0.0
        %398 = vmatmul.mubr.f32.gmra.mrb[0].mxu0 %v249
        %v399 = vpop.f32.mrb[0].mxu0
        %v400 = vadd.f32 0.0, %v399
        %v401 = vpop.f32.mrb[0].mxu0
        %402 = vmatprep.mubr.f32.mxu0 0.0
        %403 = vmatmul.mubr.f32.gmra.mrb[0].mxu0 %v250
        %v404 = vpop.f32.mrb[0].mxu0
        %v405 = vadd.f32 0.0, %v404
        %v406 = vpop.f32.mrb[0].mxu0
        %407 = vmatprep.mubr.f32.mxu0 0.0
        %408 = vmatmul.mubr.f32.gmra.mrb[0].mxu0 %v251
        %v409 = vpop.f32.mrb[0].mxu0
        %v410 = vadd.f32 0.0, %v409
        %v411 = vpop.f32.mrb[0].mxu0
        %412 = vdwg.mxu0
        %s413 = smul.u32 %s20, 128
        %s414 = scalar_lea.vmem [#allocation2], %s413
        %415 = vst [vmem:[%s414] sm:$0xff] %v335
        %416 = vst [vmem:[%s414 + $0x8] sm:$0xff] %v340
        %417 = vst [vmem:[%s414 + $0x10] sm:$0xff] %v345
        %418 = vst [vmem:[%s414 + $0x18] sm:$0xff] %v350
        %419 = vst [vmem:[%s414 + $0x20] sm:$0xff] %v355
        %420 = vst [vmem:[%s414 + $0x28] sm:$0xff] %v360
        %421 = vst [vmem:[%s414 + $0x30] sm:$0xff] %v365
        %422 = vst [vmem:[%s414 + $0x38] sm:$0xff] %v370
        %423 = vst [vmem:[%s414 + $0x40] sm:$0xff] %v375
        %424 = vst [vmem:[%s414 + $0x48] sm:$0xff] %v380
        %425 = vst [vmem:[%s414 + $0x50] sm:$0xff] %v385
        %426 = vst [vmem:[%s414 + $0x58] sm:$0xff] %v390
        %427 = vst [vmem:[%s414 + $0x60] sm:$0xff] %v395
        %428 = vst [vmem:[%s414 + $0x68] sm:$0xff] %v400
        %429 = vst [vmem:[%s414 + $0x70] sm:$0xff] %v405
        %430 = vst [vmem:[%s414 + $0x78] sm:$0xff] %v410
        %p431 = scmp.eq.s32.totalorder %s20, 0
        // Predicated region
        $region41: #{discriminator_forward.4} parent=39 // pred_check
          %p432 = pneg %p431
        $region42: #{discriminator_forward.4} parent=39 // pred_check_branch
          %434 = sbr.rel (%p432) target = $region44
        $region43: #{discriminator_forward.4} parent=39 // pred_region
          %435 = vst [vmem:[#allocation3] sm:$0x1] 0.0
          %436 = vst [vmem:[#allocation4] sm:$0x1] 0.0
        $region44: #{discriminator_forward.4} parent=39 // pred_fallthru
          _
        %v437 = vld [vmem:[#allocation3] sm:$0x1]
        %v438 = vadd.f32 %v335, %v340
        %v439 = vadd.f32 %v438, %v345
        %v440 = vadd.f32 %v439, %v350
        %v441 = vadd.f32 %v440, %v355
        %v442 = vadd.f32 %v441, %v360
        %v443 = vadd.f32 %v442, %v365
        %v444 = vadd.f32 %v443, %v370
        %v445 = vadd.f32 %v444, %v375
        %v446 = vadd.f32 %v445, %v380
        %v447 = vadd.f32 %v446, %v385
        %v448 = vadd.f32 %v447, %v390
        %v449 = vadd.f32 %v448, %v395
        %v450 = vadd.f32 %v449, %v400
        %v451 = vadd.f32 %v450, %v405
        %v452 = vadd.f32 %v451, %v410
        %v453 = vrot.slane %v452, 4
        %v454 = vadd.f32 %v452, %v453
        %v455 = vrot.slane %v454, 2
        %v456 = vadd.f32 %v454, %v455
        %v457 = vrot.slane %v456, 1
        %v458 = vadd.f32 %v456, %v457
        %v459 = vadd.f32 %v437, %v458
        %460 = vst [vmem:[#allocation3] sm:$0x1] %v459
        %v461 = vld [vmem:[#allocation4] sm:$0x1]
        %v462 = vmul.f32 %v335, %v335
        %v463 = vmul.f32 %v340, %v340
        %v464 = vmul.f32 %v345, %v345
        %v465 = vmul.f32 %v350, %v350
        %v466 = vmul.f32 %v355, %v355
        %v467 = vmul.f32 %v360, %v360
        %v468 = vmul.f32 %v365, %v365
        %v469 = vmul.f32 %v370, %v370
        %v470 = vmul.f32 %v375, %v375
        %v471 = vmul.f32 %v380, %v380
        %v472 = vmul.f32 %v385, %v385
        %v473 = vmul.f32 %v390, %v390
        %v474 = vmul.f32 %v395, %v395
        %v475 = vmul.f32 %v400, %v400
        %v476 = vmul.f32 %v405, %v405
        %v477 = vmul.f32 %v410, %v410
        %v478 = vadd.f32 %v462, %v463
        %v479 = vadd.f32 %v478, %v464
        %v480 = vadd.f32 %v479, %v465
        %v481 = vadd.f32 %v480, %v466
        %v482 = vadd.f32 %v481, %v467
        %v483 = vadd.f32 %v482, %v468
        %v484 = vadd.f32 %v483, %v469
        %v485 = vadd.f32 %v484, %v470
        %v486 = vadd.f32 %v485, %v471
        %v487 = vadd.f32 %v486, %v472
        %v488 = vadd.f32 %v487, %v473
        %v489 = vadd.f32 %v488, %v474
        %v490 = vadd.f32 %v489, %v475
        %v491 = vadd.f32 %v490, %v476
        %v492 = vadd.f32 %v491, %v477
        %v493 = vrot.slane %v492, 4
        %v494 = vadd.f32 %v492, %v493
        %v495 = vrot.slane %v494, 2
        %v496 = vadd.f32 %v494, %v495
        %v497 = vrot.slane %v496, 1
        %v498 = vadd.f32 %v496, %v497
        %v499 = vadd.f32 %v461, %v498
        %500 = vst [vmem:[#allocation4] sm:$0x1] %v499
      $region40: #{discriminator_forward.4} parent=35 // pred_fallthru
        _
      %p501 = scmp.eq.s32.totalorder %s19, 1
      // Predicated region
      $region45: #{discriminator_forward.4} parent=35 // pred_check
        %p502 = pneg %p501
      $region46: #{discriminator_forward.4} parent=35 // pred_check_branch
        %504 = sbr.rel (%p502) target = $region48
      $region47: #{discriminator_forward.4} parent=35 // pred_region
        %p505 = scmp.eq.s32.totalorder %s20, 0
        // Predicated region
        $region49: #{discriminator_forward.4} parent=47 // pred_check
          %p506 = pneg %p505
        $region50: #{discriminator_forward.4} parent=47 // pred_check_branch
          %508 = sbr.rel (%p506) target = $region52
        $region51: #{discriminator_forward.4} parent=47 // pred_region
          %v509 = vld [vmem:[#allocation3] sm:$0x1]
          %v510 = vmul.f32 %v509, 0.0078125
          %v511 = vld [vmem:[#allocation4] sm:$0x1]
          %v512 = vmul.f32 %v511, 0.0078125
          %v513 = vmul.f32 %v510, %v510
          %v514 = vsub.f32 %v512, %v513
          %v515 = vmax.f32 %v514, 0.0
          %v516 = vld [vmem:[%s2] sm:$0x1]
          %v517 = vadd.f32 %v515, 1e-05
          %v518 = vrsqrt.pop %v517
          %v519 = vmul.f32 %v516, %v518
          %520 = vst [vmem:[#allocation3] sm:$0x1] %v519
          %v521 = vld [vmem:[%s3] sm:$0x1]
          %v522 = vmul.f32 %v519, %v510
          %v523 = vsub.f32 %v521, %v522
          %524 = vst [vmem:[#allocation4] sm:$0x1] %v523
        $region52: #{discriminator_forward.4} parent=47 // pred_fallthru
          _
        %s525 = smul.u32 %s20, 128
        %s526 = scalar_lea.vmem [#allocation2], %s525
        %v527 = vld [vmem:[%s526] sm:$0xff]
        %v528 = vld [vmem:[%s526 + $0x8] sm:$0xff]
        %v529 = vld [vmem:[%s526 + $0x10] sm:$0xff]
        %v530 = vld [vmem:[%s526 + $0x18] sm:$0xff]
        %v531 = vld [vmem:[%s526 + $0x20] sm:$0xff]
        %v532 = vld [vmem:[%s526 + $0x28] sm:$0xff]
        %v533 = vld [vmem:[%s526 + $0x30] sm:$0xff]
        %v534 = vld [vmem:[%s526 + $0x38] sm:$0xff]
        %v535 = vld [vmem:[%s526 + $0x40] sm:$0xff]
        %v536 = vld [vmem:[%s526 + $0x48] sm:$0xff]
        %v537 = vld [vmem:[%s526 + $0x50] sm:$0xff]
        %v538 = vld [vmem:[%s526 + $0x58] sm:$0xff]
        %v539 = vld [vmem:[%s526 + $0x60] sm:$0xff]
        %v540 = vld [vmem:[%s526 + $0x68] sm:$0xff]
        %v541 = vld [vmem:[%s526 + $0x70] sm:$0xff]
        %v542 = vld [vmem:[%s526 + $0x78] sm:$0xff]
        %v543 = vld [vmem:[#allocation3] sm:$0x1]
        %v545 = vlaneseq
        %v546 = vshrl.u32 %v545, 7
        %v547 = vsub.s32 0, %v546
        %v548 = vrot.slane %v543, %v547
        %v550 = vmul.f32 %v548, %v527
        %v551 = vmul.f32 %v548, %v528
        %v552 = vmul.f32 %v548, %v529
        %v553 = vmul.f32 %v548, %v530
        %v554 = vmul.f32 %v548, %v531
        %v555 = vmul.f32 %v548, %v532
        %v556 = vmul.f32 %v548, %v533
        %v557 = vmul.f32 %v548, %v534
        %v558 = vmul.f32 %v548, %v535
        %v559 = vmul.f32 %v548, %v536
        %v560 = vmul.f32 %v548, %v537
        %v561 = vmul.f32 %v548, %v538
        %v562 = vmul.f32 %v548, %v539
        %v563 = vmul.f32 %v548, %v540
        %v564 = vmul.f32 %v548, %v541
        %v565 = vmul.f32 %v548, %v542
        %v566 = vld [vmem:[#allocation4] sm:$0x1]
        %v568 = vlaneseq
        %v569 = vshrl.u32 %v568, 7
        %v570 = vsub.s32 0, %v569
        %v571 = vrot.slane %v566, %v570
        %v573 = vadd.f32 %v550, %v571
        %v574 = vadd.f32 %v551, %v571
        %v575 = vadd.f32 %v552, %v571
        %v576 = vadd.f32 %v553, %v571
        %v577 = vadd.f32 %v554, %v571
        %v578 = vadd.f32 %v555, %v571
        %v579 = vadd.f32 %v556, %v571
        %v580 = vadd.f32 %v557, %v571
        %v581 = vadd.f32 %v558, %v571
        %v582 = vadd.f32 %v559, %v571
        %v583 = vadd.f32 %v560, %v571
        %v584 = vadd.f32 %v561, %v571
        %v585 = vadd.f32 %v562, %v571
        %v586 = vadd.f32 %v563, %v571
        %v587 = vadd.f32 %v564, %v571
        %v588 = vadd.f32 %v565, %v571
        %vm589 = vcmp.ge.f32.partialorder %v573, 0.0
        %vm590 = vcmp.ge.f32.partialorder %v574, 0.0
        %vm591 = vcmp.ge.f32.partialorder %v575, 0.0
        %vm592 = vcmp.ge.f32.partialorder %v576, 0.0
        %vm593 = vcmp.ge.f32.partialorder %v577, 0.0
        %vm594 = vcmp.ge.f32.partialorder %v578, 0.0
        %vm595 = vcmp.ge.f32.partialorder %v579, 0.0
        %vm596 = vcmp.ge.f32.partialorder %v580, 0.0
        %vm597 = vcmp.ge.f32.partialorder %v581, 0.0
        %vm598 = vcmp.ge.f32.partialorder %v582, 0.0
        %vm599 = vcmp.ge.f32.partialorder %v583, 0.0
        %vm600 = vcmp.ge.f32.partialorder %v584, 0.0
        %vm601 = vcmp.ge.f32.partialorder %v585, 0.0
        %vm602 = vcmp.ge.f32.partialorder %v586, 0.0
        %vm603 = vcmp.ge.f32.partialorder %v587, 0.0
        %vm604 = vcmp.ge.f32.partialorder %v588, 0.0
        %v605 = vmul.f32 %v573, 0.2
        %v606 = vmul.f32 %v574, 0.2
        %v607 = vmul.f32 %v575, 0.2
        %v608 = vmul.f32 %v576, 0.2
        %v609 = vmul.f32 %v577, 0.2
        %v610 = vmul.f32 %v578, 0.2
        %v611 = vmul.f32 %v579, 0.2
        %v612 = vmul.f32 %v580, 0.2
        %v613 = vmul.f32 %v581, 0.2
        %v614 = vmul.f32 %v582, 0.2
        %v615 = vmul.f32 %v583, 0.2
        %v616 = vmul.f32 %v584, 0.2
        %v617 = vmul.f32 %v585, 0.2
        %v618 = vmul.f32 %v586, 0.2
        %v619 = vmul.f32 %v587, 0.2
        %v620 = vmul.f32 %v588, 0.2
        %v621 = vsel %vm589, %v573, %v605
        %v622 = vsel %vm590, %v574, %v606
        %v623 = vsel %vm591, %v575, %v607
        %v624 = vsel %vm592, %v576, %v608
        %v625 = vsel %vm593, %v577, %v609
        %v626 = vsel %vm594, %v578, %v610
        %v627 = vsel %vm595, %v579, %v611
        %v628 = vsel %vm596, %v580, %v612
        %v629 = vsel %vm597, %v581, %v613
        %v630 = vsel %vm598, %v582, %v614
        %v631 = vsel %vm599, %v583, %v615
        %v632 = vsel %vm600, %v584, %v616
        %v633 = vsel %vm601, %v585, %v617
        %v634 = vsel %vm602, %v586, %v618
        %v635 = vsel %vm603, %v587, %v619
        %v636 = vsel %vm604, %v588, %v620
        %637 = vst [vmem:[%s229] sm:$0xff] %v621
        %638 = vst [vmem:[%s229 + $0x8] sm:$0xff] %v622
        %639 = vst [vmem:[%s229 + $0x10] sm:$0xff] %v623
        %640 = vst [vmem:[%s229 + $0x18] sm:$0xff] %v624
        %641 = vst [vmem:[%s229 + $0x20] sm:$0xff] %v625
        %642 = vst [vmem:[%s229 + $0x28] sm:$0xff] %v626
        %643 = vst [vmem:[%s229 + $0x30] sm:$0xff] %v627
        %644 = vst [vmem:[%s229 + $0x38] sm:$0xff] %v628
        %645 = vst [vmem:[%s229 + $0x40] sm:$0xff] %v629
        %646 = vst [vmem:[%s229 + $0x48] sm:$0xff] %v630
        %647 = vst [vmem:[%s229 + $0x50] sm:$0xff] %v631
        %648 = vst [vmem:[%s229 + $0x58] sm:$0xff] %v632
        %649 = vst [vmem:[%s229 + $0x60] sm:$0xff] %v633
        %650 = vst [vmem:[%s229 + $0x68] sm:$0xff] %v634
        %651 = vst [vmem:[%s229 + $0x70] sm:$0xff] %v635
        %652 = vst [vmem:[%s229 + $0x78] sm:$0xff] %v636
      $region48: #{discriminator_forward.4} parent=35 // pred_fallthru
        _
      %s653 = smul.u32 %s20, %s19
      %s654 = smul.u32 16, %s653
      %p655 = scmp.lt.s32.totalorder %s654, 15
      %s656 = scalar_select %p655, %s654, 15
      %s657 = smul.addr %s656, 8
      %s658 = scalar_lea.vmem %s4, %s657
      // Predicated region
      $region53: #{discriminator_forward.4} parent=35 // pred_check
        %p659 = pneg %p140
      $region54: #{discriminator_forward.4} parent=35 // pred_check_branch
        %661 = sbr.rel (%p659) target = $region56
      $region55: #{discriminator_forward.4} parent=35 // pred_region
        %s662 = smul.u32 %s20, %s19
        %s663 = smul.u32 16, %s662
      $region56: #{discriminator_forward.4} parent=35 // pred_fallthru
        _
    $region36: #{discriminator_forward.4} parent=5 // pred_fallthru
      _
    %p664 = scmp.le.s32.totalorder 2, %s10
    // Predicated region
    $region57: #{discriminator_forward.4} parent=5 // pred_check
      %p665 = pneg %p664
    $region58: #{discriminator_forward.4} parent=5 // pred_check_branch
      %667 = sbr.rel (%p665) target = $region60
    $region59: #{discriminator_forward.4} parent=5 // pred_region
      %s668 = ssub.s32 %s10, 2
      // Predicated region
      $region61: #{discriminator_forward.4} parent=59 // pred_check
        %p669 = pneg %p146
      $region62: #{discriminator_forward.4} parent=59 // pred_check_branch
        %671 = sbr.rel (%p669) target = $region64
      $region63: #{discriminator_forward.4} parent=59 // pred_region
        %s672 = smul.u32 %s22, %s21
        %s673 = smul.u32 16, %s672
        %p674 = scmp.lt.s32.totalorder %s673, 15
        %s675 = scalar_select %p674, %s673, 15
        %s676 = smul.addr %s675, 8
        %s677 = scalar_lea.vmem %s4, %s676
      $region64: #{discriminator_forward.4} parent=59 // pred_fallthru
        _
    $region60: #{discriminator_forward.4} parent=5 // pred_fallthru
      _
  $region6: #{discriminator_forward.4} parent=0 // loop_footer
    %s14 = sadd.s32 1, %s10
  $region7: #{discriminator_forward.4} parent=0 // loop_footer_branch
    %9 = sbr.rel target = $region3
  $region8: #{discriminator_forward.4} parent=0 // loop_exit
    _

// kernel: discriminator_forward.5
$region0: #{discriminator_forward.5}
  #allocation0 [shape = 'u32[]', space=smem, size = 0x4, offset = 0x4, fixed_abs, tag = 'smem constant byte address 0x4 - core index']
  #allocation1 [shape = 'u32[144,128]{1,0:T(1,128)}', space=vmem, size = 0x12000, scoped, tag = 'internal scratch']
  #allocation2 [shape = 'f32[1,32,128]{2,1,0:T(8,128)}', space=vmem, size = 0x4000, scoped, tag = 'scratch operand']
  #allocation3 [shape = 'f32[1,128]{1,0:T(1,128)}', space=vmem, size = 0x200, scoped, tag = 'scratch operand']
  #allocation4 [shape = 'f32[1,128]{1,0:T(1,128)}', space=vmem, size = 0x200, scoped, tag = 'scratch operand']
  %s0 = inlined_call_operand.vmem [shape: f32[32,640], index: 0, kind: input, shape index: {}]
  %s1 = inlined_call_operand.vmem [shape: f32[640,128], index: 1, kind: input, shape index: {}]
  %s2 = inlined_call_operand.vmem [shape: f32[1,128], index: 2, kind: input, shape index: {}]
  %s3 = inlined_call_operand.vmem [shape: f32[1,128], index: 3, kind: input, shape index: {}]
  %s4 = inlined_call_operand.vmem [shape: f32[32,128], index: 4, kind: output, shape index: {}]
  %s5 = sld [smem:[#allocation0]]
  $region65: #{discriminator_forward.5} parent=0
    _
  %s7 = ssub.s32 1, %s5
  %s8 = scalar_select 0, %s7, %s5
  loop: start=0, step=1, limit=4
  $region2: #{discriminator_forward.5} parent=0 // loop_pre_header
    _
  $region3: #{discriminator_forward.5} parent=0 // loop_header
    %s10 = sphi 0, %s14
    %p11 = scmp.ge.s32.totalorder %s10, 4
    %s17 = sphi 0, %s29
    %s18 = sphi 0, %s25
    %s19 = sphi 0, %s17
    %s20 = sphi 0, %s18
    %s21 = sphi 0, %s19
    %s22 = sphi 0, %s20
    %s36 = sphi 0, %s38
    %s39 = sphi 0, %s36
    %s40 = sphi 0, %s39
    %s56 = sphi 0, %s40
    %s60 = sphi 0, %s60
    %s62 = sphi 0, %s60
    %s63 = sphi 0, %s62
    %s77 = sphi 0, %s63
    %s81 = sphi 0, %s81
    %s83 = sphi 0, %s81
    %s84 = sphi 0, %s83
    %s98 = sphi 0, %s84
    %s102 = sphi 0, %s102
    %s104 = sphi 0, %s102
    %s105 = sphi 0, %s104
    %s119 = sphi 0, %s105
    %s127 = sphi 0, %s129
    %s130 = sphi 0, %s127
    %s131 = sphi 0, %s130
    %s147 = sphi 0, %s131
  $region4: #{discriminator_forward.5} parent=0 // loop_header_branch
    %13 = sbr.rel (%p11) target = $region8
  $region5: #{discriminator_forward.5} parent=0 // loop_body
    %s15 = ssub.s32 %s10, 1
    %s16 = ssub.s32 %s10, 2
    %s23 = sadd.s32 1, %s18
    %p24 = scmp.ge.s32.totalorder %s23, 1
    %s25 = scalar_select %p24, 0, %s23
    %s26 = sadd.s32 1, %s17
    %s27 = scalar_select %p24, %s26, %s17
    %p28 = scmp.ge.s32.totalorder %s27, 2
    %s29 = scalar_select %p28, 0, %s27
    %s30 = ssub.s32 1, %s17
    %s31 = smul.u32 %s18, %s30
    %s32 = ssub.s32 1, %s29
    %s33 = smul.u32 %s25, %s32
    %s34 = ssub.s32 %s31, %s33
    %p35 = scmp.eq.s32.totalorder %s34, 0
    %s37 = sadd.s32 %s36, 1
    %s38 = scalar_select %p35, %s36, %s37
    %p41 = pneg %p35
    %p42 = scmp.eq.s32.totalorder %s10, 1
    %p43 = por %p41, %p42
    %p44 = scmp.ne.s32.totalorder %s36, %s39
    %p45 = scmp.eq.s32.totalorder %s10, 0
    %p46 = por %p44, %p45
    %p47 = scmp.ne.s32.totalorder %s36, %s39
    %p48 = scmp.eq.s32.totalorder %s15, 1
    %p49 = por %p47, %p48
    %p50 = scmp.ne.s32.totalorder %s39, %s40
    %p51 = scmp.eq.s32.totalorder %s15, 0
    %p52 = por %p50, %p51
    %p53 = scmp.ne.s32.totalorder %s39, %s40
    %p54 = scmp.eq.s32.totalorder %s16, 1
    %p55 = por %p53, %p54
    %p57 = scmp.ne.s32.totalorder %s40, %s56
    %p58 = scmp.eq.s32.totalorder %s16, 0
    %p59 = por %p57, %p58
    %s61 = sadd.s32 %s60, 1
    %p64 = scmp.eq.s32.totalorder %s10, 1
    %p65 = scmp.ne.s32.totalorder %s60, %s62
    %p66 = scmp.eq.s32.totalorder %s10, 0
    %p67 = por %p65, %p66
    %p68 = scmp.ne.s32.totalorder %s60, %s62
    %p69 = scmp.eq.s32.totalorder %s15, 1
    %p70 = por %p68, %p69
    %p71 = scmp.ne.s32.totalorder %s62, %s63
    %p72 = scmp.eq.s32.totalorder %s15, 0
    %p73 = por %p71, %p72
    %p74 = scmp.ne.s32.totalorder %s62, %s63
    %p75 = scmp.eq.s32.totalorder %s16, 1
    %p76 = por %p74, %p75
    %p78 = scmp.ne.s32.totalorder %s63, %s77
    %p79 = scmp.eq.s32.totalorder %s16, 0
    %p80 = por %p78, %p79
    %s82 = sadd.s32 %s81, 1
    %p85 = scmp.eq.s32.totalorder %s10, 1
    %p86 = scmp.ne.s32.totalorder %s81, %s83
    %p87 = scmp.eq.s32.totalorder %s10, 0
    %p88 = por %p86, %p87
    %p89 = scmp.ne.s32.totalorder %s81, %s83
    %p90 = scmp.eq.s32.totalorder %s15, 1
    %p91 = por %p89, %p90
    %p92 = scmp.ne.s32.totalorder %s83, %s84
    %p93 = scmp.eq.s32.totalorder %s15, 0
    %p94 = por %p92, %p93
    %p95 = scmp.ne.s32.totalorder %s83, %s84
    %p96 = scmp.eq.s32.totalorder %s16, 1
    %p97 = por %p95, %p96
    %p99 = scmp.ne.s32.totalorder %s84, %s98
    %p100 = scmp.eq.s32.totalorder %s16, 0
    %p101 = por %p99, %p100
    %s103 = sadd.s32 %s102, 1
    %p106 = scmp.eq.s32.totalorder %s10, 1
    %p107 = scmp.ne.s32.totalorder %s102, %s104
    %p108 = scmp.eq.s32.totalorder %s10, 0
    %p109 = por %p107, %p108
    %p110 = scmp.ne.s32.totalorder %s102, %s104
    %p111 = scmp.eq.s32.totalorder %s15, 1
    %p112 = por %p110, %p111
    %p113 = scmp.ne.s32.totalorder %s104, %s105
    %p114 = scmp.eq.s32.totalorder %s15, 0
    %p115 = por %p113, %p114
    %p116 = scmp.ne.s32.totalorder %s104, %s105
    %p117 = scmp.eq.s32.totalorder %s16, 1
    %p118 = por %p116, %p117
    %p120 = scmp.ne.s32.totalorder %s105, %s119
    %p121 = scmp.eq.s32.totalorder %s16, 0
    %p122 = por %p120, %p121
    %s123 = smul.u32 %s18, %s17
    %s124 = smul.u32 %s25, %s29
    %s125 = ssub.s32 %s123, %s124
    %p126 = scmp.eq.s32.totalorder %s125, 0
    %s128 = sadd.s32 %s127, 1
    %s129 = scalar_select %p126, %s127, %s128
    %p132 = pneg %p126
    %p133 = scmp.eq.s32.totalorder %s10, 1
    %p134 = por %p132, %p133
    %p135 = scmp.ne.s32.totalorder %s127, %s130
    %p136 = scmp.eq.s32.totalorder %s10, 0
    %p137 = por %p135, %p136
    %p138 = scmp.ne.s32.totalorder %s127, %s130
    %p139 = scmp.eq.s32.totalorder %s15, 1
    %p140 = por %p138, %p139
    %p141 = scmp.ne.s32.totalorder %s130, %s131
    %p142 = scmp.eq.s32.totalorder %s15, 0
    %p143 = por %p141, %p142
    %p144 = scmp.ne.s32.totalorder %s130, %s131
    %p145 = scmp.eq.s32.totalorder %s16, 1
    %p146 = por %p144, %p145
    %p148 = scmp.ne.s32.totalorder %s131, %s147
    %p149 = scmp.eq.s32.totalorder %s16, 0
    %p150 = por %p148, %p149
    %p151 = scmp.le.s32.totalorder 1, %s10
    %p152 = scmp.lt.s32.totalorder %s10, 3
    %p153 = pnand %p151, %p152
    %p154 = pneg %p153
    // Predicated region
    $region9: #{discriminator_forward.5} parent=5 // pred_check
      _
    $region10: #{discriminator_forward.5} parent=5 // pred_check_branch
      %156 = sbr.rel (%p153) target = $region12
    $region11: #{discriminator_forward.5} parent=5 // pred_region
      %s157 = ssub.s32 %s10, 1
      // Predicated region
      $region13: #{discriminator_forward.5} parent=11 // pred_check
        %p158 = pneg %p73
      $region14: #{discriminator_forward.5} parent=11 // pred_check_branch
        %160 = sbr.rel (%p158) target = $region16
      $region15: #{discriminator_forward.5} parent=11 // pred_region
        _
      $region16: #{discriminator_forward.5} parent=11 // pred_fallthru
        _
      // Predicated region
      $region17: #{discriminator_forward.5} parent=11 // pred_check
        %p161 = pneg %p94
      $region18: #{discriminator_forward.5} parent=11 // pred_check_branch
        %163 = sbr.rel (%p161) target = $region20
      $region19: #{discriminator_forward.5} parent=11 // pred_region
        _
      $region20: #{discriminator_forward.5} parent=11 // pred_fallthru
        _
      // Predicated region
      $region21: #{discriminator_forward.5} parent=11 // pred_check
        %p164 = pneg %p115
      $region22: #{discriminator_forward.5} parent=11 // pred_check_branch
        %166 = sbr.rel (%p164) target = $region24
      $region23: #{discriminator_forward.5} parent=11 // pred_region
        _
      $region24: #{discriminator_forward.5} parent=11 // pred_fallthru
        _
    $region12: #{discriminator_forward.5} parent=5 // pred_fallthru
      _
    %p167 = scmp.lt.s32.totalorder %s10, 2
    // Predicated region
    $region25: #{discriminator_forward.5} parent=5 // pred_check
      %p168 = pneg %p167
    $region26: #{discriminator_forward.5} parent=5 // pred_check_branch
      %170 = sbr.rel (%p168) target = $region28
    $region27: #{discriminator_forward.5} parent=5 // pred_region
      // Predicated region
      $region29: #{discriminator_forward.5} parent=27 // pred_check
        %p171 = pneg %p46
      $region30: #{discriminator_forward.5} parent=27 // pred_check_branch
        %173 = sbr.rel (%p171) target = $region32
      $region31: #{discriminator_forward.5} parent=27 // pred_region
        %s174 = ssub.s32 1, %s17
        %s175 = smul.u32 %s18, %s174
        %s176 = smul.u32 4, %s175
        %p177 = scmp.lt.s32.totalorder %s176, 3
        %s178 = scalar_select %p177, %s176, 3
        %s179 = smul.addr %s178, 5
        %s180 = smul.addr %s179, 8
        %s181 = scalar_lea.vmem %s0, %s180
        %s182 = ssub.s32 1, %s17
        %s183 = smul.u32 %s18, %s182
        %s184 = smul.u32 4, %s183
      $region32: #{discriminator_forward.5} parent=27 // pred_fallthru
        _
    $region28: #{discriminator_forward.5} parent=5 // pred_fallthru
      _
    %p185 = scmp.le.s32.totalorder 1, %s10
    %p186 = scmp.lt.s32.totalorder %s10, 3
    %p187 = pnand %p185, %p186
    %p188 = pneg %p187
    // Predicated region
    $region33: #{discriminator_forward.5} parent=5 // pred_check
      _
    $region34: #{discriminator_forward.5} parent=5 // pred_check_branch
      %190 = sbr.rel (%p187) target = $region36
    $region35: #{discriminator_forward.5} parent=5 // pred_region
      %s191 = ssub.s32 %s10, 1
      %s192 = ssub.s32 1, %s19
      %s193 = smul.u32 %s20, %s192
      %s194 = smul.u32 4, %s193
      %p195 = scmp.lt.s32.totalorder %s194, 3
      %s196 = scalar_select %p195, %s194, 3
      %s197 = smul.addr %s196, 5
      %s198 = smul.addr %s197, 8
      %s199 = scalar_lea.vmem %s0, %s198
      %p200 = pneg %p52
      %p201 = pneg %p49
      %p202 = pneg %p73
      %p203 = pneg %p70
      %p204 = pneg %p94
      %p205 = pneg %p91
      %p206 = pneg %p115
      %p207 = pneg %p112
      %p208 = pneg %p143
      %p209 = pneg %p140
      %s210 = smul.u32 %s20, %s19
      %s211 = smul.u32 4, %s210
      %p212 = scmp.lt.s32.totalorder %s211, 3
      %s213 = scalar_select %p212, %s211, 3
      %s214 = smul.addr %s213, 8
      %s215 = scalar_lea.vmem %s4, %s214
      %s216 = ssub.s32 1, %s19
      %s217 = smul.u32 %s20, %s216
      %s218 = smul.u32 4, %s217
      %p219 = scmp.lt.s32.totalorder %s218, 3
      %s220 = scalar_select %p219, %s218, 3
      %s221 = smul.addr %s220, 5
      %s222 = smul.addr %s221, 8
      %s223 = scalar_lea.vmem %s0, %s222
      %s224 = ssub.s32 1, %s19
      %s225 = smul.u32 %s20, %s224
      %s226 = smul.u32 4, %s225
      %s227 = smul.u32 %s20, %s19
      %s228 = smul.u32 4, %s227
      %p229 = scmp.lt.s32.totalorder %s228, 3
      %s230 = scalar_select %p229, %s228, 3
      %s231 = smul.addr %s230, 8
      %s232 = scalar_lea.vmem %s4, %s231
      %s233 = smul.u32 %s20, %s19
      %s234 = smul.u32 4, %s233
      %p235 = scmp.eq.s32.totalorder %s19, 0
      // Predicated region
      $region37: #{discriminator_forward.5} parent=35 // pred_check
        %p236 = pneg %p235
      $region38: #{discriminator_forward.5} parent=35 // pred_check_branch
        %238 = sbr.rel (%p236) target = $region40
      $region39: #{discriminator_forward.5} parent=35 // pred_region
        %v239 = vld [vmem:[%s223] sm:$0xff]
        %v240 = vld [vmem:[%s223 + $0x8] sm:$0xff]
        %v241 = vld [vmem:[%s223 + $0x10] sm:$0xff]
        %v242 = vld [vmem:[%s223 + $0x18] sm:$0xff]
        %v243 = vld [vmem:[%s223 + $0x20] sm:$0xff]
        %v244 = vld [vmem:[%s223 + $0x28] sm:$0xff]
        %v245 = vld [vmem:[%s223 + $0x30] sm:$0xff]
        %v246 = vld [vmem:[%s223 + $0x38] sm:$0xff]
        %v247 = vld [vmem:[%s223 + $0x40] sm:$0xff]
        %v248 = vld [vmem:[%s223 + $0x48] sm:$0xff]
        %v249 = vld [vmem:[%s223 + $0x50] sm:$0xff]
        %v250 = vld [vmem:[%s223 + $0x58] sm:$0xff]
        %v251 = vld [vmem:[%s223 + $0x60] sm:$0xff]
        %v252 = vld [vmem:[%s223 + $0x68] sm:$0xff]
        %v253 = vld [vmem:[%s223 + $0x70] sm:$0xff]
        %v254 = vld [vmem:[%s223 + $0x78] sm:$0xff]
        %v255 = vld [vmem:[%s223 + $0x80] sm:$0xff]
        %v256 = vld [vmem:[%s223 + $0x88] sm:$0xff]
        %v257 = vld [vmem:[%s223 + $0x90] sm:$0xff]
        %v258 = vld [vmem:[%s223 + $0x98] sm:$0xff]
        %v259 = vld [vmem:[%s1] sm:$0xff]
        %v260 = vld [vmem:[%s1 + $0x8] sm:$0xff]
        %v261 = vld [vmem:[%s1 + $0x10] sm:$0xff]
        %v262 = vld [vmem:[%s1 + $0x18] sm:$0xff]
        %v263 = vld [vmem:[%s1 + $0x20] sm:$0xff]
        %v264 = vld [vmem:[%s1 + $0x28] sm:$0xff]
        %v265 = vld [vmem:[%s1 + $0x30] sm:$0xff]
        %v266 = vld [vmem:[%s1 + $0x38] sm:$0xff]
        %v267 = vld [vmem:[%s1 + $0x40] sm:$0xff]
        %v268 = vld [vmem:[%s1 + $0x48] sm:$0xff]
        %v269 = vld [vmem:[%s1 + $0x50] sm:$0xff]
        %v270 = vld [vmem:[%s1 + $0x58] sm:$0xff]
        %v271 = vld [vmem:[%s1 + $0x60] sm:$0xff]
        %v272 = vld [vmem:[%s1 + $0x68] sm:$0xff]
        %v273 = vld [vmem:[%s1 + $0x70] sm:$0xff]
        %v274 = vld [vmem:[%s1 + $0x78] sm:$0xff]
        %v275 = vld [vmem:[%s1 + $0x80] sm:$0xff]
        %v276 = vld [vmem:[%s1 + $0x88] sm:$0xff]
        %v277 = vld [vmem:[%s1 + $0x90] sm:$0xff]
        %v278 = vld [vmem:[%s1 + $0x98] sm:$0xff]
        %v279 = vld [vmem:[%s1 + $0xa0] sm:$0xff]
        %v280 = vld [vmem:[%s1 + $0xa8] sm:$0xff]
        %v281 = vld [vmem:[%s1 + $0xb0] sm:$0xff]
        %v282 = vld [vmem:[%s1 + $0xb8] sm:$0xff]
        %v283 = vld [vmem:[%s1 + $0xc0] sm:$0xff]
        %v284 = vld [vmem:[%s1 + $0xc8] sm:$0xff]
        %v285 = vld [vmem:[%s1 + $0xd0] sm:$0xff]
        %v286 = vld [vmem:[%s1 + $0xd8] sm:$0xff]
        %v287 = vld [vmem:[%s1 + $0xe0] sm:$0xff]
        %v288 = vld [vmem:[%s1 + $0xe8] sm:$0xff]
        %v289 = vld [vmem:[%s1 + $0xf0] sm:$0xff]
        %v290 = vld [vmem:[%s1 + $0xf8] sm:$0xff]
        %v291 = vld [vmem:[%s1 + $0x100] sm:$0xff]
        %v292 = vld [vmem:[%s1 + $0x108] sm:$0xff]
        %v293 = vld [vmem:[%s1 + $0x110] sm:$0xff]
        %v294 = vld [vmem:[%s1 + $0x118] sm:$0xff]
        %v295 = vld [vmem:[%s1 + $0x120] sm:$0xff]
        %v296 = vld [vmem:[%s1 + $0x128] sm:$0xff]
        %v297 = vld [vmem:[%s1 + $0x130] sm:$0xff]
        %v298 = vld [vmem:[%s1 + $0x138] sm:$0xff]
        %v299 = vld [vmem:[%s1 + $0x140] sm:$0xff]
        %v300 = vld [vmem:[%s1 + $0x148] sm:$0xff]
        %v301 = vld [vmem:[%s1 + $0x150] sm:$0xff]
        %v302 = vld [vmem:[%s1 + $0x158] sm:$0xff]
        %v303 = vld [vmem:[%s1 + $0x160] sm:$0xff]
        %v304 = vld [vmem:[%s1 + $0x168] sm:$0xff]
        %v305 = vld [vmem:[%s1 + $0x170] sm:$0xff]
        %v306 = vld [vmem:[%s1 + $0x178] sm:$0xff]
        %v307 = vld [vmem:[%s1 + $0x180] sm:$0xff]
        %v308 = vld [vmem:[%s1 + $0x188] sm:$0xff]
        %v309 = vld [vmem:[%s1 + $0x190] sm:$0xff]
        %v310 = vld [vmem:[%s1 + $0x198] sm:$0xff]
        %v311 = vld [vmem:[%s1 + $0x1a0] sm:$0xff]
        %v312 = vld [vmem:[%s1 + $0x1a8] sm:$0xff]
        %v313 = vld [vmem:[%s1 + $0x1b0] sm:$0xff]
        %v314 = vld [vmem:[%s1 + $0x1b8] sm:$0xff]
        %v315 = vld [vmem:[%s1 + $0x1c0] sm:$0xff]
        %v316 = vld [vmem:[%s1 + $0x1c8] sm:$0xff]
        %v317 = vld [vmem:[%s1 + $0x1d0] sm:$0xff]
        %v318 = vld [vmem:[%s1 + $0x1d8] sm:$0xff]
        %v319 = vld [vmem:[%s1 + $0x1e0] sm:$0xff]
        %v320 = vld [vmem:[%s1 + $0x1e8] sm:$0xff]
        %v321 = vld [vmem:[%s1 + $0x1f0] sm:$0xff]
        %v322 = vld [vmem:[%s1 + $0x1f8] sm:$0xff]
        %v323 = vld [vmem:[%s1 + $0x200] sm:$0xff]
        %v324 = vld [vmem:[%s1 + $0x208] sm:$0xff]
        %v325 = vld [vmem:[%s1 + $0x210] sm:$0xff]
        %v326 = vld [vmem:[%s1 + $0x218] sm:$0xff]
        %v327 = vld [vmem:[%s1 + $0x220] sm:$0xff]
        %v328 = vld [vmem:[%s1 + $0x228] sm:$0xff]
        %v329 = vld [vmem:[%s1 + $0x230] sm:$0xff]
        %v330 = vld [vmem:[%s1 + $0x238] sm:$0xff]
        %v331 = vld [vmem:[%s1 + $0x240] sm:$0xff]
        %v332 = vld [vmem:[%s1 + $0x248] sm:$0xff]
        %v333 = vld [vmem:[%s1 + $0x250] sm:$0xff]
        %v334 = vld [vmem:[%s1 + $0x258] sm:$0xff]
        %v335 = vld [vmem:[%s1 + $0x260] sm:$0xff]
        %v336 = vld [vmem:[%s1 + $0x268] sm:$0xff]
        %v337 = vld [vmem:[%s1 + $0x270] sm:$0xff]
        %v338 = vld [vmem:[%s1 + $0x278] sm:$0xff]
        %339 = vmatprep.subr.mxu0 0.0
        %340 = vmatpush1.msra.mxu0 %v259
        %341 = vmatprep.subr.mxu0 0.0
        %342 = vmatpush1.msra.mxu0 %v260
        %343 = vmatprep.subr.mxu0 0.0
        %344 = vmatpush1.msra.mxu0 %v261
        %345 = vmatprep.subr.mxu0 0.0
        %346 = vmatpush1.msra.mxu0 %v262
        %347 = vmatprep.subr.mxu0 0.0
        %348 = vmatpush1.msra.mxu0 %v263
        %349 = vmatprep.subr.mxu0 0.0
        %350 = vmatpush1.msra.mxu0 %v264
        %351 = vmatprep.subr.mxu0 0.0
        %352 = vmatpush1.msra.mxu0 %v265
        %353 = vmatprep.subr.mxu0 0.0
        %354 = vmatpush1.msra.mxu0 %v266
        %355 = vmatprep.subr.mxu0 0.0
        %356 = vmatpush1.msra.mxu0 %v267
        %357 = vmatprep.subr.mxu0 0.0
        %358 = vmatpush1.msra.mxu0 %v268
        %359 = vmatprep.subr.mxu0 0.0
        %360 = vmatpush1.msra.mxu0 %v269
        %361 = vmatprep.subr.mxu0 0.0
        %362 = vmatpush1.msra.mxu0 %v270
        %363 = vmatprep.subr.mxu0 0.0
        %364 = vmatpush1.msra.mxu0 %v271
        %365 = vmatprep.subr.mxu0 0.0
        %366 = vmatpush1.msra.mxu0 %v272
        %367 = vmatprep.subr.mxu0 0.0
        %368 = vmatpush1.msra.mxu0 %v273
        %369 = vmatprep.subr.mxu0 0.0
        %370 = vmatpush1.msra.mxu0 %v274
        %371 = vmatprep.subr.mxu0 0.0
        %372 = vmatpush1.msra.mxu0 %v275
        %373 = vmatprep.subr.mxu0 0.0
        %374 = vmatpush1.msra.mxu0 %v276
        %375 = vmatprep.subr.mxu0 0.0
        %376 = vmatpush1.msra.mxu0 %v277
        %377 = vmatprep.subr.mxu0 0.0
        %378 = vmatpush1.msra.mxu0 %v278
        %379 = vmatprep.subr.mxu0 0.0
        %380 = vmatpush1.msra.mxu0 %v279
        %381 = vmatprep.subr.mxu0 0.0
        %382 = vmatpush1.msra.mxu0 %v280
        %383 = vmatprep.subr.mxu0 0.0
        %384 = vmatpush1.msra.mxu0 %v281
        %385 = vmatprep.subr.mxu0 0.0
        %386 = vmatpush1.msra.mxu0 %v282
        %387 = vmatprep.subr.mxu0 0.0
        %388 = vmatpush1.msra.mxu0 %v283
        %389 = vmatprep.subr.mxu0 0.0
        %390 = vmatpush1.msra.mxu0 %v284
        %391 = vmatprep.subr.mxu0 0.0
        %392 = vmatpush1.msra.mxu0 %v285
        %393 = vmatprep.subr.mxu0 0.0
        %394 = vmatpush1.msra.mxu0 %v286
        %395 = vmatprep.subr.mxu0 0.0
        %396 = vmatpush1.msra.mxu0 %v287
        %397 = vmatprep.subr.mxu0 0.0
        %398 = vmatpush1.msra.mxu0 %v288
        %399 = vmatprep.subr.mxu0 0.0
        %400 = vmatpush1.msra.mxu0 %v289
        %401 = vmatprep.subr.mxu0 0.0
        %402 = vmatpush1.msra.mxu0 %v290
        %403 = vmatprep.mubr.f32.mxu0 %v240
        %404 = vmatmul.mubr.f32.gmra.mrb[0].mxu0 %v239
        %v405 = vpop.f32.mrb[0].mxu0
        %v406 = vadd.f32 0.0, %v405
        %v407 = vpop.f32.mrb[0].mxu0
        %408 = vmatprep.mubr.f32.mxu0 %v245
        %409 = vmatmul.mubr.f32.gmra.mrb[0].mxu0 %v244
        %v410 = vpop.f32.mrb[0].mxu0
        %v411 = vadd.f32 0.0, %v410
        %v412 = vpop.f32.mrb[0].mxu0
        %413 = vmatprep.mubr.f32.mxu0 %v250
        %414 = vmatmul.mubr.f32.gmra.mrb[0].mxu0 %v249
        %v415 = vpop.f32.mrb[0].mxu0
        %v416 = vadd.f32 0.0, %v415
        %v417 = vpop.f32.mrb[0].mxu0
        %418 = vmatprep.mubr.f32.mxu0 %v255
        %419 = vmatmul.mubr.f32.gmra.mrb[0].mxu0 %v254
        %v420 = vpop.f32.mrb[0].mxu0
        %v421 = vadd.f32 0.0, %v420
        %v422 = vpop.f32.mrb[0].mxu0
        %423 = vdwg.mxu0
        %424 = vmatprep.subr.mxu0 0.0
        %425 = vmatpush1.msra.mxu0 %v291
        %426 = vmatprep.subr.mxu0 0.0
        %427 = vmatpush1.msra.mxu0 %v292
        %428 = vmatprep.subr.mxu0 0.0
        %429 = vmatpush1.msra.mxu0 %v293
        %430 = vmatprep.subr.mxu0 0.0
        %431 = vmatpush1.msra.mxu0 %v294
        %432 = vmatprep.subr.mxu0 0.0
        %433 = vmatpush1.msra.mxu0 %v295
        %434 = vmatprep.subr.mxu0 0.0
        %435 = vmatpush1.msra.mxu0 %v296
        %436 = vmatprep.subr.mxu0 0.0
        %437 = vmatpush1.msra.mxu0 %v297
        %438 = vmatprep.subr.mxu0 0.0
        %439 = vmatpush1.msra.mxu0 %v298
        %440 = vmatprep.subr.mxu0 0.0
        %441 = vmatpush1.msra.mxu0 %v299
        %442 = vmatprep.subr.mxu0 0.0
        %443 = vmatpush1.msra.mxu0 %v300
        %444 = vmatprep.subr.mxu0 0.0
        %445 = vmatpush1.msra.mxu0 %v301
        %446 = vmatprep.subr.mxu0 0.0
        %447 = vmatpush1.msra.mxu0 %v302
        %448 = vmatprep.subr.mxu0 0.0
        %449 = vmatpush1.msra.mxu0 %v303
        %450 = vmatprep.subr.mxu0 0.0
        %451 = vmatpush1.msra.mxu0 %v304
        %452 = vmatprep.subr.mxu0 0.0
        %453 = vmatpush1.msra.mxu0 %v305
        %454 = vmatprep.subr.mxu0 0.0
        %455 = vmatpush1.msra.mxu0 %v306
        %456 = vmatprep.subr.mxu0 0.0
        %457 = vmatpush1.msra.mxu0 %v307
        %458 = vmatprep.subr.mxu0 0.0
        %459 = vmatpush1.msra.mxu0 %v308
        %460 = vmatprep.subr.mxu0 0.0
        %461 = vmatpush1.msra.mxu0 %v309
        %462 = vmatprep.subr.mxu0 0.0
        %463 = vmatpush1.msra.mxu0 %v310
        %464 = vmatprep.subr.mxu0 0.0
        %465 = vmatpush1.msra.mxu0 %v311
        %466 = vmatprep.subr.mxu0 0.0
        %467 = vmatpush1.msra.mxu0 %v312
        %468 = vmatprep.subr.mxu0 0.0
        %469 = vmatpush1.msra.mxu0 %v313
        %470 = vmatprep.subr.mxu0 0.0
        %471 = vmatpush1.msra.mxu0 %v314
        %472 = vmatprep.subr.mxu0 0.0
        %473 = vmatpush1.msra.mxu0 %v315
        %474 = vmatprep.subr.mxu0 0.0
        %475 = vmatpush1.msra.mxu0 %v316
        %476 = vmatprep.subr.mxu0 0.0
        %477 = vmatpush1.msra.mxu0 %v317
        %478 = vmatprep.subr.mxu0 0.0
        %479 = vmatpush1.msra.mxu0 %v318
        %480 = vmatprep.subr.mxu0 0.0
        %481 = vmatpush1.msra.mxu0 %v319
        %482 = vmatprep.subr.mxu0 0.0
        %483 = vmatpush1.msra.mxu0 %v320
        %484 = vmatprep.subr.mxu0 0.0
        %485 = vmatpush1.msra.mxu0 %v321
        %486 = vmatprep.subr.mxu0 0.0
        %487 = vmatpush1.msra.mxu0 %v322
        %488 = vmatprep.mubr.f32.mxu0 %v242
        %489 = vmatmul.mubr.f32.gmra.mrb[0].mxu0 %v241
        %v490 = vpop.f32.mrb[0].mxu0
        %v491 = vadd.f32 %v406, %v490
        %v492 = vpop.f32.mrb[0].mxu0
        %493 = vmatprep.mubr.f32.mxu0 %v247
        %494 = vmatmul.mubr.f32.gmra.mrb[0].mxu0 %v246
        %v495 = vpop.f32.mrb[0].mxu0
        %v496 = vadd.f32 %v411, %v495
        %v497 = vpop.f32.mrb[0].mxu0
        %498 = vmatprep.mubr.f32.mxu0 %v252
        %499 = vmatmul.mubr.f32.gmra.mrb[0].mxu0 %v251
        %v500 = vpop.f32.mrb[0].mxu0
        %v501 = vadd.f32 %v416, %v500
        %v502 = vpop.f32.mrb[0].mxu0
        %503 = vmatprep.mubr.f32.mxu0 %v257
        %504 = vmatmul.mubr.f32.gmra.mrb[0].mxu0 %v256
        %v505 = vpop.f32.mrb[0].mxu0
        %v506 = vadd.f32 %v421, %v505
        %v507 = vpop.f32.mrb[0].mxu0
        %508 = vdwg.mxu0
        %509 = vmatprep.subr.mxu0 0.0
        %510 = vmatpush1.msra.mxu0 %v323
        %511 = vmatprep.subr.mxu0 0.0
        %512 = vmatpush1.msra.mxu0 %v324
        %513 = vmatprep.subr.mxu0 0.0
        %514 = vmatpush1.msra.mxu0 %v325
        %515 = vmatprep.subr.mxu0 0.0
        %516 = vmatpush1.msra.mxu0 %v326
        %517 = vmatprep.subr.mxu0 0.0
        %518 = vmatpush1.msra.mxu0 %v327
        %519 = vmatprep.subr.mxu0 0.0
        %520 = vmatpush1.msra.mxu0 %v328
        %521 = vmatprep.subr.mxu0 0.0
        %522 = vmatpush1.msra.mxu0 %v329
        %523 = vmatprep.subr.mxu0 0.0
        %524 = vmatpush1.msra.mxu0 %v330
        %525 = vmatprep.subr.mxu0 0.0
        %526 = vmatpush1.msra.mxu0 %v331
        %527 = vmatprep.subr.mxu0 0.0
        %528 = vmatpush1.msra.mxu0 %v332
        %529 = vmatprep.subr.mxu0 0.0
        %530 = vmatpush1.msra.mxu0 %v333
        %531 = vmatprep.subr.mxu0 0.0
        %532 = vmatpush1.msra.mxu0 %v334
        %533 = vmatprep.subr.mxu0 0.0
        %534 = vmatpush1.msra.mxu0 %v335
        %535 = vmatprep.subr.mxu0 0.0
        %536 = vmatpush1.msra.mxu0 %v336
        %537 = vmatprep.subr.mxu0 0.0
        %538 = vmatpush1.msra.mxu0 %v337
        %539 = vmatprep.subr.mxu0 0.0
        %540 = vmatpush1.msra.mxu0 %v338
        %541 = vmatprep.subr.mxu0 0.0
        %542 = vmatpush1.msra.mxu0 0.0
        %543 = vmatprep.subr.mxu0 0.0
        %544 = vmatpush1.msra.mxu0 0.0
        %545 = vmatprep.subr.mxu0 0.0
        %546 = vmatpush1.msra.mxu0 0.0
        %547 = vmatprep.subr.mxu0 0.0
        %548 = vmatpush1.msra.mxu0 0.0
        %549 = vmatprep.subr.mxu0 0.0
        %550 = vmatpush1.msra.mxu0 0.0
        %551 = vmatprep.subr.mxu0 0.0
        %552 = vmatpush1.msra.mxu0 0.0
        %553 = vmatprep.subr.mxu0 0.0
        %554 = vmatpush1.msra.mxu0 0.0
        %555 = vmatprep.subr.mxu0 0.0
        %556 = vmatpush1.msra.mxu0 0.0
        %557 = vmatprep.subr.mxu0 0.0
        %558 = vmatpush1.msra.mxu0 0.0
        %559 = vmatprep.subr.mxu0 0.0
        %560 = vmatpush1.msra.mxu0 0.0
        %561 = vmatprep.subr.mxu0 0.0
        %562 = vmatpush1.msra.mxu0 0.0
        %563 = vmatprep.subr.mxu0 0.0
        %564 = vmatpush1.msra.mxu0 0.0
        %565 = vmatprep.subr.mxu0 0.0
        %566 = vmatpush1.msra.mxu0 0.0
        %567 = vmatprep.subr.mxu0 0.0
        %568 = vmatpush1.msra.mxu0 0.0
        %569 = vmatprep.subr.mxu0 0.0
        %570 = vmatpush1.msra.mxu0 0.0
        %571 = vmatprep.subr.mxu0 0.0
        %572 = vmatpush1.msra.mxu0 0.0
        %573 = vmatprep.mubr.f32.mxu0 0.0
        %574 = vmatmul.mubr.f32.gmra.mrb[0].mxu0 %v243
        %v575 = vpop.f32.mrb[0].mxu0
        %v576 = vadd.f32 %v491, %v575
        %v577 = vpop.f32.mrb[0].mxu0
        %578 = vmatprep.mubr.f32.mxu0 0.0
        %579 = vmatmul.mubr.f32.gmra.mrb[0].mxu0 %v248
        %v580 = vpop.f32.mrb[0].mxu0
        %v581 = vadd.f32 %v496, %v580
        %v582 = vpop.f32.mrb[0].mxu0
        %583 = vmatprep.mubr.f32.mxu0 0.0
        %584 = vmatmul.mubr.f32.gmra.mrb[0].mxu0 %v253
        %v585 = vpop.f32.mrb[0].mxu0
        %v586 = vadd.f32 %v501, %v585
        %v587 = vpop.f32.mrb[0].mxu0
        %588 = vmatprep.mubr.f32.mxu0 0.0
        %589 = vmatmul.mubr.f32.gmra.mrb[0].mxu0 %v258
        %v590 = vpop.f32.mrb[0].mxu0
        %v591 = vadd.f32 %v506, %v590
        %v592 = vpop.f32.mrb[0].mxu0
        %593 = vdwg.mxu0
        %s594 = smul.u32 %s20, 32
        %s595 = scalar_lea.vmem [#allocation2], %s594
        %596 = vst [vmem:[%s595] sm:$0xff] %v576
        %597 = vst [vmem:[%s595 + $0x8] sm:$0xff] %v581
        %598 = vst [vmem:[%s595 + $0x10] sm:$0xff] %v586
        %599 = vst [vmem:[%s595 + $0x18] sm:$0xff] %v591
        %p600 = scmp.eq.s32.totalorder %s20, 0
        // Predicated region
        $region41: #{discriminator_forward.5} parent=39 // pred_check
          %p601 = pneg %p600
        $region42: #{discriminator_forward.5} parent=39 // pred_check_branch
          %603 = sbr.rel (%p601) target = $region44
        $region43: #{discriminator_forward.5} parent=39 // pred_region
          %604 = vst [vmem:[#allocation3] sm:$0x1] 0.0
          %605 = vst [vmem:[#allocation4] sm:$0x1] 0.0
        $region44: #{discriminator_forward.5} parent=39 // pred_fallthru
          _
        %v606 = vld [vmem:[#allocation3] sm:$0x1]
        %v607 = vadd.f32 %v576, %v581
        %v608 = vadd.f32 %v607, %v586
        %v609 = vadd.f32 %v608, %v591
        %v610 = vrot.slane %v609, 4
        %v611 = vadd.f32 %v609, %v610
        %v612 = vrot.slane %v611, 2
        %v613 = vadd.f32 %v611, %v612
        %v614 = vrot.slane %v613, 1
        %v615 = vadd.f32 %v613, %v614
        %v616 = vadd.f32 %v606, %v615
        %617 = vst [vmem:[#allocation3] sm:$0x1] %v616
        %v618 = vld [vmem:[#allocation4] sm:$0x1]
        %v619 = vmul.f32 %v576, %v576
        %v620 = vmul.f32 %v581, %v581
        %v621 = vmul.f32 %v586, %v586
        %v622 = vmul.f32 %v591, %v591
        %v623 = vadd.f32 %v619, %v620
        %v624 = vadd.f32 %v623, %v621
        %v625 = vadd.f32 %v624, %v622
        %v626 = vrot.slane %v625, 4
        %v627 = vadd.f32 %v625, %v626
        %v628 = vrot.slane %v627, 2
        %v629 = vadd.f32 %v627, %v628
        %v630 = vrot.slane %v629, 1
        %v631 = vadd.f32 %v629, %v630
        %v632 = vadd.f32 %v618, %v631
        %633 = vst [vmem:[#allocation4] sm:$0x1] %v632
      $region40: #{discriminator_forward.5} parent=35 // pred_fallthru
        _
      %p634 = scmp.eq.s32.totalorder %s19, 1
      // Predicated region
      $region45: #{discriminator_forward.5} parent=35 // pred_check
        %p635 = pneg %p634
      $region46: #{discriminator_forward.5} parent=35 // pred_check_branch
        %637 = sbr.rel (%p635) target = $region48
      $region47: #{discriminator_forward.5} parent=35 // pred_region
        %p638 = scmp.eq.s32.totalorder %s20, 0
        // Predicated region
        $region49: #{discriminator_forward.5} parent=47 // pred_check
          %p639 = pneg %p638
        $region50: #{discriminator_forward.5} parent=47 // pred_check_branch
          %641 = sbr.rel (%p639) target = $region52
        $region51: #{discriminator_forward.5} parent=47 // pred_region
          %v642 = vld [vmem:[#allocation3] sm:$0x1]
          %v643 = vmul.f32 %v642, 0.03125
          %v644 = vld [vmem:[#allocation4] sm:$0x1]
          %v645 = vmul.f32 %v644, 0.03125
          %v646 = vmul.f32 %v643, %v643
          %v647 = vsub.f32 %v645, %v646
          %v648 = vmax.f32 %v647, 0.0
          %v649 = vld [vmem:[%s2] sm:$0x1]
          %v650 = vadd.f32 %v648, 1e-05
          %v651 = vrsqrt.pop %v650
          %v652 = vmul.f32 %v649, %v651
          %653 = vst [vmem:[#allocation3] sm:$0x1] %v652
          %v654 = vld [vmem:[%s3] sm:$0x1]
          %v655 = vmul.f32 %v652, %v643
          %v656 = vsub.f32 %v654, %v655
          %657 = vst [vmem:[#allocation4] sm:$0x1] %v656
        $region52: #{discriminator_forward.5} parent=47 // pred_fallthru
          _
        %s658 = smul.u32 %s20, 32
        %s659 = scalar_lea.vmem [#allocation2], %s658
        %v660 = vld [vmem:[%s659] sm:$0xff]
        %v661 = vld [vmem:[%s659 + $0x8] sm:$0xff]
        %v662 = vld [vmem:[%s659 + $0x10] sm:$0xff]
        %v663 = vld [vmem:[%s659 + $0x18] sm:$0xff]
        %v664 = vld [vmem:[#allocation3] sm:$0x1]
        %v666 = vlaneseq
        %v667 = vshrl.u32 %v666, 7
        %v668 = vsub.s32 0, %v667
        %v669 = vrot.slane %v664, %v668
        %v671 = vmul.f32 %v669, %v660
        %v672 = vmul.f32 %v669, %v661
        %v673 = vmul.f32 %v669, %v662
        %v674 = vmul.f32 %v669, %v663
        %v675 = vld [vmem:[#allocation4] sm:$0x1]
        %v677 = vlaneseq
        %v678 = vshrl.u32 %v677, 7
        %v679 = vsub.s32 0, %v678
        %v680 = vrot.slane %v675, %v679
        %v682 = vadd.f32 %v671, %v680
        %v683 = vadd.f32 %v672, %v680
        %v684 = vadd.f32 %v673, %v680
        %v685 = vadd.f32 %v674, %v680
        %vm686 = vcmp.ge.f32.partialorder %v682, 0.0
        %vm687 = vcmp.ge.f32.partialorder %v683, 0.0
        %vm688 = vcmp.ge.f32.partialorder %v684, 0.0
        %vm689 = vcmp.ge.f32.partialorder %v685, 0.0
        %v690 = vmul.f32 %v682, 0.2
        %v691 = vmul.f32 %v683, 0.2
        %v692 = vmul.f32 %v684, 0.2
        %v693 = vmul.f32 %v685, 0.2
        %v694 = vsel %vm686, %v682, %v690
        %v695 = vsel %vm687, %v683, %v691
        %v696 = vsel %vm688, %v684, %v692
        %v697 = vsel %vm689, %v685, %v693
        %698 = vst [vmem:[%s232] sm:$0xff] %v694
        %699 = vst [vmem:[%s232 + $0x8] sm:$0xff] %v695
        %700 = vst [vmem:[%s232 + $0x10] sm:$0xff] %v696
        %701 = vst [vmem:[%s232 + $0x18] sm:$0xff] %v697
      $region48: #{discriminator_forward.5} parent=35 // pred_fallthru
        _
      %s702 = smul.u32 %s20, %s19
      %s703 = smul.u32 4, %s702
      %p704 = scmp.lt.s32.totalorder %s703, 3
      %s705 = scalar_select %p704, %s703, 3
      %s706 = smul.addr %s705, 8
      %s707 = scalar_lea.vmem %s4, %s706
      // Predicated region
      $region53: #{discriminator_forward.5} parent=35 // pred_check
        %p708 = pneg %p140
      $region54: #{discriminator_forward.5} parent=35 // pred_check_branch
        %710 = sbr.rel (%p708) target = $region56
      $region55: #{discriminator_forward.5} parent=35 // pred_region
        %s711 = smul.u32 %s20, %s19
        %s712 = smul.u32 4, %s711
      $region56: #{discriminator_forward.5} parent=35 // pred_fallthru
        _
    $region36: #{discriminator_forward.5} parent=5 // pred_fallthru
      _
    %p713 = scmp.le.s32.totalorder 2, %s10
    // Predicated region
    $region57: #{discriminator_forward.5} parent=5 // pred_check
      %p714 = pneg %p713
    $region58: #{discriminator_forward.5} parent=5 // pred_check_branch
      %716 = sbr.rel (%p714) target = $region60
    $region59: #{discriminator_forward.5} parent=5 // pred_region
      %s717 = ssub.s32 %s10, 2
      // Predicated region
      $region61: #{discriminator_forward.5} parent=59 // pred_check
        %p718 = pneg %p146
      $region62: #{discriminator_forward.5} parent=59 // pred_check_branch
        %720 = sbr.rel (%p718) target = $region64
      $region63: #{discriminator_forward.5} parent=59 // pred_region
        %s721 = smul.u32 %s22, %s21
        %s722 = smul.u32 4, %s721
        %p723 = scmp.lt.s32.totalorder %s722, 3
        %s724 = scalar_select %p723, %s722, 3
        %s725 = smul.addr %s724, 8
        %s726 = scalar_lea.vmem %s4, %s725
      $region64: #{discriminator_forward.5} parent=59 // pred_fallthru
        _
    $region60: #{discriminator_forward.5} parent=5 // pred_fallthru
      _
  $region6: #{discriminator_forward.5} parent=0 // loop_footer
    %s14 = sadd.s32 1, %s10
  $region7: #{discriminator_forward.5} parent=0 // loop_footer_branch
    %9 = sbr.rel target = $region3
  $region8: #{discriminator_forward.5} parent=0 // loop_exit
    _

// kernel: discriminator_forward.6
$region0: #{discriminator_forward.6}
  #allocation0 [shape = 'u32[]', space=smem, size = 0x4, offset = 0x4, fixed_abs, tag = 'smem constant byte address 0x4 - core index']
  #allocation1 [shape = 'u32[144,128]{1,0:T(1,128)}', space=vmem, size = 0x12000, scoped, tag = 'internal scratch']
  #allocation2 [shape = 'f32[1,8,256]{2,1,0:T(8,128)}', space=vmem, size = 0x2000, scoped, tag = 'scratch operand']
  #allocation3 [shape = 'f32[1,256]{1,0:T(1,128)}', space=vmem, size = 0x400, scoped, tag = 'scratch operand']
  #allocation4 [shape = 'f32[1,256]{1,0:T(1,128)}', space=vmem, size = 0x400, scoped, tag = 'scratch operand']
  %s0 = inlined_call_operand.vmem [shape: f32[8,1152], index: 0, kind: input, shape index: {}]
  %s1 = inlined_call_operand.vmem [shape: f32[1152,256], index: 1, kind: input, shape index: {}]
  %s2 = inlined_call_operand.vmem [shape: f32[1,256], index: 2, kind: input, shape index: {}]
  %s3 = inlined_call_operand.vmem [shape: f32[1,256], index: 3, kind: input, shape index: {}]
  %s4 = inlined_call_operand.vmem [shape: f32[8,256], index: 4, kind: output, shape index: {}]
  %s5 = sld [smem:[#allocation0]]
  $region65: #{discriminator_forward.6} parent=0
    _
  %s7 = ssub.s32 1, %s5
  %s8 = scalar_select 0, %s7, %s5
  loop: start=0, step=1, limit=4
  $region2: #{discriminator_forward.6} parent=0 // loop_pre_header
    _
  $region3: #{discriminator_forward.6} parent=0 // loop_header
    %s10 = sphi 0, %s14
    %p11 = scmp.ge.s32.totalorder %s10, 4
    %s17 = sphi 0, %s29
    %s18 = sphi 0, %s25
    %s19 = sphi 0, %s17
    %s20 = sphi 0, %s18
    %s21 = sphi 0, %s19
    %s22 = sphi 0, %s20
    %s36 = sphi 0, %s38
    %s39 = sphi 0, %s36
    %s40 = sphi 0, %s39
    %s56 = sphi 0, %s40
    %s60 = sphi 0, %s60
    %s62 = sphi 0, %s60
    %s63 = sphi 0, %s62
    %s77 = sphi 0, %s63
    %s81 = sphi 0, %s81
    %s83 = sphi 0, %s81
    %s84 = sphi 0, %s83
    %s98 = sphi 0, %s84
    %s102 = sphi 0, %s102
    %s104 = sphi 0, %s102
    %s105 = sphi 0, %s104
    %s119 = sphi 0, %s105
    %s127 = sphi 0, %s129
    %s130 = sphi 0, %s127
    %s131 = sphi 0, %s130
    %s147 = sphi 0, %s131
  $region4: #{discriminator_forward.6} parent=0 // loop_header_branch
    %13 = sbr.rel (%p11) target = $region8
  $region5: #{discriminator_forward.6} parent=0 // loop_body
    %s15 = ssub.s32 %s10, 1
    %s16 = ssub.s32 %s10, 2
    %s23 = sadd.s32 1, %s18
    %p24 = scmp.ge.s32.totalorder %s23, 1
    %s25 = scalar_select %p24, 0, %s23
    %s26 = sadd.s32 1, %s17
    %s27 = scalar_select %p24, %s26, %s17
    %p28 = scmp.ge.s32.totalorder %s27, 2
    %s29 = scalar_select %p28, 0, %s27
    %s30 = ssub.s32 1, %s17
    %s31 = smul.u32 %s18, %s30
    %s32 = ssub.s32 1, %s29
    %s33 = smul.u32 %s25, %s32
    %s34 = ssub.s32 %s31, %s33
    %p35 = scmp.eq.s32.totalorder %s34, 0
    %s37 = sadd.s32 %s36, 1
    %s38 = scalar_select %p35, %s36, %s37
    %p41 = pneg %p35
    %p42 = scmp.eq.s32.totalorder %s10, 1
    %p43 = por %p41, %p42
    %p44 = scmp.ne.s32.totalorder %s36, %s39
    %p45 = scmp.eq.s32.totalorder %s10, 0
    %p46 = por %p44, %p45
    %p47 = scmp.ne.s32.totalorder %s36, %s39
    %p48 = scmp.eq.s32.totalorder %s15, 1
    %p49 = por %p47, %p48
    %p50 = scmp.ne.s32.totalorder %s39, %s40
    %p51 = scmp.eq.s32.totalorder %s15, 0
    %p52 = por %p50, %p51
    %p53 = scmp.ne.s32.totalorder %s39, %s40
    %p54 = scmp.eq.s32.totalorder %s16, 1
    %p55 = por %p53, %p54
    %p57 = scmp.ne.s32.totalorder %s40, %s56
    %p58 = scmp.eq.s32.totalorder %s16, 0
    %p59 = por %p57, %p58
    %s61 = sadd.s32 %s60, 1
    %p64 = scmp.eq.s32.totalorder %s10, 1
    %p65 = scmp.ne.s32.totalorder %s60, %s62
    %p66 = scmp.eq.s32.totalorder %s10, 0
    %p67 = por %p65, %p66
    %p68 = scmp.ne.s32.totalorder %s60, %s62
    %p69 = scmp.eq.s32.totalorder %s15, 1
    %p70 = por %p68, %p69
    %p71 = scmp.ne.s32.totalorder %s62, %s63
    %p72 = scmp.eq.s32.totalorder %s15, 0
    %p73 = por %p71, %p72
    %p74 = scmp.ne.s32.totalorder %s62, %s63
    %p75 = scmp.eq.s32.totalorder %s16, 1
    %p76 = por %p74, %p75
    %p78 = scmp.ne.s32.totalorder %s63, %s77
    %p79 = scmp.eq.s32.totalorder %s16, 0
    %p80 = por %p78, %p79
    %s82 = sadd.s32 %s81, 1
    %p85 = scmp.eq.s32.totalorder %s10, 1
    %p86 = scmp.ne.s32.totalorder %s81, %s83
    %p87 = scmp.eq.s32.totalorder %s10, 0
    %p88 = por %p86, %p87
    %p89 = scmp.ne.s32.totalorder %s81, %s83
    %p90 = scmp.eq.s32.totalorder %s15, 1
    %p91 = por %p89, %p90
    %p92 = scmp.ne.s32.totalorder %s83, %s84
    %p93 = scmp.eq.s32.totalorder %s15, 0
    %p94 = por %p92, %p93
    %p95 = scmp.ne.s32.totalorder %s83, %s84
    %p96 = scmp.eq.s32.totalorder %s16, 1
    %p97 = por %p95, %p96
    %p99 = scmp.ne.s32.totalorder %s84, %s98
    %p100 = scmp.eq.s32.totalorder %s16, 0
    %p101 = por %p99, %p100
    %s103 = sadd.s32 %s102, 1
    %p106 = scmp.eq.s32.totalorder %s10, 1
    %p107 = scmp.ne.s32.totalorder %s102, %s104
    %p108 = scmp.eq.s32.totalorder %s10, 0
    %p109 = por %p107, %p108
    %p110 = scmp.ne.s32.totalorder %s102, %s104
    %p111 = scmp.eq.s32.totalorder %s15, 1
    %p112 = por %p110, %p111
    %p113 = scmp.ne.s32.totalorder %s104, %s105
    %p114 = scmp.eq.s32.totalorder %s15, 0
    %p115 = por %p113, %p114
    %p116 = scmp.ne.s32.totalorder %s104, %s105
    %p117 = scmp.eq.s32.totalorder %s16, 1
    %p118 = por %p116, %p117
    %p120 = scmp.ne.s32.totalorder %s105, %s119
    %p121 = scmp.eq.s32.totalorder %s16, 0
    %p122 = por %p120, %p121
    %s123 = smul.u32 %s18, %s17
    %s124 = smul.u32 %s25, %s29
    %s125 = ssub.s32 %s123, %s124
    %p126 = scmp.eq.s32.totalorder %s125, 0
    %s128 = sadd.s32 %s127, 1
    %s129 = scalar_select %p126, %s127, %s128
    %p132 = pneg %p126
    %p133 = scmp.eq.s32.totalorder %s10, 1
    %p134 = por %p132, %p133
    %p135 = scmp.ne.s32.totalorder %s127, %s130
    %p136 = scmp.eq.s32.totalorder %s10, 0
    %p137 = por %p135, %p136
    %p138 = scmp.ne.s32.totalorder %s127, %s130
    %p139 = scmp.eq.s32.totalorder %s15, 1
    %p140 = por %p138, %p139
    %p141 = scmp.ne.s32.totalorder %s130, %s131
    %p142 = scmp.eq.s32.totalorder %s15, 0
    %p143 = por %p141, %p142
    %p144 = scmp.ne.s32.totalorder %s130, %s131
    %p145 = scmp.eq.s32.totalorder %s16, 1
    %p146 = por %p144, %p145
    %p148 = scmp.ne.s32.totalorder %s131, %s147
    %p149 = scmp.eq.s32.totalorder %s16, 0
    %p150 = por %p148, %p149
    %p151 = scmp.le.s32.totalorder 1, %s10
    %p152 = scmp.lt.s32.totalorder %s10, 3
    %p153 = pnand %p151, %p152
    %p154 = pneg %p153
    // Predicated region
    $region9: #{discriminator_forward.6} parent=5 // pred_check
      _
    $region10: #{discriminator_forward.6} parent=5 // pred_check_branch
      %156 = sbr.rel (%p153) target = $region12
    $region11: #{discriminator_forward.6} parent=5 // pred_region
      %s157 = ssub.s32 %s10, 1
      // Predicated region
      $region13: #{discriminator_forward.6} parent=11 // pred_check
        %p158 = pneg %p73
      $region14: #{discriminator_forward.6} parent=11 // pred_check_branch
        %160 = sbr.rel (%p158) target = $region16
      $region15: #{discriminator_forward.6} parent=11 // pred_region
        _
      $region16: #{discriminator_forward.6} parent=11 // pred_fallthru
        _
      // Predicated region
      $region17: #{discriminator_forward.6} parent=11 // pred_check
        %p161 = pneg %p94
      $region18: #{discriminator_forward.6} parent=11 // pred_check_branch
        %163 = sbr.rel (%p161) target = $region20
      $region19: #{discriminator_forward.6} parent=11 // pred_region
        _
      $region20: #{discriminator_forward.6} parent=11 // pred_fallthru
        _
      // Predicated region
      $region21: #{discriminator_forward.6} parent=11 // pred_check
        %p164 = pneg %p115
      $region22: #{discriminator_forward.6} parent=11 // pred_check_branch
        %166 = sbr.rel (%p164) target = $region24
      $region23: #{discriminator_forward.6} parent=11 // pred_region
        _
      $region24: #{discriminator_forward.6} parent=11 // pred_fallthru
        _
    $region12: #{discriminator_forward.6} parent=5 // pred_fallthru
      _
    %p167 = scmp.lt.s32.totalorder %s10, 2
    // Predicated region
    $region25: #{discriminator_forward.6} parent=5 // pred_check
      %p168 = pneg %p167
    $region26: #{discriminator_forward.6} parent=5 // pred_check_branch
      %170 = sbr.rel (%p168) target = $region28
    $region27: #{discriminator_forward.6} parent=5 // pred_region
      // Predicated region
      $region29: #{discriminator_forward.6} parent=27 // pred_check
        %p171 = pneg %p46
      $region30: #{discriminator_forward.6} parent=27 // pred_check_branch
        %173 = sbr.rel (%p171) target = $region32
      $region31: #{discriminator_forward.6} parent=27 // pred_region
        %s174 = ssub.s32 1, %s17
        %s175 = smul.u32 %s18, %s174
        %p176 = scmp.lt.s32.totalorder %s175, 0
        %s177 = scalar_select %p176, %s175, 0
        %s178 = smul.addr %s177, 9
        %s179 = smul.addr %s178, 8
        %s180 = scalar_lea.vmem %s0, %s179
        %s181 = ssub.s32 1, %s17
        %s182 = smul.u32 %s18, %s181
      $region32: #{discriminator_forward.6} parent=27 // pred_fallthru
        _
    $region28: #{discriminator_forward.6} parent=5 // pred_fallthru
      _
    %p183 = scmp.le.s32.totalorder 1, %s10
    %p184 = scmp.lt.s32.totalorder %s10, 3
    %p185 = pnand %p183, %p184
    %p186 = pneg %p185
    // Predicated region
    $region33: #{discriminator_forward.6} parent=5 // pred_check
      _
    $region34: #{discriminator_forward.6} parent=5 // pred_check_branch
      %188 = sbr.rel (%p185) target = $region36
    $region35: #{discriminator_forward.6} parent=5 // pred_region
      %s189 = ssub.s32 %s10, 1
      %s190 = ssub.s32 1, %s19
      %s191 = smul.u32 %s20, %s190
      %p192 = scmp.lt.s32.totalorder %s191, 0
      %s193 = scalar_select %p192, %s191, 0
      %s194 = smul.addr %s193, 9
      %s195 = smul.addr %s194, 8
      %s196 = scalar_lea.vmem %s0, %s195
      %p197 = pneg %p52
      %p198 = pneg %p49
      %p199 = pneg %p73
      %p200 = pneg %p70
      %p201 = pneg %p94
      %p202 = pneg %p91
      %p203 = pneg %p115
      %p204 = pneg %p112
      %p205 = pneg %p143
      %p206 = pneg %p140
      %s207 = smul.u32 %s20, %s19
      %p208 = scmp.lt.s32.totalorder %s207, 0
      %s209 = scalar_select %p208, %s207, 0
      %s210 = smul.addr %s209, 2
      %s211 = smul.addr %s210, 8
      %s212 = scalar_lea.vmem %s4, %s211
      %s213 = ssub.s32 1, %s19
      %s214 = smul.u32 %s20, %s213
      %p215 = scmp.lt.s32.totalorder %s214, 0
      %s216 = scalar_select %p215, %s214, 0
      %s217 = smul.addr %s216, 9
      %s218 = smul.addr %s217, 8
      %s219 = scalar_lea.vmem %s0, %s218
      %s220 = ssub.s32 1, %s19
      %s221 = smul.u32 %s20, %s220
      %s222 = smul.u32 %s20, %s19
      %p223 = scmp.lt.s32.totalorder %s222, 0
      %s224 = scalar_select %p223, %s222, 0
      %s225 = smul.addr %s224, 2
      %s226 = smul.addr %s225, 8
      %s227 = scalar_lea.vmem %s4, %s226
      %s228 = smul.u32 %s20, %s19
      %p229 = scmp.eq.s32.totalorder %s19, 0
      // Predicated region
      $region37: #{discriminator_forward.6} parent=35 // pred_check
        %p230 = pneg %p229
      $region38: #{discriminator_forward.6} parent=35 // pred_check_branch
        %232 = sbr.rel (%p230) target = $region40
      $region39: #{discriminator_forward.6} parent=35 // pred_region
        %v233 = vld [vmem:[%s219] sm:$0xff]
        %v234 = vld [vmem:[%s219 + $0x8] sm:$0xff]
        %v235 = vld [vmem:[%s219 + $0x10] sm:$0xff]
        %v236 = vld [vmem:[%s219 + $0x18] sm:$0xff]
        %v237 = vld [vmem:[%s219 + $0x20] sm:$0xff]
        %v238 = vld [vmem:[%s219 + $0x28] sm:$0xff]
        %v239 = vld [vmem:[%s219 + $0x30] sm:$0xff]
        %v240 = vld [vmem:[%s219 + $0x38] sm:$0xff]
        %v241 = vld [vmem:[%s219 + $0x40] sm:$0xff]
        %v242 = vld [vmem:[%s1] sm:$0xff]
        %v243 = vld [vmem:[%s1 + $0x8] sm:$0xff]
        %v244 = vld [vmem:[%s1 + $0x10] sm:$0xff]
        %v245 = vld [vmem:[%s1 + $0x18] sm:$0xff]
        %v246 = vld [vmem:[%s1 + $0x20] sm:$0xff]
        %v247 = vld [vmem:[%s1 + $0x28] sm:$0xff]
        %v248 = vld [vmem:[%s1 + $0x30] sm:$0xff]
        %v249 = vld [vmem:[%s1 + $0x38] sm:$0xff]
        %v250 = vld [vmem:[%s1 + $0x40] sm:$0xff]
        %v251 = vld [vmem:[%s1 + $0x48] sm:$0xff]
        %v252 = vld [vmem:[%s1 + $0x50] sm:$0xff]
        %v253 = vld [vmem:[%s1 + $0x58] sm:$0xff]
        %v254 = vld [vmem:[%s1 + $0x60] sm:$0xff]
        %v255 = vld [vmem:[%s1 + $0x68] sm:$0xff]
        %v256 = vld [vmem:[%s1 + $0x70] sm:$0xff]
        %v257 = vld [vmem:[%s1 + $0x78] sm:$0xff]
        %v258 = vld [vmem:[%s1 + $0x80] sm:$0xff]
        %v259 = vld [vmem:[%s1 + $0x88] sm:$0xff]
        %v260 = vld [vmem:[%s1 + $0x90] sm:$0xff]
        %v261 = vld [vmem:[%s1 + $0x98] sm:$0xff]
        %v262 = vld [vmem:[%s1 + $0xa0] sm:$0xff]
        %v263 = vld [vmem:[%s1 + $0xa8] sm:$0xff]
        %v264 = vld [vmem:[%s1 + $0xb0] sm:$0xff]
        %v265 = vld [vmem:[%s1 + $0xb8] sm:$0xff]
        %v266 = vld [vmem:[%s1 + $0xc0] sm:$0xff]
        %v267 = vld [vmem:[%s1 + $0xc8] sm:$0xff]
        %v268 = vld [vmem:[%s1 + $0xd0] sm:$0xff]
        %v269 = vld [vmem:[%s1 + $0xd8] sm:$0xff]
        %v270 = vld [vmem:[%s1 + $0xe0] sm:$0xff]
        %v271 = vld [vmem:[%s1 + $0xe8] sm:$0xff]
        %v272 = vld [vmem:[%s1 + $0xf0] sm:$0xff]
        %v273 = vld [vmem:[%s1 + $0xf8] sm:$0xff]
        %v274 = vld [vmem:[%s1 + $0x100] sm:$0xff]
        %v275 = vld [vmem:[%s1 + $0x108] sm:$0xff]
        %v276 = vld [vmem:[%s1 + $0x110] sm:$0xff]
        %v277 = vld [vmem:[%s1 + $0x118] sm:$0xff]
        %v278 = vld [vmem:[%s1 + $0x120] sm:$0xff]
        %v279 = vld [vmem:[%s1 + $0x128] sm:$0xff]
        %v280 = vld [vmem:[%s1 + $0x130] sm:$0xff]
        %v281 = vld [vmem:[%s1 + $0x138] sm:$0xff]
        %v282 = vld [vmem:[%s1 + $0x140] sm:$0xff]
        %v283 = vld [vmem:[%s1 + $0x148] sm:$0xff]
        %v284 = vld [vmem:[%s1 + $0x150] sm:$0xff]
        %v285 = vld [vmem:[%s1 + $0x158] sm:$0xff]
        %v286 = vld [vmem:[%s1 + $0x160] sm:$0xff]
        %v287 = vld [vmem:[%s1 + $0x168] sm:$0xff]
        %v288 = vld [vmem:[%s1 + $0x170] sm:$0xff]
        %v289 = vld [vmem:[%s1 + $0x178] sm:$0xff]
        %v290 = vld [vmem:[%s1 + $0x180] sm:$0xff]
        %v291 = vld [vmem:[%s1 + $0x188] sm:$0xff]
        %v292 = vld [vmem:[%s1 + $0x190] sm:$0xff]
        %v293 = vld [vmem:[%s1 + $0x198] sm:$0xff]
        %v294 = vld [vmem:[%s1 + $0x1a0] sm:$0xff]
        %v295 = vld [vmem:[%s1 + $0x1a8] sm:$0xff]
        %v296 = vld [vmem:[%s1 + $0x1b0] sm:$0xff]
        %v297 = vld [vmem:[%s1 + $0x1b8] sm:$0xff]
        %v298 = vld [vmem:[%s1 + $0x1c0] sm:$0xff]
        %v299 = vld [vmem:[%s1 + $0x1c8] sm:$0xff]
        %v300 = vld [vmem:[%s1 + $0x1d0] sm:$0xff]
        %v301 = vld [vmem:[%s1 + $0x1d8] sm:$0xff]
        %v302 = vld [vmem:[%s1 + $0x1e0] sm:$0xff]
        %v303 = vld [vmem:[%s1 + $0x1e8] sm:$0xff]
        %v304 = vld [vmem:[%s1 + $0x1f0] sm:$0xff]
        %v305 = vld [vmem:[%s1 + $0x1f8] sm:$0xff]
        %v306 = vld [vmem:[%s1 + $0x200] sm:$0xff]
        %v307 = vld [vmem:[%s1 + $0x208] sm:$0xff]
        %v308 = vld [vmem:[%s1 + $0x210] sm:$0xff]
        %v309 = vld [vmem:[%s1 + $0x218] sm:$0xff]
        %v310 = vld [vmem:[%s1 + $0x220] sm:$0xff]
        %v311 = vld [vmem:[%s1 + $0x228] sm:$0xff]
        %v312 = vld [vmem:[%s1 + $0x230] sm:$0xff]
        %v313 = vld [vmem:[%s1 + $0x238] sm:$0xff]
        %v314 = vld [vmem:[%s1 + $0x240] sm:$0xff]
        %v315 = vld [vmem:[%s1 + $0x248] sm:$0xff]
        %v316 = vld [vmem:[%s1 + $0x250] sm:$0xff]
        %v317 = vld [vmem:[%s1 + $0x258] sm:$0xff]
        %v318 = vld [vmem:[%s1 + $0x260] sm:$0xff]
        %v319 = vld [vmem:[%s1 + $0x268] sm:$0xff]
        %v320 = vld [vmem:[%s1 + $0x270] sm:$0xff]
        %v321 = vld [vmem:[%s1 + $0x278] sm:$0xff]
        %v322 = vld [vmem:[%s1 + $0x280] sm:$0xff]
        %v323 = vld [vmem:[%s1 + $0x288] sm:$0xff]
        %v324 = vld [vmem:[%s1 + $0x290] sm:$0xff]
        %v325 = vld [vmem:[%s1 + $0x298] sm:$0xff]
        %v326 = vld [vmem:[%s1 + $0x2a0] sm:$0xff]
        %v327 = vld [vmem:[%s1 + $0x2a8] sm:$0xff]
        %v328 = vld [vmem:[%s1 + $0x2b0] sm:$0xff]
        %v329 = vld [vmem:[%s1 + $0x2b8] sm:$0xff]
        %v330 = vld [vmem:[%s1 + $0x2c0] sm:$0xff]
        %v331 = vld [vmem:[%s1 + $0x2c8] sm:$0xff]
        %v332 = vld [vmem:[%s1 + $0x2d0] sm:$0xff]
        %v333 = vld [vmem:[%s1 + $0x2d8] sm:$0xff]
        %v334 = vld [vmem:[%s1 + $0x2e0] sm:$0xff]
        %v335 = vld [vmem:[%s1 + $0x2e8] sm:$0xff]
        %v336 = vld [vmem:[%s1 + $0x2f0] sm:$0xff]
        %v337 = vld [vmem:[%s1 + $0x2f8] sm:$0xff]
        %v338 = vld [vmem:[%s1 + $0x300] sm:$0xff]
        %v339 = vld [vmem:[%s1 + $0x308] sm:$0xff]
        %v340 = vld [vmem:[%s1 + $0x310] sm:$0xff]
        %v341 = vld [vmem:[%s1 + $0x318] sm:$0xff]
        %v342 = vld [vmem:[%s1 + $0x320] sm:$0xff]
        %v343 = vld [vmem:[%s1 + $0x328] sm:$0xff]
        %v344 = vld [vmem:[%s1 + $0x330] sm:$0xff]
        %v345 = vld [vmem:[%s1 + $0x338] sm:$0xff]
        %v346 = vld [vmem:[%s1 + $0x340] sm:$0xff]
        %v347 = vld [vmem:[%s1 + $0x348] sm:$0xff]
        %v348 = vld [vmem:[%s1 + $0x350] sm:$0xff]
        %v349 = vld [vmem:[%s1 + $0x358] sm:$0xff]
        %v350 = vld [vmem:[%s1 + $0x360] sm:$0xff]
        %v351 = vld [vmem:[%s1 + $0x368] sm:$0xff]
        %v352 = vld [vmem:[%s1 + $0x370] sm:$0xff]
        %v353 = vld [vmem:[%s1 + $0x378] sm:$0xff]
        %v354 = vld [vmem:[%s1 + $0x380] sm:$0xff]
        %v355 = vld [vmem:[%s1 + $0x388] sm:$0xff]
        %v356 = vld [vmem:[%s1 + $0x390] sm:$0xff]
        %v357 = vld [vmem:[%s1 + $0x398] sm:$0xff]
        %v358 = vld [vmem:[%s1 + $0x3a0] sm:$0xff]
        %v359 = vld [vmem:[%s1 + $0x3a8] sm:$0xff]
        %v360 = vld [vmem:[%s1 + $0x3b0] sm:$0xff]
        %v361 = vld [vmem:[%s1 + $0x3b8] sm:$0xff]
        %v362 = vld [vmem:[%s1 + $0x3c0] sm:$0xff]
        %v363 = vld [vmem:[%s1 + $0x3c8] sm:$0xff]
        %v364 = vld [vmem:[%s1 + $0x3d0] sm:$0xff]
        %v365 = vld [vmem:[%s1 + $0x3d8] sm:$0xff]
        %v366 = vld [vmem:[%s1 + $0x3e0] sm:$0xff]
        %v367 = vld [vmem:[%s1 + $0x3e8] sm:$0xff]
        %v368 = vld [vmem:[%s1 + $0x3f0] sm:$0xff]
        %v369 = vld [vmem:[%s1 + $0x3f8] sm:$0xff]
        %v370 = vld [vmem:[%s1 + $0x400] sm:$0xff]
        %v371 = vld [vmem:[%s1 + $0x408] sm:$0xff]
        %v372 = vld [vmem:[%s1 + $0x410] sm:$0xff]
        %v373 = vld [vmem:[%s1 + $0x418] sm:$0xff]
        %v374 = vld [vmem:[%s1 + $0x420] sm:$0xff]
        %v375 = vld [vmem:[%s1 + $0x428] sm:$0xff]
        %v376 = vld [vmem:[%s1 + $0x430] sm:$0xff]
        %v377 = vld [vmem:[%s1 + $0x438] sm:$0xff]
        %v378 = vld [vmem:[%s1 + $0x440] sm:$0xff]
        %v379 = vld [vmem:[%s1 + $0x448] sm:$0xff]
        %v380 = vld [vmem:[%s1 + $0x450] sm:$0xff]
        %v381 = vld [vmem:[%s1 + $0x458] sm:$0xff]
        %v382 = vld [vmem:[%s1 + $0x460] sm:$0xff]
        %v383 = vld [vmem:[%s1 + $0x468] sm:$0xff]
        %v384 = vld [vmem:[%s1 + $0x470] sm:$0xff]
        %v385 = vld [vmem:[%s1 + $0x478] sm:$0xff]
        %v386 = vld [vmem:[%s1 + $0x480] sm:$0xff]
        %v387 = vld [vmem:[%s1 + $0x488] sm:$0xff]
        %v388 = vld [vmem:[%s1 + $0x490] sm:$0xff]
        %v389 = vld [vmem:[%s1 + $0x498] sm:$0xff]
        %v390 = vld [vmem:[%s1 + $0x4a0] sm:$0xff]
        %v391 = vld [vmem:[%s1 + $0x4a8] sm:$0xff]
        %v392 = vld [vmem:[%s1 + $0x4b0] sm:$0xff]
        %v393 = vld [vmem:[%s1 + $0x4b8] sm:$0xff]
        %v394 = vld [vmem:[%s1 + $0x4c0] sm:$0xff]
        %v395 = vld [vmem:[%s1 + $0x4c8] sm:$0xff]
        %v396 = vld [vmem:[%s1 + $0x4d0] sm:$0xff]
        %v397 = vld [vmem:[%s1 + $0x4d8] sm:$0xff]
        %v398 = vld [vmem:[%s1 + $0x4e0] sm:$0xff]
        %v399 = vld [vmem:[%s1 + $0x4e8] sm:$0xff]
        %v400 = vld [vmem:[%s1 + $0x4f0] sm:$0xff]
        %v401 = vld [vmem:[%s1 + $0x4f8] sm:$0xff]
        %v402 = vld [vmem:[%s1 + $0x500] sm:$0xff]
        %v403 = vld [vmem:[%s1 + $0x508] sm:$0xff]
        %v404 = vld [vmem:[%s1 + $0x510] sm:$0xff]
        %v405 = vld [vmem:[%s1 + $0x518] sm:$0xff]
        %v406 = vld [vmem:[%s1 + $0x520] sm:$0xff]
        %v407 = vld [vmem:[%s1 + $0x528] sm:$0xff]
        %v408 = vld [vmem:[%s1 + $0x530] sm:$0xff]
        %v409 = vld [vmem:[%s1 + $0x538] sm:$0xff]
        %v410 = vld [vmem:[%s1 + $0x540] sm:$0xff]
        %v411 = vld [vmem:[%s1 + $0x548] sm:$0xff]
        %v412 = vld [vmem:[%s1 + $0x550] sm:$0xff]
        %v413 = vld [vmem:[%s1 + $0x558] sm:$0xff]
        %v414 = vld [vmem:[%s1 + $0x560] sm:$0xff]
        %v415 = vld [vmem:[%s1 + $0x568] sm:$0xff]
        %v416 = vld [vmem:[%s1 + $0x570] sm:$0xff]
        %v417 = vld [vmem:[%s1 + $0x578] sm:$0xff]
        %v418 = vld [vmem:[%s1 + $0x580] sm:$0xff]
        %v419 = vld [vmem:[%s1 + $0x588] sm:$0xff]
        %v420 = vld [vmem:[%s1 + $0x590] sm:$0xff]
        %v421 = vld [vmem:[%s1 + $0x598] sm:$0xff]
        %v422 = vld [vmem:[%s1 + $0x5a0] sm:$0xff]
        %v423 = vld [vmem:[%s1 + $0x5a8] sm:$0xff]
        %v424 = vld [vmem:[%s1 + $0x5b0] sm:$0xff]
        %v425 = vld [vmem:[%s1 + $0x5b8] sm:$0xff]
        %v426 = vld [vmem:[%s1 + $0x5c0] sm:$0xff]
        %v427 = vld [vmem:[%s1 + $0x5c8] sm:$0xff]
        %v428 = vld [vmem:[%s1 + $0x5d0] sm:$0xff]
        %v429 = vld [vmem:[%s1 + $0x5d8] sm:$0xff]
        %v430 = vld [vmem:[%s1 + $0x5e0] sm:$0xff]
        %v431 = vld [vmem:[%s1 + $0x5e8] sm:$0xff]
        %v432 = vld [vmem:[%s1 + $0x5f0] sm:$0xff]
        %v433 = vld [vmem:[%s1 + $0x5f8] sm:$0xff]
        %v434 = vld [vmem:[%s1 + $0x600] sm:$0xff]
        %v435 = vld [vmem:[%s1 + $0x608] sm:$0xff]
        %v436 = vld [vmem:[%s1 + $0x610] sm:$0xff]
        %v437 = vld [vmem:[%s1 + $0x618] sm:$0xff]
        %v438 = vld [vmem:[%s1 + $0x620] sm:$0xff]
        %v439 = vld [vmem:[%s1 + $0x628] sm:$0xff]
        %v440 = vld [vmem:[%s1 + $0x630] sm:$0xff]
        %v441 = vld [vmem:[%s1 + $0x638] sm:$0xff]
        %v442 = vld [vmem:[%s1 + $0x640] sm:$0xff]
        %v443 = vld [vmem:[%s1 + $0x648] sm:$0xff]
        %v444 = vld [vmem:[%s1 + $0x650] sm:$0xff]
        %v445 = vld [vmem:[%s1 + $0x658] sm:$0xff]
        %v446 = vld [vmem:[%s1 + $0x660] sm:$0xff]
        %v447 = vld [vmem:[%s1 + $0x668] sm:$0xff]
        %v448 = vld [vmem:[%s1 + $0x670] sm:$0xff]
        %v449 = vld [vmem:[%s1 + $0x678] sm:$0xff]
        %v450 = vld [vmem:[%s1 + $0x680] sm:$0xff]
        %v451 = vld [vmem:[%s1 + $0x688] sm:$0xff]
        %v452 = vld [vmem:[%s1 + $0x690] sm:$0xff]
        %v453 = vld [vmem:[%s1 + $0x698] sm:$0xff]
        %v454 = vld [vmem:[%s1 + $0x6a0] sm:$0xff]
        %v455 = vld [vmem:[%s1 + $0x6a8] sm:$0xff]
        %v456 = vld [vmem:[%s1 + $0x6b0] sm:$0xff]
        %v457 = vld [vmem:[%s1 + $0x6b8] sm:$0xff]
        %v458 = vld [vmem:[%s1 + $0x6c0] sm:$0xff]
        %v459 = vld [vmem:[%s1 + $0x6c8] sm:$0xff]
        %v460 = vld [vmem:[%s1 + $0x6d0] sm:$0xff]
        %v461 = vld [vmem:[%s1 + $0x6d8] sm:$0xff]
        %v462 = vld [vmem:[%s1 + $0x6e0] sm:$0xff]
        %v463 = vld [vmem:[%s1 + $0x6e8] sm:$0xff]
        %v464 = vld [vmem:[%s1 + $0x6f0] sm:$0xff]
        %v465 = vld [vmem:[%s1 + $0x6f8] sm:$0xff]
        %v466 = vld [vmem:[%s1 + $0x700] sm:$0xff]
        %v467 = vld [vmem:[%s1 + $0x708] sm:$0xff]
        %v468 = vld [vmem:[%s1 + $0x710] sm:$0xff]
        %v469 = vld [vmem:[%s1 + $0x718] sm:$0xff]
        %v470 = vld [vmem:[%s1 + $0x720] sm:$0xff]
        %v471 = vld [vmem:[%s1 + $0x728] sm:$0xff]
        %v472 = vld [vmem:[%s1 + $0x730] sm:$0xff]
        %v473 = vld [vmem:[%s1 + $0x738] sm:$0xff]
        %v474 = vld [vmem:[%s1 + $0x740] sm:$0xff]
        %v475 = vld [vmem:[%s1 + $0x748] sm:$0xff]
        %v476 = vld [vmem:[%s1 + $0x750] sm:$0xff]
        %v477 = vld [vmem:[%s1 + $0x758] sm:$0xff]
        %v478 = vld [vmem:[%s1 + $0x760] sm:$0xff]
        %v479 = vld [vmem:[%s1 + $0x768] sm:$0xff]
        %v480 = vld [vmem:[%s1 + $0x770] sm:$0xff]
        %v481 = vld [vmem:[%s1 + $0x778] sm:$0xff]
        %v482 = vld [vmem:[%s1 + $0x780] sm:$0xff]
        %v483 = vld [vmem:[%s1 + $0x788] sm:$0xff]
        %v484 = vld [vmem:[%s1 + $0x790] sm:$0xff]
        %v485 = vld [vmem:[%s1 + $0x798] sm:$0xff]
        %v486 = vld [vmem:[%s1 + $0x7a0] sm:$0xff]
        %v487 = vld [vmem:[%s1 + $0x7a8] sm:$0xff]
        %v488 = vld [vmem:[%s1 + $0x7b0] sm:$0xff]
        %v489 = vld [vmem:[%s1 + $0x7b8] sm:$0xff]
        %v490 = vld [vmem:[%s1 + $0x7c0] sm:$0xff]
        %v491 = vld [vmem:[%s1 + $0x7c8] sm:$0xff]
        %v492 = vld [vmem:[%s1 + $0x7d0] sm:$0xff]
        %v493 = vld [vmem:[%s1 + $0x7d8] sm:$0xff]
        %v494 = vld [vmem:[%s1 + $0x7e0] sm:$0xff]
        %v495 = vld [vmem:[%s1 + $0x7e8] sm:$0xff]
        %v496 = vld [vmem:[%s1 + $0x7f0] sm:$0xff]
        %v497 = vld [vmem:[%s1 + $0x7f8] sm:$0xff]
        %v498 = vld [vmem:[%s1 + $0x800] sm:$0xff]
        %v499 = vld [vmem:[%s1 + $0x808] sm:$0xff]
        %v500 = vld [vmem:[%s1 + $0x810] sm:$0xff]
        %v501 = vld [vmem:[%s1 + $0x818] sm:$0xff]
        %v502 = vld [vmem:[%s1 + $0x820] sm:$0xff]
        %v503 = vld [vmem:[%s1 + $0x828] sm:$0xff]
        %v504 = vld [vmem:[%s1 + $0x830] sm:$0xff]
        %v505 = vld [vmem:[%s1 + $0x838] sm:$0xff]
        %v506 = vld [vmem:[%s1 + $0x840] sm:$0xff]
        %v507 = vld [vmem:[%s1 + $0x848] sm:$0xff]
        %v508 = vld [vmem:[%s1 + $0x850] sm:$0xff]
        %v509 = vld [vmem:[%s1 + $0x858] sm:$0xff]
        %v510 = vld [vmem:[%s1 + $0x860] sm:$0xff]
        %v511 = vld [vmem:[%s1 + $0x868] sm:$0xff]
        %v512 = vld [vmem:[%s1 + $0x870] sm:$0xff]
        %v513 = vld [vmem:[%s1 + $0x878] sm:$0xff]
        %v514 = vld [vmem:[%s1 + $0x880] sm:$0xff]
        %v515 = vld [vmem:[%s1 + $0x888] sm:$0xff]
        %v516 = vld [vmem:[%s1 + $0x890] sm:$0xff]
        %v517 = vld [vmem:[%s1 + $0x898] sm:$0xff]
        %v518 = vld [vmem:[%s1 + $0x8a0] sm:$0xff]
        %v519 = vld [vmem:[%s1 + $0x8a8] sm:$0xff]
        %v520 = vld [vmem:[%s1 + $0x8b0] sm:$0xff]
        %v521 = vld [vmem:[%s1 + $0x8b8] sm:$0xff]
        %v522 = vld [vmem:[%s1 + $0x8c0] sm:$0xff]
        %v523 = vld [vmem:[%s1 + $0x8c8] sm:$0xff]
        %v524 = vld [vmem:[%s1 + $0x8d0] sm:$0xff]
        %v525 = vld [vmem:[%s1 + $0x8d8] sm:$0xff]
        %v526 = vld [vmem:[%s1 + $0x8e0] sm:$0xff]
        %v527 = vld [vmem:[%s1 + $0x8e8] sm:$0xff]
        %v528 = vld [vmem:[%s1 + $0x8f0] sm:$0xff]
        %v529 = vld [vmem:[%s1 + $0x8f8] sm:$0xff]
        %530 = vmatprep.subr.mxu0 %v243
        %531 = vmatpush1.msra.mxu0 %v242
        %532 = vmatprep.subr.mxu0 %v245
        %533 = vmatpush1.msra.mxu0 %v244
        %534 = vmatprep.subr.mxu0 %v247
        %535 = vmatpush1.msra.mxu0 %v246
        %536 = vmatprep.subr.mxu0 %v249
        %537 = vmatpush1.msra.mxu0 %v248
        %538 = vmatprep.subr.mxu0 %v251
        %539 = vmatpush1.msra.mxu0 %v250
        %540 = vmatprep.subr.mxu0 %v253
        %541 = vmatpush1.msra.mxu0 %v252
        %542 = vmatprep.subr.mxu0 %v255
        %543 = vmatpush1.msra.mxu0 %v254
        %544 = vmatprep.subr.mxu0 %v257
        %545 = vmatpush1.msra.mxu0 %v256
        %546 = vmatprep.subr.mxu0 %v259
        %547 = vmatpush1.msra.mxu0 %v258
        %548 = vmatprep.subr.mxu0 %v261
        %549 = vmatpush1.msra.mxu0 %v260
        %550 = vmatprep.subr.mxu0 %v263
        %551 = vmatpush1.msra.mxu0 %v262
        %552 = vmatprep.subr.mxu0 %v265
        %553 = vmatpush1.msra.mxu0 %v264
        %554 = vmatprep.subr.mxu0 %v267
        %555 = vmatpush1.msra.mxu0 %v266
        %556 = vmatprep.subr.mxu0 %v269
        %557 = vmatpush1.msra.mxu0 %v268
        %558 = vmatprep.subr.mxu0 %v271
        %559 = vmatpush1.msra.mxu0 %v270
        %560 = vmatprep.subr.mxu0 %v273
        %561 = vmatpush1.msra.mxu0 %v272
        %562 = vmatprep.subr.mxu0 %v275
        %563 = vmatpush1.msra.mxu0 %v274
        %564 = vmatprep.subr.mxu0 %v277
        %565 = vmatpush1.msra.mxu0 %v276
        %566 = vmatprep.subr.mxu0 %v279
        %567 = vmatpush1.msra.mxu0 %v278
        %568 = vmatprep.subr.mxu0 %v281
        %569 = vmatpush1.msra.mxu0 %v280
        %570 = vmatprep.subr.mxu0 %v283
        %571 = vmatpush1.msra.mxu0 %v282
        %572 = vmatprep.subr.mxu0 %v285
        %573 = vmatpush1.msra.mxu0 %v284
        %574 = vmatprep.subr.mxu0 %v287
        %575 = vmatpush1.msra.mxu0 %v286
        %576 = vmatprep.subr.mxu0 %v289
        %577 = vmatpush1.msra.mxu0 %v288
        %578 = vmatprep.subr.mxu0 %v291
        %579 = vmatpush1.msra.mxu0 %v290
        %580 = vmatprep.subr.mxu0 %v293
        %581 = vmatpush1.msra.mxu0 %v292
        %582 = vmatprep.subr.mxu0 %v295
        %583 = vmatpush1.msra.mxu0 %v294
        %584 = vmatprep.subr.mxu0 %v297
        %585 = vmatpush1.msra.mxu0 %v296
        %586 = vmatprep.subr.mxu0 %v299
        %587 = vmatpush1.msra.mxu0 %v298
        %588 = vmatprep.subr.mxu0 %v301
        %589 = vmatpush1.msra.mxu0 %v300
        %590 = vmatprep.subr.mxu0 %v303
        %591 = vmatpush1.msra.mxu0 %v302
        %592 = vmatprep.subr.mxu0 %v305
        %593 = vmatpush1.msra.mxu0 %v304
        %594 = vmatprep.mubr.f32.mxu0 %v234
        %595 = vmatmul.mubr.f32.gmra.mrb[0].mxu0 %v233
        %v596 = vpop.f32.mrb[0].mxu0
        %v597 = vadd.f32 0.0, %v596
        %v598 = vpop.f32.mrb[0].mxu0
        %v599 = vadd.f32 0.0, %v598
        %600 = vdwg.mxu0
        %601 = vmatprep.subr.mxu0 %v307
        %602 = vmatpush1.msra.mxu0 %v306
        %603 = vmatprep.subr.mxu0 %v309
        %604 = vmatpush1.msra.mxu0 %v308
        %605 = vmatprep.subr.mxu0 %v311
        %606 = vmatpush1.msra.mxu0 %v310
        %607 = vmatprep.subr.mxu0 %v313
        %608 = vmatpush1.msra.mxu0 %v312
        %609 = vmatprep.subr.mxu0 %v315
        %610 = vmatpush1.msra.mxu0 %v314
        %611 = vmatprep.subr.mxu0 %v317
        %612 = vmatpush1.msra.mxu0 %v316
        %613 = vmatprep.subr.mxu0 %v319
        %614 = vmatpush1.msra.mxu0 %v318
        %615 = vmatprep.subr.mxu0 %v321
        %616 = vmatpush1.msra.mxu0 %v320
        %617 = vmatprep.subr.mxu0 %v323
        %618 = vmatpush1.msra.mxu0 %v322
        %619 = vmatprep.subr.mxu0 %v325
        %620 = vmatpush1.msra.mxu0 %v324
        %621 = vmatprep.subr.mxu0 %v327
        %622 = vmatpush1.msra.mxu0 %v326
        %623 = vmatprep.subr.mxu0 %v329
        %624 = vmatpush1.msra.mxu0 %v328
        %625 = vmatprep.subr.mxu0 %v331
        %626 = vmatpush1.msra.mxu0 %v330
        %627 = vmatprep.subr.mxu0 %v333
        %628 = vmatpush1.msra.mxu0 %v332
        %629 = vmatprep.subr.mxu0 %v335
        %630 = vmatpush1.msra.mxu0 %v334
        %631 = vmatprep.subr.mxu0 %v337
        %632 = vmatpush1.msra.mxu0 %v336
        %633 = vmatprep.subr.mxu0 %v339
        %634 = vmatpush1.msra.mxu0 %v338
        %635 = vmatprep.subr.mxu0 %v341
        %636 = vmatpush1.msra.mxu0 %v340
        %637 = vmatprep.subr.mxu0 %v343
        %638 = vmatpush1.msra.mxu0 %v342
        %639 = vmatprep.subr.mxu0 %v345
        %640 = vmatpush1.msra.mxu0 %v344
        %641 = vmatprep.subr.mxu0 %v347
        %642 = vmatpush1.msra.mxu0 %v346
        %643 = vmatprep.subr.mxu0 %v349
        %644 = vmatpush1.msra.mxu0 %v348
        %645 = vmatprep.subr.mxu0 %v351
        %646 = vmatpush1.msra.mxu0 %v350
        %647 = vmatprep.subr.mxu0 %v353
        %648 = vmatpush1.msra.mxu0 %v352
        %649 = vmatprep.subr.mxu0 %v355
        %650 = vmatpush1.msra.mxu0 %v354
        %651 = vmatprep.subr.mxu0 %v357
        %652 = vmatpush1.msra.mxu0 %v356
        %653 = vmatprep.subr.mxu0 %v359
        %654 = vmatpush1.msra.mxu0 %v358
        %655 = vmatprep.subr.mxu0 %v361
        %656 = vmatpush1.msra.mxu0 %v360
        %657 = vmatprep.subr.mxu0 %v363
        %658 = vmatpush1.msra.mxu0 %v362
        %659 = vmatprep.subr.mxu0 %v365
        %660 = vmatpush1.msra.mxu0 %v364
        %661 = vmatprep.subr.mxu0 %v367
        %662 = vmatpush1.msra.mxu0 %v366
        %663 = vmatprep.subr.mxu0 %v369
        %664 = vmatpush1.msra.mxu0 %v368
        %665 = vmatprep.mubr.f32.mxu0 %v236
        %666 = vmatmul.mubr.f32.gmra.mrb[0].mxu0 %v235
        %v667 = vpop.f32.mrb[0].mxu0
        %v668 = vadd.f32 %v597, %v667
        %v669 = vpop.f32.mrb[0].mxu0
        %v670 = vadd.f32 %v599, %v669
        %671 = vdwg.mxu0
        %672 = vmatprep.subr.mxu0 %v371
        %673 = vmatpush1.msra.mxu0 %v370
        %674 = vmatprep.subr.mxu0 %v373
        %675 = vmatpush1.msra.mxu0 %v372
        %676 = vmatprep.subr.mxu0 %v375
        %677 = vmatpush1.msra.mxu0 %v374
        %678 = vmatprep.subr.mxu0 %v377
        %679 = vmatpush1.msra.mxu0 %v376
        %680 = vmatprep.subr.mxu0 %v379
        %681 = vmatpush1.msra.mxu0 %v378
        %682 = vmatprep.subr.mxu0 %v381
        %683 = vmatpush1.msra.mxu0 %v380
        %684 = vmatprep.subr.mxu0 %v383
        %685 = vmatpush1.msra.mxu0 %v382
        %686 = vmatprep.subr.mxu0 %v385
        %687 = vmatpush1.msra.mxu0 %v384
        %688 = vmatprep.subr.mxu0 %v387
        %689 = vmatpush1.msra.mxu0 %v386
        %690 = vmatprep.subr.mxu0 %v389
        %691 = vmatpush1.msra.mxu0 %v388
        %692 = vmatprep.subr.mxu0 %v391
        %693 = vmatpush1.msra.mxu0 %v390
        %694 = vmatprep.subr.mxu0 %v393
        %695 = vmatpush1.msra.mxu0 %v392
        %696 = vmatprep.subr.mxu0 %v395
        %697 = vmatpush1.msra.mxu0 %v394
        %698 = vmatprep.subr.mxu0 %v397
        %699 = vmatpush1.msra.mxu0 %v396
        %700 = vmatprep.subr.mxu0 %v399
        %701 = vmatpush1.msra.mxu0 %v398
        %702 = vmatprep.subr.mxu0 %v401
        %703 = vmatpush1.msra.mxu0 %v400
        %704 = vmatprep.subr.mxu0 %v403
        %705 = vmatpush1.msra.mxu0 %v402
        %706 = vmatprep.subr.mxu0 %v405
        %707 = vmatpush1.msra.mxu0 %v404
        %708 = vmatprep.subr.mxu0 %v407
        %709 = vmatpush1.msra.mxu0 %v406
        %710 = vmatprep.subr.mxu0 %v409
        %711 = vmatpush1.msra.mxu0 %v408
        %712 = vmatprep.subr.mxu0 %v411
        %713 = vmatpush1.msra.mxu0 %v410
        %714 = vmatprep.subr.mxu0 %v413
        %715 = vmatpush1.msra.mxu0 %v412
        %716 = vmatprep.subr.mxu0 %v415
        %717 = vmatpush1.msra.mxu0 %v414
        %718 = vmatprep.subr.mxu0 %v417
        %719 = vmatpush1.msra.mxu0 %v416
        %720 = vmatprep.subr.mxu0 %v419
        %721 = vmatpush1.msra.mxu0 %v418
        %722 = vmatprep.subr.mxu0 %v421
        %723 = vmatpush1.msra.mxu0 %v420
        %724 = vmatprep.subr.mxu0 %v423
        %725 = vmatpush1.msra.mxu0 %v422
        %726 = vmatprep.subr.mxu0 %v425
        %727 = vmatpush1.msra.mxu0 %v424
        %728 = vmatprep.subr.mxu0 %v427
        %729 = vmatpush1.msra.mxu0 %v426
        %730 = vmatprep.subr.mxu0 %v429
        %731 = vmatpush1.msra.mxu0 %v428
        %732 = vmatprep.subr.mxu0 %v431
        %733 = vmatpush1.msra.mxu0 %v430
        %734 = vmatprep.subr.mxu0 %v433
        %735 = vmatpush1.msra.mxu0 %v432
        %736 = vmatprep.mubr.f32.mxu0 %v238
        %737 = vmatmul.mubr.f32.gmra.mrb[0].mxu0 %v237
        %v738 = vpop.f32.mrb[0].mxu0
        %v739 = vadd.f32 %v668, %v738
        %v740 = vpop.f32.mrb[0].mxu0
        %v741 = vadd.f32 %v670, %v740
        %742 = vdwg.mxu0
        %743 = vmatprep.subr.mxu0 %v435
        %744 = vmatpush1.msra.mxu0 %v434
        %745 = vmatprep.subr.mxu0 %v437
        %746 = vmatpush1.msra.mxu0 %v436
        %747 = vmatprep.subr.mxu0 %v439
        %748 = vmatpush1.msra.mxu0 %v438
        %749 = vmatprep.subr.mxu0 %v441
        %750 = vmatpush1.msra.mxu0 %v440
        %751 = vmatprep.subr.mxu0 %v443
        %752 = vmatpush1.msra.mxu0 %v442
        %753 = vmatprep.subr.mxu0 %v445
        %754 = vmatpush1.msra.mxu0 %v444
        %755 = vmatprep.subr.mxu0 %v447
        %756 = vmatpush1.msra.mxu0 %v446
        %757 = vmatprep.subr.mxu0 %v449
        %758 = vmatpush1.msra.mxu0 %v448
        %759 = vmatprep.subr.mxu0 %v451
        %760 = vmatpush1.msra.mxu0 %v450
        %761 = vmatprep.subr.mxu0 %v453
        %762 = vmatpush1.msra.mxu0 %v452
        %763 = vmatprep.subr.mxu0 %v455
        %764 = vmatpush1.msra.mxu0 %v454
        %765 = vmatprep.subr.mxu0 %v457
        %766 = vmatpush1.msra.mxu0 %v456
        %767 = vmatprep.subr.mxu0 %v459
        %768 = vmatpush1.msra.mxu0 %v458
        %769 = vmatprep.subr.mxu0 %v461
        %770 = vmatpush1.msra.mxu0 %v460
        %771 = vmatprep.subr.mxu0 %v463
        %772 = vmatpush1.msra.mxu0 %v462
        %773 = vmatprep.subr.mxu0 %v465
        %774 = vmatpush1.msra.mxu0 %v464
        %775 = vmatprep.subr.mxu0 %v467
        %776 = vmatpush1.msra.mxu0 %v466
        %777 = vmatprep.subr.mxu0 %v469
        %778 = vmatpush1.msra.mxu0 %v468
        %779 = vmatprep.subr.mxu0 %v471
        %780 = vmatpush1.msra.mxu0 %v470
        %781 = vmatprep.subr.mxu0 %v473
        %782 = vmatpush1.msra.mxu0 %v472
        %783 = vmatprep.subr.mxu0 %v475
        %784 = vmatpush1.msra.mxu0 %v474
        %785 = vmatprep.subr.mxu0 %v477
        %786 = vmatpush1.msra.mxu0 %v476
        %787 = vmatprep.subr.mxu0 %v479
        %788 = vmatpush1.msra.mxu0 %v478
        %789 = vmatprep.subr.mxu0 %v481
        %790 = vmatpush1.msra.mxu0 %v480
        %791 = vmatprep.subr.mxu0 %v483
        %792 = vmatpush1.msra.mxu0 %v482
        %793 = vmatprep.subr.mxu0 %v485
        %794 = vmatpush1.msra.mxu0 %v484
        %795 = vmatprep.subr.mxu0 %v487
        %796 = vmatpush1.msra.mxu0 %v486
        %797 = vmatprep.subr.mxu0 %v489
        %798 = vmatpush1.msra.mxu0 %v488
        %799 = vmatprep.subr.mxu0 %v491
        %800 = vmatpush1.msra.mxu0 %v490
        %801 = vmatprep.subr.mxu0 %v493
        %802 = vmatpush1.msra.mxu0 %v492
        %803 = vmatprep.subr.mxu0 %v495
        %804 = vmatpush1.msra.mxu0 %v494
        %805 = vmatprep.subr.mxu0 %v497
        %806 = vmatpush1.msra.mxu0 %v496
        %807 = vmatprep.mubr.f32.mxu0 %v240
        %808 = vmatmul.mubr.f32.gmra.mrb[0].mxu0 %v239
        %v809 = vpop.f32.mrb[0].mxu0
        %v810 = vadd.f32 %v739, %v809
        %v811 = vpop.f32.mrb[0].mxu0
        %v812 = vadd.f32 %v741, %v811
        %813 = vdwg.mxu0
        %814 = vmatprep.subr.mxu0 %v499
        %815 = vmatpush1.msra.mxu0 %v498
        %816 = vmatprep.subr.mxu0 %v501
        %817 = vmatpush1.msra.mxu0 %v500
        %818 = vmatprep.subr.mxu0 %v503
        %819 = vmatpush1.msra.mxu0 %v502
        %820 = vmatprep.subr.mxu0 %v505
        %821 = vmatpush1.msra.mxu0 %v504
        %822 = vmatprep.subr.mxu0 %v507
        %823 = vmatpush1.msra.mxu0 %v506
        %824 = vmatprep.subr.mxu0 %v509
        %825 = vmatpush1.msra.mxu0 %v508
        %826 = vmatprep.subr.mxu0 %v511
        %827 = vmatpush1.msra.mxu0 %v510
        %828 = vmatprep.subr.mxu0 %v513
        %829 = vmatpush1.msra.mxu0 %v512
        %830 = vmatprep.subr.mxu0 %v515
        %831 = vmatpush1.msra.mxu0 %v514
        %832 = vmatprep.subr.mxu0 %v517
        %833 = vmatpush1.msra.mxu0 %v516
        %834 = vmatprep.subr.mxu0 %v519
        %835 = vmatpush1.msra.mxu0 %v518
        %836 = vmatprep.subr.mxu0 %v521
        %837 = vmatpush1.msra.mxu0 %v520
        %838 = vmatprep.subr.mxu0 %v523
        %839 = vmatpush1.msra.mxu0 %v522
        %840 = vmatprep.subr.mxu0 %v525
        %841 = vmatpush1.msra.mxu0 %v524
        %842 = vmatprep.subr.mxu0 %v527
        %843 = vmatpush1.msra.mxu0 %v526
        %844 = vmatprep.subr.mxu0 %v529
        %845 = vmatpush1.msra.mxu0 %v528
        %846 = vmatprep.subr.mxu0 0.0
        %847 = vmatpush1.msra.mxu0 0.0
        %848 = vmatprep.subr.mxu0 0.0
        %849 = vmatpush1.msra.mxu0 0.0
        %850 = vmatprep.subr.mxu0 0.0
        %851 = vmatpush1.msra.mxu0 0.0
        %852 = vmatprep.subr.mxu0 0.0
        %853 = vmatpush1.msra.mxu0 0.0
        %854 = vmatprep.subr.mxu0 0.0
        %855 = vmatpush1.msra.mxu0 0.0
        %856 = vmatprep.subr.mxu0 0.0
        %857 = vmatpush1.msra.mxu0 0.0
        %858 = vmatprep.subr.mxu0 0.0
        %859 = vmatpush1.msra.mxu0 0.0
        %860 = vmatprep.subr.mxu0 0.0
        %861 = vmatpush1.msra.mxu0 0.0
        %862 = vmatprep.subr.mxu0 0.0
        %863 = vmatpush1.msra.mxu0 0.0
        %864 = vmatprep.subr.mxu0 0.0
        %865 = vmatpush1.msra.mxu0 0.0
        %866 = vmatprep.subr.mxu0 0.0
        %867 = vmatpush1.msra.mxu0 0.0
        %868 = vmatprep.subr.mxu0 0.0
        %869 = vmatpush1.msra.mxu0 0.0
        %870 = vmatprep.subr.mxu0 0.0
        %871 = vmatpush1.msra.mxu0 0.0
        %872 = vmatprep.subr.mxu0 0.0
        %873 = vmatpush1.msra.mxu0 0.0
        %874 = vmatprep.subr.mxu0 0.0
        %875 = vmatpush1.msra.mxu0 0.0
        %876 = vmatprep.subr.mxu0 0.0
        %877 = vmatpush1.msra.mxu0 0.0
        %878 = vmatprep.mubr.f32.mxu0 0.0
        %879 = vmatmul.mubr.f32.gmra.mrb[0].mxu0 %v241
        %v880 = vpop.f32.mrb[0].mxu0
        %v881 = vadd.f32 %v810, %v880
        %v882 = vpop.f32.mrb[0].mxu0
        %v883 = vadd.f32 %v812, %v882
        %884 = vdwg.mxu0
        %s885 = smul.u32 %s20, 2
        %s886 = smul.addr %s885, 8
        %s887 = scalar_lea.vmem [#allocation2], %s886
        %888 = vst [vmem:[%s887] sm:$0xff] %v881
        %889 = vst [vmem:[%s887 + $0x8] sm:$0xff] %v883
        %p890 = scmp.eq.s32.totalorder %s20, 0
        // Predicated region
        $region41: #{discriminator_forward.6} parent=39 // pred_check
          %p891 = pneg %p890
        $region42: #{discriminator_forward.6} parent=39 // pred_check_branch
          %893 = sbr.rel (%p891) target = $region44
        $region43: #{discriminator_forward.6} parent=39 // pred_region
          %v894 = vlaneseq
          %vm895 = vcmp.ge.s32.totalorder %v894, 0
          %vm896 = vcmp.lt.s32.totalorder %v894, 256
          %vm897 = vmand %vm895, %vm896
          %898 = vst.msk [vmem:[#allocation3] sm:$0x3] %vm897, 0.0
          %899 = vst.msk [vmem:[#allocation4] sm:$0x3] %vm897, 0.0
        $region44: #{discriminator_forward.6} parent=39 // pred_fallthru
          _
        %v900 = vld [vmem:[#allocation3] sm:$0x3]
        %v901 = vrot.slane %v881, 4
        %v902 = vadd.f32 %v881, %v901
        %v903 = vrot.slane %v902, 2
        %v904 = vadd.f32 %v902, %v903
        %v905 = vrot.slane %v904, 1
        %v906 = vadd.f32 %v904, %v905
        %v907 = vrot.slane %v883, 4
        %v908 = vadd.f32 %v883, %v907
        %v909 = vrot.slane %v908, 2
        %v910 = vadd.f32 %v908, %v909
        %v911 = vrot.slane %v910, 1
        %v912 = vadd.f32 %v910, %v911
        %v915 = vcombine.low %v906, %v912
        %v917 = vunpack.c.l.s4 1966171168
        %v918 = vunpack.c.0.s8 %v917
        %v919 = vlaneseq
        %v920 = vshrl.u32 %v919, 7
        %v921 = vsub.s32 %v918, %v920
        %v922 = vrot.slane %v915, %v921
        %v924 = vunpack.c.l.s4 1966171168
        %v925 = vunpack.c.0.s8 %v924
        %v926 = vlaneseq
        %v927 = vshrl.u32 %v926, 7
        %v928 = vsub.s32 %v925, %v927
        %v929 = vrot.slane %v922, %v928
        %v931 = vadd.f32 %v900, %v929
        %v932 = vlaneseq
        %vm933 = vcmp.ge.s32.totalorder %v932, 0
        %vm934 = vcmp.lt.s32.totalorder %v932, 256
        %vm935 = vmand %vm933, %vm934
        %936 = vst.msk [vmem:[#allocation3] sm:$0x3] %vm935, %v931
        %v937 = vld [vmem:[#allocation4] sm:$0x3]
        %v938 = vmul.f32 %v881, %v881
        %v939 = vmul.f32 %v883, %v883
        %v940 = vrot.slane %v938, 4
        %v941 = vadd.f32 %v938, %v940
        %v942 = vrot.slane %v941, 2
        %v943 = vadd.f32 %v941, %v942
        %v944 = vrot.slane %v943, 1
        %v945 = vadd.f32 %v943, %v944
        %v946 = vrot.slane %v939, 4
        %v947 = vadd.f32 %v939, %v946
        %v948 = vrot.slane %v947, 2
        %v949 = vadd.f32 %v947, %v948
        %v950 = vrot.slane %v949, 1
        %v951 = vadd.f32 %v949, %v950
        %v954 = vcombine.low %v945, %v951
        %v956 = vunpack.c.l.s4 1966171168
        %v957 = vunpack.c.0.s8 %v956
        %v958 = vlaneseq
        %v959 = vshrl.u32 %v958, 7
        %v960 = vsub.s32 %v957, %v959
        %v961 = vrot.slane %v954, %v960
        %v963 = vunpack.c.l.s4 1966171168
        %v964 = vunpack.c.0.s8 %v963
        %v965 = vlaneseq
        %v966 = vshrl.u32 %v965, 7
        %v967 = vsub.s32 %v964, %v966
        %v968 = vrot.slane %v961, %v967
        %v970 = vadd.f32 %v937, %v968
        %971 = vst.msk [vmem:[#allocation4] sm:$0x3] %vm935, %v970
      $region40: #{discriminator_forward.6} parent=35 // pred_fallthru
        _
      %p972 = scmp.eq.s32.totalorder %s19, 1
      // Predicated region
      $region45: #{discriminator_forward.6} parent=35 // pred_check
        %p973 = pneg %p972
      $region46: #{discriminator_forward.6} parent=35 // pred_check_branch
        %975 = sbr.rel (%p973) target = $region48
      $region47: #{discriminator_forward.6} parent=35 // pred_region
        %p976 = scmp.eq.s32.totalorder %s20, 0
        // Predicated region
        $region49: #{discriminator_forward.6} parent=47 // pred_check
          %p977 = pneg %p976
        $region50: #{discriminator_forward.6} parent=47 // pred_check_branch
          %979 = sbr.rel (%p977) target = $region52
        $region51: #{discriminator_forward.6} parent=47 // pred_region
          %v980 = vld [vmem:[#allocation3] sm:$0x3]
          %v981 = vmul.f32 %v980, 0.125
          %v982 = vld [vmem:[#allocation4] sm:$0x3]
          %v983 = vmul.f32 %v982, 0.125
          %v984 = vmul.f32 %v981, %v981
          %v985 = vsub.f32 %v983, %v984
          %v986 = vmax.f32 %v985, 0.0
          %v987 = vld [vmem:[%s2] sm:$0x3]
          %v988 = vadd.f32 %v986, 1e-05
          %v989 = vrsqrt.pop %v988
          %v990 = vmul.f32 %v987, %v989
          %v991 = vlaneseq
          %vm992 = vcmp.ge.s32.totalorder %v991, 0
          %vm993 = vcmp.lt.s32.totalorder %v991, 256
          %vm994 = vmand %vm992, %vm993
          %995 = vst.msk [vmem:[#allocation3] sm:$0x3] %vm994, %v990
          %v996 = vld [vmem:[%s3] sm:$0x3]
          %v997 = vmul.f32 %v990, %v981
          %v998 = vsub.f32 %v996, %v997
          %999 = vst.msk [vmem:[#allocation4] sm:$0x3] %vm994, %v998
        $region52: #{discriminator_forward.6} parent=47 // pred_fallthru
          _
        %s1000 = smul.u32 %s20, 2
        %s1001 = smul.addr %s1000, 8
        %s1002 = scalar_lea.vmem [#allocation2], %s1001
        %v1003 = vld [vmem:[%s1002] sm:$0xff]
        %v1004 = vld [vmem:[%s1002 + $0x8] sm:$0xff]
        %v1005 = vld [vmem:[#allocation3] sm:$0x3]
        %v1007 = vlaneseq
        %v1008 = vshrl.u32 %v1007, 7
        %v1009 = vsub.s32 0, %v1008
        %v1010 = vrot.slane %v1005, %v1009
        %v1011 = vlaneseq
        %v1012 = vshrl.u32 %v1011, 7
        %v1013 = vsub.s32 1, %v1012
        %v1014 = vrot.slane %v1005, %v1013
        %v1017 = vmul.f32 %v1010, %v1003
        %v1018 = vmul.f32 %v1014, %v1004
        %v1019 = vld [vmem:[#allocation4] sm:$0x3]
        %v1021 = vlaneseq
        %v1022 = vshrl.u32 %v1021, 7
        %v1023 = vsub.s32 0, %v1022
        %v1024 = vrot.slane %v1019, %v1023
        %v1025 = vlaneseq
        %v1026 = vshrl.u32 %v1025, 7
        %v1027 = vsub.s32 1, %v1026
        %v1028 = vrot.slane %v1019, %v1027
        %v1031 = vadd.f32 %v1017, %v1024
        %v1032 = vadd.f32 %v1018, %v1028
        %vm1033 = vcmp.ge.f32.partialorder %v1031, 0.0
        %vm1034 = vcmp.ge.f32.partialorder %v1032, 0.0
        %v1035 = vmul.f32 %v1031, 0.2
        %v1036 = vmul.f32 %v1032, 0.2
        %v1037 = vsel %vm1033, %v1031, %v1035
        %v1038 = vsel %vm1034, %v1032, %v1036
        %1039 = vst [vmem:[%s227] sm:$0xff] %v1037
        %1040 = vst [vmem:[%s227 + $0x8] sm:$0xff] %v1038
      $region48: #{discriminator_forward.6} parent=35 // pred_fallthru
        _
      %s1041 = smul.u32 %s20, %s19
      %p1042 = scmp.lt.s32.totalorder %s1041, 0
      %s1043 = scalar_select %p1042, %s1041, 0
      %s1044 = smul.addr %s1043, 2
      %s1045 = smul.addr %s1044, 8
      %s1046 = scalar_lea.vmem %s4, %s1045
      // Predicated region
      $region53: #{discriminator_forward.6} parent=35 // pred_check
        %p1047 = pneg %p140
      $region54: #{discriminator_forward.6} parent=35 // pred_check_branch
        %1049 = sbr.rel (%p1047) target = $region56
      $region55: #{discriminator_forward.6} parent=35 // pred_region
        %s1050 = smul.u32 %s20, %s19
      $region56: #{discriminator_forward.6} parent=35 // pred_fallthru
        _
    $region36: #{discriminator_forward.6} parent=5 // pred_fallthru
      _
    %p1051 = scmp.le.s32.totalorder 2, %s10
    // Predicated region
    $region57: #{discriminator_forward.6} parent=5 // pred_check
      %p1052 = pneg %p1051
    $region58: #{discriminator_forward.6} parent=5 // pred_check_branch
      %1054 = sbr.rel (%p1052) target = $region60
    $region59: #{discriminator_forward.6} parent=5 // pred_region
      %s1055 = ssub.s32 %s10, 2
      // Predicated region
      $region61: #{discriminator_forward.6} parent=59 // pred_check
        %p1056 = pneg %p146
      $region62: #{discriminator_forward.6} parent=59 // pred_check_branch
        %1058 = sbr.rel (%p1056) target = $region64
      $region63: #{discriminator_forward.6} parent=59 // pred_region
        %s1059 = smul.u32 %s22, %s21
        %p1060 = scmp.lt.s32.totalorder %s1059, 0
        %s1061 = scalar_select %p1060, %s1059, 0
        %s1062 = smul.addr %s1061, 2
        %s1063 = smul.addr %s1062, 8
        %s1064 = scalar_lea.vmem %s4, %s1063
      $region64: #{discriminator_forward.6} parent=59 // pred_fallthru
        _
    $region60: #{discriminator_forward.6} parent=5 // pred_fallthru
      _
  $region6: #{discriminator_forward.6} parent=0 // loop_footer
    %s14 = sadd.s32 1, %s10
  $region7: #{discriminator_forward.6} parent=0 // loop_footer_branch
    %9 = sbr.rel target = $region3
  $region8: #{discriminator_forward.6} parent=0 // loop_exit
    _

// kernel: discriminator_forward.7
$region0: #{discriminator_forward.7}
  #allocation0 [shape = 'u32[]', space=smem, size = 0x4, offset = 0x4, fixed_abs, tag = 'smem constant byte address 0x4 - core index']
  #allocation1 [shape = 'u32[144,128]{1,0:T(1,128)}', space=vmem, size = 0x12000, scoped, tag = 'internal scratch']
  #allocation2 [shape = 'f32[1,2,512]{2,1,0:T(2,128)}', space=vmem, size = 0x1000, scoped, tag = 'scratch operand']
  #allocation3 [shape = 'f32[1,512]{1,0:T(1,128)}', space=vmem, size = 0x800, scoped, tag = 'scratch operand']
  #allocation4 [shape = 'f32[1,512]{1,0:T(1,128)}', space=vmem, size = 0x800, scoped, tag = 'scratch operand']
  %s0 = inlined_call_operand.vmem [shape: f32[2,2304], index: 0, kind: input, shape index: {}]
  %s1 = inlined_call_operand.vmem [shape: f32[2304,512], index: 1, kind: input, shape index: {}]
  %s2 = inlined_call_operand.vmem [shape: f32[1,512], index: 2, kind: input, shape index: {}]
  %s3 = inlined_call_operand.vmem [shape: f32[1,512], index: 3, kind: input, shape index: {}]
  %s4 = inlined_call_operand.vmem [shape: f32[2,512], index: 4, kind: output, shape index: {}]
  %s5 = sld [smem:[#allocation0]]
  $region65: #{discriminator_forward.7} parent=0
    _
  %s7 = ssub.s32 1, %s5
  %s8 = scalar_select 0, %s7, %s5
  loop: start=0, step=1, limit=4
  $region2: #{discriminator_forward.7} parent=0 // loop_pre_header
    _
  $region3: #{discriminator_forward.7} parent=0 // loop_header
    %s10 = sphi 0, %s14
    %p11 = scmp.ge.s32.totalorder %s10, 4
    %s17 = sphi 0, %s29
    %s18 = sphi 0, %s25
    %s19 = sphi 0, %s17
    %s20 = sphi 0, %s18
    %s21 = sphi 0, %s19
    %s22 = sphi 0, %s20
    %s36 = sphi 0, %s38
    %s39 = sphi 0, %s36
    %s40 = sphi 0, %s39
    %s56 = sphi 0, %s40
    %s60 = sphi 0, %s60
    %s62 = sphi 0, %s60
    %s63 = sphi 0, %s62
    %s77 = sphi 0, %s63
    %s81 = sphi 0, %s81
    %s83 = sphi 0, %s81
    %s84 = sphi 0, %s83
    %s98 = sphi 0, %s84
    %s102 = sphi 0, %s102
    %s104 = sphi 0, %s102
    %s105 = sphi 0, %s104
    %s119 = sphi 0, %s105
    %s127 = sphi 0, %s129
    %s130 = sphi 0, %s127
    %s131 = sphi 0, %s130
    %s147 = sphi 0, %s131
  $region4: #{discriminator_forward.7} parent=0 // loop_header_branch
    %13 = sbr.rel (%p11) target = $region8
  $region5: #{discriminator_forward.7} parent=0 // loop_body
    %s15 = ssub.s32 %s10, 1
    %s16 = ssub.s32 %s10, 2
    %s23 = sadd.s32 1, %s18
    %p24 = scmp.ge.s32.totalorder %s23, 1
    %s25 = scalar_select %p24, 0, %s23
    %s26 = sadd.s32 1, %s17
    %s27 = scalar_select %p24, %s26, %s17
    %p28 = scmp.ge.s32.totalorder %s27, 2
    %s29 = scalar_select %p28, 0, %s27
    %s30 = ssub.s32 1, %s17
    %s31 = smul.u32 %s18, %s30
    %s32 = ssub.s32 1, %s29
    %s33 = smul.u32 %s25, %s32
    %s34 = ssub.s32 %s31, %s33
    %p35 = scmp.eq.s32.totalorder %s34, 0
    %s37 = sadd.s32 %s36, 1
    %s38 = scalar_select %p35, %s36, %s37
    %p41 = pneg %p35
    %p42 = scmp.eq.s32.totalorder %s10, 1
    %p43 = por %p41, %p42
    %p44 = scmp.ne.s32.totalorder %s36, %s39
    %p45 = scmp.eq.s32.totalorder %s10, 0
    %p46 = por %p44, %p45
    %p47 = scmp.ne.s32.totalorder %s36, %s39
    %p48 = scmp.eq.s32.totalorder %s15, 1
    %p49 = por %p47, %p48
    %p50 = scmp.ne.s32.totalorder %s39, %s40
    %p51 = scmp.eq.s32.totalorder %s15, 0
    %p52 = por %p50, %p51
    %p53 = scmp.ne.s32.totalorder %s39, %s40
    %p54 = scmp.eq.s32.totalorder %s16, 1
    %p55 = por %p53, %p54
    %p57 = scmp.ne.s32.totalorder %s40, %s56
    %p58 = scmp.eq.s32.totalorder %s16, 0
    %p59 = por %p57, %p58
    %s61 = sadd.s32 %s60, 1
    %p64 = scmp.eq.s32.totalorder %s10, 1
    %p65 = scmp.ne.s32.totalorder %s60, %s62
    %p66 = scmp.eq.s32.totalorder %s10, 0
    %p67 = por %p65, %p66
    %p68 = scmp.ne.s32.totalorder %s60, %s62
    %p69 = scmp.eq.s32.totalorder %s15, 1
    %p70 = por %p68, %p69
    %p71 = scmp.ne.s32.totalorder %s62, %s63
    %p72 = scmp.eq.s32.totalorder %s15, 0
    %p73 = por %p71, %p72
    %p74 = scmp.ne.s32.totalorder %s62, %s63
    %p75 = scmp.eq.s32.totalorder %s16, 1
    %p76 = por %p74, %p75
    %p78 = scmp.ne.s32.totalorder %s63, %s77
    %p79 = scmp.eq.s32.totalorder %s16, 0
    %p80 = por %p78, %p79
    %s82 = sadd.s32 %s81, 1
    %p85 = scmp.eq.s32.totalorder %s10, 1
    %p86 = scmp.ne.s32.totalorder %s81, %s83
    %p87 = scmp.eq.s32.totalorder %s10, 0
    %p88 = por %p86, %p87
    %p89 = scmp.ne.s32.totalorder %s81, %s83
    %p90 = scmp.eq.s32.totalorder %s15, 1
    %p91 = por %p89, %p90
    %p92 = scmp.ne.s32.totalorder %s83, %s84
    %p93 = scmp.eq.s32.totalorder %s15, 0
    %p94 = por %p92, %p93
    %p95 = scmp.ne.s32.totalorder %s83, %s84
    %p96 = scmp.eq.s32.totalorder %s16, 1
    %p97 = por %p95, %p96
    %p99 = scmp.ne.s32.totalorder %s84, %s98
    %p100 = scmp.eq.s32.totalorder %s16, 0
    %p101 = por %p99, %p100
    %s103 = sadd.s32 %s102, 1
    %p106 = scmp.eq.s32.totalorder %s10, 1
    %p107 = scmp.ne.s32.totalorder %s102, %s104
    %p108 = scmp.eq.s32.totalorder %s10, 0
    %p109 = por %p107, %p108
    %p110 = scmp.ne.s32.totalorder %s102, %s104
    %p111 = scmp.eq.s32.totalorder %s15, 1
    %p112 = por %p110, %p111
    %p113 = scmp.ne.s32.totalorder %s104, %s105
    %p114 = scmp.eq.s32.totalorder %s15, 0
    %p115 = por %p113, %p114
    %p116 = scmp.ne.s32.totalorder %s104, %s105
    %p117 = scmp.eq.s32.totalorder %s16, 1
    %p118 = por %p116, %p117
    %p120 = scmp.ne.s32.totalorder %s105, %s119
    %p121 = scmp.eq.s32.totalorder %s16, 0
    %p122 = por %p120, %p121
    %s123 = smul.u32 %s18, %s17
    %s124 = smul.u32 %s25, %s29
    %s125 = ssub.s32 %s123, %s124
    %p126 = scmp.eq.s32.totalorder %s125, 0
    %s128 = sadd.s32 %s127, 1
    %s129 = scalar_select %p126, %s127, %s128
    %p132 = pneg %p126
    %p133 = scmp.eq.s32.totalorder %s10, 1
    %p134 = por %p132, %p133
    %p135 = scmp.ne.s32.totalorder %s127, %s130
    %p136 = scmp.eq.s32.totalorder %s10, 0
    %p137 = por %p135, %p136
    %p138 = scmp.ne.s32.totalorder %s127, %s130
    %p139 = scmp.eq.s32.totalorder %s15, 1
    %p140 = por %p138, %p139
    %p141 = scmp.ne.s32.totalorder %s130, %s131
    %p142 = scmp.eq.s32.totalorder %s15, 0
    %p143 = por %p141, %p142
    %p144 = scmp.ne.s32.totalorder %s130, %s131
    %p145 = scmp.eq.s32.totalorder %s16, 1
    %p146 = por %p144, %p145
    %p148 = scmp.ne.s32.totalorder %s131, %s147
    %p149 = scmp.eq.s32.totalorder %s16, 0
    %p150 = por %p148, %p149
    %p151 = scmp.le.s32.totalorder 1, %s10
    %p152 = scmp.lt.s32.totalorder %s10, 3
    %p153 = pnand %p151, %p152
    %p154 = pneg %p153
    // Predicated region
    $region9: #{discriminator_forward.7} parent=5 // pred_check
      _
    $region10: #{discriminator_forward.7} parent=5 // pred_check_branch
      %156 = sbr.rel (%p153) target = $region12
    $region11: #{discriminator_forward.7} parent=5 // pred_region
      %s157 = ssub.s32 %s10, 1
      // Predicated region
      $region13: #{discriminator_forward.7} parent=11 // pred_check
        %p158 = pneg %p73
      $region14: #{discriminator_forward.7} parent=11 // pred_check_branch
        %160 = sbr.rel (%p158) target = $region16
      $region15: #{discriminator_forward.7} parent=11 // pred_region
        _
      $region16: #{discriminator_forward.7} parent=11 // pred_fallthru
        _
      // Predicated region
      $region17: #{discriminator_forward.7} parent=11 // pred_check
        %p161 = pneg %p94
      $region18: #{discriminator_forward.7} parent=11 // pred_check_branch
        %163 = sbr.rel (%p161) target = $region20
      $region19: #{discriminator_forward.7} parent=11 // pred_region
        _
      $region20: #{discriminator_forward.7} parent=11 // pred_fallthru
        _
      // Predicated region
      $region21: #{discriminator_forward.7} parent=11 // pred_check
        %p164 = pneg %p115
      $region22: #{discriminator_forward.7} parent=11 // pred_check_branch
        %166 = sbr.rel (%p164) target = $region24
      $region23: #{discriminator_forward.7} parent=11 // pred_region
        _
      $region24: #{discriminator_forward.7} parent=11 // pred_fallthru
        _
    $region12: #{discriminator_forward.7} parent=5 // pred_fallthru
      _
    %p167 = scmp.lt.s32.totalorder %s10, 2
    // Predicated region
    $region25: #{discriminator_forward.7} parent=5 // pred_check
      %p168 = pneg %p167
    $region26: #{discriminator_forward.7} parent=5 // pred_check_branch
      %170 = sbr.rel (%p168) target = $region28
    $region27: #{discriminator_forward.7} parent=5 // pred_region
      // Predicated region
      $region29: #{discriminator_forward.7} parent=27 // pred_check
        %p171 = pneg %p46
      $region30: #{discriminator_forward.7} parent=27 // pred_check_branch
        %173 = sbr.rel (%p171) target = $region32
      $region31: #{discriminator_forward.7} parent=27 // pred_region
        %s174 = ssub.s32 1, %s17
        %s175 = smul.u32 %s18, %s174
        %p176 = scmp.lt.s32.totalorder %s175, 0
        %s177 = scalar_select %p176, %s175, 0
        %s178 = smul.addr %s177, 18
        %s179 = smul.addr %s178, 2
        %s180 = scalar_lea.vmem %s0, %s179
        %s181 = ssub.s32 1, %s17
        %s182 = smul.u32 %s18, %s181
      $region32: #{discriminator_forward.7} parent=27 // pred_fallthru
        _
    $region28: #{discriminator_forward.7} parent=5 // pred_fallthru
      _
    %p183 = scmp.le.s32.totalorder 1, %s10
    %p184 = scmp.lt.s32.totalorder %s10, 3
    %p185 = pnand %p183, %p184
    %p186 = pneg %p185
    // Predicated region
    $region33: #{discriminator_forward.7} parent=5 // pred_check
      _
    $region34: #{discriminator_forward.7} parent=5 // pred_check_branch
      %188 = sbr.rel (%p185) target = $region36
    $region35: #{discriminator_forward.7} parent=5 // pred_region
      %s189 = ssub.s32 %s10, 1
      %s190 = ssub.s32 1, %s19
      %s191 = smul.u32 %s20, %s190
      %p192 = scmp.lt.s32.totalorder %s191, 0
      %s193 = scalar_select %p192, %s191, 0
      %s194 = smul.addr %s193, 18
      %s195 = smul.addr %s194, 2
      %s196 = scalar_lea.vmem %s0, %s195
      %p197 = pneg %p52
      %p198 = pneg %p49
      %p199 = pneg %p73
      %p200 = pneg %p70
      %p201 = pneg %p94
      %p202 = pneg %p91
      %p203 = pneg %p115
      %p204 = pneg %p112
      %p205 = pneg %p143
      %p206 = pneg %p140
      %s207 = smul.u32 %s20, %s19
      %p208 = scmp.lt.s32.totalorder %s207, 0
      %s209 = scalar_select %p208, %s207, 0
      %s210 = smul.addr %s209, 4
      %s211 = smul.addr %s210, 2
      %s212 = scalar_lea.vmem %s4, %s211
      %s213 = ssub.s32 1, %s19
      %s214 = smul.u32 %s20, %s213
      %p215 = scmp.lt.s32.totalorder %s214, 0
      %s216 = scalar_select %p215, %s214, 0
      %s217 = smul.addr %s216, 18
      %s218 = smul.addr %s217, 2
      %s219 = scalar_lea.vmem %s0, %s218
      %s220 = ssub.s32 1, %s19
      %s221 = smul.u32 %s20, %s220
      %s222 = smul.u32 %s20, %s19
      %p223 = scmp.lt.s32.totalorder %s222, 0
      %s224 = scalar_select %p223, %s222, 0
      %s225 = smul.addr %s224, 4
      %s226 = smul.addr %s225, 2
      %s227 = scalar_lea.vmem %s4, %s226
      %s228 = smul.u32 %s20, %s19
      %p229 = scmp.eq.s32.totalorder %s19, 0
      // Predicated region
      $region37: #{discriminator_forward.7} parent=35 // pred_check
        %p230 = pneg %p229
      $region38: #{discriminator_forward.7} parent=35 // pred_check_branch
        %232 = sbr.rel (%p230) target = $region40
      $region39: #{discriminator_forward.7} parent=35 // pred_region
        %v233 = vld [vmem:[%s219] sm:$0xff]
        %v234 = vld [vmem:[%s219 + $0x8] sm:$0xff]
        %v235 = vld [vmem:[%s219 + $0x10] sm:$0xff]
        %v236 = vld [vmem:[%s219 + $0x18] sm:$0xff]
        %v237 = vld [vmem:[%s219 + $0x20] sm:$0xf]
        %v238 = vld [vmem:[%s1] sm:$0xff]
        %v239 = vld [vmem:[%s1 + $0x8] sm:$0xff]
        %v240 = vld [vmem:[%s1 + $0x10] sm:$0xff]
        %v241 = vld [vmem:[%s1 + $0x18] sm:$0xff]
        %v242 = vld [vmem:[%s1 + $0x20] sm:$0xff]
        %v243 = vld [vmem:[%s1 + $0x28] sm:$0xff]
        %v244 = vld [vmem:[%s1 + $0x30] sm:$0xff]
        %v245 = vld [vmem:[%s1 + $0x38] sm:$0xff]
        %v246 = vld [vmem:[%s1 + $0x40] sm:$0xff]
        %v247 = vld [vmem:[%s1 + $0x48] sm:$0xff]
        %v248 = vld [vmem:[%s1 + $0x50] sm:$0xff]
        %v249 = vld [vmem:[%s1 + $0x58] sm:$0xff]
        %v250 = vld [vmem:[%s1 + $0x60] sm:$0xff]
        %v251 = vld [vmem:[%s1 + $0x68] sm:$0xff]
        %v252 = vld [vmem:[%s1 + $0x70] sm:$0xff]
        %v253 = vld [vmem:[%s1 + $0x78] sm:$0xff]
        %v254 = vld [vmem:[%s1 + $0x80] sm:$0xff]
        %v255 = vld [vmem:[%s1 + $0x88] sm:$0xff]
        %v256 = vld [vmem:[%s1 + $0x90] sm:$0xff]
        %v257 = vld [vmem:[%s1 + $0x98] sm:$0xff]
        %v258 = vld [vmem:[%s1 + $0xa0] sm:$0xff]
        %v259 = vld [vmem:[%s1 + $0xa8] sm:$0xff]
        %v260 = vld [vmem:[%s1 + $0xb0] sm:$0xff]
        %v261 = vld [vmem:[%s1 + $0xb8] sm:$0xff]
        %v262 = vld [vmem:[%s1 + $0xc0] sm:$0xff]
        %v263 = vld [vmem:[%s1 + $0xc8] sm:$0xff]
        %v264 = vld [vmem:[%s1 + $0xd0] sm:$0xff]
        %v265 = vld [vmem:[%s1 + $0xd8] sm:$0xff]
        %v266 = vld [vmem:[%s1 + $0xe0] sm:$0xff]
        %v267 = vld [vmem:[%s1 + $0xe8] sm:$0xff]
        %v268 = vld [vmem:[%s1 + $0xf0] sm:$0xff]
        %v269 = vld [vmem:[%s1 + $0xf8] sm:$0xff]
        %v270 = vld [vmem:[%s1 + $0x100] sm:$0xff]
        %v271 = vld [vmem:[%s1 + $0x108] sm:$0xff]
        %v272 = vld [vmem:[%s1 + $0x110] sm:$0xff]
        %v273 = vld [vmem:[%s1 + $0x118] sm:$0xff]
        %v274 = vld [vmem:[%s1 + $0x120] sm:$0xff]
        %v275 = vld [vmem:[%s1 + $0x128] sm:$0xff]
        %v276 = vld [vmem:[%s1 + $0x130] sm:$0xff]
        %v277 = vld [vmem:[%s1 + $0x138] sm:$0xff]
        %v278 = vld [vmem:[%s1 + $0x140] sm:$0xff]
        %v279 = vld [vmem:[%s1 + $0x148] sm:$0xff]
        %v280 = vld [vmem:[%s1 + $0x150] sm:$0xff]
        %v281 = vld [vmem:[%s1 + $0x158] sm:$0xff]
        %v282 = vld [vmem:[%s1 + $0x160] sm:$0xff]
        %v283 = vld [vmem:[%s1 + $0x168] sm:$0xff]
        %v284 = vld [vmem:[%s1 + $0x170] sm:$0xff]
        %v285 = vld [vmem:[%s1 + $0x178] sm:$0xff]
        %v286 = vld [vmem:[%s1 + $0x180] sm:$0xff]
        %v287 = vld [vmem:[%s1 + $0x188] sm:$0xff]
        %v288 = vld [vmem:[%s1 + $0x190] sm:$0xff]
        %v289 = vld [vmem:[%s1 + $0x198] sm:$0xff]
        %v290 = vld [vmem:[%s1 + $0x1a0] sm:$0xff]
        %v291 = vld [vmem:[%s1 + $0x1a8] sm:$0xff]
        %v292 = vld [vmem:[%s1 + $0x1b0] sm:$0xff]
        %v293 = vld [vmem:[%s1 + $0x1b8] sm:$0xff]
        %v294 = vld [vmem:[%s1 + $0x1c0] sm:$0xff]
        %v295 = vld [vmem:[%s1 + $0x1c8] sm:$0xff]
        %v296 = vld [vmem:[%s1 + $0x1d0] sm:$0xff]
        %v297 = vld [vmem:[%s1 + $0x1d8] sm:$0xff]
        %v298 = vld [vmem:[%s1 + $0x1e0] sm:$0xff]
        %v299 = vld [vmem:[%s1 + $0x1e8] sm:$0xff]
        %v300 = vld [vmem:[%s1 + $0x1f0] sm:$0xff]
        %v301 = vld [vmem:[%s1 + $0x1f8] sm:$0xff]
        %v302 = vld [vmem:[%s1 + $0x200] sm:$0xff]
        %v303 = vld [vmem:[%s1 + $0x208] sm:$0xff]
        %v304 = vld [vmem:[%s1 + $0x210] sm:$0xff]
        %v305 = vld [vmem:[%s1 + $0x218] sm:$0xff]
        %v306 = vld [vmem:[%s1 + $0x220] sm:$0xff]
        %v307 = vld [vmem:[%s1 + $0x228] sm:$0xff]
        %v308 = vld [vmem:[%s1 + $0x230] sm:$0xff]
        %v309 = vld [vmem:[%s1 + $0x238] sm:$0xff]
        %v310 = vld [vmem:[%s1 + $0x240] sm:$0xff]
        %v311 = vld [vmem:[%s1 + $0x248] sm:$0xff]
        %v312 = vld [vmem:[%s1 + $0x250] sm:$0xff]
        %v313 = vld [vmem:[%s1 + $0x258] sm:$0xff]
        %v314 = vld [vmem:[%s1 + $0x260] sm:$0xff]
        %v315 = vld [vmem:[%s1 + $0x268] sm:$0xff]
        %v316 = vld [vmem:[%s1 + $0x270] sm:$0xff]
        %v317 = vld [vmem:[%s1 + $0x278] sm:$0xff]
        %v318 = vld [vmem:[%s1 + $0x280] sm:$0xff]
        %v319 = vld [vmem:[%s1 + $0x288] sm:$0xff]
        %v320 = vld [vmem:[%s1 + $0x290] sm:$0xff]
        %v321 = vld [vmem:[%s1 + $0x298] sm:$0xff]
        %v322 = vld [vmem:[%s1 + $0x2a0] sm:$0xff]
        %v323 = vld [vmem:[%s1 + $0x2a8] sm:$0xff]
        %v324 = vld [vmem:[%s1 + $0x2b0] sm:$0xff]
        %v325 = vld [vmem:[%s1 + $0x2b8] sm:$0xff]
        %v326 = vld [vmem:[%s1 + $0x2c0] sm:$0xff]
        %v327 = vld [vmem:[%s1 + $0x2c8] sm:$0xff]
        %v328 = vld [vmem:[%s1 + $0x2d0] sm:$0xff]
        %v329 = vld [vmem:[%s1 + $0x2d8] sm:$0xff]
        %v330 = vld [vmem:[%s1 + $0x2e0] sm:$0xff]
        %v331 = vld [vmem:[%s1 + $0x2e8] sm:$0xff]
        %v332 = vld [vmem:[%s1 + $0x2f0] sm:$0xff]
        %v333 = vld [vmem:[%s1 + $0x2f8] sm:$0xff]
        %v334 = vld [vmem:[%s1 + $0x300] sm:$0xff]
        %v335 = vld [vmem:[%s1 + $0x308] sm:$0xff]
        %v336 = vld [vmem:[%s1 + $0x310] sm:$0xff]
        %v337 = vld [vmem:[%s1 + $0x318] sm:$0xff]
        %v338 = vld [vmem:[%s1 + $0x320] sm:$0xff]
        %v339 = vld [vmem:[%s1 + $0x328] sm:$0xff]
        %v340 = vld [vmem:[%s1 + $0x330] sm:$0xff]
        %v341 = vld [vmem:[%s1 + $0x338] sm:$0xff]
        %v342 = vld [vmem:[%s1 + $0x340] sm:$0xff]
        %v343 = vld [vmem:[%s1 + $0x348] sm:$0xff]
        %v344 = vld [vmem:[%s1 + $0x350] sm:$0xff]
        %v345 = vld [vmem:[%s1 + $0x358] sm:$0xff]
        %v346 = vld [vmem:[%s1 + $0x360] sm:$0xff]
        %v347 = vld [vmem:[%s1 + $0x368] sm:$0xff]
        %v348 = vld [vmem:[%s1 + $0x370] sm:$0xff]
        %v349 = vld [vmem:[%s1 + $0x378] sm:$0xff]
        %v350 = vld [vmem:[%s1 + $0x380] sm:$0xff]
        %v351 = vld [vmem:[%s1 + $0x388] sm:$0xff]
        %v352 = vld [vmem:[%s1 + $0x390] sm:$0xff]
        %v353 = vld [vmem:[%s1 + $0x398] sm:$0xff]
        %v354 = vld [vmem:[%s1 + $0x3a0] sm:$0xff]
        %v355 = vld [vmem:[%s1 + $0x3a8] sm:$0xff]
        %v356 = vld [vmem:[%s1 + $0x3b0] sm:$0xff]
        %v357 = vld [vmem:[%s1 + $0x3b8] sm:$0xff]
        %v358 = vld [vmem:[%s1 + $0x3c0] sm:$0xff]
        %v359 = vld [vmem:[%s1 + $0x3c8] sm:$0xff]
        %v360 = vld [vmem:[%s1 + $0x3d0] sm:$0xff]
        %v361 = vld [vmem:[%s1 + $0x3d8] sm:$0xff]
        %v362 = vld [vmem:[%s1 + $0x3e0] sm:$0xff]
        %v363 = vld [vmem:[%s1 + $0x3e8] sm:$0xff]
        %v364 = vld [vmem:[%s1 + $0x3f0] sm:$0xff]
        %v365 = vld [vmem:[%s1 + $0x3f8] sm:$0xff]
        %v366 = vld [vmem:[%s1 + $0x400] sm:$0xff]
        %v367 = vld [vmem:[%s1 + $0x408] sm:$0xff]
        %v368 = vld [vmem:[%s1 + $0x410] sm:$0xff]
        %v369 = vld [vmem:[%s1 + $0x418] sm:$0xff]
        %v370 = vld [vmem:[%s1 + $0x420] sm:$0xff]
        %v371 = vld [vmem:[%s1 + $0x428] sm:$0xff]
        %v372 = vld [vmem:[%s1 + $0x430] sm:$0xff]
        %v373 = vld [vmem:[%s1 + $0x438] sm:$0xff]
        %v374 = vld [vmem:[%s1 + $0x440] sm:$0xff]
        %v375 = vld [vmem:[%s1 + $0x448] sm:$0xff]
        %v376 = vld [vmem:[%s1 + $0x450] sm:$0xff]
        %v377 = vld [vmem:[%s1 + $0x458] sm:$0xff]
        %v378 = vld [vmem:[%s1 + $0x460] sm:$0xff]
        %v379 = vld [vmem:[%s1 + $0x468] sm:$0xff]
        %v380 = vld [vmem:[%s1 + $0x470] sm:$0xff]
        %v381 = vld [vmem:[%s1 + $0x478] sm:$0xff]
        %v382 = vld [vmem:[%s1 + $0x480] sm:$0xff]
        %v383 = vld [vmem:[%s1 + $0x488] sm:$0xff]
        %v384 = vld [vmem:[%s1 + $0x490] sm:$0xff]
        %v385 = vld [vmem:[%s1 + $0x498] sm:$0xff]
        %v386 = vld [vmem:[%s1 + $0x4a0] sm:$0xff]
        %v387 = vld [vmem:[%s1 + $0x4a8] sm:$0xff]
        %v388 = vld [vmem:[%s1 + $0x4b0] sm:$0xff]
        %v389 = vld [vmem:[%s1 + $0x4b8] sm:$0xff]
        %v390 = vld [vmem:[%s1 + $0x4c0] sm:$0xff]
        %v391 = vld [vmem:[%s1 + $0x4c8] sm:$0xff]
        %v392 = vld [vmem:[%s1 + $0x4d0] sm:$0xff]
        %v393 = vld [vmem:[%s1 + $0x4d8] sm:$0xff]
        %v394 = vld [vmem:[%s1 + $0x4e0] sm:$0xff]
        %v395 = vld [vmem:[%s1 + $0x4e8] sm:$0xff]
        %v396 = vld [vmem:[%s1 + $0x4f0] sm:$0xff]
        %v397 = vld [vmem:[%s1 + $0x4f8] sm:$0xff]
        %v398 = vld [vmem:[%s1 + $0x500] sm:$0xff]
        %v399 = vld [vmem:[%s1 + $0x508] sm:$0xff]
        %v400 = vld [vmem:[%s1 + $0x510] sm:$0xff]
        %v401 = vld [vmem:[%s1 + $0x518] sm:$0xff]
        %v402 = vld [vmem:[%s1 + $0x520] sm:$0xff]
        %v403 = vld [vmem:[%s1 + $0x528] sm:$0xff]
        %v404 = vld [vmem:[%s1 + $0x530] sm:$0xff]
        %v405 = vld [vmem:[%s1 + $0x538] sm:$0xff]
        %v406 = vld [vmem:[%s1 + $0x540] sm:$0xff]
        %v407 = vld [vmem:[%s1 + $0x548] sm:$0xff]
        %v408 = vld [vmem:[%s1 + $0x550] sm:$0xff]
        %v409 = vld [vmem:[%s1 + $0x558] sm:$0xff]
        %v410 = vld [vmem:[%s1 + $0x560] sm:$0xff]
        %v411 = vld [vmem:[%s1 + $0x568] sm:$0xff]
        %v412 = vld [vmem:[%s1 + $0x570] sm:$0xff]
        %v413 = vld [vmem:[%s1 + $0x578] sm:$0xff]
        %v414 = vld [vmem:[%s1 + $0x580] sm:$0xff]
        %v415 = vld [vmem:[%s1 + $0x588] sm:$0xff]
        %v416 = vld [vmem:[%s1 + $0x590] sm:$0xff]
        %v417 = vld [vmem:[%s1 + $0x598] sm:$0xff]
        %v418 = vld [vmem:[%s1 + $0x5a0] sm:$0xff]
        %v419 = vld [vmem:[%s1 + $0x5a8] sm:$0xff]
        %v420 = vld [vmem:[%s1 + $0x5b0] sm:$0xff]
        %v421 = vld [vmem:[%s1 + $0x5b8] sm:$0xff]
        %v422 = vld [vmem:[%s1 + $0x5c0] sm:$0xff]
        %v423 = vld [vmem:[%s1 + $0x5c8] sm:$0xff]
        %v424 = vld [vmem:[%s1 + $0x5d0] sm:$0xff]
        %v425 = vld [vmem:[%s1 + $0x5d8] sm:$0xff]
        %v426 = vld [vmem:[%s1 + $0x5e0] sm:$0xff]
        %v427 = vld [vmem:[%s1 + $0x5e8] sm:$0xff]
        %v428 = vld [vmem:[%s1 + $0x5f0] sm:$0xff]
        %v429 = vld [vmem:[%s1 + $0x5f8] sm:$0xff]
        %v430 = vld [vmem:[%s1 + $0x600] sm:$0xff]
        %v431 = vld [vmem:[%s1 + $0x608] sm:$0xff]
        %v432 = vld [vmem:[%s1 + $0x610] sm:$0xff]
        %v433 = vld [vmem:[%s1 + $0x618] sm:$0xff]
        %v434 = vld [vmem:[%s1 + $0x620] sm:$0xff]
        %v435 = vld [vmem:[%s1 + $0x628] sm:$0xff]
        %v436 = vld [vmem:[%s1 + $0x630] sm:$0xff]
        %v437 = vld [vmem:[%s1 + $0x638] sm:$0xff]
        %v438 = vld [vmem:[%s1 + $0x640] sm:$0xff]
        %v439 = vld [vmem:[%s1 + $0x648] sm:$0xff]
        %v440 = vld [vmem:[%s1 + $0x650] sm:$0xff]
        %v441 = vld [vmem:[%s1 + $0x658] sm:$0xff]
        %v442 = vld [vmem:[%s1 + $0x660] sm:$0xff]
        %v443 = vld [vmem:[%s1 + $0x668] sm:$0xff]
        %v444 = vld [vmem:[%s1 + $0x670] sm:$0xff]
        %v445 = vld [vmem:[%s1 + $0x678] sm:$0xff]
        %v446 = vld [vmem:[%s1 + $0x680] sm:$0xff]
        %v447 = vld [vmem:[%s1 + $0x688] sm:$0xff]
        %v448 = vld [vmem:[%s1 + $0x690] sm:$0xff]
        %v449 = vld [vmem:[%s1 + $0x698] sm:$0xff]
        %v450 = vld [vmem:[%s1 + $0x6a0] sm:$0xff]
        %v451 = vld [vmem:[%s1 + $0x6a8] sm:$0xff]
        %v452 = vld [vmem:[%s1 + $0x6b0] sm:$0xff]
        %v453 = vld [vmem:[%s1 + $0x6b8] sm:$0xff]
        %v454 = vld [vmem:[%s1 + $0x6c0] sm:$0xff]
        %v455 = vld [vmem:[%s1 + $0x6c8] sm:$0xff]
        %v456 = vld [vmem:[%s1 + $0x6d0] sm:$0xff]
        %v457 = vld [vmem:[%s1 + $0x6d8] sm:$0xff]
        %v458 = vld [vmem:[%s1 + $0x6e0] sm:$0xff]
        %v459 = vld [vmem:[%s1 + $0x6e8] sm:$0xff]
        %v460 = vld [vmem:[%s1 + $0x6f0] sm:$0xff]
        %v461 = vld [vmem:[%s1 + $0x6f8] sm:$0xff]
        %v462 = vld [vmem:[%s1 + $0x700] sm:$0xff]
        %v463 = vld [vmem:[%s1 + $0x708] sm:$0xff]
        %v464 = vld [vmem:[%s1 + $0x710] sm:$0xff]
        %v465 = vld [vmem:[%s1 + $0x718] sm:$0xff]
        %v466 = vld [vmem:[%s1 + $0x720] sm:$0xff]
        %v467 = vld [vmem:[%s1 + $0x728] sm:$0xff]
        %v468 = vld [vmem:[%s1 + $0x730] sm:$0xff]
        %v469 = vld [vmem:[%s1 + $0x738] sm:$0xff]
        %v470 = vld [vmem:[%s1 + $0x740] sm:$0xff]
        %v471 = vld [vmem:[%s1 + $0x748] sm:$0xff]
        %v472 = vld [vmem:[%s1 + $0x750] sm:$0xff]
        %v473 = vld [vmem:[%s1 + $0x758] sm:$0xff]
        %v474 = vld [vmem:[%s1 + $0x760] sm:$0xff]
        %v475 = vld [vmem:[%s1 + $0x768] sm:$0xff]
        %v476 = vld [vmem:[%s1 + $0x770] sm:$0xff]
        %v477 = vld [vmem:[%s1 + $0x778] sm:$0xff]
        %v478 = vld [vmem:[%s1 + $0x780] sm:$0xff]
        %v479 = vld [vmem:[%s1 + $0x788] sm:$0xff]
        %v480 = vld [vmem:[%s1 + $0x790] sm:$0xff]
        %v481 = vld [vmem:[%s1 + $0x798] sm:$0xff]
        %v482 = vld [vmem:[%s1 + $0x7a0] sm:$0xff]
        %v483 = vld [vmem:[%s1 + $0x7a8] sm:$0xff]
        %v484 = vld [vmem:[%s1 + $0x7b0] sm:$0xff]
        %v485 = vld [vmem:[%s1 + $0x7b8] sm:$0xff]
        %v486 = vld [vmem:[%s1 + $0x7c0] sm:$0xff]
        %v487 = vld [vmem:[%s1 + $0x7c8] sm:$0xff]
        %v488 = vld [vmem:[%s1 + $0x7d0] sm:$0xff]
        %v489 = vld [vmem:[%s1 + $0x7d8] sm:$0xff]
        %v490 = vld [vmem:[%s1 + $0x7e0] sm:$0xff]
        %v491 = vld [vmem:[%s1 + $0x7e8] sm:$0xff]
        %v492 = vld [vmem:[%s1 + $0x7f0] sm:$0xff]
        %v493 = vld [vmem:[%s1 + $0x7f8] sm:$0xff]
        %v494 = vld [vmem:[%s1 + $0x800] sm:$0xff]
        %v495 = vld [vmem:[%s1 + $0x808] sm:$0xff]
        %v496 = vld [vmem:[%s1 + $0x810] sm:$0xff]
        %v497 = vld [vmem:[%s1 + $0x818] sm:$0xff]
        %v498 = vld [vmem:[%s1 + $0x820] sm:$0xff]
        %v499 = vld [vmem:[%s1 + $0x828] sm:$0xff]
        %v500 = vld [vmem:[%s1 + $0x830] sm:$0xff]
        %v501 = vld [vmem:[%s1 + $0x838] sm:$0xff]
        %v502 = vld [vmem:[%s1 + $0x840] sm:$0xff]
        %v503 = vld [vmem:[%s1 + $0x848] sm:$0xff]
        %v504 = vld [vmem:[%s1 + $0x850] sm:$0xff]
        %v505 = vld [vmem:[%s1 + $0x858] sm:$0xff]
        %v506 = vld [vmem:[%s1 + $0x860] sm:$0xff]
        %v507 = vld [vmem:[%s1 + $0x868] sm:$0xff]
        %v508 = vld [vmem:[%s1 + $0x870] sm:$0xff]
        %v509 = vld [vmem:[%s1 + $0x878] sm:$0xff]
        %v510 = vld [vmem:[%s1 + $0x880] sm:$0xff]
        %v511 = vld [vmem:[%s1 + $0x888] sm:$0xff]
        %v512 = vld [vmem:[%s1 + $0x890] sm:$0xff]
        %v513 = vld [vmem:[%s1 + $0x898] sm:$0xff]
        %v514 = vld [vmem:[%s1 + $0x8a0] sm:$0xff]
        %v515 = vld [vmem:[%s1 + $0x8a8] sm:$0xff]
        %v516 = vld [vmem:[%s1 + $0x8b0] sm:$0xff]
        %v517 = vld [vmem:[%s1 + $0x8b8] sm:$0xff]
        %v518 = vld [vmem:[%s1 + $0x8c0] sm:$0xff]
        %v519 = vld [vmem:[%s1 + $0x8c8] sm:$0xff]
        %v520 = vld [vmem:[%s1 + $0x8d0] sm:$0xff]
        %v521 = vld [vmem:[%s1 + $0x8d8] sm:$0xff]
        %v522 = vld [vmem:[%s1 + $0x8e0] sm:$0xff]
        %v523 = vld [vmem:[%s1 + $0x8e8] sm:$0xff]
        %v524 = vld [vmem:[%s1 + $0x8f0] sm:$0xff]
        %v525 = vld [vmem:[%s1 + $0x8f8] sm:$0xff]
        %v526 = vld [vmem:[%s1 + $0x900] sm:$0xff]
        %v527 = vld [vmem:[%s1 + $0x908] sm:$0xff]
        %v528 = vld [vmem:[%s1 + $0x910] sm:$0xff]
        %v529 = vld [vmem:[%s1 + $0x918] sm:$0xff]
        %v530 = vld [vmem:[%s1 + $0x920] sm:$0xff]
        %v531 = vld [vmem:[%s1 + $0x928] sm:$0xff]
        %v532 = vld [vmem:[%s1 + $0x930] sm:$0xff]
        %v533 = vld [vmem:[%s1 + $0x938] sm:$0xff]
        %v534 = vld [vmem:[%s1 + $0x940] sm:$0xff]
        %v535 = vld [vmem:[%s1 + $0x948] sm:$0xff]
        %v536 = vld [vmem:[%s1 + $0x950] sm:$0xff]
        %v537 = vld [vmem:[%s1 + $0x958] sm:$0xff]
        %v538 = vld [vmem:[%s1 + $0x960] sm:$0xff]
        %v539 = vld [vmem:[%s1 + $0x968] sm:$0xff]
        %v540 = vld [vmem:[%s1 + $0x970] sm:$0xff]
        %v541 = vld [vmem:[%s1 + $0x978] sm:$0xff]
        %v542 = vld [vmem:[%s1 + $0x980] sm:$0xff]
        %v543 = vld [vmem:[%s1 + $0x988] sm:$0xff]
        %v544 = vld [vmem:[%s1 + $0x990] sm:$0xff]
        %v545 = vld [vmem:[%s1 + $0x998] sm:$0xff]
        %v546 = vld [vmem:[%s1 + $0x9a0] sm:$0xff]
        %v547 = vld [vmem:[%s1 + $0x9a8] sm:$0xff]
        %v548 = vld [vmem:[%s1 + $0x9b0] sm:$0xff]
        %v549 = vld [vmem:[%s1 + $0x9b8] sm:$0xff]
        %v550 = vld [vmem:[%s1 + $0x9c0] sm:$0xff]
        %v551 = vld [vmem:[%s1 + $0x9c8] sm:$0xff]
        %v552 = vld [vmem:[%s1 + $0x9d0] sm:$0xff]
        %v553 = vld [vmem:[%s1 + $0x9d8] sm:$0xff]
        %v554 = vld [vmem:[%s1 + $0x9e0] sm:$0xff]
        %v555 = vld [vmem:[%s1 + $0x9e8] sm:$0xff]
        %v556 = vld [vmem:[%s1 + $0x9f0] sm:$0xff]
        %v557 = vld [vmem:[%s1 + $0x9f8] sm:$0xff]
        %v558 = vld [vmem:[%s1 + $0xa00] sm:$0xff]
        %v559 = vld [vmem:[%s1 + $0xa08] sm:$0xff]
        %v560 = vld [vmem:[%s1 + $0xa10] sm:$0xff]
        %v561 = vld [vmem:[%s1 + $0xa18] sm:$0xff]
        %v562 = vld [vmem:[%s1 + $0xa20] sm:$0xff]
        %v563 = vld [vmem:[%s1 + $0xa28] sm:$0xff]
        %v564 = vld [vmem:[%s1 + $0xa30] sm:$0xff]
        %v565 = vld [vmem:[%s1 + $0xa38] sm:$0xff]
        %v566 = vld [vmem:[%s1 + $0xa40] sm:$0xff]
        %v567 = vld [vmem:[%s1 + $0xa48] sm:$0xff]
        %v568 = vld [vmem:[%s1 + $0xa50] sm:$0xff]
        %v569 = vld [vmem:[%s1 + $0xa58] sm:$0xff]
        %v570 = vld [vmem:[%s1 + $0xa60] sm:$0xff]
        %v571 = vld [vmem:[%s1 + $0xa68] sm:$0xff]
        %v572 = vld [vmem:[%s1 + $0xa70] sm:$0xff]
        %v573 = vld [vmem:[%s1 + $0xa78] sm:$0xff]
        %v574 = vld [vmem:[%s1 + $0xa80] sm:$0xff]
        %v575 = vld [vmem:[%s1 + $0xa88] sm:$0xff]
        %v576 = vld [vmem:[%s1 + $0xa90] sm:$0xff]
        %v577 = vld [vmem:[%s1 + $0xa98] sm:$0xff]
        %v578 = vld [vmem:[%s1 + $0xaa0] sm:$0xff]
        %v579 = vld [vmem:[%s1 + $0xaa8] sm:$0xff]
        %v580 = vld [vmem:[%s1 + $0xab0] sm:$0xff]
        %v581 = vld [vmem:[%s1 + $0xab8] sm:$0xff]
        %v582 = vld [vmem:[%s1 + $0xac0] sm:$0xff]
        %v583 = vld [vmem:[%s1 + $0xac8] sm:$0xff]
        %v584 = vld [vmem:[%s1 + $0xad0] sm:$0xff]
        %v585 = vld [vmem:[%s1 + $0xad8] sm:$0xff]
        %v586 = vld [vmem:[%s1 + $0xae0] sm:$0xff]
        %v587 = vld [vmem:[%s1 + $0xae8] sm:$0xff]
        %v588 = vld [vmem:[%s1 + $0xaf0] sm:$0xff]
        %v589 = vld [vmem:[%s1 + $0xaf8] sm:$0xff]
        %v590 = vld [vmem:[%s1 + $0xb00] sm:$0xff]
        %v591 = vld [vmem:[%s1 + $0xb08] sm:$0xff]
        %v592 = vld [vmem:[%s1 + $0xb10] sm:$0xff]
        %v593 = vld [vmem:[%s1 + $0xb18] sm:$0xff]
        %v594 = vld [vmem:[%s1 + $0xb20] sm:$0xff]
        %v595 = vld [vmem:[%s1 + $0xb28] sm:$0xff]
        %v596 = vld [vmem:[%s1 + $0xb30] sm:$0xff]
        %v597 = vld [vmem:[%s1 + $0xb38] sm:$0xff]
        %v598 = vld [vmem:[%s1 + $0xb40] sm:$0xff]
        %v599 = vld [vmem:[%s1 + $0xb48] sm:$0xff]
        %v600 = vld [vmem:[%s1 + $0xb50] sm:$0xff]
        %v601 = vld [vmem:[%s1 + $0xb58] sm:$0xff]
        %v602 = vld [vmem:[%s1 + $0xb60] sm:$0xff]
        %v603 = vld [vmem:[%s1 + $0xb68] sm:$0xff]
        %v604 = vld [vmem:[%s1 + $0xb70] sm:$0xff]
        %v605 = vld [vmem:[%s1 + $0xb78] sm:$0xff]
        %v606 = vld [vmem:[%s1 + $0xb80] sm:$0xff]
        %v607 = vld [vmem:[%s1 + $0xb88] sm:$0xff]
        %v608 = vld [vmem:[%s1 + $0xb90] sm:$0xff]
        %v609 = vld [vmem:[%s1 + $0xb98] sm:$0xff]
        %v610 = vld [vmem:[%s1 + $0xba0] sm:$0xff]
        %v611 = vld [vmem:[%s1 + $0xba8] sm:$0xff]
        %v612 = vld [vmem:[%s1 + $0xbb0] sm:$0xff]
        %v613 = vld [vmem:[%s1 + $0xbb8] sm:$0xff]
        %v614 = vld [vmem:[%s1 + $0xbc0] sm:$0xff]
        %v615 = vld [vmem:[%s1 + $0xbc8] sm:$0xff]
        %v616 = vld [vmem:[%s1 + $0xbd0] sm:$0xff]
        %v617 = vld [vmem:[%s1 + $0xbd8] sm:$0xff]
        %v618 = vld [vmem:[%s1 + $0xbe0] sm:$0xff]
        %v619 = vld [vmem:[%s1 + $0xbe8] sm:$0xff]
        %v620 = vld [vmem:[%s1 + $0xbf0] sm:$0xff]
        %v621 = vld [vmem:[%s1 + $0xbf8] sm:$0xff]
        %v622 = vld [vmem:[%s1 + $0xc00] sm:$0xff]
        %v623 = vld [vmem:[%s1 + $0xc08] sm:$0xff]
        %v624 = vld [vmem:[%s1 + $0xc10] sm:$0xff]
        %v625 = vld [vmem:[%s1 + $0xc18] sm:$0xff]
        %v626 = vld [vmem:[%s1 + $0xc20] sm:$0xff]
        %v627 = vld [vmem:[%s1 + $0xc28] sm:$0xff]
        %v628 = vld [vmem:[%s1 + $0xc30] sm:$0xff]
        %v629 = vld [vmem:[%s1 + $0xc38] sm:$0xff]
        %v630 = vld [vmem:[%s1 + $0xc40] sm:$0xff]
        %v631 = vld [vmem:[%s1 + $0xc48] sm:$0xff]
        %v632 = vld [vmem:[%s1 + $0xc50] sm:$0xff]
        %v633 = vld [vmem:[%s1 + $0xc58] sm:$0xff]
        %v634 = vld [vmem:[%s1 + $0xc60] sm:$0xff]
        %v635 = vld [vmem:[%s1 + $0xc68] sm:$0xff]
        %v636 = vld [vmem:[%s1 + $0xc70] sm:$0xff]
        %v637 = vld [vmem:[%s1 + $0xc78] sm:$0xff]
        %v638 = vld [vmem:[%s1 + $0xc80] sm:$0xff]
        %v639 = vld [vmem:[%s1 + $0xc88] sm:$0xff]
        %v640 = vld [vmem:[%s1 + $0xc90] sm:$0xff]
        %v641 = vld [vmem:[%s1 + $0xc98] sm:$0xff]
        %v642 = vld [vmem:[%s1 + $0xca0] sm:$0xff]
        %v643 = vld [vmem:[%s1 + $0xca8] sm:$0xff]
        %v644 = vld [vmem:[%s1 + $0xcb0] sm:$0xff]
        %v645 = vld [vmem:[%s1 + $0xcb8] sm:$0xff]
        %v646 = vld [vmem:[%s1 + $0xcc0] sm:$0xff]
        %v647 = vld [vmem:[%s1 + $0xcc8] sm:$0xff]
        %v648 = vld [vmem:[%s1 + $0xcd0] sm:$0xff]
        %v649 = vld [vmem:[%s1 + $0xcd8] sm:$0xff]
        %v650 = vld [vmem:[%s1 + $0xce0] sm:$0xff]
        %v651 = vld [vmem:[%s1 + $0xce8] sm:$0xff]
        %v652 = vld [vmem:[%s1 + $0xcf0] sm:$0xff]
        %v653 = vld [vmem:[%s1 + $0xcf8] sm:$0xff]
        %v654 = vld [vmem:[%s1 + $0xd00] sm:$0xff]
        %v655 = vld [vmem:[%s1 + $0xd08] sm:$0xff]
        %v656 = vld [vmem:[%s1 + $0xd10] sm:$0xff]
        %v657 = vld [vmem:[%s1 + $0xd18] sm:$0xff]
        %v658 = vld [vmem:[%s1 + $0xd20] sm:$0xff]
        %v659 = vld [vmem:[%s1 + $0xd28] sm:$0xff]
        %v660 = vld [vmem:[%s1 + $0xd30] sm:$0xff]
        %v661 = vld [vmem:[%s1 + $0xd38] sm:$0xff]
        %v662 = vld [vmem:[%s1 + $0xd40] sm:$0xff]
        %v663 = vld [vmem:[%s1 + $0xd48] sm:$0xff]
        %v664 = vld [vmem:[%s1 + $0xd50] sm:$0xff]
        %v665 = vld [vmem:[%s1 + $0xd58] sm:$0xff]
        %v666 = vld [vmem:[%s1 + $0xd60] sm:$0xff]
        %v667 = vld [vmem:[%s1 + $0xd68] sm:$0xff]
        %v668 = vld [vmem:[%s1 + $0xd70] sm:$0xff]
        %v669 = vld [vmem:[%s1 + $0xd78] sm:$0xff]
        %v670 = vld [vmem:[%s1 + $0xd80] sm:$0xff]
        %v671 = vld [vmem:[%s1 + $0xd88] sm:$0xff]
        %v672 = vld [vmem:[%s1 + $0xd90] sm:$0xff]
        %v673 = vld [vmem:[%s1 + $0xd98] sm:$0xff]
        %v674 = vld [vmem:[%s1 + $0xda0] sm:$0xff]
        %v675 = vld [vmem:[%s1 + $0xda8] sm:$0xff]
        %v676 = vld [vmem:[%s1 + $0xdb0] sm:$0xff]
        %v677 = vld [vmem:[%s1 + $0xdb8] sm:$0xff]
        %v678 = vld [vmem:[%s1 + $0xdc0] sm:$0xff]
        %v679 = vld [vmem:[%s1 + $0xdc8] sm:$0xff]
        %v680 = vld [vmem:[%s1 + $0xdd0] sm:$0xff]
        %v681 = vld [vmem:[%s1 + $0xdd8] sm:$0xff]
        %v682 = vld [vmem:[%s1 + $0xde0] sm:$0xff]
        %v683 = vld [vmem:[%s1 + $0xde8] sm:$0xff]
        %v684 = vld [vmem:[%s1 + $0xdf0] sm:$0xff]
        %v685 = vld [vmem:[%s1 + $0xdf8] sm:$0xff]
        %v686 = vld [vmem:[%s1 + $0xe00] sm:$0xff]
        %v687 = vld [vmem:[%s1 + $0xe08] sm:$0xff]
        %v688 = vld [vmem:[%s1 + $0xe10] sm:$0xff]
        %v689 = vld [vmem:[%s1 + $0xe18] sm:$0xff]
        %v690 = vld [vmem:[%s1 + $0xe20] sm:$0xff]
        %v691 = vld [vmem:[%s1 + $0xe28] sm:$0xff]
        %v692 = vld [vmem:[%s1 + $0xe30] sm:$0xff]
        %v693 = vld [vmem:[%s1 + $0xe38] sm:$0xff]
        %v694 = vld [vmem:[%s1 + $0xe40] sm:$0xff]
        %v695 = vld [vmem:[%s1 + $0xe48] sm:$0xff]
        %v696 = vld [vmem:[%s1 + $0xe50] sm:$0xff]
        %v697 = vld [vmem:[%s1 + $0xe58] sm:$0xff]
        %v698 = vld [vmem:[%s1 + $0xe60] sm:$0xff]
        %v699 = vld [vmem:[%s1 + $0xe68] sm:$0xff]
        %v700 = vld [vmem:[%s1 + $0xe70] sm:$0xff]
        %v701 = vld [vmem:[%s1 + $0xe78] sm:$0xff]
        %v702 = vld [vmem:[%s1 + $0xe80] sm:$0xff]
        %v703 = vld [vmem:[%s1 + $0xe88] sm:$0xff]
        %v704 = vld [vmem:[%s1 + $0xe90] sm:$0xff]
        %v705 = vld [vmem:[%s1 + $0xe98] sm:$0xff]
        %v706 = vld [vmem:[%s1 + $0xea0] sm:$0xff]
        %v707 = vld [vmem:[%s1 + $0xea8] sm:$0xff]
        %v708 = vld [vmem:[%s1 + $0xeb0] sm:$0xff]
        %v709 = vld [vmem:[%s1 + $0xeb8] sm:$0xff]
        %v710 = vld [vmem:[%s1 + $0xec0] sm:$0xff]
        %v711 = vld [vmem:[%s1 + $0xec8] sm:$0xff]
        %v712 = vld [vmem:[%s1 + $0xed0] sm:$0xff]
        %v713 = vld [vmem:[%s1 + $0xed8] sm:$0xff]
        %v714 = vld [vmem:[%s1 + $0xee0] sm:$0xff]
        %v715 = vld [vmem:[%s1 + $0xee8] sm:$0xff]
        %v716 = vld [vmem:[%s1 + $0xef0] sm:$0xff]
        %v717 = vld [vmem:[%s1 + $0xef8] sm:$0xff]
        %v718 = vld [vmem:[%s1 + $0xf00] sm:$0xff]
        %v719 = vld [vmem:[%s1 + $0xf08] sm:$0xff]
        %v720 = vld [vmem:[%s1 + $0xf10] sm:$0xff]
        %v721 = vld [vmem:[%s1 + $0xf18] sm:$0xff]
        %v722 = vld [vmem:[%s1 + $0xf20] sm:$0xff]
        %v723 = vld [vmem:[%s1 + $0xf28] sm:$0xff]
        %v724 = vld [vmem:[%s1 + $0xf30] sm:$0xff]
        %v725 = vld [vmem:[%s1 + $0xf38] sm:$0xff]
        %v726 = vld [vmem:[%s1 + $0xf40] sm:$0xff]
        %v727 = vld [vmem:[%s1 + $0xf48] sm:$0xff]
        %v728 = vld [vmem:[%s1 + $0xf50] sm:$0xff]
        %v729 = vld [vmem:[%s1 + $0xf58] sm:$0xff]
        %v730 = vld [vmem:[%s1 + $0xf60] sm:$0xff]
        %v731 = vld [vmem:[%s1 + $0xf68] sm:$0xff]
        %v732 = vld [vmem:[%s1 + $0xf70] sm:$0xff]
        %v733 = vld [vmem:[%s1 + $0xf78] sm:$0xff]
        %v734 = vld [vmem:[%s1 + $0xf80] sm:$0xff]
        %v735 = vld [vmem:[%s1 + $0xf88] sm:$0xff]
        %v736 = vld [vmem:[%s1 + $0xf90] sm:$0xff]
        %v737 = vld [vmem:[%s1 + $0xf98] sm:$0xff]
        %v738 = vld [vmem:[%s1 + $0xfa0] sm:$0xff]
        %v739 = vld [vmem:[%s1 + $0xfa8] sm:$0xff]
        %v740 = vld [vmem:[%s1 + $0xfb0] sm:$0xff]
        %v741 = vld [vmem:[%s1 + $0xfb8] sm:$0xff]
        %v742 = vld [vmem:[%s1 + $0xfc0] sm:$0xff]
        %v743 = vld [vmem:[%s1 + $0xfc8] sm:$0xff]
        %v744 = vld [vmem:[%s1 + $0xfd0] sm:$0xff]
        %v745 = vld [vmem:[%s1 + $0xfd8] sm:$0xff]
        %v746 = vld [vmem:[%s1 + $0xfe0] sm:$0xff]
        %v747 = vld [vmem:[%s1 + $0xfe8] sm:$0xff]
        %v748 = vld [vmem:[%s1 + $0xff0] sm:$0xff]
        %v749 = vld [vmem:[%s1 + $0xff8] sm:$0xff]
        %v750 = vld [vmem:[%s1 + $0x1000] sm:$0xff]
        %v751 = vld [vmem:[%s1 + $0x1008] sm:$0xff]
        %v752 = vld [vmem:[%s1 + $0x1010] sm:$0xff]
        %v753 = vld [vmem:[%s1 + $0x1018] sm:$0xff]
        %v754 = vld [vmem:[%s1 + $0x1020] sm:$0xff]
        %v755 = vld [vmem:[%s1 + $0x1028] sm:$0xff]
        %v756 = vld [vmem:[%s1 + $0x1030] sm:$0xff]
        %v757 = vld [vmem:[%s1 + $0x1038] sm:$0xff]
        %v758 = vld [vmem:[%s1 + $0x1040] sm:$0xff]
        %v759 = vld [vmem:[%s1 + $0x1048] sm:$0xff]
        %v760 = vld [vmem:[%s1 + $0x1050] sm:$0xff]
        %v761 = vld [vmem:[%s1 + $0x1058] sm:$0xff]
        %v762 = vld [vmem:[%s1 + $0x1060] sm:$0xff]
        %v763 = vld [vmem:[%s1 + $0x1068] sm:$0xff]
        %v764 = vld [vmem:[%s1 + $0x1070] sm:$0xff]
        %v765 = vld [vmem:[%s1 + $0x1078] sm:$0xff]
        %v766 = vld [vmem:[%s1 + $0x1080] sm:$0xff]
        %v767 = vld [vmem:[%s1 + $0x1088] sm:$0xff]
        %v768 = vld [vmem:[%s1 + $0x1090] sm:$0xff]
        %v769 = vld [vmem:[%s1 + $0x1098] sm:$0xff]
        %v770 = vld [vmem:[%s1 + $0x10a0] sm:$0xff]
        %v771 = vld [vmem:[%s1 + $0x10a8] sm:$0xff]
        %v772 = vld [vmem:[%s1 + $0x10b0] sm:$0xff]
        %v773 = vld [vmem:[%s1 + $0x10b8] sm:$0xff]
        %v774 = vld [vmem:[%s1 + $0x10c0] sm:$0xff]
        %v775 = vld [vmem:[%s1 + $0x10c8] sm:$0xff]
        %v776 = vld [vmem:[%s1 + $0x10d0] sm:$0xff]
        %v777 = vld [vmem:[%s1 + $0x10d8] sm:$0xff]
        %v778 = vld [vmem:[%s1 + $0x10e0] sm:$0xff]
        %v779 = vld [vmem:[%s1 + $0x10e8] sm:$0xff]
        %v780 = vld [vmem:[%s1 + $0x10f0] sm:$0xff]
        %v781 = vld [vmem:[%s1 + $0x10f8] sm:$0xff]
        %v782 = vld [vmem:[%s1 + $0x1100] sm:$0xff]
        %v783 = vld [vmem:[%s1 + $0x1108] sm:$0xff]
        %v784 = vld [vmem:[%s1 + $0x1110] sm:$0xff]
        %v785 = vld [vmem:[%s1 + $0x1118] sm:$0xff]
        %v786 = vld [vmem:[%s1 + $0x1120] sm:$0xff]
        %v787 = vld [vmem:[%s1 + $0x1128] sm:$0xff]
        %v788 = vld [vmem:[%s1 + $0x1130] sm:$0xff]
        %v789 = vld [vmem:[%s1 + $0x1138] sm:$0xff]
        %v790 = vld [vmem:[%s1 + $0x1140] sm:$0xff]
        %v791 = vld [vmem:[%s1 + $0x1148] sm:$0xff]
        %v792 = vld [vmem:[%s1 + $0x1150] sm:$0xff]
        %v793 = vld [vmem:[%s1 + $0x1158] sm:$0xff]
        %v794 = vld [vmem:[%s1 + $0x1160] sm:$0xff]
        %v795 = vld [vmem:[%s1 + $0x1168] sm:$0xff]
        %v796 = vld [vmem:[%s1 + $0x1170] sm:$0xff]
        %v797 = vld [vmem:[%s1 + $0x1178] sm:$0xff]
        %v798 = vld [vmem:[%s1 + $0x1180] sm:$0xff]
        %v799 = vld [vmem:[%s1 + $0x1188] sm:$0xff]
        %v800 = vld [vmem:[%s1 + $0x1190] sm:$0xff]
        %v801 = vld [vmem:[%s1 + $0x1198] sm:$0xff]
        %v802 = vld [vmem:[%s1 + $0x11a0] sm:$0xff]
        %v803 = vld [vmem:[%s1 + $0x11a8] sm:$0xff]
        %v804 = vld [vmem:[%s1 + $0x11b0] sm:$0xff]
        %v805 = vld [vmem:[%s1 + $0x11b8] sm:$0xff]
        %v806 = vld [vmem:[%s1 + $0x11c0] sm:$0xff]
        %v807 = vld [vmem:[%s1 + $0x11c8] sm:$0xff]
        %v808 = vld [vmem:[%s1 + $0x11d0] sm:$0xff]
        %v809 = vld [vmem:[%s1 + $0x11d8] sm:$0xff]
        %v810 = vld [vmem:[%s1 + $0x11e0] sm:$0xff]
        %v811 = vld [vmem:[%s1 + $0x11e8] sm:$0xff]
        %v812 = vld [vmem:[%s1 + $0x11f0] sm:$0xff]
        %v813 = vld [vmem:[%s1 + $0x11f8] sm:$0xff]
        %v814 = vld [vmem:[%s1 + $0x1200] sm:$0xff]
        %v815 = vld [vmem:[%s1 + $0x1208] sm:$0xff]
        %v816 = vld [vmem:[%s1 + $0x1210] sm:$0xff]
        %v817 = vld [vmem:[%s1 + $0x1218] sm:$0xff]
        %v818 = vld [vmem:[%s1 + $0x1220] sm:$0xff]
        %v819 = vld [vmem:[%s1 + $0x1228] sm:$0xff]
        %v820 = vld [vmem:[%s1 + $0x1230] sm:$0xff]
        %v821 = vld [vmem:[%s1 + $0x1238] sm:$0xff]
        %v822 = vld [vmem:[%s1 + $0x1240] sm:$0xff]
        %v823 = vld [vmem:[%s1 + $0x1248] sm:$0xff]
        %v824 = vld [vmem:[%s1 + $0x1250] sm:$0xff]
        %v825 = vld [vmem:[%s1 + $0x1258] sm:$0xff]
        %v826 = vld [vmem:[%s1 + $0x1260] sm:$0xff]
        %v827 = vld [vmem:[%s1 + $0x1268] sm:$0xff]
        %v828 = vld [vmem:[%s1 + $0x1270] sm:$0xff]
        %v829 = vld [vmem:[%s1 + $0x1278] sm:$0xff]
        %v830 = vld [vmem:[%s1 + $0x1280] sm:$0xff]
        %v831 = vld [vmem:[%s1 + $0x1288] sm:$0xff]
        %v832 = vld [vmem:[%s1 + $0x1290] sm:$0xff]
        %v833 = vld [vmem:[%s1 + $0x1298] sm:$0xff]
        %v834 = vld [vmem:[%s1 + $0x12a0] sm:$0xff]
        %v835 = vld [vmem:[%s1 + $0x12a8] sm:$0xff]
        %v836 = vld [vmem:[%s1 + $0x12b0] sm:$0xff]
        %v837 = vld [vmem:[%s1 + $0x12b8] sm:$0xff]
        %v838 = vld [vmem:[%s1 + $0x12c0] sm:$0xff]
        %v839 = vld [vmem:[%s1 + $0x12c8] sm:$0xff]
        %v840 = vld [vmem:[%s1 + $0x12d0] sm:$0xff]
        %v841 = vld [vmem:[%s1 + $0x12d8] sm:$0xff]
        %v842 = vld [vmem:[%s1 + $0x12e0] sm:$0xff]
        %v843 = vld [vmem:[%s1 + $0x12e8] sm:$0xff]
        %v844 = vld [vmem:[%s1 + $0x12f0] sm:$0xff]
        %v845 = vld [vmem:[%s1 + $0x12f8] sm:$0xff]
        %v846 = vld [vmem:[%s1 + $0x1300] sm:$0xff]
        %v847 = vld [vmem:[%s1 + $0x1308] sm:$0xff]
        %v848 = vld [vmem:[%s1 + $0x1310] sm:$0xff]
        %v849 = vld [vmem:[%s1 + $0x1318] sm:$0xff]
        %v850 = vld [vmem:[%s1 + $0x1320] sm:$0xff]
        %v851 = vld [vmem:[%s1 + $0x1328] sm:$0xff]
        %v852 = vld [vmem:[%s1 + $0x1330] sm:$0xff]
        %v853 = vld [vmem:[%s1 + $0x1338] sm:$0xff]
        %v854 = vld [vmem:[%s1 + $0x1340] sm:$0xff]
        %v855 = vld [vmem:[%s1 + $0x1348] sm:$0xff]
        %v856 = vld [vmem:[%s1 + $0x1350] sm:$0xff]
        %v857 = vld [vmem:[%s1 + $0x1358] sm:$0xff]
        %v858 = vld [vmem:[%s1 + $0x1360] sm:$0xff]
        %v859 = vld [vmem:[%s1 + $0x1368] sm:$0xff]
        %v860 = vld [vmem:[%s1 + $0x1370] sm:$0xff]
        %v861 = vld [vmem:[%s1 + $0x1378] sm:$0xff]
        %v862 = vld [vmem:[%s1 + $0x1380] sm:$0xff]
        %v863 = vld [vmem:[%s1 + $0x1388] sm:$0xff]
        %v864 = vld [vmem:[%s1 + $0x1390] sm:$0xff]
        %v865 = vld [vmem:[%s1 + $0x1398] sm:$0xff]
        %v866 = vld [vmem:[%s1 + $0x13a0] sm:$0xff]
        %v867 = vld [vmem:[%s1 + $0x13a8] sm:$0xff]
        %v868 = vld [vmem:[%s1 + $0x13b0] sm:$0xff]
        %v869 = vld [vmem:[%s1 + $0x13b8] sm:$0xff]
        %v870 = vld [vmem:[%s1 + $0x13c0] sm:$0xff]
        %v871 = vld [vmem:[%s1 + $0x13c8] sm:$0xff]
        %v872 = vld [vmem:[%s1 + $0x13d0] sm:$0xff]
        %v873 = vld [vmem:[%s1 + $0x13d8] sm:$0xff]
        %v874 = vld [vmem:[%s1 + $0x13e0] sm:$0xff]
        %v875 = vld [vmem:[%s1 + $0x13e8] sm:$0xff]
        %v876 = vld [vmem:[%s1 + $0x13f0] sm:$0xff]
        %v877 = vld [vmem:[%s1 + $0x13f8] sm:$0xff]
        %v878 = vld [vmem:[%s1 + $0x1400] sm:$0xff]
        %v879 = vld [vmem:[%s1 + $0x1408] sm:$0xff]
        %v880 = vld [vmem:[%s1 + $0x1410] sm:$0xff]
        %v881 = vld [vmem:[%s1 + $0x1418] sm:$0xff]
        %v882 = vld [vmem:[%s1 + $0x1420] sm:$0xff]
        %v883 = vld [vmem:[%s1 + $0x1428] sm:$0xff]
        %v884 = vld [vmem:[%s1 + $0x1430] sm:$0xff]
        %v885 = vld [vmem:[%s1 + $0x1438] sm:$0xff]
        %v886 = vld [vmem:[%s1 + $0x1440] sm:$0xff]
        %v887 = vld [vmem:[%s1 + $0x1448] sm:$0xff]
        %v888 = vld [vmem:[%s1 + $0x1450] sm:$0xff]
        %v889 = vld [vmem:[%s1 + $0x1458] sm:$0xff]
        %v890 = vld [vmem:[%s1 + $0x1460] sm:$0xff]
        %v891 = vld [vmem:[%s1 + $0x1468] sm:$0xff]
        %v892 = vld [vmem:[%s1 + $0x1470] sm:$0xff]
        %v893 = vld [vmem:[%s1 + $0x1478] sm:$0xff]
        %v894 = vld [vmem:[%s1 + $0x1480] sm:$0xff]
        %v895 = vld [vmem:[%s1 + $0x1488] sm:$0xff]
        %v896 = vld [vmem:[%s1 + $0x1490] sm:$0xff]
        %v897 = vld [vmem:[%s1 + $0x1498] sm:$0xff]
        %v898 = vld [vmem:[%s1 + $0x14a0] sm:$0xff]
        %v899 = vld [vmem:[%s1 + $0x14a8] sm:$0xff]
        %v900 = vld [vmem:[%s1 + $0x14b0] sm:$0xff]
        %v901 = vld [vmem:[%s1 + $0x14b8] sm:$0xff]
        %v902 = vld [vmem:[%s1 + $0x14c0] sm:$0xff]
        %v903 = vld [vmem:[%s1 + $0x14c8] sm:$0xff]
        %v904 = vld [vmem:[%s1 + $0x14d0] sm:$0xff]
        %v905 = vld [vmem:[%s1 + $0x14d8] sm:$0xff]
        %v906 = vld [vmem:[%s1 + $0x14e0] sm:$0xff]
        %v907 = vld [vmem:[%s1 + $0x14e8] sm:$0xff]
        %v908 = vld [vmem:[%s1 + $0x14f0] sm:$0xff]
        %v909 = vld [vmem:[%s1 + $0x14f8] sm:$0xff]
        %v910 = vld [vmem:[%s1 + $0x1500] sm:$0xff]
        %v911 = vld [vmem:[%s1 + $0x1508] sm:$0xff]
        %v912 = vld [vmem:[%s1 + $0x1510] sm:$0xff]
        %v913 = vld [vmem:[%s1 + $0x1518] sm:$0xff]
        %v914 = vld [vmem:[%s1 + $0x1520] sm:$0xff]
        %v915 = vld [vmem:[%s1 + $0x1528] sm:$0xff]
        %v916 = vld [vmem:[%s1 + $0x1530] sm:$0xff]
        %v917 = vld [vmem:[%s1 + $0x1538] sm:$0xff]
        %v918 = vld [vmem:[%s1 + $0x1540] sm:$0xff]
        %v919 = vld [vmem:[%s1 + $0x1548] sm:$0xff]
        %v920 = vld [vmem:[%s1 + $0x1550] sm:$0xff]
        %v921 = vld [vmem:[%s1 + $0x1558] sm:$0xff]
        %v922 = vld [vmem:[%s1 + $0x1560] sm:$0xff]
        %v923 = vld [vmem:[%s1 + $0x1568] sm:$0xff]
        %v924 = vld [vmem:[%s1 + $0x1570] sm:$0xff]
        %v925 = vld [vmem:[%s1 + $0x1578] sm:$0xff]
        %v926 = vld [vmem:[%s1 + $0x1580] sm:$0xff]
        %v927 = vld [vmem:[%s1 + $0x1588] sm:$0xff]
        %v928 = vld [vmem:[%s1 + $0x1590] sm:$0xff]
        %v929 = vld [vmem:[%s1 + $0x1598] sm:$0xff]
        %v930 = vld [vmem:[%s1 + $0x15a0] sm:$0xff]
        %v931 = vld [vmem:[%s1 + $0x15a8] sm:$0xff]
        %v932 = vld [vmem:[%s1 + $0x15b0] sm:$0xff]
        %v933 = vld [vmem:[%s1 + $0x15b8] sm:$0xff]
        %v934 = vld [vmem:[%s1 + $0x15c0] sm:$0xff]
        %v935 = vld [vmem:[%s1 + $0x15c8] sm:$0xff]
        %v936 = vld [vmem:[%s1 + $0x15d0] sm:$0xff]
        %v937 = vld [vmem:[%s1 + $0x15d8] sm:$0xff]
        %v938 = vld [vmem:[%s1 + $0x15e0] sm:$0xff]
        %v939 = vld [vmem:[%s1 + $0x15e8] sm:$0xff]
        %v940 = vld [vmem:[%s1 + $0x15f0] sm:$0xff]
        %v941 = vld [vmem:[%s1 + $0x15f8] sm:$0xff]
        %v942 = vld [vmem:[%s1 + $0x1600] sm:$0xff]
        %v943 = vld [vmem:[%s1 + $0x1608] sm:$0xff]
        %v944 = vld [vmem:[%s1 + $0x1610] sm:$0xff]
        %v945 = vld [vmem:[%s1 + $0x1618] sm:$0xff]
        %v946 = vld [vmem:[%s1 + $0x1620] sm:$0xff]
        %v947 = vld [vmem:[%s1 + $0x1628] sm:$0xff]
        %v948 = vld [vmem:[%s1 + $0x1630] sm:$0xff]
        %v949 = vld [vmem:[%s1 + $0x1638] sm:$0xff]
        %v950 = vld [vmem:[%s1 + $0x1640] sm:$0xff]
        %v951 = vld [vmem:[%s1 + $0x1648] sm:$0xff]
        %v952 = vld [vmem:[%s1 + $0x1650] sm:$0xff]
        %v953 = vld [vmem:[%s1 + $0x1658] sm:$0xff]
        %v954 = vld [vmem:[%s1 + $0x1660] sm:$0xff]
        %v955 = vld [vmem:[%s1 + $0x1668] sm:$0xff]
        %v956 = vld [vmem:[%s1 + $0x1670] sm:$0xff]
        %v957 = vld [vmem:[%s1 + $0x1678] sm:$0xff]
        %v958 = vld [vmem:[%s1 + $0x1680] sm:$0xff]
        %v959 = vld [vmem:[%s1 + $0x1688] sm:$0xff]
        %v960 = vld [vmem:[%s1 + $0x1690] sm:$0xff]
        %v961 = vld [vmem:[%s1 + $0x1698] sm:$0xff]
        %v962 = vld [vmem:[%s1 + $0x16a0] sm:$0xff]
        %v963 = vld [vmem:[%s1 + $0x16a8] sm:$0xff]
        %v964 = vld [vmem:[%s1 + $0x16b0] sm:$0xff]
        %v965 = vld [vmem:[%s1 + $0x16b8] sm:$0xff]
        %v966 = vld [vmem:[%s1 + $0x16c0] sm:$0xff]
        %v967 = vld [vmem:[%s1 + $0x16c8] sm:$0xff]
        %v968 = vld [vmem:[%s1 + $0x16d0] sm:$0xff]
        %v969 = vld [vmem:[%s1 + $0x16d8] sm:$0xff]
        %v970 = vld [vmem:[%s1 + $0x16e0] sm:$0xff]
        %v971 = vld [vmem:[%s1 + $0x16e8] sm:$0xff]
        %v972 = vld [vmem:[%s1 + $0x16f0] sm:$0xff]
        %v973 = vld [vmem:[%s1 + $0x16f8] sm:$0xff]
        %v974 = vld [vmem:[%s1 + $0x1700] sm:$0xff]
        %v975 = vld [vmem:[%s1 + $0x1708] sm:$0xff]
        %v976 = vld [vmem:[%s1 + $0x1710] sm:$0xff]
        %v977 = vld [vmem:[%s1 + $0x1718] sm:$0xff]
        %v978 = vld [vmem:[%s1 + $0x1720] sm:$0xff]
        %v979 = vld [vmem:[%s1 + $0x1728] sm:$0xff]
        %v980 = vld [vmem:[%s1 + $0x1730] sm:$0xff]
        %v981 = vld [vmem:[%s1 + $0x1738] sm:$0xff]
        %v982 = vld [vmem:[%s1 + $0x1740] sm:$0xff]
        %v983 = vld [vmem:[%s1 + $0x1748] sm:$0xff]
        %v984 = vld [vmem:[%s1 + $0x1750] sm:$0xff]
        %v985 = vld [vmem:[%s1 + $0x1758] sm:$0xff]
        %v986 = vld [vmem:[%s1 + $0x1760] sm:$0xff]
        %v987 = vld [vmem:[%s1 + $0x1768] sm:$0xff]
        %v988 = vld [vmem:[%s1 + $0x1770] sm:$0xff]
        %v989 = vld [vmem:[%s1 + $0x1778] sm:$0xff]
        %v990 = vld [vmem:[%s1 + $0x1780] sm:$0xff]
        %v991 = vld [vmem:[%s1 + $0x1788] sm:$0xff]
        %v992 = vld [vmem:[%s1 + $0x1790] sm:$0xff]
        %v993 = vld [vmem:[%s1 + $0x1798] sm:$0xff]
        %v994 = vld [vmem:[%s1 + $0x17a0] sm:$0xff]
        %v995 = vld [vmem:[%s1 + $0x17a8] sm:$0xff]
        %v996 = vld [vmem:[%s1 + $0x17b0] sm:$0xff]
        %v997 = vld [vmem:[%s1 + $0x17b8] sm:$0xff]
        %v998 = vld [vmem:[%s1 + $0x17c0] sm:$0xff]
        %v999 = vld [vmem:[%s1 + $0x17c8] sm:$0xff]
        %v1000 = vld [vmem:[%s1 + $0x17d0] sm:$0xff]
        %v1001 = vld [vmem:[%s1 + $0x17d8] sm:$0xff]
        %v1002 = vld [vmem:[%s1 + $0x17e0] sm:$0xff]
        %v1003 = vld [vmem:[%s1 + $0x17e8] sm:$0xff]
        %v1004 = vld [vmem:[%s1 + $0x17f0] sm:$0xff]
        %v1005 = vld [vmem:[%s1 + $0x17f8] sm:$0xff]
        %v1006 = vld [vmem:[%s1 + $0x1800] sm:$0xff]
        %v1007 = vld [vmem:[%s1 + $0x1808] sm:$0xff]
        %v1008 = vld [vmem:[%s1 + $0x1810] sm:$0xff]
        %v1009 = vld [vmem:[%s1 + $0x1818] sm:$0xff]
        %v1010 = vld [vmem:[%s1 + $0x1820] sm:$0xff]
        %v1011 = vld [vmem:[%s1 + $0x1828] sm:$0xff]
        %v1012 = vld [vmem:[%s1 + $0x1830] sm:$0xff]
        %v1013 = vld [vmem:[%s1 + $0x1838] sm:$0xff]
        %v1014 = vld [vmem:[%s1 + $0x1840] sm:$0xff]
        %v1015 = vld [vmem:[%s1 + $0x1848] sm:$0xff]
        %v1016 = vld [vmem:[%s1 + $0x1850] sm:$0xff]
        %v1017 = vld [vmem:[%s1 + $0x1858] sm:$0xff]
        %v1018 = vld [vmem:[%s1 + $0x1860] sm:$0xff]
        %v1019 = vld [vmem:[%s1 + $0x1868] sm:$0xff]
        %v1020 = vld [vmem:[%s1 + $0x1870] sm:$0xff]
        %v1021 = vld [vmem:[%s1 + $0x1878] sm:$0xff]
        %v1022 = vld [vmem:[%s1 + $0x1880] sm:$0xff]
        %v1023 = vld [vmem:[%s1 + $0x1888] sm:$0xff]
        %v1024 = vld [vmem:[%s1 + $0x1890] sm:$0xff]
        %v1025 = vld [vmem:[%s1 + $0x1898] sm:$0xff]
        %v1026 = vld [vmem:[%s1 + $0x18a0] sm:$0xff]
        %v1027 = vld [vmem:[%s1 + $0x18a8] sm:$0xff]
        %v1028 = vld [vmem:[%s1 + $0x18b0] sm:$0xff]
        %v1029 = vld [vmem:[%s1 + $0x18b8] sm:$0xff]
        %v1030 = vld [vmem:[%s1 + $0x18c0] sm:$0xff]
        %v1031 = vld [vmem:[%s1 + $0x18c8] sm:$0xff]
        %v1032 = vld [vmem:[%s1 + $0x18d0] sm:$0xff]
        %v1033 = vld [vmem:[%s1 + $0x18d8] sm:$0xff]
        %v1034 = vld [vmem:[%s1 + $0x18e0] sm:$0xff]
        %v1035 = vld [vmem:[%s1 + $0x18e8] sm:$0xff]
        %v1036 = vld [vmem:[%s1 + $0x18f0] sm:$0xff]
        %v1037 = vld [vmem:[%s1 + $0x18f8] sm:$0xff]
        %v1038 = vld [vmem:[%s1 + $0x1900] sm:$0xff]
        %v1039 = vld [vmem:[%s1 + $0x1908] sm:$0xff]
        %v1040 = vld [vmem:[%s1 + $0x1910] sm:$0xff]
        %v1041 = vld [vmem:[%s1 + $0x1918] sm:$0xff]
        %v1042 = vld [vmem:[%s1 + $0x1920] sm:$0xff]
        %v1043 = vld [vmem:[%s1 + $0x1928] sm:$0xff]
        %v1044 = vld [vmem:[%s1 + $0x1930] sm:$0xff]
        %v1045 = vld [vmem:[%s1 + $0x1938] sm:$0xff]
        %v1046 = vld [vmem:[%s1 + $0x1940] sm:$0xff]
        %v1047 = vld [vmem:[%s1 + $0x1948] sm:$0xff]
        %v1048 = vld [vmem:[%s1 + $0x1950] sm:$0xff]
        %v1049 = vld [vmem:[%s1 + $0x1958] sm:$0xff]
        %v1050 = vld [vmem:[%s1 + $0x1960] sm:$0xff]
        %v1051 = vld [vmem:[%s1 + $0x1968] sm:$0xff]
        %v1052 = vld [vmem:[%s1 + $0x1970] sm:$0xff]
        %v1053 = vld [vmem:[%s1 + $0x1978] sm:$0xff]
        %v1054 = vld [vmem:[%s1 + $0x1980] sm:$0xff]
        %v1055 = vld [vmem:[%s1 + $0x1988] sm:$0xff]
        %v1056 = vld [vmem:[%s1 + $0x1990] sm:$0xff]
        %v1057 = vld [vmem:[%s1 + $0x1998] sm:$0xff]
        %v1058 = vld [vmem:[%s1 + $0x19a0] sm:$0xff]
        %v1059 = vld [vmem:[%s1 + $0x19a8] sm:$0xff]
        %v1060 = vld [vmem:[%s1 + $0x19b0] sm:$0xff]
        %v1061 = vld [vmem:[%s1 + $0x19b8] sm:$0xff]
        %v1062 = vld [vmem:[%s1 + $0x19c0] sm:$0xff]
        %v1063 = vld [vmem:[%s1 + $0x19c8] sm:$0xff]
        %v1064 = vld [vmem:[%s1 + $0x19d0] sm:$0xff]
        %v1065 = vld [vmem:[%s1 + $0x19d8] sm:$0xff]
        %v1066 = vld [vmem:[%s1 + $0x19e0] sm:$0xff]
        %v1067 = vld [vmem:[%s1 + $0x19e8] sm:$0xff]
        %v1068 = vld [vmem:[%s1 + $0x19f0] sm:$0xff]
        %v1069 = vld [vmem:[%s1 + $0x19f8] sm:$0xff]
        %v1070 = vld [vmem:[%s1 + $0x1a00] sm:$0xff]
        %v1071 = vld [vmem:[%s1 + $0x1a08] sm:$0xff]
        %v1072 = vld [vmem:[%s1 + $0x1a10] sm:$0xff]
        %v1073 = vld [vmem:[%s1 + $0x1a18] sm:$0xff]
        %v1074 = vld [vmem:[%s1 + $0x1a20] sm:$0xff]
        %v1075 = vld [vmem:[%s1 + $0x1a28] sm:$0xff]
        %v1076 = vld [vmem:[%s1 + $0x1a30] sm:$0xff]
        %v1077 = vld [vmem:[%s1 + $0x1a38] sm:$0xff]
        %v1078 = vld [vmem:[%s1 + $0x1a40] sm:$0xff]
        %v1079 = vld [vmem:[%s1 + $0x1a48] sm:$0xff]
        %v1080 = vld [vmem:[%s1 + $0x1a50] sm:$0xff]
        %v1081 = vld [vmem:[%s1 + $0x1a58] sm:$0xff]
        %v1082 = vld [vmem:[%s1 + $0x1a60] sm:$0xff]
        %v1083 = vld [vmem:[%s1 + $0x1a68] sm:$0xff]
        %v1084 = vld [vmem:[%s1 + $0x1a70] sm:$0xff]
        %v1085 = vld [vmem:[%s1 + $0x1a78] sm:$0xff]
        %v1086 = vld [vmem:[%s1 + $0x1a80] sm:$0xff]
        %v1087 = vld [vmem:[%s1 + $0x1a88] sm:$0xff]
        %v1088 = vld [vmem:[%s1 + $0x1a90] sm:$0xff]
        %v1089 = vld [vmem:[%s1 + $0x1a98] sm:$0xff]
        %v1090 = vld [vmem:[%s1 + $0x1aa0] sm:$0xff]
        %v1091 = vld [vmem:[%s1 + $0x1aa8] sm:$0xff]
        %v1092 = vld [vmem:[%s1 + $0x1ab0] sm:$0xff]
        %v1093 = vld [vmem:[%s1 + $0x1ab8] sm:$0xff]
        %v1094 = vld [vmem:[%s1 + $0x1ac0] sm:$0xff]
        %v1095 = vld [vmem:[%s1 + $0x1ac8] sm:$0xff]
        %v1096 = vld [vmem:[%s1 + $0x1ad0] sm:$0xff]
        %v1097 = vld [vmem:[%s1 + $0x1ad8] sm:$0xff]
        %v1098 = vld [vmem:[%s1 + $0x1ae0] sm:$0xff]
        %v1099 = vld [vmem:[%s1 + $0x1ae8] sm:$0xff]
        %v1100 = vld [vmem:[%s1 + $0x1af0] sm:$0xff]
        %v1101 = vld [vmem:[%s1 + $0x1af8] sm:$0xff]
        %v1102 = vld [vmem:[%s1 + $0x1b00] sm:$0xff]
        %v1103 = vld [vmem:[%s1 + $0x1b08] sm:$0xff]
        %v1104 = vld [vmem:[%s1 + $0x1b10] sm:$0xff]
        %v1105 = vld [vmem:[%s1 + $0x1b18] sm:$0xff]
        %v1106 = vld [vmem:[%s1 + $0x1b20] sm:$0xff]
        %v1107 = vld [vmem:[%s1 + $0x1b28] sm:$0xff]
        %v1108 = vld [vmem:[%s1 + $0x1b30] sm:$0xff]
        %v1109 = vld [vmem:[%s1 + $0x1b38] sm:$0xff]
        %v1110 = vld [vmem:[%s1 + $0x1b40] sm:$0xff]
        %v1111 = vld [vmem:[%s1 + $0x1b48] sm:$0xff]
        %v1112 = vld [vmem:[%s1 + $0x1b50] sm:$0xff]
        %v1113 = vld [vmem:[%s1 + $0x1b58] sm:$0xff]
        %v1114 = vld [vmem:[%s1 + $0x1b60] sm:$0xff]
        %v1115 = vld [vmem:[%s1 + $0x1b68] sm:$0xff]
        %v1116 = vld [vmem:[%s1 + $0x1b70] sm:$0xff]
        %v1117 = vld [vmem:[%s1 + $0x1b78] sm:$0xff]
        %v1118 = vld [vmem:[%s1 + $0x1b80] sm:$0xff]
        %v1119 = vld [vmem:[%s1 + $0x1b88] sm:$0xff]
        %v1120 = vld [vmem:[%s1 + $0x1b90] sm:$0xff]
        %v1121 = vld [vmem:[%s1 + $0x1b98] sm:$0xff]
        %v1122 = vld [vmem:[%s1 + $0x1ba0] sm:$0xff]
        %v1123 = vld [vmem:[%s1 + $0x1ba8] sm:$0xff]
        %v1124 = vld [vmem:[%s1 + $0x1bb0] sm:$0xff]
        %v1125 = vld [vmem:[%s1 + $0x1bb8] sm:$0xff]
        %v1126 = vld [vmem:[%s1 + $0x1bc0] sm:$0xff]
        %v1127 = vld [vmem:[%s1 + $0x1bc8] sm:$0xff]
        %v1128 = vld [vmem:[%s1 + $0x1bd0] sm:$0xff]
        %v1129 = vld [vmem:[%s1 + $0x1bd8] sm:$0xff]
        %v1130 = vld [vmem:[%s1 + $0x1be0] sm:$0xff]
        %v1131 = vld [vmem:[%s1 + $0x1be8] sm:$0xff]
        %v1132 = vld [vmem:[%s1 + $0x1bf0] sm:$0xff]
        %v1133 = vld [vmem:[%s1 + $0x1bf8] sm:$0xff]
        %v1134 = vld [vmem:[%s1 + $0x1c00] sm:$0xff]
        %v1135 = vld [vmem:[%s1 + $0x1c08] sm:$0xff]
        %v1136 = vld [vmem:[%s1 + $0x1c10] sm:$0xff]
        %v1137 = vld [vmem:[%s1 + $0x1c18] sm:$0xff]
        %v1138 = vld [vmem:[%s1 + $0x1c20] sm:$0xff]
        %v1139 = vld [vmem:[%s1 + $0x1c28] sm:$0xff]
        %v1140 = vld [vmem:[%s1 + $0x1c30] sm:$0xff]
        %v1141 = vld [vmem:[%s1 + $0x1c38] sm:$0xff]
        %v1142 = vld [vmem:[%s1 + $0x1c40] sm:$0xff]
        %v1143 = vld [vmem:[%s1 + $0x1c48] sm:$0xff]
        %v1144 = vld [vmem:[%s1 + $0x1c50] sm:$0xff]
        %v1145 = vld [vmem:[%s1 + $0x1c58] sm:$0xff]
        %v1146 = vld [vmem:[%s1 + $0x1c60] sm:$0xff]
        %v1147 = vld [vmem:[%s1 + $0x1c68] sm:$0xff]
        %v1148 = vld [vmem:[%s1 + $0x1c70] sm:$0xff]
        %v1149 = vld [vmem:[%s1 + $0x1c78] sm:$0xff]
        %v1150 = vld [vmem:[%s1 + $0x1c80] sm:$0xff]
        %v1151 = vld [vmem:[%s1 + $0x1c88] sm:$0xff]
        %v1152 = vld [vmem:[%s1 + $0x1c90] sm:$0xff]
        %v1153 = vld [vmem:[%s1 + $0x1c98] sm:$0xff]
        %v1154 = vld [vmem:[%s1 + $0x1ca0] sm:$0xff]
        %v1155 = vld [vmem:[%s1 + $0x1ca8] sm:$0xff]
        %v1156 = vld [vmem:[%s1 + $0x1cb0] sm:$0xff]
        %v1157 = vld [vmem:[%s1 + $0x1cb8] sm:$0xff]
        %v1158 = vld [vmem:[%s1 + $0x1cc0] sm:$0xff]
        %v1159 = vld [vmem:[%s1 + $0x1cc8] sm:$0xff]
        %v1160 = vld [vmem:[%s1 + $0x1cd0] sm:$0xff]
        %v1161 = vld [vmem:[%s1 + $0x1cd8] sm:$0xff]
        %v1162 = vld [vmem:[%s1 + $0x1ce0] sm:$0xff]
        %v1163 = vld [vmem:[%s1 + $0x1ce8] sm:$0xff]
        %v1164 = vld [vmem:[%s1 + $0x1cf0] sm:$0xff]
        %v1165 = vld [vmem:[%s1 + $0x1cf8] sm:$0xff]
        %v1166 = vld [vmem:[%s1 + $0x1d00] sm:$0xff]
        %v1167 = vld [vmem:[%s1 + $0x1d08] sm:$0xff]
        %v1168 = vld [vmem:[%s1 + $0x1d10] sm:$0xff]
        %v1169 = vld [vmem:[%s1 + $0x1d18] sm:$0xff]
        %v1170 = vld [vmem:[%s1 + $0x1d20] sm:$0xff]
        %v1171 = vld [vmem:[%s1 + $0x1d28] sm:$0xff]
        %v1172 = vld [vmem:[%s1 + $0x1d30] sm:$0xff]
        %v1173 = vld [vmem:[%s1 + $0x1d38] sm:$0xff]
        %v1174 = vld [vmem:[%s1 + $0x1d40] sm:$0xff]
        %v1175 = vld [vmem:[%s1 + $0x1d48] sm:$0xff]
        %v1176 = vld [vmem:[%s1 + $0x1d50] sm:$0xff]
        %v1177 = vld [vmem:[%s1 + $0x1d58] sm:$0xff]
        %v1178 = vld [vmem:[%s1 + $0x1d60] sm:$0xff]
        %v1179 = vld [vmem:[%s1 + $0x1d68] sm:$0xff]
        %v1180 = vld [vmem:[%s1 + $0x1d70] sm:$0xff]
        %v1181 = vld [vmem:[%s1 + $0x1d78] sm:$0xff]
        %v1182 = vld [vmem:[%s1 + $0x1d80] sm:$0xff]
        %v1183 = vld [vmem:[%s1 + $0x1d88] sm:$0xff]
        %v1184 = vld [vmem:[%s1 + $0x1d90] sm:$0xff]
        %v1185 = vld [vmem:[%s1 + $0x1d98] sm:$0xff]
        %v1186 = vld [vmem:[%s1 + $0x1da0] sm:$0xff]
        %v1187 = vld [vmem:[%s1 + $0x1da8] sm:$0xff]
        %v1188 = vld [vmem:[%s1 + $0x1db0] sm:$0xff]
        %v1189 = vld [vmem:[%s1 + $0x1db8] sm:$0xff]
        %v1190 = vld [vmem:[%s1 + $0x1dc0] sm:$0xff]
        %v1191 = vld [vmem:[%s1 + $0x1dc8] sm:$0xff]
        %v1192 = vld [vmem:[%s1 + $0x1dd0] sm:$0xff]
        %v1193 = vld [vmem:[%s1 + $0x1dd8] sm:$0xff]
        %v1194 = vld [vmem:[%s1 + $0x1de0] sm:$0xff]
        %v1195 = vld [vmem:[%s1 + $0x1de8] sm:$0xff]
        %v1196 = vld [vmem:[%s1 + $0x1df0] sm:$0xff]
        %v1197 = vld [vmem:[%s1 + $0x1df8] sm:$0xff]
        %v1198 = vld [vmem:[%s1 + $0x1e00] sm:$0xff]
        %v1199 = vld [vmem:[%s1 + $0x1e08] sm:$0xff]
        %v1200 = vld [vmem:[%s1 + $0x1e10] sm:$0xff]
        %v1201 = vld [vmem:[%s1 + $0x1e18] sm:$0xff]
        %v1202 = vld [vmem:[%s1 + $0x1e20] sm:$0xff]
        %v1203 = vld [vmem:[%s1 + $0x1e28] sm:$0xff]
        %v1204 = vld [vmem:[%s1 + $0x1e30] sm:$0xff]
        %v1205 = vld [vmem:[%s1 + $0x1e38] sm:$0xff]
        %v1206 = vld [vmem:[%s1 + $0x1e40] sm:$0xff]
        %v1207 = vld [vmem:[%s1 + $0x1e48] sm:$0xff]
        %v1208 = vld [vmem:[%s1 + $0x1e50] sm:$0xff]
        %v1209 = vld [vmem:[%s1 + $0x1e58] sm:$0xff]
        %v1210 = vld [vmem:[%s1 + $0x1e60] sm:$0xff]
        %v1211 = vld [vmem:[%s1 + $0x1e68] sm:$0xff]
        %v1212 = vld [vmem:[%s1 + $0x1e70] sm:$0xff]
        %v1213 = vld [vmem:[%s1 + $0x1e78] sm:$0xff]
        %v1214 = vld [vmem:[%s1 + $0x1e80] sm:$0xff]
        %v1215 = vld [vmem:[%s1 + $0x1e88] sm:$0xff]
        %v1216 = vld [vmem:[%s1 + $0x1e90] sm:$0xff]
        %v1217 = vld [vmem:[%s1 + $0x1e98] sm:$0xff]
        %v1218 = vld [vmem:[%s1 + $0x1ea0] sm:$0xff]
        %v1219 = vld [vmem:[%s1 + $0x1ea8] sm:$0xff]
        %v1220 = vld [vmem:[%s1 + $0x1eb0] sm:$0xff]
        %v1221 = vld [vmem:[%s1 + $0x1eb8] sm:$0xff]
        %v1222 = vld [vmem:[%s1 + $0x1ec0] sm:$0xff]
        %v1223 = vld [vmem:[%s1 + $0x1ec8] sm:$0xff]
        %v1224 = vld [vmem:[%s1 + $0x1ed0] sm:$0xff]
        %v1225 = vld [vmem:[%s1 + $0x1ed8] sm:$0xff]
        %v1226 = vld [vmem:[%s1 + $0x1ee0] sm:$0xff]
        %v1227 = vld [vmem:[%s1 + $0x1ee8] sm:$0xff]
        %v1228 = vld [vmem:[%s1 + $0x1ef0] sm:$0xff]
        %v1229 = vld [vmem:[%s1 + $0x1ef8] sm:$0xff]
        %v1230 = vld [vmem:[%s1 + $0x1f00] sm:$0xff]
        %v1231 = vld [vmem:[%s1 + $0x1f08] sm:$0xff]
        %v1232 = vld [vmem:[%s1 + $0x1f10] sm:$0xff]
        %v1233 = vld [vmem:[%s1 + $0x1f18] sm:$0xff]
        %v1234 = vld [vmem:[%s1 + $0x1f20] sm:$0xff]
        %v1235 = vld [vmem:[%s1 + $0x1f28] sm:$0xff]
        %v1236 = vld [vmem:[%s1 + $0x1f30] sm:$0xff]
        %v1237 = vld [vmem:[%s1 + $0x1f38] sm:$0xff]
        %v1238 = vld [vmem:[%s1 + $0x1f40] sm:$0xff]
        %v1239 = vld [vmem:[%s1 + $0x1f48] sm:$0xff]
        %v1240 = vld [vmem:[%s1 + $0x1f50] sm:$0xff]
        %v1241 = vld [vmem:[%s1 + $0x1f58] sm:$0xff]
        %v1242 = vld [vmem:[%s1 + $0x1f60] sm:$0xff]
        %v1243 = vld [vmem:[%s1 + $0x1f68] sm:$0xff]
        %v1244 = vld [vmem:[%s1 + $0x1f70] sm:$0xff]
        %v1245 = vld [vmem:[%s1 + $0x1f78] sm:$0xff]
        %v1246 = vld [vmem:[%s1 + $0x1f80] sm:$0xff]
        %v1247 = vld [vmem:[%s1 + $0x1f88] sm:$0xff]
        %v1248 = vld [vmem:[%s1 + $0x1f90] sm:$0xff]
        %v1249 = vld [vmem:[%s1 + $0x1f98] sm:$0xff]
        %v1250 = vld [vmem:[%s1 + $0x1fa0] sm:$0xff]
        %v1251 = vld [vmem:[%s1 + $0x1fa8] sm:$0xff]
        %v1252 = vld [vmem:[%s1 + $0x1fb0] sm:$0xff]
        %v1253 = vld [vmem:[%s1 + $0x1fb8] sm:$0xff]
        %v1254 = vld [vmem:[%s1 + $0x1fc0] sm:$0xff]
        %v1255 = vld [vmem:[%s1 + $0x1fc8] sm:$0xff]
        %v1256 = vld [vmem:[%s1 + $0x1fd0] sm:$0xff]
        %v1257 = vld [vmem:[%s1 + $0x1fd8] sm:$0xff]
        %v1258 = vld [vmem:[%s1 + $0x1fe0] sm:$0xff]
        %v1259 = vld [vmem:[%s1 + $0x1fe8] sm:$0xff]
        %v1260 = vld [vmem:[%s1 + $0x1ff0] sm:$0xff]
        %v1261 = vld [vmem:[%s1 + $0x1ff8] sm:$0xff]
        %v1262 = vld [vmem:[%s1 + $0x2000] sm:$0xff]
        %v1263 = vld [vmem:[%s1 + $0x2008] sm:$0xff]
        %v1264 = vld [vmem:[%s1 + $0x2010] sm:$0xff]
        %v1265 = vld [vmem:[%s1 + $0x2018] sm:$0xff]
        %v1266 = vld [vmem:[%s1 + $0x2020] sm:$0xff]
        %v1267 = vld [vmem:[%s1 + $0x2028] sm:$0xff]
        %v1268 = vld [vmem:[%s1 + $0x2030] sm:$0xff]
        %v1269 = vld [vmem:[%s1 + $0x2038] sm:$0xff]
        %v1270 = vld [vmem:[%s1 + $0x2040] sm:$0xff]
        %v1271 = vld [vmem:[%s1 + $0x2048] sm:$0xff]
        %v1272 = vld [vmem:[%s1 + $0x2050] sm:$0xff]
        %v1273 = vld [vmem:[%s1 + $0x2058] sm:$0xff]
        %v1274 = vld [vmem:[%s1 + $0x2060] sm:$0xff]
        %v1275 = vld [vmem:[%s1 + $0x2068] sm:$0xff]
        %v1276 = vld [vmem:[%s1 + $0x2070] sm:$0xff]
        %v1277 = vld [vmem:[%s1 + $0x2078] sm:$0xff]
        %v1278 = vld [vmem:[%s1 + $0x2080] sm:$0xff]
        %v1279 = vld [vmem:[%s1 + $0x2088] sm:$0xff]
        %v1280 = vld [vmem:[%s1 + $0x2090] sm:$0xff]
        %v1281 = vld [vmem:[%s1 + $0x2098] sm:$0xff]
        %v1282 = vld [vmem:[%s1 + $0x20a0] sm:$0xff]
        %v1283 = vld [vmem:[%s1 + $0x20a8] sm:$0xff]
        %v1284 = vld [vmem:[%s1 + $0x20b0] sm:$0xff]
        %v1285 = vld [vmem:[%s1 + $0x20b8] sm:$0xff]
        %v1286 = vld [vmem:[%s1 + $0x20c0] sm:$0xff]
        %v1287 = vld [vmem:[%s1 + $0x20c8] sm:$0xff]
        %v1288 = vld [vmem:[%s1 + $0x20d0] sm:$0xff]
        %v1289 = vld [vmem:[%s1 + $0x20d8] sm:$0xff]
        %v1290 = vld [vmem:[%s1 + $0x20e0] sm:$0xff]
        %v1291 = vld [vmem:[%s1 + $0x20e8] sm:$0xff]
        %v1292 = vld [vmem:[%s1 + $0x20f0] sm:$0xff]
        %v1293 = vld [vmem:[%s1 + $0x20f8] sm:$0xff]
        %v1294 = vld [vmem:[%s1 + $0x2100] sm:$0xff]
        %v1295 = vld [vmem:[%s1 + $0x2108] sm:$0xff]
        %v1296 = vld [vmem:[%s1 + $0x2110] sm:$0xff]
        %v1297 = vld [vmem:[%s1 + $0x2118] sm:$0xff]
        %v1298 = vld [vmem:[%s1 + $0x2120] sm:$0xff]
        %v1299 = vld [vmem:[%s1 + $0x2128] sm:$0xff]
        %v1300 = vld [vmem:[%s1 + $0x2130] sm:$0xff]
        %v1301 = vld [vmem:[%s1 + $0x2138] sm:$0xff]
        %v1302 = vld [vmem:[%s1 + $0x2140] sm:$0xff]
        %v1303 = vld [vmem:[%s1 + $0x2148] sm:$0xff]
        %v1304 = vld [vmem:[%s1 + $0x2150] sm:$0xff]
        %v1305 = vld [vmem:[%s1 + $0x2158] sm:$0xff]
        %v1306 = vld [vmem:[%s1 + $0x2160] sm:$0xff]
        %v1307 = vld [vmem:[%s1 + $0x2168] sm:$0xff]
        %v1308 = vld [vmem:[%s1 + $0x2170] sm:$0xff]
        %v1309 = vld [vmem:[%s1 + $0x2178] sm:$0xff]
        %v1310 = vld [vmem:[%s1 + $0x2180] sm:$0xff]
        %v1311 = vld [vmem:[%s1 + $0x2188] sm:$0xff]
        %v1312 = vld [vmem:[%s1 + $0x2190] sm:$0xff]
        %v1313 = vld [vmem:[%s1 + $0x2198] sm:$0xff]
        %v1314 = vld [vmem:[%s1 + $0x21a0] sm:$0xff]
        %v1315 = vld [vmem:[%s1 + $0x21a8] sm:$0xff]
        %v1316 = vld [vmem:[%s1 + $0x21b0] sm:$0xff]
        %v1317 = vld [vmem:[%s1 + $0x21b8] sm:$0xff]
        %v1318 = vld [vmem:[%s1 + $0x21c0] sm:$0xff]
        %v1319 = vld [vmem:[%s1 + $0x21c8] sm:$0xff]
        %v1320 = vld [vmem:[%s1 + $0x21d0] sm:$0xff]
        %v1321 = vld [vmem:[%s1 + $0x21d8] sm:$0xff]
        %v1322 = vld [vmem:[%s1 + $0x21e0] sm:$0xff]
        %v1323 = vld [vmem:[%s1 + $0x21e8] sm:$0xff]
        %v1324 = vld [vmem:[%s1 + $0x21f0] sm:$0xff]
        %v1325 = vld [vmem:[%s1 + $0x21f8] sm:$0xff]
        %v1326 = vld [vmem:[%s1 + $0x2200] sm:$0xff]
        %v1327 = vld [vmem:[%s1 + $0x2208] sm:$0xff]
        %v1328 = vld [vmem:[%s1 + $0x2210] sm:$0xff]
        %v1329 = vld [vmem:[%s1 + $0x2218] sm:$0xff]
        %v1330 = vld [vmem:[%s1 + $0x2220] sm:$0xff]
        %v1331 = vld [vmem:[%s1 + $0x2228] sm:$0xff]
        %v1332 = vld [vmem:[%s1 + $0x2230] sm:$0xff]
        %v1333 = vld [vmem:[%s1 + $0x2238] sm:$0xff]
        %v1334 = vld [vmem:[%s1 + $0x2240] sm:$0xff]
        %v1335 = vld [vmem:[%s1 + $0x2248] sm:$0xff]
        %v1336 = vld [vmem:[%s1 + $0x2250] sm:$0xff]
        %v1337 = vld [vmem:[%s1 + $0x2258] sm:$0xff]
        %v1338 = vld [vmem:[%s1 + $0x2260] sm:$0xff]
        %v1339 = vld [vmem:[%s1 + $0x2268] sm:$0xff]
        %v1340 = vld [vmem:[%s1 + $0x2270] sm:$0xff]
        %v1341 = vld [vmem:[%s1 + $0x2278] sm:$0xff]
        %v1342 = vld [vmem:[%s1 + $0x2280] sm:$0xff]
        %v1343 = vld [vmem:[%s1 + $0x2288] sm:$0xff]
        %v1344 = vld [vmem:[%s1 + $0x2290] sm:$0xff]
        %v1345 = vld [vmem:[%s1 + $0x2298] sm:$0xff]
        %v1346 = vld [vmem:[%s1 + $0x22a0] sm:$0xff]
        %v1347 = vld [vmem:[%s1 + $0x22a8] sm:$0xff]
        %v1348 = vld [vmem:[%s1 + $0x22b0] sm:$0xff]
        %v1349 = vld [vmem:[%s1 + $0x22b8] sm:$0xff]
        %v1350 = vld [vmem:[%s1 + $0x22c0] sm:$0xff]
        %v1351 = vld [vmem:[%s1 + $0x22c8] sm:$0xff]
        %v1352 = vld [vmem:[%s1 + $0x22d0] sm:$0xff]
        %v1353 = vld [vmem:[%s1 + $0x22d8] sm:$0xff]
        %v1354 = vld [vmem:[%s1 + $0x22e0] sm:$0xff]
        %v1355 = vld [vmem:[%s1 + $0x22e8] sm:$0xff]
        %v1356 = vld [vmem:[%s1 + $0x22f0] sm:$0xff]
        %v1357 = vld [vmem:[%s1 + $0x22f8] sm:$0xff]
        %v1358 = vld [vmem:[%s1 + $0x2300] sm:$0xff]
        %v1359 = vld [vmem:[%s1 + $0x2308] sm:$0xff]
        %v1360 = vld [vmem:[%s1 + $0x2310] sm:$0xff]
        %v1361 = vld [vmem:[%s1 + $0x2318] sm:$0xff]
        %v1362 = vld [vmem:[%s1 + $0x2320] sm:$0xff]
        %v1363 = vld [vmem:[%s1 + $0x2328] sm:$0xff]
        %v1364 = vld [vmem:[%s1 + $0x2330] sm:$0xff]
        %v1365 = vld [vmem:[%s1 + $0x2338] sm:$0xff]
        %v1366 = vld [vmem:[%s1 + $0x2340] sm:$0xff]
        %v1367 = vld [vmem:[%s1 + $0x2348] sm:$0xff]
        %v1368 = vld [vmem:[%s1 + $0x2350] sm:$0xff]
        %v1369 = vld [vmem:[%s1 + $0x2358] sm:$0xff]
        %v1370 = vld [vmem:[%s1 + $0x2360] sm:$0xff]
        %v1371 = vld [vmem:[%s1 + $0x2368] sm:$0xff]
        %v1372 = vld [vmem:[%s1 + $0x2370] sm:$0xff]
        %v1373 = vld [vmem:[%s1 + $0x2378] sm:$0xff]
        %v1374 = vld [vmem:[%s1 + $0x2380] sm:$0xff]
        %v1375 = vld [vmem:[%s1 + $0x2388] sm:$0xff]
        %v1376 = vld [vmem:[%s1 + $0x2390] sm:$0xff]
        %v1377 = vld [vmem:[%s1 + $0x2398] sm:$0xff]
        %v1378 = vld [vmem:[%s1 + $0x23a0] sm:$0xff]
        %v1379 = vld [vmem:[%s1 + $0x23a8] sm:$0xff]
        %v1380 = vld [vmem:[%s1 + $0x23b0] sm:$0xff]
        %v1381 = vld [vmem:[%s1 + $0x23b8] sm:$0xff]
        %v1382 = vld [vmem:[%s1 + $0x23c0] sm:$0xff]
        %v1383 = vld [vmem:[%s1 + $0x23c8] sm:$0xff]
        %v1384 = vld [vmem:[%s1 + $0x23d0] sm:$0xff]
        %v1385 = vld [vmem:[%s1 + $0x23d8] sm:$0xff]
        %v1386 = vld [vmem:[%s1 + $0x23e0] sm:$0xff]
        %v1387 = vld [vmem:[%s1 + $0x23e8] sm:$0xff]
        %v1388 = vld [vmem:[%s1 + $0x23f0] sm:$0xff]
        %v1389 = vld [vmem:[%s1 + $0x23f8] sm:$0xff]
        %v1395 = vcombine.high %v233, %v233
        %v1397 = vunpack.c.l.s4 1983009808
        %v1398 = vunpack.c.0.s8 %v1397
        %v1399 = vlaneseq
        %v1400 = vshrl.u32 %v1399, 7
        %v1401 = vsub.s32 %v1398, %v1400
        %v1402 = vrot.slane %v233, %v1401
        %v1404 = vunpack.c.l.s4 1983009808
        %v1405 = vunpack.c.0.s8 %v1404
        %v1406 = vlaneseq
        %v1407 = vshrl.u32 %v1406, 7
        %v1408 = vsub.s32 %v1405, %v1407
        %v1409 = vrot.slane %v1395, %v1408
        %v1410 = vcombine.high %v1402, %v1402
        %v1411 = vcombine.high %v1409, %v1409
        %v1412 = vcombine.high %v234, %v234
        %v1414 = vunpack.c.l.s4 1983009808
        %v1415 = vunpack.c.0.s8 %v1414
        %v1416 = vlaneseq
        %v1417 = vshrl.u32 %v1416, 7
        %v1418 = vsub.s32 %v1415, %v1417
        %v1419 = vrot.slane %v234, %v1418
        %v1421 = vunpack.c.l.s4 1983009808
        %v1422 = vunpack.c.0.s8 %v1421
        %v1423 = vlaneseq
        %v1424 = vshrl.u32 %v1423, 7
        %v1425 = vsub.s32 %v1422, %v1424
        %v1426 = vrot.slane %v1412, %v1425
        %v1427 = vcombine.high %v1419, %v1419
        %v1428 = vcombine.high %v1426, %v1426
        %v1429 = vcombine.high %v235, %v235
        %v1431 = vunpack.c.l.s4 1983009808
        %v1432 = vunpack.c.0.s8 %v1431
        %v1433 = vlaneseq
        %v1434 = vshrl.u32 %v1433, 7
        %v1435 = vsub.s32 %v1432, %v1434
        %v1436 = vrot.slane %v235, %v1435
        %v1438 = vunpack.c.l.s4 1983009808
        %v1439 = vunpack.c.0.s8 %v1438
        %v1440 = vlaneseq
        %v1441 = vshrl.u32 %v1440, 7
        %v1442 = vsub.s32 %v1439, %v1441
        %v1443 = vrot.slane %v1429, %v1442
        %v1444 = vcombine.high %v1436, %v1436
        %v1445 = vcombine.high %v1443, %v1443
        %v1446 = vcombine.high %v236, %v236
        %v1448 = vunpack.c.l.s4 1983009808
        %v1449 = vunpack.c.0.s8 %v1448
        %v1450 = vlaneseq
        %v1451 = vshrl.u32 %v1450, 7
        %v1452 = vsub.s32 %v1449, %v1451
        %v1453 = vrot.slane %v236, %v1452
        %v1455 = vunpack.c.l.s4 1983009808
        %v1456 = vunpack.c.0.s8 %v1455
        %v1457 = vlaneseq
        %v1458 = vshrl.u32 %v1457, 7
        %v1459 = vsub.s32 %v1456, %v1458
        %v1460 = vrot.slane %v1446, %v1459
        %v1461 = vcombine.high %v1453, %v1453
        %v1462 = vcombine.high %v1460, %v1460
        %v1464 = vunpack.c.l.s4 1983009808
        %v1465 = vunpack.c.0.s8 %v1464
        %v1466 = vlaneseq
        %v1467 = vshrl.u32 %v1466, 7
        %v1468 = vsub.s32 %v1465, %v1467
        %v1469 = vrot.slane %v237, %v1468
        %v1470 = vcombine.high %v1469, %v1469
        %1489 = vmatprep.subr.mxu0 %v239
        %1490 = vmatpush1.msra.mxu0 %v238
        %1491 = vmatprep.subr.mxu0 %v243
        %1492 = vmatpush1.msra.mxu0 %v242
        %1493 = vmatprep.subr.mxu0 %v247
        %1494 = vmatpush1.msra.mxu0 %v246
        %1495 = vmatprep.subr.mxu0 %v251
        %1496 = vmatpush1.msra.mxu0 %v250
        %1497 = vmatprep.subr.mxu0 %v255
        %1498 = vmatpush1.msra.mxu0 %v254
        %1499 = vmatprep.subr.mxu0 %v259
        %1500 = vmatpush1.msra.mxu0 %v258
        %1501 = vmatprep.subr.mxu0 %v263
        %1502 = vmatpush1.msra.mxu0 %v262
        %1503 = vmatprep.subr.mxu0 %v267
        %1504 = vmatpush1.msra.mxu0 %v266
        %1505 = vmatprep.subr.mxu0 %v271
        %1506 = vmatpush1.msra.mxu0 %v270
        %1507 = vmatprep.subr.mxu0 %v275
        %1508 = vmatpush1.msra.mxu0 %v274
        %1509 = vmatprep.subr.mxu0 %v279
        %1510 = vmatpush1.msra.mxu0 %v278
        %1511 = vmatprep.subr.mxu0 %v283
        %1512 = vmatpush1.msra.mxu0 %v282
        %1513 = vmatprep.subr.mxu0 %v287
        %1514 = vmatpush1.msra.mxu0 %v286
        %1515 = vmatprep.subr.mxu0 %v291
        %1516 = vmatpush1.msra.mxu0 %v290
        %1517 = vmatprep.subr.mxu0 %v295
        %1518 = vmatpush1.msra.mxu0 %v294
        %1519 = vmatprep.subr.mxu0 %v299
        %1520 = vmatpush1.msra.mxu0 %v298
        %1521 = vmatprep.subr.mxu0 %v303
        %1522 = vmatpush1.msra.mxu0 %v302
        %1523 = vmatprep.subr.mxu0 %v307
        %1524 = vmatpush1.msra.mxu0 %v306
        %1525 = vmatprep.subr.mxu0 %v311
        %1526 = vmatpush1.msra.mxu0 %v310
        %1527 = vmatprep.subr.mxu0 %v315
        %1528 = vmatpush1.msra.mxu0 %v314
        %1529 = vmatprep.subr.mxu0 %v319
        %1530 = vmatpush1.msra.mxu0 %v318
        %1531 = vmatprep.subr.mxu0 %v323
        %1532 = vmatpush1.msra.mxu0 %v322
        %1533 = vmatprep.subr.mxu0 %v327
        %1534 = vmatpush1.msra.mxu0 %v326
        %1535 = vmatprep.subr.mxu0 %v331
        %1536 = vmatpush1.msra.mxu0 %v330
        %1537 = vmatprep.subr.mxu0 %v335
        %1538 = vmatpush1.msra.mxu0 %v334
        %1539 = vmatprep.subr.mxu0 %v339
        %1540 = vmatpush1.msra.mxu0 %v338
        %1541 = vmatprep.subr.mxu0 %v343
        %1542 = vmatpush1.msra.mxu0 %v342
        %1543 = vmatprep.subr.mxu0 %v347
        %1544 = vmatpush1.msra.mxu0 %v346
        %1545 = vmatprep.subr.mxu0 %v351
        %1546 = vmatpush1.msra.mxu0 %v350
        %1547 = vmatprep.subr.mxu0 %v355
        %1548 = vmatpush1.msra.mxu0 %v354
        %1549 = vmatprep.subr.mxu0 %v359
        %1550 = vmatpush1.msra.mxu0 %v358
        %1551 = vmatprep.subr.mxu0 %v363
        %1552 = vmatpush1.msra.mxu0 %v362
        %1553 = vmatprep.mubr.f32.mxu0 %v1410
        %1554 = vmatmul.mubr.f32.gmra.mrb[0].mxu0 %v1402
        %v1555 = vpop.f32.mrb[0].mxu0
        %v1556 = vadd.f32 0.0, %v1555
        %v1557 = vpop.f32.mrb[0].mxu0
        %v1558 = vadd.f32 0.0, %v1557
        %1559 = vdwg.mxu0
        %1560 = vmatprep.subr.mxu0 %v367
        %1561 = vmatpush1.msra.mxu0 %v366
        %1562 = vmatprep.subr.mxu0 %v371
        %1563 = vmatpush1.msra.mxu0 %v370
        %1564 = vmatprep.subr.mxu0 %v375
        %1565 = vmatpush1.msra.mxu0 %v374
        %1566 = vmatprep.subr.mxu0 %v379
        %1567 = vmatpush1.msra.mxu0 %v378
        %1568 = vmatprep.subr.mxu0 %v383
        %1569 = vmatpush1.msra.mxu0 %v382
        %1570 = vmatprep.subr.mxu0 %v387
        %1571 = vmatpush1.msra.mxu0 %v386
        %1572 = vmatprep.subr.mxu0 %v391
        %1573 = vmatpush1.msra.mxu0 %v390
        %1574 = vmatprep.subr.mxu0 %v395
        %1575 = vmatpush1.msra.mxu0 %v394
        %1576 = vmatprep.subr.mxu0 %v399
        %1577 = vmatpush1.msra.mxu0 %v398
        %1578 = vmatprep.subr.mxu0 %v403
        %1579 = vmatpush1.msra.mxu0 %v402
        %1580 = vmatprep.subr.mxu0 %v407
        %1581 = vmatpush1.msra.mxu0 %v406
        %1582 = vmatprep.subr.mxu0 %v411
        %1583 = vmatpush1.msra.mxu0 %v410
        %1584 = vmatprep.subr.mxu0 %v415
        %1585 = vmatpush1.msra.mxu0 %v414
        %1586 = vmatprep.subr.mxu0 %v419
        %1587 = vmatpush1.msra.mxu0 %v418
        %1588 = vmatprep.subr.mxu0 %v423
        %1589 = vmatpush1.msra.mxu0 %v422
        %1590 = vmatprep.subr.mxu0 %v427
        %1591 = vmatpush1.msra.mxu0 %v426
        %1592 = vmatprep.subr.mxu0 %v431
        %1593 = vmatpush1.msra.mxu0 %v430
        %1594 = vmatprep.subr.mxu0 %v435
        %1595 = vmatpush1.msra.mxu0 %v434
        %1596 = vmatprep.subr.mxu0 %v439
        %1597 = vmatpush1.msra.mxu0 %v438
        %1598 = vmatprep.subr.mxu0 %v443
        %1599 = vmatpush1.msra.mxu0 %v442
        %1600 = vmatprep.subr.mxu0 %v447
        %1601 = vmatpush1.msra.mxu0 %v446
        %1602 = vmatprep.subr.mxu0 %v451
        %1603 = vmatpush1.msra.mxu0 %v450
        %1604 = vmatprep.subr.mxu0 %v455
        %1605 = vmatpush1.msra.mxu0 %v454
        %1606 = vmatprep.subr.mxu0 %v459
        %1607 = vmatpush1.msra.mxu0 %v458
        %1608 = vmatprep.subr.mxu0 %v463
        %1609 = vmatpush1.msra.mxu0 %v462
        %1610 = vmatprep.subr.mxu0 %v467
        %1611 = vmatpush1.msra.mxu0 %v466
        %1612 = vmatprep.subr.mxu0 %v471
        %1613 = vmatpush1.msra.mxu0 %v470
        %1614 = vmatprep.subr.mxu0 %v475
        %1615 = vmatpush1.msra.mxu0 %v474
        %1616 = vmatprep.subr.mxu0 %v479
        %1617 = vmatpush1.msra.mxu0 %v478
        %1618 = vmatprep.subr.mxu0 %v483
        %1619 = vmatpush1.msra.mxu0 %v482
        %1620 = vmatprep.subr.mxu0 %v487
        %1621 = vmatpush1.msra.mxu0 %v486
        %1622 = vmatprep.subr.mxu0 %v491
        %1623 = vmatpush1.msra.mxu0 %v490
        %1624 = vmatprep.mubr.f32.mxu0 %v1411
        %1625 = vmatmul.mubr.f32.gmra.mrb[0].mxu0 %v1409
        %v1626 = vpop.f32.mrb[0].mxu0
        %v1627 = vadd.f32 %v1556, %v1626
        %v1628 = vpop.f32.mrb[0].mxu0
        %v1629 = vadd.f32 %v1558, %v1628
        %1630 = vdwg.mxu0
        %1631 = vmatprep.subr.mxu0 %v495
        %1632 = vmatpush1.msra.mxu0 %v494
        %1633 = vmatprep.subr.mxu0 %v499
        %1634 = vmatpush1.msra.mxu0 %v498
        %1635 = vmatprep.subr.mxu0 %v503
        %1636 = vmatpush1.msra.mxu0 %v502
        %1637 = vmatprep.subr.mxu0 %v507
        %1638 = vmatpush1.msra.mxu0 %v506
        %1639 = vmatprep.subr.mxu0 %v511
        %1640 = vmatpush1.msra.mxu0 %v510
        %1641 = vmatprep.subr.mxu0 %v515
        %1642 = vmatpush1.msra.mxu0 %v514
        %1643 = vmatprep.subr.mxu0 %v519
        %1644 = vmatpush1.msra.mxu0 %v518
        %1645 = vmatprep.subr.mxu0 %v523
        %1646 = vmatpush1.msra.mxu0 %v522
        %1647 = vmatprep.subr.mxu0 %v527
        %1648 = vmatpush1.msra.mxu0 %v526
        %1649 = vmatprep.subr.mxu0 %v531
        %1650 = vmatpush1.msra.mxu0 %v530
        %1651 = vmatprep.subr.mxu0 %v535
        %1652 = vmatpush1.msra.mxu0 %v534
        %1653 = vmatprep.subr.mxu0 %v539
        %1654 = vmatpush1.msra.mxu0 %v538
        %1655 = vmatprep.subr.mxu0 %v543
        %1656 = vmatpush1.msra.mxu0 %v542
        %1657 = vmatprep.subr.mxu0 %v547
        %1658 = vmatpush1.msra.mxu0 %v546
        %1659 = vmatprep.subr.mxu0 %v551
        %1660 = vmatpush1.msra.mxu0 %v550
        %1661 = vmatprep.subr.mxu0 %v555
        %1662 = vmatpush1.msra.mxu0 %v554
        %1663 = vmatprep.subr.mxu0 %v559
        %1664 = vmatpush1.msra.mxu0 %v558
        %1665 = vmatprep.subr.mxu0 %v563
        %1666 = vmatpush1.msra.mxu0 %v562
        %1667 = vmatprep.subr.mxu0 %v567
        %1668 = vmatpush1.msra.mxu0 %v566
        %1669 = vmatprep.subr.mxu0 %v571
        %1670 = vmatpush1.msra.mxu0 %v570
        %1671 = vmatprep.subr.mxu0 %v575
        %1672 = vmatpush1.msra.mxu0 %v574
        %1673 = vmatprep.subr.mxu0 %v579
        %1674 = vmatpush1.msra.mxu0 %v578
        %1675 = vmatprep.subr.mxu0 %v583
        %1676 = vmatpush1.msra.mxu0 %v582
        %1677 = vmatprep.subr.mxu0 %v587
        %1678 = vmatpush1.msra.mxu0 %v586
        %1679 = vmatprep.subr.mxu0 %v591
        %1680 = vmatpush1.msra.mxu0 %v590
        %1681 = vmatprep.subr.mxu0 %v595
        %1682 = vmatpush1.msra.mxu0 %v594
        %1683 = vmatprep.subr.mxu0 %v599
        %1684 = vmatpush1.msra.mxu0 %v598
        %1685 = vmatprep.subr.mxu0 %v603
        %1686 = vmatpush1.msra.mxu0 %v602
        %1687 = vmatprep.subr.mxu0 %v607
        %1688 = vmatpush1.msra.mxu0 %v606
        %1689 = vmatprep.subr.mxu0 %v611
        %1690 = vmatpush1.msra.mxu0 %v610
        %1691 = vmatprep.subr.mxu0 %v615
        %1692 = vmatpush1.msra.mxu0 %v614
        %1693 = vmatprep.subr.mxu0 %v619
        %1694 = vmatpush1.msra.mxu0 %v618
        %1695 = vmatprep.mubr.f32.mxu0 %v1427
        %1696 = vmatmul.mubr.f32.gmra.mrb[0].mxu0 %v1419
        %v1697 = vpop.f32.mrb[0].mxu0
        %v1698 = vadd.f32 %v1627, %v1697
        %v1699 = vpop.f32.mrb[0].mxu0
        %v1700 = vadd.f32 %v1629, %v1699
        %1701 = vdwg.mxu0
        %1702 = vmatprep.subr.mxu0 %v623
        %1703 = vmatpush1.msra.mxu0 %v622
        %1704 = vmatprep.subr.mxu0 %v627
        %1705 = vmatpush1.msra.mxu0 %v626
        %1706 = vmatprep.subr.mxu0 %v631
        %1707 = vmatpush1.msra.mxu0 %v630
        %1708 = vmatprep.subr.mxu0 %v635
        %1709 = vmatpush1.msra.mxu0 %v634
        %1710 = vmatprep.subr.mxu0 %v639
        %1711 = vmatpush1.msra.mxu0 %v638
        %1712 = vmatprep.subr.mxu0 %v643
        %1713 = vmatpush1.msra.mxu0 %v642
        %1714 = vmatprep.subr.mxu0 %v647
        %1715 = vmatpush1.msra.mxu0 %v646
        %1716 = vmatprep.subr.mxu0 %v651
        %1717 = vmatpush1.msra.mxu0 %v650
        %1718 = vmatprep.subr.mxu0 %v655
        %1719 = vmatpush1.msra.mxu0 %v654
        %1720 = vmatprep.subr.mxu0 %v659
        %1721 = vmatpush1.msra.mxu0 %v658
        %1722 = vmatprep.subr.mxu0 %v663
        %1723 = vmatpush1.msra.mxu0 %v662
        %1724 = vmatprep.subr.mxu0 %v667
        %1725 = vmatpush1.msra.mxu0 %v666
        %1726 = vmatprep.subr.mxu0 %v671
        %1727 = vmatpush1.msra.mxu0 %v670
        %1728 = vmatprep.subr.mxu0 %v675
        %1729 = vmatpush1.msra.mxu0 %v674
        %1730 = vmatprep.subr.mxu0 %v679
        %1731 = vmatpush1.msra.mxu0 %v678
        %1732 = vmatprep.subr.mxu0 %v683
        %1733 = vmatpush1.msra.mxu0 %v682
        %1734 = vmatprep.subr.mxu0 %v687
        %1735 = vmatpush1.msra.mxu0 %v686
        %1736 = vmatprep.subr.mxu0 %v691
        %1737 = vmatpush1.msra.mxu0 %v690
        %1738 = vmatprep.subr.mxu0 %v695
        %1739 = vmatpush1.msra.mxu0 %v694
        %1740 = vmatprep.subr.mxu0 %v699
        %1741 = vmatpush1.msra.mxu0 %v698
        %1742 = vmatprep.subr.mxu0 %v703
        %1743 = vmatpush1.msra.mxu0 %v702
        %1744 = vmatprep.subr.mxu0 %v707
        %1745 = vmatpush1.msra.mxu0 %v706
        %1746 = vmatprep.subr.mxu0 %v711
        %1747 = vmatpush1.msra.mxu0 %v710
        %1748 = vmatprep.subr.mxu0 %v715
        %1749 = vmatpush1.msra.mxu0 %v714
        %1750 = vmatprep.subr.mxu0 %v719
        %1751 = vmatpush1.msra.mxu0 %v718
        %1752 = vmatprep.subr.mxu0 %v723
        %1753 = vmatpush1.msra.mxu0 %v722
        %1754 = vmatprep.subr.mxu0 %v727
        %1755 = vmatpush1.msra.mxu0 %v726
        %1756 = vmatprep.subr.mxu0 %v731
        %1757 = vmatpush1.msra.mxu0 %v730
        %1758 = vmatprep.subr.mxu0 %v735
        %1759 = vmatpush1.msra.mxu0 %v734
        %1760 = vmatprep.subr.mxu0 %v739
        %1761 = vmatpush1.msra.mxu0 %v738
        %1762 = vmatprep.subr.mxu0 %v743
        %1763 = vmatpush1.msra.mxu0 %v742
        %1764 = vmatprep.subr.mxu0 %v747
        %1765 = vmatpush1.msra.mxu0 %v746
        %1766 = vmatprep.mubr.f32.mxu0 %v1428
        %1767 = vmatmul.mubr.f32.gmra.mrb[0].mxu0 %v1426
        %v1768 = vpop.f32.mrb[0].mxu0
        %v1769 = vadd.f32 %v1698, %v1768
        %v1770 = vpop.f32.mrb[0].mxu0
        %v1771 = vadd.f32 %v1700, %v1770
        %1772 = vdwg.mxu0
        %1773 = vmatprep.subr.mxu0 %v751
        %1774 = vmatpush1.msra.mxu0 %v750
        %1775 = vmatprep.subr.mxu0 %v755
        %1776 = vmatpush1.msra.mxu0 %v754
        %1777 = vmatprep.subr.mxu0 %v759
        %1778 = vmatpush1.msra.mxu0 %v758
        %1779 = vmatprep.subr.mxu0 %v763
        %1780 = vmatpush1.msra.mxu0 %v762
        %1781 = vmatprep.subr.mxu0 %v767
        %1782 = vmatpush1.msra.mxu0 %v766
        %1783 = vmatprep.subr.mxu0 %v771
        %1784 = vmatpush1.msra.mxu0 %v770
        %1785 = vmatprep.subr.mxu0 %v775
        %1786 = vmatpush1.msra.mxu0 %v774
        %1787 = vmatprep.subr.mxu0 %v779
        %1788 = vmatpush1.msra.mxu0 %v778
        %1789 = vmatprep.subr.mxu0 %v783
        %1790 = vmatpush1.msra.mxu0 %v782
        %1791 = vmatprep.subr.mxu0 %v787
        %1792 = vmatpush1.msra.mxu0 %v786
        %1793 = vmatprep.subr.mxu0 %v791
        %1794 = vmatpush1.msra.mxu0 %v790
        %1795 = vmatprep.subr.mxu0 %v795
        %1796 = vmatpush1.msra.mxu0 %v794
        %1797 = vmatprep.subr.mxu0 %v799
        %1798 = vmatpush1.msra.mxu0 %v798
        %1799 = vmatprep.subr.mxu0 %v803
        %1800 = vmatpush1.msra.mxu0 %v802
        %1801 = vmatprep.subr.mxu0 %v807
        %1802 = vmatpush1.msra.mxu0 %v806
        %1803 = vmatprep.subr.mxu0 %v811
        %1804 = vmatpush1.msra.mxu0 %v810
        %1805 = vmatprep.subr.mxu0 %v815
        %1806 = vmatpush1.msra.mxu0 %v814
        %1807 = vmatprep.subr.mxu0 %v819
        %1808 = vmatpush1.msra.mxu0 %v818
        %1809 = vmatprep.subr.mxu0 %v823
        %1810 = vmatpush1.msra.mxu0 %v822
        %1811 = vmatprep.subr.mxu0 %v827
        %1812 = vmatpush1.msra.mxu0 %v826
        %1813 = vmatprep.subr.mxu0 %v831
        %1814 = vmatpush1.msra.mxu0 %v830
        %1815 = vmatprep.subr.mxu0 %v835
        %1816 = vmatpush1.msra.mxu0 %v834
        %1817 = vmatprep.subr.mxu0 %v839
        %1818 = vmatpush1.msra.mxu0 %v838
        %1819 = vmatprep.subr.mxu0 %v843
        %1820 = vmatpush1.msra.mxu0 %v842
        %1821 = vmatprep.subr.mxu0 %v847
        %1822 = vmatpush1.msra.mxu0 %v846
        %1823 = vmatprep.subr.mxu0 %v851
        %1824 = vmatpush1.msra.mxu0 %v850
        %1825 = vmatprep.subr.mxu0 %v855
        %1826 = vmatpush1.msra.mxu0 %v854
        %1827 = vmatprep.subr.mxu0 %v859
        %1828 = vmatpush1.msra.mxu0 %v858
        %1829 = vmatprep.subr.mxu0 %v863
        %1830 = vmatpush1.msra.mxu0 %v862
        %1831 = vmatprep.subr.mxu0 %v867
        %1832 = vmatpush1.msra.mxu0 %v866
        %1833 = vmatprep.subr.mxu0 %v871
        %1834 = vmatpush1.msra.mxu0 %v870
        %1835 = vmatprep.subr.mxu0 %v875
        %1836 = vmatpush1.msra.mxu0 %v874
        %1837 = vmatprep.mubr.f32.mxu0 %v1444
        %1838 = vmatmul.mubr.f32.gmra.mrb[0].mxu0 %v1436
        %v1839 = vpop.f32.mrb[0].mxu0
        %v1840 = vadd.f32 %v1769, %v1839
        %v1841 = vpop.f32.mrb[0].mxu0
        %v1842 = vadd.f32 %v1771, %v1841
        %1843 = vdwg.mxu0
        %1844 = vmatprep.subr.mxu0 %v879
        %1845 = vmatpush1.msra.mxu0 %v878
        %1846 = vmatprep.subr.mxu0 %v883
        %1847 = vmatpush1.msra.mxu0 %v882
        %1848 = vmatprep.subr.mxu0 %v887
        %1849 = vmatpush1.msra.mxu0 %v886
        %1850 = vmatprep.subr.mxu0 %v891
        %1851 = vmatpush1.msra.mxu0 %v890
        %1852 = vmatprep.subr.mxu0 %v895
        %1853 = vmatpush1.msra.mxu0 %v894
        %1854 = vmatprep.subr.mxu0 %v899
        %1855 = vmatpush1.msra.mxu0 %v898
        %1856 = vmatprep.subr.mxu0 %v903
        %1857 = vmatpush1.msra.mxu0 %v902
        %1858 = vmatprep.subr.mxu0 %v907
        %1859 = vmatpush1.msra.mxu0 %v906
        %1860 = vmatprep.subr.mxu0 %v911
        %1861 = vmatpush1.msra.mxu0 %v910
        %1862 = vmatprep.subr.mxu0 %v915
        %1863 = vmatpush1.msra.mxu0 %v914
        %1864 = vmatprep.subr.mxu0 %v919
        %1865 = vmatpush1.msra.mxu0 %v918
        %1866 = vmatprep.subr.mxu0 %v923
        %1867 = vmatpush1.msra.mxu0 %v922
        %1868 = vmatprep.subr.mxu0 %v927
        %1869 = vmatpush1.msra.mxu0 %v926
        %1870 = vmatprep.subr.mxu0 %v931
        %1871 = vmatpush1.msra.mxu0 %v930
        %1872 = vmatprep.subr.mxu0 %v935
        %1873 = vmatpush1.msra.mxu0 %v934
        %1874 = vmatprep.subr.mxu0 %v939
        %1875 = vmatpush1.msra.mxu0 %v938
        %1876 = vmatprep.subr.mxu0 %v943
        %1877 = vmatpush1.msra.mxu0 %v942
        %1878 = vmatprep.subr.mxu0 %v947
        %1879 = vmatpush1.msra.mxu0 %v946
        %1880 = vmatprep.subr.mxu0 %v951
        %1881 = vmatpush1.msra.mxu0 %v950
        %1882 = vmatprep.subr.mxu0 %v955
        %1883 = vmatpush1.msra.mxu0 %v954
        %1884 = vmatprep.subr.mxu0 %v959
        %1885 = vmatpush1.msra.mxu0 %v958
        %1886 = vmatprep.subr.mxu0 %v963
        %1887 = vmatpush1.msra.mxu0 %v962
        %1888 = vmatprep.subr.mxu0 %v967
        %1889 = vmatpush1.msra.mxu0 %v966
        %1890 = vmatprep.subr.mxu0 %v971
        %1891 = vmatpush1.msra.mxu0 %v970
        %1892 = vmatprep.subr.mxu0 %v975
        %1893 = vmatpush1.msra.mxu0 %v974
        %1894 = vmatprep.subr.mxu0 %v979
        %1895 = vmatpush1.msra.mxu0 %v978
        %1896 = vmatprep.subr.mxu0 %v983
        %1897 = vmatpush1.msra.mxu0 %v982
        %1898 = vmatprep.subr.mxu0 %v987
        %1899 = vmatpush1.msra.mxu0 %v986
        %1900 = vmatprep.subr.mxu0 %v991
        %1901 = vmatpush1.msra.mxu0 %v990
        %1902 = vmatprep.subr.mxu0 %v995
        %1903 = vmatpush1.msra.mxu0 %v994
        %1904 = vmatprep.subr.mxu0 %v999
        %1905 = vmatpush1.msra.mxu0 %v998
        %1906 = vmatprep.subr.mxu0 %v1003
        %1907 = vmatpush1.msra.mxu0 %v1002
        %1908 = vmatprep.mubr.f32.mxu0 %v1445
        %1909 = vmatmul.mubr.f32.gmra.mrb[0].mxu0 %v1443
        %v1910 = vpop.f32.mrb[0].mxu0
        %v1911 = vadd.f32 %v1840, %v1910
        %v1912 = vpop.f32.mrb[0].mxu0
        %v1913 = vadd.f32 %v1842, %v1912
        %1914 = vdwg.mxu0
        %1915 = vmatprep.subr.mxu0 %v1007
        %1916 = vmatpush1.msra.mxu0 %v1006
        %1917 = vmatprep.subr.mxu0 %v1011
        %1918 = vmatpush1.msra.mxu0 %v1010
        %1919 = vmatprep.subr.mxu0 %v1015
        %1920 = vmatpush1.msra.mxu0 %v1014
        %1921 = vmatprep.subr.mxu0 %v1019
        %1922 = vmatpush1.msra.mxu0 %v1018
        %1923 = vmatprep.subr.mxu0 %v1023
        %1924 = vmatpush1.msra.mxu0 %v1022
        %1925 = vmatprep.subr.mxu0 %v1027
        %1926 = vmatpush1.msra.mxu0 %v1026
        %1927 = vmatprep.subr.mxu0 %v1031
        %1928 = vmatpush1.msra.mxu0 %v1030
        %1929 = vmatprep.subr.mxu0 %v1035
        %1930 = vmatpush1.msra.mxu0 %v1034
        %1931 = vmatprep.subr.mxu0 %v1039
        %1932 = vmatpush1.msra.mxu0 %v1038
        %1933 = vmatprep.subr.mxu0 %v1043
        %1934 = vmatpush1.msra.mxu0 %v1042
        %1935 = vmatprep.subr.mxu0 %v1047
        %1936 = vmatpush1.msra.mxu0 %v1046
        %1937 = vmatprep.subr.mxu0 %v1051
        %1938 = vmatpush1.msra.mxu0 %v1050
        %1939 = vmatprep.subr.mxu0 %v1055
        %1940 = vmatpush1.msra.mxu0 %v1054
        %1941 = vmatprep.subr.mxu0 %v1059
        %1942 = vmatpush1.msra.mxu0 %v1058
        %1943 = vmatprep.subr.mxu0 %v1063
        %1944 = vmatpush1.msra.mxu0 %v1062
        %1945 = vmatprep.subr.mxu0 %v1067
        %1946 = vmatpush1.msra.mxu0 %v1066
        %1947 = vmatprep.subr.mxu0 %v1071
        %1948 = vmatpush1.msra.mxu0 %v1070
        %1949 = vmatprep.subr.mxu0 %v1075
        %1950 = vmatpush1.msra.mxu0 %v1074
        %1951 = vmatprep.subr.mxu0 %v1079
        %1952 = vmatpush1.msra.mxu0 %v1078
        %1953 = vmatprep.subr.mxu0 %v1083
        %1954 = vmatpush1.msra.mxu0 %v1082
        %1955 = vmatprep.subr.mxu0 %v1087
        %1956 = vmatpush1.msra.mxu0 %v1086
        %1957 = vmatprep.subr.mxu0 %v1091
        %1958 = vmatpush1.msra.mxu0 %v1090
        %1959 = vmatprep.subr.mxu0 %v1095
        %1960 = vmatpush1.msra.mxu0 %v1094
        %1961 = vmatprep.subr.mxu0 %v1099
        %1962 = vmatpush1.msra.mxu0 %v1098
        %1963 = vmatprep.subr.mxu0 %v1103
        %1964 = vmatpush1.msra.mxu0 %v1102
        %1965 = vmatprep.subr.mxu0 %v1107
        %1966 = vmatpush1.msra.mxu0 %v1106
        %1967 = vmatprep.subr.mxu0 %v1111
        %1968 = vmatpush1.msra.mxu0 %v1110
        %1969 = vmatprep.subr.mxu0 %v1115
        %1970 = vmatpush1.msra.mxu0 %v1114
        %1971 = vmatprep.subr.mxu0 %v1119
        %1972 = vmatpush1.msra.mxu0 %v1118
        %1973 = vmatprep.subr.mxu0 %v1123
        %1974 = vmatpush1.msra.mxu0 %v1122
        %1975 = vmatprep.subr.mxu0 %v1127
        %1976 = vmatpush1.msra.mxu0 %v1126
        %1977 = vmatprep.subr.mxu0 %v1131
        %1978 = vmatpush1.msra.mxu0 %v1130
        %1979 = vmatprep.mubr.f32.mxu0 %v1461
        %1980 = vmatmul.mubr.f32.gmra.mrb[0].mxu0 %v1453
        %v1981 = vpop.f32.mrb[0].mxu0
        %v1982 = vadd.f32 %v1911, %v1981
        %v1983 = vpop.f32.mrb[0].mxu0
        %v1984 = vadd.f32 %v1913, %v1983
        %1985 = vdwg.mxu0
        %1986 = vmatprep.subr.mxu0 %v1135
        %1987 = vmatpush1.msra.mxu0 %v1134
        %1988 = vmatprep.subr.mxu0 %v1139
        %1989 = vmatpush1.msra.mxu0 %v1138
        %1990 = vmatprep.subr.mxu0 %v1143
        %1991 = vmatpush1.msra.mxu0 %v1142
        %1992 = vmatprep.subr.mxu0 %v1147
        %1993 = vmatpush1.msra.mxu0 %v1146
        %1994 = vmatprep.subr.mxu0 %v1151
        %1995 = vmatpush1.msra.mxu0 %v1150
        %1996 = vmatprep.subr.mxu0 %v1155
        %1997 = vmatpush1.msra.mxu0 %v1154
        %1998 = vmatprep.subr.mxu0 %v1159
        %1999 = vmatpush1.msra.mxu0 %v1158
        %2000 = vmatprep.subr.mxu0 %v1163
        %2001 = vmatpush1.msra.mxu0 %v1162
        %2002 = vmatprep.subr.mxu0 %v1167
        %2003 = vmatpush1.msra.mxu0 %v1166
        %2004 = vmatprep.subr.mxu0 %v1171
        %2005 = vmatpush1.msra.mxu0 %v1170
        %2006 = vmatprep.subr.mxu0 %v1175
        %2007 = vmatpush1.msra.mxu0 %v1174
        %2008 = vmatprep.subr.mxu0 %v1179
        %2009 = vmatpush1.msra.mxu0 %v1178
        %2010 = vmatprep.subr.mxu0 %v1183
        %2011 = vmatpush1.msra.mxu0 %v1182
        %2012 = vmatprep.subr.mxu0 %v1187
        %2013 = vmatpush1.msra.mxu0 %v1186
        %2014 = vmatprep.subr.mxu0 %v1191
        %2015 = vmatpush1.msra.mxu0 %v1190
        %2016 = vmatprep.subr.mxu0 %v1195
        %2017 = vmatpush1.msra.mxu0 %v1194
        %2018 = vmatprep.subr.mxu0 %v1199
        %2019 = vmatpush1.msra.mxu0 %v1198
        %2020 = vmatprep.subr.mxu0 %v1203
        %2021 = vmatpush1.msra.mxu0 %v1202
        %2022 = vmatprep.subr.mxu0 %v1207
        %2023 = vmatpush1.msra.mxu0 %v1206
        %2024 = vmatprep.subr.mxu0 %v1211
        %2025 = vmatpush1.msra.mxu0 %v1210
        %2026 = vmatprep.subr.mxu0 %v1215
        %2027 = vmatpush1.msra.mxu0 %v1214
        %2028 = vmatprep.subr.mxu0 %v1219
        %2029 = vmatpush1.msra.mxu0 %v1218
        %2030 = vmatprep.subr.mxu0 %v1223
        %2031 = vmatpush1.msra.mxu0 %v1222
        %2032 = vmatprep.subr.mxu0 %v1227
        %2033 = vmatpush1.msra.mxu0 %v1226
        %2034 = vmatprep.subr.mxu0 %v1231
        %2035 = vmatpush1.msra.mxu0 %v1230
        %2036 = vmatprep.subr.mxu0 %v1235
        %2037 = vmatpush1.msra.mxu0 %v1234
        %2038 = vmatprep.subr.mxu0 %v1239
        %2039 = vmatpush1.msra.mxu0 %v1238
        %2040 = vmatprep.subr.mxu0 %v1243
        %2041 = vmatpush1.msra.mxu0 %v1242
        %2042 = vmatprep.subr.mxu0 %v1247
        %2043 = vmatpush1.msra.mxu0 %v1246
        %2044 = vmatprep.subr.mxu0 %v1251
        %2045 = vmatpush1.msra.mxu0 %v1250
        %2046 = vmatprep.subr.mxu0 %v1255
        %2047 = vmatpush1.msra.mxu0 %v1254
        %2048 = vmatprep.subr.mxu0 %v1259
        %2049 = vmatpush1.msra.mxu0 %v1258
        %2050 = vmatprep.mubr.f32.mxu0 %v1462
        %2051 = vmatmul.mubr.f32.gmra.mrb[0].mxu0 %v1460
        %v2052 = vpop.f32.mrb[0].mxu0
        %v2053 = vadd.f32 %v1982, %v2052
        %v2054 = vpop.f32.mrb[0].mxu0
        %v2055 = vadd.f32 %v1984, %v2054
        %2056 = vdwg.mxu0
        %2057 = vmatprep.subr.mxu0 %v1263
        %2058 = vmatpush1.msra.mxu0 %v1262
        %2059 = vmatprep.subr.mxu0 %v1267
        %2060 = vmatpush1.msra.mxu0 %v1266
        %2061 = vmatprep.subr.mxu0 %v1271
        %2062 = vmatpush1.msra.mxu0 %v1270
        %2063 = vmatprep.subr.mxu0 %v1275
        %2064 = vmatpush1.msra.mxu0 %v1274
        %2065 = vmatprep.subr.mxu0 %v1279
        %2066 = vmatpush1.msra.mxu0 %v1278
        %2067 = vmatprep.subr.mxu0 %v1283
        %2068 = vmatpush1.msra.mxu0 %v1282
        %2069 = vmatprep.subr.mxu0 %v1287
        %2070 = vmatpush1.msra.mxu0 %v1286
        %2071 = vmatprep.subr.mxu0 %v1291
        %2072 = vmatpush1.msra.mxu0 %v1290
        %2073 = vmatprep.subr.mxu0 %v1295
        %2074 = vmatpush1.msra.mxu0 %v1294
        %2075 = vmatprep.subr.mxu0 %v1299
        %2076 = vmatpush1.msra.mxu0 %v1298
        %2077 = vmatprep.subr.mxu0 %v1303
        %2078 = vmatpush1.msra.mxu0 %v1302
        %2079 = vmatprep.subr.mxu0 %v1307
        %2080 = vmatpush1.msra.mxu0 %v1306
        %2081 = vmatprep.subr.mxu0 %v1311
        %2082 = vmatpush1.msra.mxu0 %v1310
        %2083 = vmatprep.subr.mxu0 %v1315
        %2084 = vmatpush1.msra.mxu0 %v1314
        %2085 = vmatprep.subr.mxu0 %v1319
        %2086 = vmatpush1.msra.mxu0 %v1318
        %2087 = vmatprep.subr.mxu0 %v1323
        %2088 = vmatpush1.msra.mxu0 %v1322
        %2089 = vmatprep.subr.mxu0 %v1327
        %2090 = vmatpush1.msra.mxu0 %v1326
        %2091 = vmatprep.subr.mxu0 %v1331
        %2092 = vmatpush1.msra.mxu0 %v1330
        %2093 = vmatprep.subr.mxu0 %v1335
        %2094 = vmatpush1.msra.mxu0 %v1334
        %2095 = vmatprep.subr.mxu0 %v1339
        %2096 = vmatpush1.msra.mxu0 %v1338
        %2097 = vmatprep.subr.mxu0 %v1343
        %2098 = vmatpush1.msra.mxu0 %v1342
        %2099 = vmatprep.subr.mxu0 %v1347
        %2100 = vmatpush1.msra.mxu0 %v1346
        %2101 = vmatprep.subr.mxu0 %v1351
        %2102 = vmatpush1.msra.mxu0 %v1350
        %2103 = vmatprep.subr.mxu0 %v1355
        %2104 = vmatpush1.msra.mxu0 %v1354
        %2105 = vmatprep.subr.mxu0 %v1359
        %2106 = vmatpush1.msra.mxu0 %v1358
        %2107 = vmatprep.subr.mxu0 %v1363
        %2108 = vmatpush1.msra.mxu0 %v1362
        %2109 = vmatprep.subr.mxu0 %v1367
        %2110 = vmatpush1.msra.mxu0 %v1366
        %2111 = vmatprep.subr.mxu0 %v1371
        %2112 = vmatpush1.msra.mxu0 %v1370
        %2113 = vmatprep.subr.mxu0 %v1375
        %2114 = vmatpush1.msra.mxu0 %v1374
        %2115 = vmatprep.subr.mxu0 %v1379
        %2116 = vmatpush1.msra.mxu0 %v1378
        %2117 = vmatprep.subr.mxu0 %v1383
        %2118 = vmatpush1.msra.mxu0 %v1382
        %2119 = vmatprep.subr.mxu0 %v1387
        %2120 = vmatpush1.msra.mxu0 %v1386
        %2121 = vmatprep.mubr.f32.mxu0 %v1470
        %2122 = vmatmul.mubr.f32.gmra.mrb[0].mxu0 %v1469
        %v2123 = vpop.f32.mrb[0].mxu0
        %v2124 = vadd.f32 %v2053, %v2123
        %v2125 = vpop.f32.mrb[0].mxu0
        %v2126 = vadd.f32 %v2055, %v2125
        %2127 = vdwg.mxu0
        %2128 = vmatprep.subr.mxu0 %v241
        %2129 = vmatpush1.msra.mxu0 %v240
        %2130 = vmatprep.subr.mxu0 %v245
        %2131 = vmatpush1.msra.mxu0 %v244
        %2132 = vmatprep.subr.mxu0 %v249
        %2133 = vmatpush1.msra.mxu0 %v248
        %2134 = vmatprep.subr.mxu0 %v253
        %2135 = vmatpush1.msra.mxu0 %v252
        %2136 = vmatprep.subr.mxu0 %v257
        %2137 = vmatpush1.msra.mxu0 %v256
        %2138 = vmatprep.subr.mxu0 %v261
        %2139 = vmatpush1.msra.mxu0 %v260
        %2140 = vmatprep.subr.mxu0 %v265
        %2141 = vmatpush1.msra.mxu0 %v264
        %2142 = vmatprep.subr.mxu0 %v269
        %2143 = vmatpush1.msra.mxu0 %v268
        %2144 = vmatprep.subr.mxu0 %v273
        %2145 = vmatpush1.msra.mxu0 %v272
        %2146 = vmatprep.subr.mxu0 %v277
        %2147 = vmatpush1.msra.mxu0 %v276
        %2148 = vmatprep.subr.mxu0 %v281
        %2149 = vmatpush1.msra.mxu0 %v280
        %2150 = vmatprep.subr.mxu0 %v285
        %2151 = vmatpush1.msra.mxu0 %v284
        %2152 = vmatprep.subr.mxu0 %v289
        %2153 = vmatpush1.msra.mxu0 %v288
        %2154 = vmatprep.subr.mxu0 %v293
        %2155 = vmatpush1.msra.mxu0 %v292
        %2156 = vmatprep.subr.mxu0 %v297
        %2157 = vmatpush1.msra.mxu0 %v296
        %2158 = vmatprep.subr.mxu0 %v301
        %2159 = vmatpush1.msra.mxu0 %v300
        %2160 = vmatprep.subr.mxu0 %v305
        %2161 = vmatpush1.msra.mxu0 %v304
        %2162 = vmatprep.subr.mxu0 %v309
        %2163 = vmatpush1.msra.mxu0 %v308
        %2164 = vmatprep.subr.mxu0 %v313
        %2165 = vmatpush1.msra.mxu0 %v312
        %2166 = vmatprep.subr.mxu0 %v317
        %2167 = vmatpush1.msra.mxu0 %v316
        %2168 = vmatprep.subr.mxu0 %v321
        %2169 = vmatpush1.msra.mxu0 %v320
        %2170 = vmatprep.subr.mxu0 %v325
        %2171 = vmatpush1.msra.mxu0 %v324
        %2172 = vmatprep.subr.mxu0 %v329
        %2173 = vmatpush1.msra.mxu0 %v328
        %2174 = vmatprep.subr.mxu0 %v333
        %2175 = vmatpush1.msra.mxu0 %v332
        %2176 = vmatprep.subr.mxu0 %v337
        %2177 = vmatpush1.msra.mxu0 %v336
        %2178 = vmatprep.subr.mxu0 %v341
        %2179 = vmatpush1.msra.mxu0 %v340
        %2180 = vmatprep.subr.mxu0 %v345
        %2181 = vmatpush1.msra.mxu0 %v344
        %2182 = vmatprep.subr.mxu0 %v349
        %2183 = vmatpush1.msra.mxu0 %v348
        %2184 = vmatprep.subr.mxu0 %v353
        %2185 = vmatpush1.msra.mxu0 %v352
        %2186 = vmatprep.subr.mxu0 %v357
        %2187 = vmatpush1.msra.mxu0 %v356
        %2188 = vmatprep.subr.mxu0 %v361
        %2189 = vmatpush1.msra.mxu0 %v360
        %2190 = vmatprep.subr.mxu0 %v365
        %2191 = vmatpush1.msra.mxu0 %v364
        %2192 = vmatprep.mubr.f32.mxu0 %v1410
        %2193 = vmatmul.mubr.f32.gmra.mrb[0].mxu0 %v1402
        %v2194 = vpop.f32.mrb[0].mxu0
        %v2195 = vadd.f32 0.0, %v2194
        %v2196 = vpop.f32.mrb[0].mxu0
        %v2197 = vadd.f32 0.0, %v2196
        %2198 = vdwg.mxu0
        %2199 = vmatprep.subr.mxu0 %v369
        %2200 = vmatpush1.msra.mxu0 %v368
        %2201 = vmatprep.subr.mxu0 %v373
        %2202 = vmatpush1.msra.mxu0 %v372
        %2203 = vmatprep.subr.mxu0 %v377
        %2204 = vmatpush1.msra.mxu0 %v376
        %2205 = vmatprep.subr.mxu0 %v381
        %2206 = vmatpush1.msra.mxu0 %v380
        %2207 = vmatprep.subr.mxu0 %v385
        %2208 = vmatpush1.msra.mxu0 %v384
        %2209 = vmatprep.subr.mxu0 %v389
        %2210 = vmatpush1.msra.mxu0 %v388
        %2211 = vmatprep.subr.mxu0 %v393
        %2212 = vmatpush1.msra.mxu0 %v392
        %2213 = vmatprep.subr.mxu0 %v397
        %2214 = vmatpush1.msra.mxu0 %v396
        %2215 = vmatprep.subr.mxu0 %v401
        %2216 = vmatpush1.msra.mxu0 %v400
        %2217 = vmatprep.subr.mxu0 %v405
        %2218 = vmatpush1.msra.mxu0 %v404
        %2219 = vmatprep.subr.mxu0 %v409
        %2220 = vmatpush1.msra.mxu0 %v408
        %2221 = vmatprep.subr.mxu0 %v413
        %2222 = vmatpush1.msra.mxu0 %v412
        %2223 = vmatprep.subr.mxu0 %v417
        %2224 = vmatpush1.msra.mxu0 %v416
        %2225 = vmatprep.subr.mxu0 %v421
        %2226 = vmatpush1.msra.mxu0 %v420
        %2227 = vmatprep.subr.mxu0 %v425
        %2228 = vmatpush1.msra.mxu0 %v424
        %2229 = vmatprep.subr.mxu0 %v429
        %2230 = vmatpush1.msra.mxu0 %v428
        %2231 = vmatprep.subr.mxu0 %v433
        %2232 = vmatpush1.msra.mxu0 %v432
        %2233 = vmatprep.subr.mxu0 %v437
        %2234 = vmatpush1.msra.mxu0 %v436
        %2235 = vmatprep.subr.mxu0 %v441
        %2236 = vmatpush1.msra.mxu0 %v440
        %2237 = vmatprep.subr.mxu0 %v445
        %2238 = vmatpush1.msra.mxu0 %v444
        %2239 = vmatprep.subr.mxu0 %v449
        %2240 = vmatpush1.msra.mxu0 %v448
        %2241 = vmatprep.subr.mxu0 %v453
        %2242 = vmatpush1.msra.mxu0 %v452
        %2243 = vmatprep.subr.mxu0 %v457
        %2244 = vmatpush1.msra.mxu0 %v456
        %2245 = vmatprep.subr.mxu0 %v461
        %2246 = vmatpush1.msra.mxu0 %v460
        %2247 = vmatprep.subr.mxu0 %v465
        %2248 = vmatpush1.msra.mxu0 %v464
        %2249 = vmatprep.subr.mxu0 %v469
        %2250 = vmatpush1.msra.mxu0 %v468
        %2251 = vmatprep.subr.mxu0 %v473
        %2252 = vmatpush1.msra.mxu0 %v472
        %2253 = vmatprep.subr.mxu0 %v477
        %2254 = vmatpush1.msra.mxu0 %v476
        %2255 = vmatprep.subr.mxu0 %v481
        %2256 = vmatpush1.msra.mxu0 %v480
        %2257 = vmatprep.subr.mxu0 %v485
        %2258 = vmatpush1.msra.mxu0 %v484
        %2259 = vmatprep.subr.mxu0 %v489
        %2260 = vmatpush1.msra.mxu0 %v488
        %2261 = vmatprep.subr.mxu0 %v493
        %2262 = vmatpush1.msra.mxu0 %v492
        %2263 = vmatprep.mubr.f32.mxu0 %v1411
        %2264 = vmatmul.mubr.f32.gmra.mrb[0].mxu0 %v1409
        %v2265 = vpop.f32.mrb[0].mxu0
        %v2266 = vadd.f32 %v2195, %v2265
        %v2267 = vpop.f32.mrb[0].mxu0
        %v2268 = vadd.f32 %v2197, %v2267
        %2269 = vdwg.mxu0
        %2270 = vmatprep.subr.mxu0 %v497
        %2271 = vmatpush1.msra.mxu0 %v496
        %2272 = vmatprep.subr.mxu0 %v501
        %2273 = vmatpush1.msra.mxu0 %v500
        %2274 = vmatprep.subr.mxu0 %v505
        %2275 = vmatpush1.msra.mxu0 %v504
        %2276 = vmatprep.subr.mxu0 %v509
        %2277 = vmatpush1.msra.mxu0 %v508
        %2278 = vmatprep.subr.mxu0 %v513
        %2279 = vmatpush1.msra.mxu0 %v512
        %2280 = vmatprep.subr.mxu0 %v517
        %2281 = vmatpush1.msra.mxu0 %v516
        %2282 = vmatprep.subr.mxu0 %v521
        %2283 = vmatpush1.msra.mxu0 %v520
        %2284 = vmatprep.subr.mxu0 %v525
        %2285 = vmatpush1.msra.mxu0 %v524
        %2286 = vmatprep.subr.mxu0 %v529
        %2287 = vmatpush1.msra.mxu0 %v528
        %2288 = vmatprep.subr.mxu0 %v533
        %2289 = vmatpush1.msra.mxu0 %v532
        %2290 = vmatprep.subr.mxu0 %v537
        %2291 = vmatpush1.msra.mxu0 %v536
        %2292 = vmatprep.subr.mxu0 %v541
        %2293 = vmatpush1.msra.mxu0 %v540
        %2294 = vmatprep.subr.mxu0 %v545
        %2295 = vmatpush1.msra.mxu0 %v544
        %2296 = vmatprep.subr.mxu0 %v549
        %2297 = vmatpush1.msra.mxu0 %v548
        %2298 = vmatprep.subr.mxu0 %v553
        %2299 = vmatpush1.msra.mxu0 %v552
        %2300 = vmatprep.subr.mxu0 %v557
        %2301 = vmatpush1.msra.mxu0 %v556
        %2302 = vmatprep.subr.mxu0 %v561
        %2303 = vmatpush1.msra.mxu0 %v560
        %2304 = vmatprep.subr.mxu0 %v565
        %2305 = vmatpush1.msra.mxu0 %v564
        %2306 = vmatprep.subr.mxu0 %v569
        %2307 = vmatpush1.msra.mxu0 %v568
        %2308 = vmatprep.subr.mxu0 %v573
        %2309 = vmatpush1.msra.mxu0 %v572
        %2310 = vmatprep.subr.mxu0 %v577
        %2311 = vmatpush1.msra.mxu0 %v576
        %2312 = vmatprep.subr.mxu0 %v581
        %2313 = vmatpush1.msra.mxu0 %v580
        %2314 = vmatprep.subr.mxu0 %v585
        %2315 = vmatpush1.msra.mxu0 %v584
        %2316 = vmatprep.subr.mxu0 %v589
        %2317 = vmatpush1.msra.mxu0 %v588
        %2318 = vmatprep.subr.mxu0 %v593
        %2319 = vmatpush1.msra.mxu0 %v592
        %2320 = vmatprep.subr.mxu0 %v597
        %2321 = vmatpush1.msra.mxu0 %v596
        %2322 = vmatprep.subr.mxu0 %v601
        %2323 = vmatpush1.msra.mxu0 %v600
        %2324 = vmatprep.subr.mxu0 %v605
        %2325 = vmatpush1.msra.mxu0 %v604
        %2326 = vmatprep.subr.mxu0 %v609
        %2327 = vmatpush1.msra.mxu0 %v608
        %2328 = vmatprep.subr.mxu0 %v613
        %2329 = vmatpush1.msra.mxu0 %v612
        %2330 = vmatprep.subr.mxu0 %v617
        %2331 = vmatpush1.msra.mxu0 %v616
        %2332 = vmatprep.subr.mxu0 %v621
        %2333 = vmatpush1.msra.mxu0 %v620
        %2334 = vmatprep.mubr.f32.mxu0 %v1427
        %2335 = vmatmul.mubr.f32.gmra.mrb[0].mxu0 %v1419
        %v2336 = vpop.f32.mrb[0].mxu0
        %v2337 = vadd.f32 %v2266, %v2336
        %v2338 = vpop.f32.mrb[0].mxu0
        %v2339 = vadd.f32 %v2268, %v2338
        %2340 = vdwg.mxu0
        %2341 = vmatprep.subr.mxu0 %v625
        %2342 = vmatpush1.msra.mxu0 %v624
        %2343 = vmatprep.subr.mxu0 %v629
        %2344 = vmatpush1.msra.mxu0 %v628
        %2345 = vmatprep.subr.mxu0 %v633
        %2346 = vmatpush1.msra.mxu0 %v632
        %2347 = vmatprep.subr.mxu0 %v637
        %2348 = vmatpush1.msra.mxu0 %v636
        %2349 = vmatprep.subr.mxu0 %v641
        %2350 = vmatpush1.msra.mxu0 %v640
        %2351 = vmatprep.subr.mxu0 %v645
        %2352 = vmatpush1.msra.mxu0 %v644
        %2353 = vmatprep.subr.mxu0 %v649
        %2354 = vmatpush1.msra.mxu0 %v648
        %2355 = vmatprep.subr.mxu0 %v653
        %2356 = vmatpush1.msra.mxu0 %v652
        %2357 = vmatprep.subr.mxu0 %v657
        %2358 = vmatpush1.msra.mxu0 %v656
        %2359 = vmatprep.subr.mxu0 %v661
        %2360 = vmatpush1.msra.mxu0 %v660
        %2361 = vmatprep.subr.mxu0 %v665
        %2362 = vmatpush1.msra.mxu0 %v664
        %2363 = vmatprep.subr.mxu0 %v669
        %2364 = vmatpush1.msra.mxu0 %v668
        %2365 = vmatprep.subr.mxu0 %v673
        %2366 = vmatpush1.msra.mxu0 %v672
        %2367 = vmatprep.subr.mxu0 %v677
        %2368 = vmatpush1.msra.mxu0 %v676
        %2369 = vmatprep.subr.mxu0 %v681
        %2370 = vmatpush1.msra.mxu0 %v680
        %2371 = vmatprep.subr.mxu0 %v685
        %2372 = vmatpush1.msra.mxu0 %v684
        %2373 = vmatprep.subr.mxu0 %v689
        %2374 = vmatpush1.msra.mxu0 %v688
        %2375 = vmatprep.subr.mxu0 %v693
        %2376 = vmatpush1.msra.mxu0 %v692
        %2377 = vmatprep.subr.mxu0 %v697
        %2378 = vmatpush1.msra.mxu0 %v696
        %2379 = vmatprep.subr.mxu0 %v701
        %2380 = vmatpush1.msra.mxu0 %v700
        %2381 = vmatprep.subr.mxu0 %v705
        %2382 = vmatpush1.msra.mxu0 %v704
        %2383 = vmatprep.subr.mxu0 %v709
        %2384 = vmatpush1.msra.mxu0 %v708
        %2385 = vmatprep.subr.mxu0 %v713
        %2386 = vmatpush1.msra.mxu0 %v712
        %2387 = vmatprep.subr.mxu0 %v717
        %2388 = vmatpush1.msra.mxu0 %v716
        %2389 = vmatprep.subr.mxu0 %v721
        %2390 = vmatpush1.msra.mxu0 %v720
        %2391 = vmatprep.subr.mxu0 %v725
        %2392 = vmatpush1.msra.mxu0 %v724
        %2393 = vmatprep.subr.mxu0 %v729
        %2394 = vmatpush1.msra.mxu0 %v728
        %2395 = vmatprep.subr.mxu0 %v733
        %2396 = vmatpush1.msra.mxu0 %v732
        %2397 = vmatprep.subr.mxu0 %v737
        %2398 = vmatpush1.msra.mxu0 %v736
        %2399 = vmatprep.subr.mxu0 %v741
        %2400 = vmatpush1.msra.mxu0 %v740
        %2401 = vmatprep.subr.mxu0 %v745
        %2402 = vmatpush1.msra.mxu0 %v744
        %2403 = vmatprep.subr.mxu0 %v749
        %2404 = vmatpush1.msra.mxu0 %v748
        %2405 = vmatprep.mubr.f32.mxu0 %v1428
        %2406 = vmatmul.mubr.f32.gmra.mrb[0].mxu0 %v1426
        %v2407 = vpop.f32.mrb[0].mxu0
        %v2408 = vadd.f32 %v2337, %v2407
        %v2409 = vpop.f32.mrb[0].mxu0
        %v2410 = vadd.f32 %v2339, %v2409
        %2411 = vdwg.mxu0
        %2412 = vmatprep.subr.mxu0 %v753
        %2413 = vmatpush1.msra.mxu0 %v752
        %2414 = vmatprep.subr.mxu0 %v757
        %2415 = vmatpush1.msra.mxu0 %v756
        %2416 = vmatprep.subr.mxu0 %v761
        %2417 = vmatpush1.msra.mxu0 %v760
        %2418 = vmatprep.subr.mxu0 %v765
        %2419 = vmatpush1.msra.mxu0 %v764
        %2420 = vmatprep.subr.mxu0 %v769
        %2421 = vmatpush1.msra.mxu0 %v768
        %2422 = vmatprep.subr.mxu0 %v773
        %2423 = vmatpush1.msra.mxu0 %v772
        %2424 = vmatprep.subr.mxu0 %v777
        %2425 = vmatpush1.msra.mxu0 %v776
        %2426 = vmatprep.subr.mxu0 %v781
        %2427 = vmatpush1.msra.mxu0 %v780
        %2428 = vmatprep.subr.mxu0 %v785
        %2429 = vmatpush1.msra.mxu0 %v784
        %2430 = vmatprep.subr.mxu0 %v789
        %2431 = vmatpush1.msra.mxu0 %v788
        %2432 = vmatprep.subr.mxu0 %v793
        %2433 = vmatpush1.msra.mxu0 %v792
        %2434 = vmatprep.subr.mxu0 %v797
        %2435 = vmatpush1.msra.mxu0 %v796
        %2436 = vmatprep.subr.mxu0 %v801
        %2437 = vmatpush1.msra.mxu0 %v800
        %2438 = vmatprep.subr.mxu0 %v805
        %2439 = vmatpush1.msra.mxu0 %v804
        %2440 = vmatprep.subr.mxu0 %v809
        %2441 = vmatpush1.msra.mxu0 %v808
        %2442 = vmatprep.subr.mxu0 %v813
        %2443 = vmatpush1.msra.mxu0 %v812
        %2444 = vmatprep.subr.mxu0 %v817
        %2445 = vmatpush1.msra.mxu0 %v816
        %2446 = vmatprep.subr.mxu0 %v821
        %2447 = vmatpush1.msra.mxu0 %v820
        %2448 = vmatprep.subr.mxu0 %v825
        %2449 = vmatpush1.msra.mxu0 %v824
        %2450 = vmatprep.subr.mxu0 %v829
        %2451 = vmatpush1.msra.mxu0 %v828
        %2452 = vmatprep.subr.mxu0 %v833
        %2453 = vmatpush1.msra.mxu0 %v832
        %2454 = vmatprep.subr.mxu0 %v837
        %2455 = vmatpush1.msra.mxu0 %v836
        %2456 = vmatprep.subr.mxu0 %v841
        %2457 = vmatpush1.msra.mxu0 %v840
        %2458 = vmatprep.subr.mxu0 %v845
        %2459 = vmatpush1.msra.mxu0 %v844
        %2460 = vmatprep.subr.mxu0 %v849
        %2461 = vmatpush1.msra.mxu0 %v848
        %2462 = vmatprep.subr.mxu0 %v853
        %2463 = vmatpush1.msra.mxu0 %v852
        %2464 = vmatprep.subr.mxu0 %v857
        %2465 = vmatpush1.msra.mxu0 %v856
        %2466 = vmatprep.subr.mxu0 %v861
        %2467 = vmatpush1.msra.mxu0 %v860
        %2468 = vmatprep.subr.mxu0 %v865
        %2469 = vmatpush1.msra.mxu0 %v864
        %2470 = vmatprep.subr.mxu0 %v869
        %2471 = vmatpush1.msra.mxu0 %v868
        %2472 = vmatprep.subr.mxu0 %v873
        %2473 = vmatpush1.msra.mxu0 %v872
        %2474 = vmatprep.subr.mxu0 %v877
        %2475 = vmatpush1.msra.mxu0 %v876
        %2476 = vmatprep.mubr.f32.mxu0 %v1444
        %2477 = vmatmul.mubr.f32.gmra.mrb[0].mxu0 %v1436
        %v2478 = vpop.f32.mrb[0].mxu0
        %v2479 = vadd.f32 %v2408, %v2478
        %v2480 = vpop.f32.mrb[0].mxu0
        %v2481 = vadd.f32 %v2410, %v2480
        %2482 = vdwg.mxu0
        %2483 = vmatprep.subr.mxu0 %v881
        %2484 = vmatpush1.msra.mxu0 %v880
        %2485 = vmatprep.subr.mxu0 %v885
        %2486 = vmatpush1.msra.mxu0 %v884
        %2487 = vmatprep.subr.mxu0 %v889
        %2488 = vmatpush1.msra.mxu0 %v888
        %2489 = vmatprep.subr.mxu0 %v893
        %2490 = vmatpush1.msra.mxu0 %v892
        %2491 = vmatprep.subr.mxu0 %v897
        %2492 = vmatpush1.msra.mxu0 %v896
        %2493 = vmatprep.subr.mxu0 %v901
        %2494 = vmatpush1.msra.mxu0 %v900
        %2495 = vmatprep.subr.mxu0 %v905
        %2496 = vmatpush1.msra.mxu0 %v904
        %2497 = vmatprep.subr.mxu0 %v909
        %2498 = vmatpush1.msra.mxu0 %v908
        %2499 = vmatprep.subr.mxu0 %v913
        %2500 = vmatpush1.msra.mxu0 %v912
        %2501 = vmatprep.subr.mxu0 %v917
        %2502 = vmatpush1.msra.mxu0 %v916
        %2503 = vmatprep.subr.mxu0 %v921
        %2504 = vmatpush1.msra.mxu0 %v920
        %2505 = vmatprep.subr.mxu0 %v925
        %2506 = vmatpush1.msra.mxu0 %v924
        %2507 = vmatprep.subr.mxu0 %v929
        %2508 = vmatpush1.msra.mxu0 %v928
        %2509 = vmatprep.subr.mxu0 %v933
        %2510 = vmatpush1.msra.mxu0 %v932
        %2511 = vmatprep.subr.mxu0 %v937
        %2512 = vmatpush1.msra.mxu0 %v936
        %2513 = vmatprep.subr.mxu0 %v941
        %2514 = vmatpush1.msra.mxu0 %v940
        %2515 = vmatprep.subr.mxu0 %v945
        %2516 = vmatpush1.msra.mxu0 %v944
        %2517 = vmatprep.subr.mxu0 %v949
        %2518 = vmatpush1.msra.mxu0 %v948
        %2519 = vmatprep.subr.mxu0 %v953
        %2520 = vmatpush1.msra.mxu0 %v952
        %2521 = vmatprep.subr.mxu0 %v957
        %2522 = vmatpush1.msra.mxu0 %v956
        %2523 = vmatprep.subr.mxu0 %v961
        %2524 = vmatpush1.msra.mxu0 %v960
        %2525 = vmatprep.subr.mxu0 %v965
        %2526 = vmatpush1.msra.mxu0 %v964
        %2527 = vmatprep.subr.mxu0 %v969
        %2528 = vmatpush1.msra.mxu0 %v968
        %2529 = vmatprep.subr.mxu0 %v973
        %2530 = vmatpush1.msra.mxu0 %v972
        %2531 = vmatprep.subr.mxu0 %v977
        %2532 = vmatpush1.msra.mxu0 %v976
        %2533 = vmatprep.subr.mxu0 %v981
        %2534 = vmatpush1.msra.mxu0 %v980
        %2535 = vmatprep.subr.mxu0 %v985
        %2536 = vmatpush1.msra.mxu0 %v984
        %2537 = vmatprep.subr.mxu0 %v989
        %2538 = vmatpush1.msra.mxu0 %v988
        %2539 = vmatprep.subr.mxu0 %v993
        %2540 = vmatpush1.msra.mxu0 %v992
        %2541 = vmatprep.subr.mxu0 %v997
        %2542 = vmatpush1.msra.mxu0 %v996
        %2543 = vmatprep.subr.mxu0 %v1001
        %2544 = vmatpush1.msra.mxu0 %v1000
        %2545 = vmatprep.subr.mxu0 %v1005
        %2546 = vmatpush1.msra.mxu0 %v1004
        %2547 = vmatprep.mubr.f32.mxu0 %v1445
        %2548 = vmatmul.mubr.f32.gmra.mrb[0].mxu0 %v1443
        %v2549 = vpop.f32.mrb[0].mxu0
        %v2550 = vadd.f32 %v2479, %v2549
        %v2551 = vpop.f32.mrb[0].mxu0
        %v2552 = vadd.f32 %v2481, %v2551
        %2553 = vdwg.mxu0
        %2554 = vmatprep.subr.mxu0 %v1009
        %2555 = vmatpush1.msra.mxu0 %v1008
        %2556 = vmatprep.subr.mxu0 %v1013
        %2557 = vmatpush1.msra.mxu0 %v1012
        %2558 = vmatprep.subr.mxu0 %v1017
        %2559 = vmatpush1.msra.mxu0 %v1016
        %2560 = vmatprep.subr.mxu0 %v1021
        %2561 = vmatpush1.msra.mxu0 %v1020
        %2562 = vmatprep.subr.mxu0 %v1025
        %2563 = vmatpush1.msra.mxu0 %v1024
        %2564 = vmatprep.subr.mxu0 %v1029
        %2565 = vmatpush1.msra.mxu0 %v1028
        %2566 = vmatprep.subr.mxu0 %v1033
        %2567 = vmatpush1.msra.mxu0 %v1032
        %2568 = vmatprep.subr.mxu0 %v1037
        %2569 = vmatpush1.msra.mxu0 %v1036
        %2570 = vmatprep.subr.mxu0 %v1041
        %2571 = vmatpush1.msra.mxu0 %v1040
        %2572 = vmatprep.subr.mxu0 %v1045
        %2573 = vmatpush1.msra.mxu0 %v1044
        %2574 = vmatprep.subr.mxu0 %v1049
        %2575 = vmatpush1.msra.mxu0 %v1048
        %2576 = vmatprep.subr.mxu0 %v1053
        %2577 = vmatpush1.msra.mxu0 %v1052
        %2578 = vmatprep.subr.mxu0 %v1057
        %2579 = vmatpush1.msra.mxu0 %v1056
        %2580 = vmatprep.subr.mxu0 %v1061
        %2581 = vmatpush1.msra.mxu0 %v1060
        %2582 = vmatprep.subr.mxu0 %v1065
        %2583 = vmatpush1.msra.mxu0 %v1064
        %2584 = vmatprep.subr.mxu0 %v1069
        %2585 = vmatpush1.msra.mxu0 %v1068
        %2586 = vmatprep.subr.mxu0 %v1073
        %2587 = vmatpush1.msra.mxu0 %v1072
        %2588 = vmatprep.subr.mxu0 %v1077
        %2589 = vmatpush1.msra.mxu0 %v1076
        %2590 = vmatprep.subr.mxu0 %v1081
        %2591 = vmatpush1.msra.mxu0 %v1080
        %2592 = vmatprep.subr.mxu0 %v1085
        %2593 = vmatpush1.msra.mxu0 %v1084
        %2594 = vmatprep.subr.mxu0 %v1089
        %2595 = vmatpush1.msra.mxu0 %v1088
        %2596 = vmatprep.subr.mxu0 %v1093
        %2597 = vmatpush1.msra.mxu0 %v1092
        %2598 = vmatprep.subr.mxu0 %v1097
        %2599 = vmatpush1.msra.mxu0 %v1096
        %2600 = vmatprep.subr.mxu0 %v1101
        %2601 = vmatpush1.msra.mxu0 %v1100
        %2602 = vmatprep.subr.mxu0 %v1105
        %2603 = vmatpush1.msra.mxu0 %v1104
        %2604 = vmatprep.subr.mxu0 %v1109
        %2605 = vmatpush1.msra.mxu0 %v1108
        %2606 = vmatprep.subr.mxu0 %v1113
        %2607 = vmatpush1.msra.mxu0 %v1112
        %2608 = vmatprep.subr.mxu0 %v1117
        %2609 = vmatpush1.msra.mxu0 %v1116
        %2610 = vmatprep.subr.mxu0 %v1121
        %2611 = vmatpush1.msra.mxu0 %v1120
        %2612 = vmatprep.subr.mxu0 %v1125
        %2613 = vmatpush1.msra.mxu0 %v1124
        %2614 = vmatprep.subr.mxu0 %v1129
        %2615 = vmatpush1.msra.mxu0 %v1128
        %2616 = vmatprep.subr.mxu0 %v1133
        %2617 = vmatpush1.msra.mxu0 %v1132
        %2618 = vmatprep.mubr.f32.mxu0 %v1461
        %2619 = vmatmul.mubr.f32.gmra.mrb[0].mxu0 %v1453
        %v2620 = vpop.f32.mrb[0].mxu0
        %v2621 = vadd.f32 %v2550, %v2620
        %v2622 = vpop.f32.mrb[0].mxu0
        %v2623 = vadd.f32 %v2552, %v2622
        %2624 = vdwg.mxu0
        %2625 = vmatprep.subr.mxu0 %v1137
        %2626 = vmatpush1.msra.mxu0 %v1136
        %2627 = vmatprep.subr.mxu0 %v1141
        %2628 = vmatpush1.msra.mxu0 %v1140
        %2629 = vmatprep.subr.mxu0 %v1145
        %2630 = vmatpush1.msra.mxu0 %v1144
        %2631 = vmatprep.subr.mxu0 %v1149
        %2632 = vmatpush1.msra.mxu0 %v1148
        %2633 = vmatprep.subr.mxu0 %v1153
        %2634 = vmatpush1.msra.mxu0 %v1152
        %2635 = vmatprep.subr.mxu0 %v1157
        %2636 = vmatpush1.msra.mxu0 %v1156
        %2637 = vmatprep.subr.mxu0 %v1161
        %2638 = vmatpush1.msra.mxu0 %v1160
        %2639 = vmatprep.subr.mxu0 %v1165
        %2640 = vmatpush1.msra.mxu0 %v1164
        %2641 = vmatprep.subr.mxu0 %v1169
        %2642 = vmatpush1.msra.mxu0 %v1168
        %2643 = vmatprep.subr.mxu0 %v1173
        %2644 = vmatpush1.msra.mxu0 %v1172
        %2645 = vmatprep.subr.mxu0 %v1177
        %2646 = vmatpush1.msra.mxu0 %v1176
        %2647 = vmatprep.subr.mxu0 %v1181
        %2648 = vmatpush1.msra.mxu0 %v1180
        %2649 = vmatprep.subr.mxu0 %v1185
        %2650 = vmatpush1.msra.mxu0 %v1184
        %2651 = vmatprep.subr.mxu0 %v1189
        %2652 = vmatpush1.msra.mxu0 %v1188
        %2653 = vmatprep.subr.mxu0 %v1193
        %2654 = vmatpush1.msra.mxu0 %v1192
        %2655 = vmatprep.subr.mxu0 %v1197
        %2656 = vmatpush1.msra.mxu0 %v1196
        %2657 = vmatprep.subr.mxu0 %v1201
        %2658 = vmatpush1.msra.mxu0 %v1200
        %2659 = vmatprep.subr.mxu0 %v1205
        %2660 = vmatpush1.msra.mxu0 %v1204
        %2661 = vmatprep.subr.mxu0 %v1209
        %2662 = vmatpush1.msra.mxu0 %v1208
        %2663 = vmatprep.subr.mxu0 %v1213
        %2664 = vmatpush1.msra.mxu0 %v1212
        %2665 = vmatprep.subr.mxu0 %v1217
        %2666 = vmatpush1.msra.mxu0 %v1216
        %2667 = vmatprep.subr.mxu0 %v1221
        %2668 = vmatpush1.msra.mxu0 %v1220
        %2669 = vmatprep.subr.mxu0 %v1225
        %2670 = vmatpush1.msra.mxu0 %v1224
        %2671 = vmatprep.subr.mxu0 %v1229
        %2672 = vmatpush1.msra.mxu0 %v1228
        %2673 = vmatprep.subr.mxu0 %v1233
        %2674 = vmatpush1.msra.mxu0 %v1232
        %2675 = vmatprep.subr.mxu0 %v1237
        %2676 = vmatpush1.msra.mxu0 %v1236
        %2677 = vmatprep.subr.mxu0 %v1241
        %2678 = vmatpush1.msra.mxu0 %v1240
        %2679 = vmatprep.subr.mxu0 %v1245
        %2680 = vmatpush1.msra.mxu0 %v1244
        %2681 = vmatprep.subr.mxu0 %v1249
        %2682 = vmatpush1.msra.mxu0 %v1248
        %2683 = vmatprep.subr.mxu0 %v1253
        %2684 = vmatpush1.msra.mxu0 %v1252
        %2685 = vmatprep.subr.mxu0 %v1257
        %2686 = vmatpush1.msra.mxu0 %v1256
        %2687 = vmatprep.subr.mxu0 %v1261
        %2688 = vmatpush1.msra.mxu0 %v1260
        %2689 = vmatprep.mubr.f32.mxu0 %v1462
        %2690 = vmatmul.mubr.f32.gmra.mrb[0].mxu0 %v1460
        %v2691 = vpop.f32.mrb[0].mxu0
        %v2692 = vadd.f32 %v2621, %v2691
        %v2693 = vpop.f32.mrb[0].mxu0
        %v2694 = vadd.f32 %v2623, %v2693
        %2695 = vdwg.mxu0
        %2696 = vmatprep.subr.mxu0 %v1265
        %2697 = vmatpush1.msra.mxu0 %v1264
        %2698 = vmatprep.subr.mxu0 %v1269
        %2699 = vmatpush1.msra.mxu0 %v1268
        %2700 = vmatprep.subr.mxu0 %v1273
        %2701 = vmatpush1.msra.mxu0 %v1272
        %2702 = vmatprep.subr.mxu0 %v1277
        %2703 = vmatpush1.msra.mxu0 %v1276
        %2704 = vmatprep.subr.mxu0 %v1281
        %2705 = vmatpush1.msra.mxu0 %v1280
        %2706 = vmatprep.subr.mxu0 %v1285
        %2707 = vmatpush1.msra.mxu0 %v1284
        %2708 = vmatprep.subr.mxu0 %v1289
        %2709 = vmatpush1.msra.mxu0 %v1288
        %2710 = vmatprep.subr.mxu0 %v1293
        %2711 = vmatpush1.msra.mxu0 %v1292
        %2712 = vmatprep.subr.mxu0 %v1297
        %2713 = vmatpush1.msra.mxu0 %v1296
        %2714 = vmatprep.subr.mxu0 %v1301
        %2715 = vmatpush1.msra.mxu0 %v1300
        %2716 = vmatprep.subr.mxu0 %v1305
        %2717 = vmatpush1.msra.mxu0 %v1304
        %2718 = vmatprep.subr.mxu0 %v1309
        %2719 = vmatpush1.msra.mxu0 %v1308
        %2720 = vmatprep.subr.mxu0 %v1313
        %2721 = vmatpush1.msra.mxu0 %v1312
        %2722 = vmatprep.subr.mxu0 %v1317
        %2723 = vmatpush1.msra.mxu0 %v1316
        %2724 = vmatprep.subr.mxu0 %v1321
        %2725 = vmatpush1.msra.mxu0 %v1320
        %2726 = vmatprep.subr.mxu0 %v1325
        %2727 = vmatpush1.msra.mxu0 %v1324
        %2728 = vmatprep.subr.mxu0 %v1329
        %2729 = vmatpush1.msra.mxu0 %v1328
        %2730 = vmatprep.subr.mxu0 %v1333
        %2731 = vmatpush1.msra.mxu0 %v1332
        %2732 = vmatprep.subr.mxu0 %v1337
        %2733 = vmatpush1.msra.mxu0 %v1336
        %2734 = vmatprep.subr.mxu0 %v1341
        %2735 = vmatpush1.msra.mxu0 %v1340
        %2736 = vmatprep.subr.mxu0 %v1345
        %2737 = vmatpush1.msra.mxu0 %v1344
        %2738 = vmatprep.subr.mxu0 %v1349
        %2739 = vmatpush1.msra.mxu0 %v1348
        %2740 = vmatprep.subr.mxu0 %v1353
        %2741 = vmatpush1.msra.mxu0 %v1352
        %2742 = vmatprep.subr.mxu0 %v1357
        %2743 = vmatpush1.msra.mxu0 %v1356
        %2744 = vmatprep.subr.mxu0 %v1361
        %2745 = vmatpush1.msra.mxu0 %v1360
        %2746 = vmatprep.subr.mxu0 %v1365
        %2747 = vmatpush1.msra.mxu0 %v1364
        %2748 = vmatprep.subr.mxu0 %v1369
        %2749 = vmatpush1.msra.mxu0 %v1368
        %2750 = vmatprep.subr.mxu0 %v1373
        %2751 = vmatpush1.msra.mxu0 %v1372
        %2752 = vmatprep.subr.mxu0 %v1377
        %2753 = vmatpush1.msra.mxu0 %v1376
        %2754 = vmatprep.subr.mxu0 %v1381
        %2755 = vmatpush1.msra.mxu0 %v1380
        %2756 = vmatprep.subr.mxu0 %v1385
        %2757 = vmatpush1.msra.mxu0 %v1384
        %2758 = vmatprep.subr.mxu0 %v1389
        %2759 = vmatpush1.msra.mxu0 %v1388
        %2760 = vmatprep.mubr.f32.mxu0 %v1470
        %2761 = vmatmul.mubr.f32.gmra.mrb[0].mxu0 %v1469
        %v2762 = vpop.f32.mrb[0].mxu0
        %v2763 = vadd.f32 %v2692, %v2762
        %v2764 = vpop.f32.mrb[0].mxu0
        %v2765 = vadd.f32 %v2694, %v2764
        %2766 = vdwg.mxu0
        %v2771 = vcombine.low %v2124, %v2126
        %v2772 = vcombine.low %v2763, %v2765
        %v2774 = vunpack.c.l.s4 1983009808
        %v2775 = vunpack.c.0.s8 %v2774
        %v2776 = vlaneseq
        %v2777 = vshrl.u32 %v2776, 7
        %v2778 = vsub.s32 %v2775, %v2777
        %v2779 = vrot.slane %v2771, %v2778
        %v2781 = vunpack.c.l.s4 1983009808
        %v2782 = vunpack.c.0.s8 %v2781
        %v2783 = vlaneseq
        %v2784 = vshrl.u32 %v2783, 7
        %v2785 = vsub.s32 %v2782, %v2784
        %v2786 = vrot.slane %v2772, %v2785
        %v2787 = vcombine.low %v2779, %v2786
        %s2789 = smul.u32 %s20, 4
        %s2790 = smul.addr %s2789, 2
        %s2791 = scalar_lea.vmem [#allocation2], %s2790
        %2792 = vst [vmem:[%s2791] sm:$0xff] %v2787
        %p2793 = scmp.eq.s32.totalorder %s20, 0
        // Predicated region
        $region41: #{discriminator_forward.7} parent=39 // pred_check
          %p2794 = pneg %p2793
        $region42: #{discriminator_forward.7} parent=39 // pred_check_branch
          %2796 = sbr.rel (%p2794) target = $region44
        $region43: #{discriminator_forward.7} parent=39 // pred_region
          %v2797 = vlaneseq
          %vm2798 = vcmp.ge.s32.totalorder %v2797, 0
          %vm2799 = vcmp.lt.s32.totalorder %v2797, 512
          %vm2800 = vmand %vm2798, %vm2799
          %2801 = vst.msk [vmem:[#allocation3] sm:$0xf] %vm2800, 0.0
          %2802 = vst.msk [vmem:[#allocation4] sm:$0xf] %vm2800, 0.0
        $region44: #{discriminator_forward.7} parent=39 // pred_fallthru
          _
        %v2803 = vld [vmem:[#allocation3] sm:$0xf]
        %vm2804 = vcmask 1041408
        %v2805 = vsel %vm2804, %v2124, 0.0
        %v2806 = vrot.slane %v2805, 4
        %v2807 = vadd.f32 %v2805, %v2806
        %v2808 = vrot.slane %v2807, 2
        %v2809 = vadd.f32 %v2807, %v2808
        %v2810 = vrot.slane %v2809, 1
        %v2811 = vadd.f32 %v2809, %v2810
        %v2812 = vsel %vm2804, %v2126, 0.0
        %v2813 = vrot.slane %v2812, 4
        %v2814 = vadd.f32 %v2812, %v2813
        %v2815 = vrot.slane %v2814, 2
        %v2816 = vadd.f32 %v2814, %v2815
        %v2817 = vrot.slane %v2816, 1
        %v2818 = vadd.f32 %v2816, %v2817
        %v2819 = vsel %vm2804, %v2763, 0.0
        %v2820 = vrot.slane %v2819, 4
        %v2821 = vadd.f32 %v2819, %v2820
        %v2822 = vrot.slane %v2821, 2
        %v2823 = vadd.f32 %v2821, %v2822
        %v2824 = vrot.slane %v2823, 1
        %v2825 = vadd.f32 %v2823, %v2824
        %v2826 = vsel %vm2804, %v2765, 0.0
        %v2827 = vrot.slane %v2826, 4
        %v2828 = vadd.f32 %v2826, %v2827
        %v2829 = vrot.slane %v2828, 2
        %v2830 = vadd.f32 %v2828, %v2829
        %v2831 = vrot.slane %v2830, 1
        %v2832 = vadd.f32 %v2830, %v2831
        %v2837 = vcombine.low %v2811, %v2818
        %v2838 = vcombine.low %v2825, %v2832
        %v2840 = vunpack.c.l.s4 1966171168
        %v2841 = vunpack.c.0.s8 %v2840
        %v2842 = vlaneseq
        %v2843 = vshrl.u32 %v2842, 7
        %v2844 = vsub.s32 %v2841, %v2843
        %v2845 = vrot.slane %v2837, %v2844
        %v2847 = vunpack.c.l.s4 1966171168
        %v2848 = vunpack.c.0.s8 %v2847
        %v2849 = vlaneseq
        %v2850 = vshrl.u32 %v2849, 7
        %v2851 = vsub.s32 %v2848, %v2850
        %v2852 = vrot.slane %v2838, %v2851
        %v2853 = vcombine.low %v2845, %v2852
        %v2855 = vunpack.c.l.s4 1966171168
        %v2856 = vunpack.c.0.s8 %v2855
        %v2857 = vlaneseq
        %v2858 = vshrl.u32 %v2857, 7
        %v2859 = vsub.s32 %v2856, %v2858
        %v2860 = vrot.slane %v2853, %v2859
        %v2862 = vadd.f32 %v2803, %v2860
        %v2863 = vlaneseq
        %vm2864 = vcmp.ge.s32.totalorder %v2863, 0
        %vm2865 = vcmp.lt.s32.totalorder %v2863, 512
        %vm2866 = vmand %vm2864, %vm2865
        %2867 = vst.msk [vmem:[#allocation3] sm:$0xf] %vm2866, %v2862
        %v2868 = vld [vmem:[#allocation4] sm:$0xf]
        %v2869 = vmul.f32 %v2124, %v2124
        %v2870 = vmul.f32 %v2126, %v2126
        %v2871 = vmul.f32 %v2763, %v2763
        %v2872 = vmul.f32 %v2765, %v2765
        %v2873 = vsel %vm2804, %v2869, 0.0
        %v2874 = vrot.slane %v2873, 4
        %v2875 = vadd.f32 %v2873, %v2874
        %v2876 = vrot.slane %v2875, 2
        %v2877 = vadd.f32 %v2875, %v2876
        %v2878 = vrot.slane %v2877, 1
        %v2879 = vadd.f32 %v2877, %v2878
        %v2880 = vsel %vm2804, %v2870, 0.0
        %v2881 = vrot.slane %v2880, 4
        %v2882 = vadd.f32 %v2880, %v2881
        %v2883 = vrot.slane %v2882, 2
        %v2884 = vadd.f32 %v2882, %v2883
        %v2885 = vrot.slane %v2884, 1
        %v2886 = vadd.f32 %v2884, %v2885
        %v2887 = vsel %vm2804, %v2871, 0.0
        %v2888 = vrot.slane %v2887, 4
        %v2889 = vadd.f32 %v2887, %v2888
        %v2890 = vrot.slane %v2889, 2
        %v2891 = vadd.f32 %v2889, %v2890
        %v2892 = vrot.slane %v2891, 1
        %v2893 = vadd.f32 %v2891, %v2892
        %v2894 = vsel %vm2804, %v2872, 0.0
        %v2895 = vrot.slane %v2894, 4
        %v2896 = vadd.f32 %v2894, %v2895
        %v2897 = vrot.slane %v2896, 2
        %v2898 = vadd.f32 %v2896, %v2897
        %v2899 = vrot.slane %v2898, 1
        %v2900 = vadd.f32 %v2898, %v2899
        %v2905 = vcombine.low %v2879, %v2886
        %v2906 = vcombine.low %v2893, %v2900
        %v2908 = vunpack.c.l.s4 1966171168
        %v2909 = vunpack.c.0.s8 %v2908
        %v2910 = vlaneseq
        %v2911 = vshrl.u32 %v2910, 7
        %v2912 = vsub.s32 %v2909, %v2911
        %v2913 = vrot.slane %v2905, %v2912
        %v2915 = vunpack.c.l.s4 1966171168
        %v2916 = vunpack.c.0.s8 %v2915
        %v2917 = vlaneseq
        %v2918 = vshrl.u32 %v2917, 7
        %v2919 = vsub.s32 %v2916, %v2918
        %v2920 = vrot.slane %v2906, %v2919
        %v2921 = vcombine.low %v2913, %v2920
        %v2923 = vunpack.c.l.s4 1966171168
        %v2924 = vunpack.c.0.s8 %v2923
        %v2925 = vlaneseq
        %v2926 = vshrl.u32 %v2925, 7
        %v2927 = vsub.s32 %v2924, %v2926
        %v2928 = vrot.slane %v2921, %v2927
        %v2930 = vadd.f32 %v2868, %v2928
        %2931 = vst.msk [vmem:[#allocation4] sm:$0xf] %vm2866, %v2930
      $region40: #{discriminator_forward.7} parent=35 // pred_fallthru
        _
      %p2932 = scmp.eq.s32.totalorder %s19, 1
      // Predicated region
      $region45: #{discriminator_forward.7} parent=35 // pred_check
        %p2933 = pneg %p2932
      $region46: #{discriminator_forward.7} parent=35 // pred_check_branch
        %2935 = sbr.rel (%p2933) target = $region48
      $region47: #{discriminator_forward.7} parent=35 // pred_region
        %p2936 = scmp.eq.s32.totalorder %s20, 0
        // Predicated region
        $region49: #{discriminator_forward.7} parent=47 // pred_check
          %p2937 = pneg %p2936
        $region50: #{discriminator_forward.7} parent=47 // pred_check_branch
          %2939 = sbr.rel (%p2937) target = $region52
        $region51: #{discriminator_forward.7} parent=47 // pred_region
          %v2940 = vld [vmem:[#allocation3] sm:$0xf]
          %v2941 = vmul.f32 %v2940, 0.5
          %v2942 = vld [vmem:[#allocation4] sm:$0xf]
          %v2943 = vmul.f32 %v2942, 0.5
          %v2944 = vmul.f32 %v2941, %v2941
          %v2945 = vsub.f32 %v2943, %v2944
          %v2946 = vmax.f32 %v2945, 0.0
          %v2947 = vld [vmem:[%s2] sm:$0xf]
          %v2948 = vadd.f32 %v2946, 1e-05
          %v2949 = vrsqrt.pop %v2948
          %v2950 = vmul.f32 %v2947, %v2949
          %v2951 = vlaneseq
          %vm2952 = vcmp.ge.s32.totalorder %v2951, 0
          %vm2953 = vcmp.lt.s32.totalorder %v2951, 512
          %vm2954 = vmand %vm2952, %vm2953
          %2955 = vst.msk [vmem:[#allocation3] sm:$0xf] %vm2954, %v2950
          %v2956 = vld [vmem:[%s3] sm:$0xf]
          %v2957 = vmul.f32 %v2950, %v2941
          %v2958 = vsub.f32 %v2956, %v2957
          %2959 = vst.msk [vmem:[#allocation4] sm:$0xf] %vm2954, %v2958
        $region52: #{discriminator_forward.7} parent=47 // pred_fallthru
          _
        %s2960 = smul.u32 %s20, 4
        %s2961 = smul.addr %s2960, 2
        %s2962 = scalar_lea.vmem [#allocation2], %s2961
        %v2963 = vld [vmem:[%s2962] sm:$0xff]
        %v2964 = vld [vmem:[#allocation3] sm:$0xf]
        %v2966 = vlaneseq
        %v2967 = vshrl.u32 %v2966, 7
        %v2968 = vsub.s32 0, %v2967
        %v2969 = vrot.slane %v2964, %v2968
        %v2970 = vlaneseq
        %v2971 = vshrl.u32 %v2970, 7
        %v2972 = vsub.s32 1, %v2971
        %v2973 = vrot.slane %v2964, %v2972
        %v2974 = vlaneseq
        %v2975 = vshrl.u32 %v2974, 7
        %v2976 = vsub.s32 2, %v2975
        %v2977 = vrot.slane %v2964, %v2976
        %v2978 = vlaneseq
        %v2979 = vshrl.u32 %v2978, 7
        %v2980 = vsub.s32 3, %v2979
        %v2981 = vrot.slane %v2964, %v2980
        %v2987 = vcombine.high %v2963, %v2963
        %v2989 = vunpack.c.l.s4 1983009808
        %v2990 = vunpack.c.0.s8 %v2989
        %v2991 = vlaneseq
        %v2992 = vshrl.u32 %v2991, 7
        %v2993 = vsub.s32 %v2990, %v2992
        %v2994 = vrot.slane %v2963, %v2993
        %v2996 = vunpack.c.l.s4 1983009808
        %v2997 = vunpack.c.0.s8 %v2996
        %v2998 = vlaneseq
        %v2999 = vshrl.u32 %v2998, 7
        %v3000 = vsub.s32 %v2997, %v2999
        %v3001 = vrot.slane %v2987, %v3000
        %v3002 = vcombine.high %v2994, %v2994
        %v3003 = vcombine.high %v3001, %v3001
        %v3008 = vmul.f32 %v2969, %v2994
        %v3009 = vmul.f32 %v2973, %v3002
        %v3010 = vmul.f32 %v2977, %v3001
        %v3011 = vmul.f32 %v2981, %v3003
        %v3012 = vld [vmem:[#allocation4] sm:$0xf]
        %v3014 = vlaneseq
        %v3015 = vshrl.u32 %v3014, 7
        %v3016 = vsub.s32 0, %v3015
        %v3017 = vrot.slane %v3012, %v3016
        %v3018 = vlaneseq
        %v3019 = vshrl.u32 %v3018, 7
        %v3020 = vsub.s32 1, %v3019
        %v3021 = vrot.slane %v3012, %v3020
        %v3022 = vlaneseq
        %v3023 = vshrl.u32 %v3022, 7
        %v3024 = vsub.s32 2, %v3023
        %v3025 = vrot.slane %v3012, %v3024
        %v3026 = vlaneseq
        %v3027 = vshrl.u32 %v3026, 7
        %v3028 = vsub.s32 3, %v3027
        %v3029 = vrot.slane %v3012, %v3028
        %v3034 = vadd.f32 %v3008, %v3017
        %v3035 = vadd.f32 %v3009, %v3021
        %v3036 = vadd.f32 %v3010, %v3025
        %v3037 = vadd.f32 %v3011, %v3029
        %vm3038 = vcmp.ge.f32.partialorder %v3034, 0.0
        %vm3039 = vcmp.ge.f32.partialorder %v3035, 0.0
        %vm3040 = vcmp.ge.f32.partialorder %v3036, 0.0
        %vm3041 = vcmp.ge.f32.partialorder %v3037, 0.0
        %v3042 = vmul.f32 %v3034, 0.2
        %v3043 = vmul.f32 %v3035, 0.2
        %v3044 = vmul.f32 %v3036, 0.2
        %v3045 = vmul.f32 %v3037, 0.2
        %v3046 = vsel %vm3038, %v3034, %v3042
        %v3047 = vsel %vm3039, %v3035, %v3043
        %v3048 = vsel %vm3040, %v3036, %v3044
        %v3049 = vsel %vm3041, %v3037, %v3045
        %v3054 = vcombine.low %v3046, %v3047
        %v3055 = vcombine.low %v3048, %v3049
        %v3057 = vunpack.c.l.s4 1983009808
        %v3058 = vunpack.c.0.s8 %v3057
        %v3059 = vlaneseq
        %v3060 = vshrl.u32 %v3059, 7
        %v3061 = vsub.s32 %v3058, %v3060
        %v3062 = vrot.slane %v3054, %v3061
        %v3064 = vunpack.c.l.s4 1983009808
        %v3065 = vunpack.c.0.s8 %v3064
        %v3066 = vlaneseq
        %v3067 = vshrl.u32 %v3066, 7
        %v3068 = vsub.s32 %v3065, %v3067
        %v3069 = vrot.slane %v3055, %v3068
        %v3070 = vcombine.low %v3062, %v3069
        %3072 = vst [vmem:[%s227] sm:$0xff] %v3070
      $region48: #{discriminator_forward.7} parent=35 // pred_fallthru
        _
      %s3073 = smul.u32 %s20, %s19
      %p3074 = scmp.lt.s32.totalorder %s3073, 0
      %s3075 = scalar_select %p3074, %s3073, 0
      %s3076 = smul.addr %s3075, 4
      %s3077 = smul.addr %s3076, 2
      %s3078 = scalar_lea.vmem %s4, %s3077
      // Predicated region
      $region53: #{discriminator_forward.7} parent=35 // pred_check
        %p3079 = pneg %p140
      $region54: #{discriminator_forward.7} parent=35 // pred_check_branch
        %3081 = sbr.rel (%p3079) target = $region56
      $region55: #{discriminator_forward.7} parent=35 // pred_region
        %s3082 = smul.u32 %s20, %s19
      $region56: #{discriminator_forward.7} parent=35 // pred_fallthru
        _
    $region36: #{discriminator_forward.7} parent=5 // pred_fallthru
      _
    %p3083 = scmp.le.s32.totalorder 2, %s10
    // Predicated region
    $region57: #{discriminator_forward.7} parent=5 // pred_check
      %p3084 = pneg %p3083
    $region58: #{discriminator_forward.7} parent=5 // pred_check_branch
      %3086 = sbr.rel (%p3084) target = $region60
    $region59: #{discriminator_forward.7} parent=5 // pred_region
      %s3087 = ssub.s32 %s10, 2
      // Predicated region
      $region61: #{discriminator_forward.7} parent=59 // pred_check
        %p3088 = pneg %p146
      $region62: #{discriminator_forward.7} parent=59 // pred_check_branch
        %3090 = sbr.rel (%p3088) target = $region64
      $region63: #{discriminator_forward.7} parent=59 // pred_region
        %s3091 = smul.u32 %s22, %s21
        %p3092 = scmp.lt.s32.totalorder %s3091, 0
        %s3093 = scalar_select %p3092, %s3091, 0
        %s3094 = smul.addr %s3093, 4
        %s3095 = smul.addr %s3094, 2
        %s3096 = scalar_lea.vmem %s4, %s3095
      $region64: #{discriminator_forward.7} parent=59 // pred_fallthru
        _
    $region60: #{discriminator_forward.7} parent=5 // pred_fallthru
      _
  $region6: #{discriminator_forward.7} parent=0 // loop_footer
    %s14 = sadd.s32 1, %s10
  $region7: #{discriminator_forward.7} parent=0 // loop_footer_branch
    %9 = sbr.rel target = $region3
  $region8: #{discriminator_forward.7} parent=0 // loop_exit
    _

</llo_original>
